<compile_context>
chip_gen: v5e
topology: v5e:2x2
jax: 0.10.0
libtpu: 0.0.40
codegen_flags: <defaults>
</compile_context>

<pallas_src>
import jax
import jax.numpy as jnp
from jax.experimental import pallas as pl
from jax.experimental.pallas import tpu as pltpu

LABEL_LEN_EXPANDED = 12  # stand-in for consts.LABEL_LEN_EXPANDED
BN_EPS = 1e-5


def _round_up(x, m):
    return (x + m - 1) // m * m


# ----------------------------------------------------------------------------
# Input glue: conv1 patches in "recursive 2x2-parity" column order.
#
# Column j of the returned (12, 4096) per-image patch matrix corresponds to
# conv1 output pixel (a, b) with j's bits = [a0 b0 a1 b1 a2 b2 | a>>3 | b>>3],
# i.e. every later layer's four (kh, kw) tap groups are contiguous 1/4 slabs.
# Row q = (kh*2 + kw)*3 + c holds image[c, 2a+kh, 2b+kw].
# ----------------------------------------------------------------------------
def build_conv1_patches(imgs_nchw):
    n = imgs_nchw.shape[0]
    t = imgs_nchw.astype(jnp.bfloat16)
    # space-to-depth of conv1: (N,C,128,128) -> (N, 12, 64, 64)
    t = t.reshape(n, 3, 64, 2, 64, 2)          # [N, C, A, KH, B, KW]
    t = t.transpose(0, 3, 5, 1, 2, 4)          # [N, KH, KW, C, A, B]
    t = t.reshape(n, 12, 1, 64, 64)            # [N, Q, M, A, B]
    s = 64
    for _ in range(3):                         # peel parity bits into the M axis
        m = t.shape[2]
        t = t.reshape(n, 12, m, s // 2, 2, s // 2, 2)   # [N,Q,M,Ahi,A0,Bhi,B0]
        t = t.transpose(0, 1, 2, 4, 6, 3, 5)            # [N,Q,M,A0,B0,Ahi,Bhi]
        s //= 2
        t = t.reshape(n, 12, m * 4, s, s)
    return t.reshape(n, 12, 4096)


# ----------------------------------------------------------------------------
# Fused conv chain kernel: conv1..conv4 (+BN eval +ReLU) for one image.
# Activations are (channels, pixels); weights are pre-split per kernel tap.
# ----------------------------------------------------------------------------
def _conv_chain_kernel(pT_ref, lab_ref, w1_ref, b1_ref, wlab_ref,
                       w2_ref, b2_ref, w3_ref, b3_ref, w4_ref, b4_ref,
                       out_ref, s1_ref, s2_ref):
    # conv1: (16, 12) @ (12, 4096) -> (16, 4096)
    y1 = jnp.dot(w1_ref[...], pT_ref[0], preferred_element_type=jnp.float32)
    s1_ref[...] = jnp.maximum(y1 + b1_ref[...], 0.0).astype(s1_ref.dtype)

    # Label planes are spatially constant -> per-image per-channel bias (32, 1).
    lb = jnp.sum(wlab_ref[...] * lab_ref[0], axis=1, keepdims=True)

    # conv2: 4 taps over contiguous 1024-column slabs of s1 -> (32, 1024)
    y2 = jnp.zeros((32, 1024), jnp.float32)
    for g in range(4):
        y2 = y2 + jnp.dot(w2_ref[g], s1_ref[:, g * 1024:(g + 1) * 1024],
                          preferred_element_type=jnp.float32)
    s2_ref[...] = jnp.maximum(y2 + b2_ref[...] + lb, 0.0).astype(s2_ref.dtype)

    # conv3: 4 taps over 256-column slabs of s2 -> (64, 256)
    y3 = jnp.zeros((64, 256), jnp.float32)
    for g in range(4):
        y3 = y3 + jnp.dot(w3_ref[g], s2_ref[:, g * 256:(g + 1) * 256],
                          preferred_element_type=jnp.float32)
    y3 = jnp.maximum(y3 + b3_ref[...], 0.0)                       # f32 (64, 256)

    # conv4: 4 taps over 64-column slabs of y3 -> (128, 64)
    y4 = jnp.zeros((128, 64), jnp.float32)
    for g in range(4):
        y4 = y4 + jnp.dot(w4_ref[g],
                          y3[:, g * 64:(g + 1) * 64].astype(jnp.bfloat16),
                          preferred_element_type=jnp.float32)
    # Columns are already in 8x8 raster order -> reshape outside gives the
    # exact PyTorch NCHW flatten order for fc1.
    out_ref[0] = jnp.maximum(y4 + b4_ref[...], 0.0).astype(out_ref.dtype)


def conv_chain(params, pT, lab):
    n = pT.shape[0]
    w1T, b1 = params["conv1"]
    w2g, b2, wlab = params["conv2"]
    w3g, b3 = params["conv3"]
    w4g, b4 = params["conv4"]
    lab_dim = lab.shape[-1]
    z2 = lambda b: (0, 0)
    z3 = lambda b: (0, 0, 0)
    return pl.pallas_call(
        _conv_chain_kernel,
        out_shape=jax.ShapeDtypeStruct((n, 128, 64), jnp.bfloat16),
        grid_spec=pltpu.PrefetchScalarGridSpec(
            num_scalar_prefetch=0,
            grid=(n,),
            in_specs=[
                pl.BlockSpec((1, 12, 4096), lambda b: (b, 0, 0)),   # patches
                pl.BlockSpec((1, 1, lab_dim), lambda b: (b, 0, 0)),  # labels
                pl.BlockSpec((16, 12), z2),                          # w1
                pl.BlockSpec((16, 1), z2),                           # b1
                pl.BlockSpec((32, lab_dim), z2),                     # w_label
                pl.BlockSpec((4, 32, 16), z3),                       # w2 taps
                pl.BlockSpec((32, 1), z2),                           # b2
                pl.BlockSpec((4, 64, 32), z3),                       # w3 taps
                pl.BlockSpec((64, 1), z2),                           # b3
                pl.BlockSpec((4, 128, 64), z3),                      # w4 taps
                pl.BlockSpec((128, 1), z2),                          # b4
            ],
            out_specs=pl.BlockSpec((1, 128, 64), lambda b: (b, 0, 0)),
            scratch_shapes=[
                pltpu.VMEM((16, 4096), jnp.bfloat16),   # conv1 activations
                pltpu.VMEM((32, 1024), jnp.bfloat16),   # conv2 activations
            ],
        ),
        compiler_params=pltpu.CompilerParams(
            dimension_semantics=("parallel",)),
    )(pT, lab, w1T, b1, wlab, w2g, b2, w3g, b3, w4g, b4)


# ----------------------------------------------------------------------------
# Fused fc1 (LeakyReLU) + fc2 kernel, K-blocked accumulation, fc2 as epilogue.
# ----------------------------------------------------------------------------
def _fc_fused_kernel(x_ref, w1_ref, b1_ref, w2_ref, b2_ref, out_ref, acc_ref):
    k = pl.program_id(0)

    @pl.when(k == 0)
    def _():
        acc_ref[...] = jnp.zeros_like(acc_ref)

    acc_ref[...] += jnp.dot(x_ref[...], w1_ref[...],
                            preferred_element_type=jnp.float32)

    @pl.when(k == pl.num_programs(0) - 1)
    def _():
        h = acc_ref[...] + b1_ref[...]
        h = jnp.where(h >= 0.0, h, 0.01 * h).astype(jnp.bfloat16)  # LeakyReLU
        y = jnp.dot(h, w2_ref[...], preferred_element_type=jnp.float32)
        out_ref[...] = y + b2_ref[...]


def fc_head(params, x):
    mp, kdim = x.shape
    w1, b1 = params["fc1"]
    w2p, b2p = params["fc2"]
    ndim = w1.shape[1]
    n2 = w2p.shape[1]
    tk = min(kdim, 2048)                 # full-N blocks: contiguous 4 MiB DMAs
    assert kdim % tk == 0
    nk = kdim // tk
    flops = 2 * mp * kdim * ndim + 2 * mp * ndim * n2
    bytes_accessed = (x.size + w1.size + w2p.size) * 2 + \
                     (b1.size + b2p.size) * 4 + mp * n2 * 4
    return pl.pallas_call(
        _fc_fused_kernel,
        out_shape=jax.ShapeDtypeStruct((mp, n2), jnp.float32),
        grid_spec=pltpu.PrefetchScalarGridSpec(
            num_scalar_prefetch=0,
            grid=(nk,),
            in_specs=[
                pl.BlockSpec((mp, tk), lambda k: (0, k)),
                pl.BlockSpec((tk, ndim), lambda k: (k, 0)),
                pl.BlockSpec((1, ndim), lambda k: (0, 0)),
                pl.BlockSpec((ndim, n2), lambda k: (0, 0)),
                pl.BlockSpec((1, n2), lambda k: (0, 0)),
            ],
            out_specs=pl.BlockSpec((mp, n2), lambda k: (0, 0)),
            scratch_shapes=[pltpu.VMEM((mp, ndim), jnp.float32)],
        ),
        compiler_params=pltpu.CompilerParams(
            dimension_semantics=("arbitrary",)),
        cost_estimate=pl.CostEstimate(
            flops=flops, transcendentals=0, bytes_accessed=bytes_accessed),
    )(x, w1, b1, w2p, b2p)


# ----------------------------------------------------------------------------
# Parameters (deterministic synthetic init; shapes from the module __init__)
# ----------------------------------------------------------------------------
def init_raw_params(key):
    in_dims = (3, 16 + LABEL_LEN_EXPANDED, 32, 64)
    out_dims = (16, 32, 64, 128)
    raw = {"conv": [], "fc": []}
    for cin, cout in zip(in_dims, out_dims):
        key, k1, k2 = jax.random.split(key, 3)
        w = jax.random.normal(k1, (cout, cin, 2, 2), jnp.float32) * 0.05
        b = jax.random.normal(k2, (cout,), jnp.float32) * 0.01
        gamma = jnp.ones((cout,), jnp.float32)     # BatchNorm2d default init
        beta = jnp.zeros((cout,), jnp.float32)
        rmean = jnp.zeros((cout,), jnp.float32)
        rvar = jnp.ones((cout,), jnp.float32)
        raw["conv"].append((w, b, gamma, beta, rmean, rvar))
    for din, dout in ((128 * 8 * 8, 1024), (1024, 1)):
        key, k1, k2 = jax.random.split(key, 3)
        w = jax.random.normal(k1, (dout, din), jnp.float32) / jnp.sqrt(float(din))
        b = jax.random.normal(k2, (dout,), jnp.float32) * 0.01
        raw["fc"].append((w, b))
    return raw


def prepare_params(raw):
    """One-time constant preprocessing (runs at init, NOT per forward):
    BN (eval mode) folded into weights/biases, conv weights split per 2x2 tap
    in (cout, cin) layout, conv2 label channels collapsed to a label->bias
    matrix, fc1 transposed, fc2 lane-padded to 128 columns, bf16 casts."""
    # TODO(synk): BatchNorm folded in inference mode (running stats);
    # training-mode batch statistics are not reproduced.
    params = {}

    def bn_fold(w, b, gamma, beta, rmean, rvar):
        s = gamma / jnp.sqrt(rvar + BN_EPS)
        return w * s[:, None, None, None], (b - rmean) * s + beta

    # conv1: single matmul (cout, 4*cin) with q = (kh*2+kw)*3 + c
    w, b, gamma, beta, rmean, rvar = raw["conv"][0]
    ws, bs = bn_fold(w, b, gamma, beta, rmean, rvar)
    w1T = ws.transpose(0, 2, 3, 1).reshape(ws.shape[0], -1)          # (16, 12)
    params["conv1"] = (w1T.astype(jnp.bfloat16), bs.reshape(-1, 1))

    # conv2: split real input channels (taps) vs. constant label channels
    w, b, gamma, beta, rmean, rvar = raw["conv"][1]
    ws, bs = bn_fold(w, b, gamma, beta, rmean, rvar)
    main, labp = ws[:, :16], ws[:, 16:]
    w2g = main.transpose(2, 3, 0, 1).reshape(4, 32, 16)              # (g,co,ci)
    wlab = labp.sum(axis=(2, 3))                                     # (32, LAB)
    params["conv2"] = (w2g.astype(jnp.bfloat16), bs.reshape(-1, 1),
                       wlab.astype(jnp.float32))

    # conv3 / conv4
    for idx, name in ((2, "conv3"), (3, "conv4")):
        w, b, gamma, beta, rmean, rvar = raw["conv"][idx]
        ws, bs = bn_fold(w, b, gamma, beta, rmean, rvar)
        cout, cin = ws.shape[0], ws.shape[1]
        wg = ws.transpose(2, 3, 0, 1).reshape(4, cout, cin)
        params[name] = (wg.astype(jnp.bfloat16), bs.reshape(-1, 1))

    # fc layers
    (w1, b1), (w2, b2) = raw["fc"]
    params["fc1"] = (jnp.transpose(w1).astype(jnp.bfloat16), b1.reshape(1, -1))
    n2 = 128   # lane-pad fc2's single output column (zero weight/bias padding)
    w2p = jnp.zeros((w2.shape[1], n2), jnp.float32).at[:, :w2.shape[0]].set(
        jnp.transpose(w2))
    b2p = jnp.zeros((1, n2), jnp.float32).at[0, :w2.shape[0]].set(b2)
    params["fc2"] = (w2p.astype(jnp.bfloat16), b2p)
    return params


# ----------------------------------------------------------------------------
# Forward pass
# ----------------------------------------------------------------------------
def discriminator_img_forward(params, imgs_nchw, labels):
    # imgs_nchw: (N, 3, 128, 128); labels: (N, LABEL_LEN_EXPANDED)
    n = imgs_nchw.shape[0]
    pT = build_conv1_patches(imgs_nchw)                       # (N, 12, 4096) bf16
    lab = labels.astype(jnp.float32).reshape(n, 1, -1)        # (N, 1, LAB)

    conv_out = conv_chain(params, pT, lab)                    # (N, 128, 64) bf16
    # Column order of conv_out is 8x8 raster -> this reshape IS the NCHW flatten.
    flat = conv_out.reshape(n, 128 * 64)

    mp = max(8, _round_up(n, 8))                              # pad batch for MXU
    flat = jnp.pad(flat, ((0, mp - n), (0, 0)))
    out = fc_head(params, flat)                               # (mp, 128) f32
    return out[:n, :1]                                        # (N, 1)


if __name__ == "__main__":
    key = jax.random.PRNGKey(0)
    k_params, k_img, k_lab = jax.random.split(key, 3)
    params = prepare_params(init_raw_params(k_params))
    # 128x128 input is required by the module (fc1 expects 128*8*8 features).
    imgs = jax.random.normal(k_img, (2, 3, 128, 128), jnp.float32)
    labels = jax.random.uniform(k_lab, (2, LABEL_LEN_EXPANDED), jnp.float32)

    fwd = jax.jit(discriminator_img_forward)
    out = jax.block_until_ready(fwd(params, imgs, labels))
    assert out.shape == (2, 1) and out.dtype == jnp.float32
    print("KERNEL_OK")
</pallas_src>

<mosaic_0001>
module attributes {stable_mosaic.version = 11 : i64} {
  func.func @_fc_fused_kernel(%arg0: i32, %arg1: memref<8x2048xbf16, #tpu.memory_space<vmem>>, %arg2: memref<2048x1024xbf16, #tpu.memory_space<vmem>>, %arg3: memref<1x1024xf32, #tpu.memory_space<vmem>>, %arg4: memref<1024x128xbf16, #tpu.memory_space<vmem>>, %arg5: memref<1x128xf32, #tpu.memory_space<vmem>>, %arg6: memref<8x128xf32, #tpu.memory_space<vmem>>, %arg7: memref<8x1024xf32, #tpu.memory_space<vmem>>) attributes {dimension_semantics = [#tpu.dimension_semantics<arbitrary>], iteration_bounds = array<i64: 4>, scalar_prefetch = 0 : i64, scratch_operands = 1 : i64, tpu.core_type = #tpu.core_type<tc>, window_params = [{transform_indices = @transform_0, window_bounds = array<i64: 8, 2048>}, {transform_indices = @transform_1, window_bounds = array<i64: 2048, 1024>}, {pipeline_mode = #tpu.pipeline_mode<synchronous>, transform_indices = @transform_2, window_bounds = array<i64: 1, 1024>}, {pipeline_mode = #tpu.pipeline_mode<synchronous>, transform_indices = @transform_3, window_bounds = array<i64: 1024, 128>}, {pipeline_mode = #tpu.pipeline_mode<synchronous>, transform_indices = @transform_4, window_bounds = array<i64: 1, 128>}, {pipeline_mode = #tpu.pipeline_mode<synchronous>, transform_indices = @transform_5, window_bounds = array<i64: 8, 128>}]} {
    %c0_i32 = arith.constant 0 : i32
    %0 = arith.cmpi eq, %arg0, %c0_i32 : i32
    %1 = arith.extui %0 : i1 to i32
    %c0_i32_0 = arith.constant 0 : i32
    %2 = arith.cmpi ne, %1, %c0_i32_0 : i32
    scf.if %2 {
      %cst_9 = arith.constant 0.000000e+00 : f32
      %12 = vector.broadcast %cst_9 : f32 to vector<8x1024xf32>
      %c0_10 = arith.constant 0 : index
      %c0_11 = arith.constant 0 : index
      %13 = vector.load %arg7[%c0_10, %c0_11] : memref<8x1024xf32, #tpu.memory_space<vmem>>, vector<8x1024xf32>
      tpu.vector_store %arg7[%c0_10, %c0_11], %12 {strides = array<i32>} : memref<8x1024xf32, #tpu.memory_space<vmem>>, vector<8x1024xf32>,
    } else {
    }
    %c0 = arith.constant 0 : index
    %c0_1 = arith.constant 0 : index
    %3 = vector.load %arg7[%c0, %c0_1] : memref<8x1024xf32, #tpu.memory_space<vmem>>, vector<8x1024xf32>
    %c0_2 = arith.constant 0 : index
    %c0_3 = arith.constant 0 : index
    %4 = vector.load %arg1[%c0_2, %c0_3] : memref<8x2048xbf16, #tpu.memory_space<vmem>>, vector<8x2048xbf16>
    %c0_4 = arith.constant 0 : index
    %c0_5 = arith.constant 0 : index
    %5 = vector.load %arg2[%c0_4, %c0_5] : memref<2048x1024xbf16, #tpu.memory_space<vmem>>, vector<2048x1024xbf16>
    %cst = arith.constant dense<0.000000e+00> : vector<8x1024xf32>
    %6 = tpu.matmul %4, %5, %cst {dimension_numbers = #tpu.dot_dimension_numbers<[1], [0], [0], [1], [0, 0, 1, 1], [], []>} : vector<8x2048xbf16>, vector<2048x1024xbf16>, vector<8x1024xf32> -> vector<8x1024xf32>
    %7 = arith.addf %3, %6 : vector<8x1024xf32>
    %c0_6 = arith.constant 0 : index
    %c0_7 = arith.constant 0 : index
    %8 = vector.load %arg7[%c0_6, %c0_7] : memref<8x1024xf32, #tpu.memory_space<vmem>>, vector<8x1024xf32>
    tpu.vector_store %arg7[%c0_6, %c0_7], %7 {strides = array<i32>} : memref<8x1024xf32, #tpu.memory_space<vmem>>, vector<8x1024xf32>,
    %c3_i32 = arith.constant 3 : i32
    %9 = arith.cmpi eq, %arg0, %c3_i32 : i32
    %10 = arith.extui %9 : i1 to i32
    %c0_i32_8 = arith.constant 0 : i32
    %11 = arith.cmpi ne, %10, %c0_i32_8 : i32
    scf.if %11 {
      %c0_9 = arith.constant 0 : index
      %c0_10 = arith.constant 0 : index
      %12 = vector.load %arg7[%c0_9, %c0_10] : memref<8x1024xf32, #tpu.memory_space<vmem>>, vector<8x1024xf32>
      %c0_11 = arith.constant 0 : index
      %c0_12 = arith.constant 0 : index
      %13 = vector.load %arg3[%c0_11, %c0_12] : memref<1x1024xf32, #tpu.memory_space<vmem>>, vector<1x1024xf32>
      %14 = vector.broadcast %13 : vector<1x1024xf32> to vector<8x1024xf32>
      %15 = arith.addf %12, %14 : vector<8x1024xf32>
      %cst_13 = arith.constant 0.000000e+00 : f32
      %16 = vector.broadcast %cst_13 : f32 to vector<8x1024xf32>
      %17 = arith.cmpf oge, %15, %16 : vector<8x1024xf32>
      %cst_14 = arith.constant 0.00999999977 : f32
      %18 = vector.broadcast %cst_14 : f32 to vector<8x1024xf32>
      %19 = arith.mulf %18, %15 : vector<8x1024xf32>
      %20 = arith.select %17, %15, %19 : vector<8x1024xi1>, vector<8x1024xf32>
      %21 = arith.truncf %20 : vector<8x1024xf32> to vector<8x1024xbf16>
      %c0_15 = arith.constant 0 : index
      %c0_16 = arith.constant 0 : index
      %22 = vector.load %arg4[%c0_15, %c0_16] : memref<1024x128xbf16, #tpu.memory_space<vmem>>, vector<1024x128xbf16>
      %cst_17 = arith.constant dense<0.000000e+00> : vector<8x128xf32>
      %23 = tpu.matmul %21, %22, %cst_17 {dimension_numbers = #tpu.dot_dimension_numbers<[1], [0], [0], [1], [0, 0, 1, 1], [], []>} : vector<8x1024xbf16>, vector<1024x128xbf16>, vector<8x128xf32> -> vector<8x128xf32>
      %c0_18 = arith.constant 0 : index
      %c0_19 = arith.constant 0 : index
      %24 = vector.load %arg5[%c0_18, %c0_19] : memref<1x128xf32, #tpu.memory_space<vmem>>, vector<1x128xf32>
      %25 = vector.broadcast %24 : vector<1x128xf32> to vector<8x128xf32>
      %26 = arith.addf %23, %25 : vector<8x128xf32>
      %c0_20 = arith.constant 0 : index
      %c0_21 = arith.constant 0 : index
      %27 = vector.load %arg6[%c0_20, %c0_21] : memref<8x128xf32, #tpu.memory_space<vmem>>, vector<8x128xf32>
      tpu.vector_store %arg6[%c0_20, %c0_21], %26 {strides = array<i32>} : memref<8x128xf32, #tpu.memory_space<vmem>>, vector<8x128xf32>,
    } else {
    }
    return
  }
  func.func @transform_0(%arg0: i32) -> (i32, i32) {
    %c0_i32 = arith.constant 0 : i32
    %c0_i32_0 = arith.constant 0 : i32
    return %c0_i32, %arg0 : i32, i32
  }
  func.func @transform_1(%arg0: i32) -> (i32, i32) {
    %c0_i32 = arith.constant 0 : i32
    %c0_i32_0 = arith.constant 0 : i32
    return %arg0, %c0_i32 : i32, i32
  }
  func.func @transform_2(%arg0: i32) -> (i32, i32) {
    %c0_i32 = arith.constant 0 : i32
    %c0_i32_0 = arith.constant 0 : i32
    %c0_i32_1 = arith.constant 0 : i32
    return %c0_i32, %c0_i32_0 : i32, i32
  }
  func.func @transform_3(%arg0: i32) -> (i32, i32) {
    %c0_i32 = arith.constant 0 : i32
    %c0_i32_0 = arith.constant 0 : i32
    %c0_i32_1 = arith.constant 0 : i32
    return %c0_i32, %c0_i32_0 : i32, i32
  }
  func.func @transform_4(%arg0: i32) -> (i32, i32) {
    %c0_i32 = arith.constant 0 : i32
    %c0_i32_0 = arith.constant 0 : i32
    %c0_i32_1 = arith.constant 0 : i32
    return %c0_i32, %c0_i32_0 : i32, i32
  }
  func.func @transform_5(%arg0: i32) -> (i32, i32) {
    %c0_i32 = arith.constant 0 : i32
    %c0_i32_0 = arith.constant 0 : i32
    %c0_i32_1 = arith.constant 0 : i32
    return %c0_i32, %c0_i32_0 : i32, i32
  }
}

module attributes {stable_mosaic.version = 11 : i64} {
  func.func @_conv_chain_kernel(%arg0: i32, %arg1: memref<1x12x4096xbf16, #tpu.memory_space<vmem>>, %arg2: memref<1x1x12xf32, #tpu.memory_space<vmem>>, %arg3: memref<16x12xbf16, #tpu.memory_space<vmem>>, %arg4: memref<16x1xf32, #tpu.memory_space<vmem>>, %arg5: memref<32x12xf32, #tpu.memory_space<vmem>>, %arg6: memref<4x32x16xbf16, #tpu.memory_space<vmem>>, %arg7: memref<32x1xf32, #tpu.memory_space<vmem>>, %arg8: memref<4x64x32xbf16, #tpu.memory_space<vmem>>, %arg9: memref<64x1xf32, #tpu.memory_space<vmem>>, %arg10: memref<4x128x64xbf16, #tpu.memory_space<vmem>>, %arg11: memref<128x1xf32, #tpu.memory_space<vmem>>, %arg12: memref<1x128x64xbf16, #tpu.memory_space<vmem>>, %arg13: memref<16x4096xbf16, #tpu.memory_space<vmem>>, %arg14: memref<32x1024xbf16, #tpu.memory_space<vmem>>) attributes {dimension_semantics = [#tpu.dimension_semantics<parallel>], iteration_bounds = array<i64: 2>, scalar_prefetch = 0 : i64, scratch_operands = 2 : i64, tpu.core_type = #tpu.core_type<tc>, window_params = [{transform_indices = @transform_0, window_bounds = array<i64: 1, 12, 4096>}, {transform_indices = @transform_1, window_bounds = array<i64: 1, 1, 12>}, {pipeline_mode = #tpu.pipeline_mode<synchronous>, transform_indices = @transform_2, window_bounds = array<i64: 16, 12>}, {pipeline_mode = #tpu.pipeline_mode<synchronous>, transform_indices = @transform_3, window_bounds = array<i64: 16, 1>}, {pipeline_mode = #tpu.pipeline_mode<synchronous>, transform_indices = @transform_4, window_bounds = array<i64: 32, 12>}, {pipeline_mode = #tpu.pipeline_mode<synchronous>, transform_indices = @transform_5, window_bounds = array<i64: 4, 32, 16>}, {pipeline_mode = #tpu.pipeline_mode<synchronous>, transform_indices = @transform_6, window_bounds = array<i64: 32, 1>}, {pipeline_mode = #tpu.pipeline_mode<synchronous>, transform_indices = @transform_7, window_bounds = array<i64: 4, 64, 32>}, {pipeline_mode = #tpu.pipeline_mode<synchronous>, transform_indices = @transform_8, window_bounds = array<i64: 64, 1>}, {pipeline_mode = #tpu.pipeline_mode<synchronous>, transform_indices = @transform_9, window_bounds = array<i64: 4, 128, 64>}, {pipeline_mode = #tpu.pipeline_mode<synchronous>, transform_indices = @transform_10, window_bounds = array<i64: 128, 1>}, {transform_indices = @transform_11, window_bounds = array<i64: 1, 128, 64>}]} {
    %c0 = arith.constant 0 : index
    %c0_0 = arith.constant 0 : index
    %0 = vector.load %arg3[%c0, %c0_0] : memref<16x12xbf16, #tpu.memory_space<vmem>>, vector<16x12xbf16>
    %c0_1 = arith.constant 0 : index
    %c0_2 = arith.constant 0 : index
    %c0_3 = arith.constant 0 : index
    %1 = vector.load %arg1[%c0_1, %c0_2, %c0_3] : memref<1x12x4096xbf16, #tpu.memory_space<vmem>>, vector<1x12x4096xbf16>
    %2 = vector.shape_cast %1 : vector<1x12x4096xbf16> to vector<12x4096xbf16>
    %cst = arith.constant dense<0.000000e+00> : vector<16x4096xf32>
    %3 = tpu.matmul %0, %2, %cst {dimension_numbers = #tpu.dot_dimension_numbers<[1], [0], [0], [1], [0, 0, 1, 1], [], []>} : vector<16x12xbf16>, vector<12x4096xbf16>, vector<16x4096xf32> -> vector<16x4096xf32>
    %c0_4 = arith.constant 0 : index
    %c0_5 = arith.constant 0 : index
    %4 = vector.load %arg4[%c0_4, %c0_5] : memref<16x1xf32, #tpu.memory_space<vmem>>, vector<16x1xf32>
    %5 = vector.broadcast %4 : vector<16x1xf32> to vector<16x4096xf32>
    %6 = arith.addf %3, %5 : vector<16x4096xf32>
    %cst_6 = arith.constant 0.000000e+00 : f32
    %7 = vector.broadcast %cst_6 : f32 to vector<16x4096xf32>
    %8 = arith.maximumf %6, %7 : vector<16x4096xf32>
    %9 = arith.truncf %8 : vector<16x4096xf32> to vector<16x4096xbf16>
    %c0_7 = arith.constant 0 : index
    %c0_8 = arith.constant 0 : index
    %10 = vector.load %arg13[%c0_7, %c0_8] : memref<16x4096xbf16, #tpu.memory_space<vmem>>, vector<16x4096xbf16>
    tpu.vector_store %arg13[%c0_7, %c0_8], %9 {strides = array<i32>} : memref<16x4096xbf16, #tpu.memory_space<vmem>>, vector<16x4096xbf16>,
    %c0_9 = arith.constant 0 : index
    %c0_10 = arith.constant 0 : index
    %11 = vector.load %arg5[%c0_9, %c0_10] : memref<32x12xf32, #tpu.memory_space<vmem>>, vector<32x12xf32>
    %c0_11 = arith.constant 0 : index
    %c0_12 = arith.constant 0 : index
    %c0_13 = arith.constant 0 : index
    %12 = vector.load %arg2[%c0_11, %c0_12, %c0_13] : memref<1x1x12xf32, #tpu.memory_space<vmem>>, vector<1x1x12xf32>
    %13 = vector.shape_cast %12 : vector<1x1x12xf32> to vector<1x12xf32>
    %14 = vector.broadcast %13 : vector<1x12xf32> to vector<32x12xf32>
    %15 = arith.mulf %11, %14 : vector<32x12xf32>
    %cst_14 = arith.constant dense<0.000000e+00> : vector<32xf32>
    %16 = vector.multi_reduction <add>, %15, %cst_14 [1] : vector<32x12xf32> to vector<32xf32>
    %17 = vector.shape_cast %16 : vector<32xf32> to vector<32x1xf32>
    %cst_15 = arith.constant 0.000000e+00 : f32
    %18 = vector.broadcast %cst_15 : f32 to vector<32x1024xf32>
    %c0_16 = arith.constant 0 : index
    %c0_17 = arith.constant 0 : index
    %c0_18 = arith.constant 0 : index
    %19 = vector.load %arg6[%c0_16, %c0_17, %c0_18] : memref<4x32x16xbf16, #tpu.memory_space<vmem>>, vector<1x32x16xbf16>
    %20 = vector.shape_cast %19 : vector<1x32x16xbf16> to vector<32x16xbf16>
    %c0_19 = arith.constant 0 : index
    %c0_20 = arith.constant 0 : index
    %21 = vector.load %arg13[%c0_19, %c0_20] : memref<16x4096xbf16, #tpu.memory_space<vmem>>, vector<16x1024xbf16>
    %cst_21 = arith.constant dense<0.000000e+00> : vector<32x1024xf32>
    %22 = tpu.matmul %20, %21, %cst_21 {dimension_numbers = #tpu.dot_dimension_numbers<[1], [0], [0], [1], [0, 0, 1, 1], [], []>} : vector<32x16xbf16>, vector<16x1024xbf16>, vector<32x1024xf32> -> vector<32x1024xf32>
    %23 = arith.addf %18, %22 : vector<32x1024xf32>
    %c1 = arith.constant 1 : index
    %c0_22 = arith.constant 0 : index
    %c0_23 = arith.constant 0 : index
    %24 = vector.load %arg6[%c1, %c0_22, %c0_23] : memref<4x32x16xbf16, #tpu.memory_space<vmem>>, vector<1x32x16xbf16>
    %25 = vector.shape_cast %24 : vector<1x32x16xbf16> to vector<32x16xbf16>
    %c0_24 = arith.constant 0 : index
    %c1024 = arith.constant 1024 : index
    %26 = vector.load %arg13[%c0_24, %c1024] : memref<16x4096xbf16, #tpu.memory_space<vmem>>, vector<16x1024xbf16>
    %cst_25 = arith.constant dense<0.000000e+00> : vector<32x1024xf32>
    %27 = tpu.matmul %25, %26, %cst_25 {dimension_numbers = #tpu.dot_dimension_numbers<[1], [0], [0], [1], [0, 0, 1, 1], [], []>} : vector<32x16xbf16>, vector<16x1024xbf16>, vector<32x1024xf32> -> vector<32x1024xf32>
    %28 = arith.addf %23, %27 : vector<32x1024xf32>
    %c2 = arith.constant 2 : index
    %c0_26 = arith.constant 0 : index
    %c0_27 = arith.constant 0 : index
    %29 = vector.load %arg6[%c2, %c0_26, %c0_27] : memref<4x32x16xbf16, #tpu.memory_space<vmem>>, vector<1x32x16xbf16>
    %30 = vector.shape_cast %29 : vector<1x32x16xbf16> to vector<32x16xbf16>
    %c0_28 = arith.constant 0 : index
    %c2048 = arith.constant 2048 : index
    %31 = vector.load %arg13[%c0_28, %c2048] : memref<16x4096xbf16, #tpu.memory_space<vmem>>, vector<16x1024xbf16>
    %cst_29 = arith.constant dense<0.000000e+00> : vector<32x1024xf32>
    %32 = tpu.matmul %30, %31, %cst_29 {dimension_numbers = #tpu.dot_dimension_numbers<[1], [0], [0], [1], [0, 0, 1, 1], [], []>} : vector<32x16xbf16>, vector<16x1024xbf16>, vector<32x1024xf32> -> vector<32x1024xf32>
    %33 = arith.addf %28, %32 : vector<32x1024xf32>
    %c3 = arith.constant 3 : index
    %c0_30 = arith.constant 0 : index
    %c0_31 = arith.constant 0 : index
    %34 = vector.load %arg6[%c3, %c0_30, %c0_31] : memref<4x32x16xbf16, #tpu.memory_space<vmem>>, vector<1x32x16xbf16>
    %35 = vector.shape_cast %34 : vector<1x32x16xbf16> to vector<32x16xbf16>
    %c0_32 = arith.constant 0 : index
    %c3072 = arith.constant 3072 : index
    %36 = vector.load %arg13[%c0_32, %c3072] : memref<16x4096xbf16, #tpu.memory_space<vmem>>, vector<16x1024xbf16>
    %cst_33 = arith.constant dense<0.000000e+00> : vector<32x1024xf32>
    %37 = tpu.matmul %35, %36, %cst_33 {dimension_numbers = #tpu.dot_dimension_numbers<[1], [0], [0], [1], [0, 0, 1, 1], [], []>} : vector<32x16xbf16>, vector<16x1024xbf16>, vector<32x1024xf32> -> vector<32x1024xf32>
    %38 = arith.addf %33, %37 : vector<32x1024xf32>
    %c0_34 = arith.constant 0 : index
    %c0_35 = arith.constant 0 : index
    %39 = vector.load %arg7[%c0_34, %c0_35] : memref<32x1xf32, #tpu.memory_space<vmem>>, vector<32x1xf32>
    %40 = vector.broadcast %39 : vector<32x1xf32> to vector<32x1024xf32>
    %41 = arith.addf %38, %40 : vector<32x1024xf32>
    %42 = vector.broadcast %17 : vector<32x1xf32> to vector<32x1024xf32>
    %43 = arith.addf %41, %42 : vector<32x1024xf32>
    %cst_36 = arith.constant 0.000000e+00 : f32
    %44 = vector.broadcast %cst_36 : f32 to vector<32x1024xf32>
    %45 = arith.maximumf %43, %44 : vector<32x1024xf32>
    %46 = arith.truncf %45 : vector<32x1024xf32> to vector<32x1024xbf16>
    %c0_37 = arith.constant 0 : index
    %c0_38 = arith.constant 0 : index
    %47 = vector.load %arg14[%c0_37, %c0_38] : memref<32x1024xbf16, #tpu.memory_space<vmem>>, vector<32x1024xbf16>
    tpu.vector_store %arg14[%c0_37, %c0_38], %46 {strides = array<i32>} : memref<32x1024xbf16, #tpu.memory_space<vmem>>, vector<32x1024xbf16>,
    %cst_39 = arith.constant 0.000000e+00 : f32
    %48 = vector.broadcast %cst_39 : f32 to vector<64x256xf32>
    %c0_40 = arith.constant 0 : index
    %c0_41 = arith.constant 0 : index
    %c0_42 = arith.constant 0 : index
    %49 = vector.load %arg8[%c0_40, %c0_41, %c0_42] : memref<4x64x32xbf16, #tpu.memory_space<vmem>>, vector<1x64x32xbf16>
    %50 = vector.shape_cast %49 : vector<1x64x32xbf16> to vector<64x32xbf16>
    %c0_43 = arith.constant 0 : index
    %c0_44 = arith.constant 0 : index
    %51 = vector.load %arg14[%c0_43, %c0_44] : memref<32x1024xbf16, #tpu.memory_space<vmem>>, vector<32x256xbf16>
    %cst_45 = arith.constant dense<0.000000e+00> : vector<64x256xf32>
    %52 = tpu.matmul %50, %51, %cst_45 {dimension_numbers = #tpu.dot_dimension_numbers<[1], [0], [0], [1], [0, 0, 1, 1], [], []>} : vector<64x32xbf16>, vector<32x256xbf16>, vector<64x256xf32> -> vector<64x256xf32>
    %53 = arith.addf %48, %52 : vector<64x256xf32>
    %c1_46 = arith.constant 1 : index
    %c0_47 = arith.constant 0 : index
    %c0_48 = arith.constant 0 : index
    %54 = vector.load %arg8[%c1_46, %c0_47, %c0_48] : memref<4x64x32xbf16, #tpu.memory_space<vmem>>, vector<1x64x32xbf16>
    %55 = vector.shape_cast %54 : vector<1x64x32xbf16> to vector<64x32xbf16>
    %c0_49 = arith.constant 0 : index
    %c256 = arith.constant 256 : index
    %56 = vector.load %arg14[%c0_49, %c256] : memref<32x1024xbf16, #tpu.memory_space<vmem>>, vector<32x256xbf16>
    %cst_50 = arith.constant dense<0.000000e+00> : vector<64x256xf32>
    %57 = tpu.matmul %55, %56, %cst_50 {dimension_numbers = #tpu.dot_dimension_numbers<[1], [0], [0], [1], [0, 0, 1, 1], [], []>} : vector<64x32xbf16>, vector<32x256xbf16>, vector<64x256xf32> -> vector<64x256xf32>
    %58 = arith.addf %53, %57 : vector<64x256xf32>
    %c2_51 = arith.constant 2 : index
    %c0_52 = arith.constant 0 : index
    %c0_53 = arith.constant 0 : index
    %59 = vector.load %arg8[%c2_51, %c0_52, %c0_53] : memref<4x64x32xbf16, #tpu.memory_space<vmem>>, vector<1x64x32xbf16>
    %60 = vector.shape_cast %59 : vector<1x64x32xbf16> to vector<64x32xbf16>
    %c0_54 = arith.constant 0 : index
    %c512 = arith.constant 512 : index
    %61 = vector.load %arg14[%c0_54, %c512] : memref<32x1024xbf16, #tpu.memory_space<vmem>>, vector<32x256xbf16>
    %cst_55 = arith.constant dense<0.000000e+00> : vector<64x256xf32>
    %62 = tpu.matmul %60, %61, %cst_55 {dimension_numbers = #tpu.dot_dimension_numbers<[1], [0], [0], [1], [0, 0, 1, 1], [], []>} : vector<64x32xbf16>, vector<32x256xbf16>, vector<64x256xf32> -> vector<64x256xf32>
    %63 = arith.addf %58, %62 : vector<64x256xf32>
    %c3_56 = arith.constant 3 : index
    %c0_57 = arith.constant 0 : index
    %c0_58 = arith.constant 0 : index
    %64 = vector.load %arg8[%c3_56, %c0_57, %c0_58] : memref<4x64x32xbf16, #tpu.memory_space<vmem>>, vector<1x64x32xbf16>
    %65 = vector.shape_cast %64 : vector<1x64x32xbf16> to vector<64x32xbf16>
    %c0_59 = arith.constant 0 : index
    %c768 = arith.constant 768 : index
    %66 = vector.load %arg14[%c0_59, %c768] : memref<32x1024xbf16, #tpu.memory_space<vmem>>, vector<32x256xbf16>
    %cst_60 = arith.constant dense<0.000000e+00> : vector<64x256xf32>
    %67 = tpu.matmul %65, %66, %cst_60 {dimension_numbers = #tpu.dot_dimension_numbers<[1], [0], [0], [1], [0, 0, 1, 1], [], []>} : vector<64x32xbf16>, vector<32x256xbf16>, vector<64x256xf32> -> vector<64x256xf32>
    %68 = arith.addf %63, %67 : vector<64x256xf32>
    %c0_61 = arith.constant 0 : index
    %c0_62 = arith.constant 0 : index
    %69 = vector.load %arg9[%c0_61, %c0_62] : memref<64x1xf32, #tpu.memory_space<vmem>>, vector<64x1xf32>
    %70 = vector.broadcast %69 : vector<64x1xf32> to vector<64x256xf32>
    %71 = arith.addf %68, %70 : vector<64x256xf32>
    %cst_63 = arith.constant 0.000000e+00 : f32
    %72 = vector.broadcast %cst_63 : f32 to vector<64x256xf32>
    %73 = arith.maximumf %71, %72 : vector<64x256xf32>
    %cst_64 = arith.constant 0.000000e+00 : f32
    %74 = vector.broadcast %cst_64 : f32 to vector<128x64xf32>
    %c0_65 = arith.constant 0 : index
    %c0_66 = arith.constant 0 : index
    %c0_67 = arith.constant 0 : index
    %75 = vector.load %arg10[%c0_65, %c0_66, %c0_67] : memref<4x128x64xbf16, #tpu.memory_space<vmem>>, vector<1x128x64xbf16>
    %76 = vector.shape_cast %75 : vector<1x128x64xbf16> to vector<128x64xbf16>
    %77 = vector.extract_strided_slice %73 {offsets = [0, 0], sizes = [64, 64], strides = [1, 1]} : vector<64x256xf32> to vector<64x64xf32>
    %78 = arith.truncf %77 : vector<64x64xf32> to vector<64x64xbf16>
    %cst_68 = arith.constant dense<0.000000e+00> : vector<128x64xf32>
    %79 = tpu.matmul %76, %78, %cst_68 {dimension_numbers = #tpu.dot_dimension_numbers<[1], [0], [0], [1], [0, 0, 1, 1], [], []>} : vector<128x64xbf16>, vector<64x64xbf16>, vector<128x64xf32> -> vector<128x64xf32>
    %80 = arith.addf %74, %79 : vector<128x64xf32>
    %c1_69 = arith.constant 1 : index
    %c0_70 = arith.constant 0 : index
    %c0_71 = arith.constant 0 : index
    %81 = vector.load %arg10[%c1_69, %c0_70, %c0_71] : memref<4x128x64xbf16, #tpu.memory_space<vmem>>, vector<1x128x64xbf16>
    %82 = vector.shape_cast %81 : vector<1x128x64xbf16> to vector<128x64xbf16>
    %83 = vector.extract_strided_slice %73 {offsets = [0, 64], sizes = [64, 64], strides = [1, 1]} : vector<64x256xf32> to vector<64x64xf32>
    %84 = arith.truncf %83 : vector<64x64xf32> to vector<64x64xbf16>
    %cst_72 = arith.constant dense<0.000000e+00> : vector<128x64xf32>
    %85 = tpu.matmul %82, %84, %cst_72 {dimension_numbers = #tpu.dot_dimension_numbers<[1], [0], [0], [1], [0, 0, 1, 1], [], []>} : vector<128x64xbf16>, vector<64x64xbf16>, vector<128x64xf32> -> vector<128x64xf32>
    %86 = arith.addf %80, %85 : vector<128x64xf32>
    %c2_73 = arith.constant 2 : index
    %c0_74 = arith.constant 0 : index
    %c0_75 = arith.constant 0 : index
    %87 = vector.load %arg10[%c2_73, %c0_74, %c0_75] : memref<4x128x64xbf16, #tpu.memory_space<vmem>>, vector<1x128x64xbf16>
    %88 = vector.shape_cast %87 : vector<1x128x64xbf16> to vector<128x64xbf16>
    %89 = vector.extract_strided_slice %73 {offsets = [0, 128], sizes = [64, 64], strides = [1, 1]} : vector<64x256xf32> to vector<64x64xf32>
    %90 = arith.truncf %89 : vector<64x64xf32> to vector<64x64xbf16>
    %cst_76 = arith.constant dense<0.000000e+00> : vector<128x64xf32>
    %91 = tpu.matmul %88, %90, %cst_76 {dimension_numbers = #tpu.dot_dimension_numbers<[1], [0], [0], [1], [0, 0, 1, 1], [], []>} : vector<128x64xbf16>, vector<64x64xbf16>, vector<128x64xf32> -> vector<128x64xf32>
    %92 = arith.addf %86, %91 : vector<128x64xf32>
    %c3_77 = arith.constant 3 : index
    %c0_78 = arith.constant 0 : index
    %c0_79 = arith.constant 0 : index
    %93 = vector.load %arg10[%c3_77, %c0_78, %c0_79] : memref<4x128x64xbf16, #tpu.memory_space<vmem>>, vector<1x128x64xbf16>
    %94 = vector.shape_cast %93 : vector<1x128x64xbf16> to vector<128x64xbf16>
    %95 = vector.extract_strided_slice %73 {offsets = [0, 192], sizes = [64, 64], strides = [1, 1]} : vector<64x256xf32> to vector<64x64xf32>
    %96 = arith.truncf %95 : vector<64x64xf32> to vector<64x64xbf16>
    %cst_80 = arith.constant dense<0.000000e+00> : vector<128x64xf32>
    %97 = tpu.matmul %94, %96, %cst_80 {dimension_numbers = #tpu.dot_dimension_numbers<[1], [0], [0], [1], [0, 0, 1, 1], [], []>} : vector<128x64xbf16>, vector<64x64xbf16>, vector<128x64xf32> -> vector<128x64xf32>
    %98 = arith.addf %92, %97 : vector<128x64xf32>
    %c0_81 = arith.constant 0 : index
    %c0_82 = arith.constant 0 : index
    %99 = vector.load %arg11[%c0_81, %c0_82] : memref<128x1xf32, #tpu.memory_space<vmem>>, vector<128x1xf32>
    %100 = vector.broadcast %99 : vector<128x1xf32> to vector<128x64xf32>
    %101 = arith.addf %98, %100 : vector<128x64xf32>
    %cst_83 = arith.constant 0.000000e+00 : f32
    %102 = vector.broadcast %cst_83 : f32 to vector<128x64xf32>
    %103 = arith.maximumf %101, %102 : vector<128x64xf32>
    %104 = arith.truncf %103 : vector<128x64xf32> to vector<128x64xbf16>
    %c0_84 = arith.constant 0 : index
    %c0_85 = arith.constant 0 : index
    %c0_86 = arith.constant 0 : index
    %105 = vector.load %arg12[%c0_84, %c0_85, %c0_86] : memref<1x128x64xbf16, #tpu.memory_space<vmem>>, vector<1x128x64xbf16>
    %106 = vector.shape_cast %105 : vector<1x128x64xbf16> to vector<128x64xbf16>
    %107 = vector.shape_cast %104 : vector<128x64xbf16> to vector<1x128x64xbf16>
    tpu.vector_store %arg12[%c0_84, %c0_85, %c0_86], %107 {strides = array<i32>} : memref<1x128x64xbf16, #tpu.memory_space<vmem>>, vector<1x128x64xbf16>,
    return
  }
  func.func @transform_0(%arg0: i32) -> (i32, i32, i32) {
    %c0_i32 = arith.constant 0 : i32
    %c0_i32_0 = arith.constant 0 : i32
    %c0_i32_1 = arith.constant 0 : i32
    return %arg0, %c0_i32, %c0_i32_0 : i32, i32, i32
  }
  func.func @transform_1(%arg0: i32) -> (i32, i32, i32) {
    %c0_i32 = arith.constant 0 : i32
    %c0_i32_0 = arith.constant 0 : i32
    %c0_i32_1 = arith.constant 0 : i32
    return %arg0, %c0_i32, %c0_i32_0 : i32, i32, i32
  }
  func.func @transform_2(%arg0: i32) -> (i32, i32) {
    %c0_i32 = arith.constant 0 : i32
    %c0_i32_0 = arith.constant 0 : i32
    %c0_i32_1 = arith.constant 0 : i32
    return %c0_i32, %c0_i32_0 : i32, i32
  }
  func.func @transform_3(%arg0: i32) -> (i32, i32) {
    %c0_i32 = arith.constant 0 : i32
    %c0_i32_0 = arith.constant 0 : i32
    %c0_i32_1 = arith.constant 0 : i32
    return %c0_i32, %c0_i32_0 : i32, i32
  }
  func.func @transform_4(%arg0: i32) -> (i32, i32) {
    %c0_i32 = arith.constant 0 : i32
    %c0_i32_0 = arith.constant 0 : i32
    %c0_i32_1 = arith.constant 0 : i32
    return %c0_i32, %c0_i32_0 : i32, i32
  }
  func.func @transform_5(%arg0: i32) -> (i32, i32, i32) {
    %c0_i32 = arith.constant 0 : i32
    %c0_i32_0 = arith.constant 0 : i32
    %c0_i32_1 = arith.constant 0 : i32
    %c0_i32_2 = arith.constant 0 : i32
    return %c0_i32, %c0_i32_0, %c0_i32_1 : i32, i32, i32
  }
  func.func @transform_6(%arg0: i32) -> (i32, i32) {
    %c0_i32 = arith.constant 0 : i32
    %c0_i32_0 = arith.constant 0 : i32
    %c0_i32_1 = arith.constant 0 : i32
    return %c0_i32, %c0_i32_0 : i32, i32
  }
  func.func @transform_7(%arg0: i32) -> (i32, i32, i32) {
    %c0_i32 = arith.constant 0 : i32
    %c0_i32_0 = arith.constant 0 : i32
    %c0_i32_1 = arith.constant 0 : i32
    %c0_i32_2 = arith.constant 0 : i32
    return %c0_i32, %c0_i32_0, %c0_i32_1 : i32, i32, i32
  }
  func.func @transform_8(%arg0: i32) -> (i32, i32) {
    %c0_i32 = arith.constant 0 : i32
    %c0_i32_0 = arith.constant 0 : i32
    %c0_i32_1 = arith.constant 0 : i32
    return %c0_i32, %c0_i32_0 : i32, i32
  }
  func.func @transform_9(%arg0: i32) -> (i32, i32, i32) {
    %c0_i32 = arith.constant 0 : i32
    %c0_i32_0 = arith.constant 0 : i32
    %c0_i32_1 = arith.constant 0 : i32
    %c0_i32_2 = arith.constant 0 : i32
    return %c0_i32, %c0_i32_0, %c0_i32_1 : i32, i32, i32
  }
  func.func @transform_10(%arg0: i32) -> (i32, i32) {
    %c0_i32 = arith.constant 0 : i32
    %c0_i32_0 = arith.constant 0 : i32
    %c0_i32_1 = arith.constant 0 : i32
    return %c0_i32, %c0_i32_0 : i32, i32
  }
  func.func @transform_11(%arg0: i32) -> (i32, i32, i32) {
    %c0_i32 = arith.constant 0 : i32
    %c0_i32_0 = arith.constant 0 : i32
    %c0_i32_1 = arith.constant 0 : i32
    return %arg0, %c0_i32, %c0_i32_0 : i32, i32, i32
  }
}

</mosaic_0001>

<llo_original>
// kernel: discriminator_img_forward.2
$region0: #{discriminator_img_forward.2}
  #allocation0 [shape = 'u32[]', space=smem, size = 0x4, offset = 0x4, fixed_abs, tag = 'smem constant byte address 0x4 - core index']
  #allocation1 [shape = 'u32[72,128]{1,0:T(1,128)}', space=vmem, size = 0x9000, scoped, tag = 'internal scratch']
  #allocation2 [shape = 'bf16[16,4096]{1,0:T(8,128)(2,1)}', space=vmem, size = 0x20000, scoped, tag = 'scratch operand']
  #allocation3 [shape = 'bf16[32,1024]{1,0:T(8,128)(2,1)}', space=vmem, size = 0x10000, scoped, tag = 'scratch operand']
  %s0 = inlined_call_operand.vmem [shape: bf16[2,12,4096], index: 0, kind: input, shape index: {}]
  %s1 = inlined_call_operand.vmem [shape: f32[2,1,12], index: 1, kind: input, shape index: {}]
  %s2 = inlined_call_operand.vmem [shape: bf16[16,12], index: 2, kind: input, shape index: {}]
  %s3 = inlined_call_operand.vmem [shape: f32[16,1], index: 3, kind: input, shape index: {}]
  %s4 = inlined_call_operand.vmem [shape: f32[32,12], index: 4, kind: input, shape index: {}]
  %s5 = inlined_call_operand.vmem [shape: bf16[4,32,16], index: 5, kind: input, shape index: {}]
  %s6 = inlined_call_operand.vmem [shape: f32[32,1], index: 6, kind: input, shape index: {}]
  %s7 = inlined_call_operand.vmem [shape: bf16[4,64,32], index: 7, kind: input, shape index: {}]
  %s8 = inlined_call_operand.vmem [shape: f32[64,1], index: 8, kind: input, shape index: {}]
  %s9 = inlined_call_operand.vmem [shape: bf16[4,128,64], index: 9, kind: input, shape index: {}]
  %s10 = inlined_call_operand.vmem [shape: f32[128,1], index: 10, kind: input, shape index: {}]
  %s11 = inlined_call_operand.vmem [shape: bf16[2,128,64], index: 11, kind: output, shape index: {}]
  %s12 = sld [smem:[#allocation0]]
  $region77: #{discriminator_img_forward.2} parent=0
    _
  %s14 = ssub.s32 1, %s12
  %s15 = scalar_select 0, %s14, %s12
  loop: start=0, step=1, limit=4
  $region2: #{discriminator_img_forward.2} parent=0 // loop_pre_header
    _
  $region3: #{discriminator_img_forward.2} parent=0 // loop_header
    %s17 = sphi 0, %s21
    %p18 = scmp.ge.s32.totalorder %s17, 4
    %s27 = sphi 0, %s29
    %s30 = sphi 0, %s27
    %s31 = sphi 0, %s30
    %s47 = sphi 0, %s31
    %s53 = sphi 0, %s55
    %s56 = sphi 0, %s53
    %s57 = sphi 0, %s56
    %s73 = sphi 0, %s57
    %s77 = sphi 0, %s77
    %s79 = sphi 0, %s77
    %s80 = sphi 0, %s79
    %s94 = sphi 0, %s80
    %s98 = sphi 0, %s98
    %s100 = sphi 0, %s98
    %s101 = sphi 0, %s100
    %s115 = sphi 0, %s101
    %s119 = sphi 0, %s119
    %s121 = sphi 0, %s119
    %s122 = sphi 0, %s121
    %s136 = sphi 0, %s122
    %s140 = sphi 0, %s140
    %s142 = sphi 0, %s140
    %s143 = sphi 0, %s142
    %s157 = sphi 0, %s143
    %s161 = sphi 0, %s161
    %s163 = sphi 0, %s161
    %s164 = sphi 0, %s163
    %s178 = sphi 0, %s164
    %s182 = sphi 0, %s182
    %s184 = sphi 0, %s182
    %s185 = sphi 0, %s184
    %s199 = sphi 0, %s185
    %s203 = sphi 0, %s203
    %s205 = sphi 0, %s203
    %s206 = sphi 0, %s205
    %s220 = sphi 0, %s206
    %s224 = sphi 0, %s224
    %s226 = sphi 0, %s224
    %s227 = sphi 0, %s226
    %s241 = sphi 0, %s227
    %s245 = sphi 0, %s245
    %s247 = sphi 0, %s245
    %s248 = sphi 0, %s247
    %s262 = sphi 0, %s248
    %s268 = sphi 0, %s270
    %s271 = sphi 0, %s268
    %s272 = sphi 0, %s271
    %s288 = sphi 0, %s272
  $region4: #{discriminator_img_forward.2} parent=0 // loop_header_branch
    %20 = sbr.rel (%p18) target = $region8
  $region5: #{discriminator_img_forward.2} parent=0 // loop_body
    %s22 = ssub.s32 %s17, 1
    %s23 = ssub.s32 %s17, 2
    %s24 = sadd.s32 %s17, 1
    %s25 = ssub.s32 %s17, %s24
    %p26 = scmp.eq.s32.totalorder %s25, 0
    %s28 = sadd.s32 %s27, 1
    %s29 = scalar_select %p26, %s27, %s28
    %p32 = pneg %p26
    %p33 = scmp.eq.s32.totalorder %s17, 1
    %p34 = por %p32, %p33
    %p35 = scmp.ne.s32.totalorder %s27, %s30
    %p36 = scmp.eq.s32.totalorder %s17, 0
    %p37 = por %p35, %p36
    %p38 = scmp.ne.s32.totalorder %s27, %s30
    %p39 = scmp.eq.s32.totalorder %s22, 1
    %p40 = por %p38, %p39
    %p41 = scmp.ne.s32.totalorder %s30, %s31
    %p42 = scmp.eq.s32.totalorder %s22, 0
    %p43 = por %p41, %p42
    %p44 = scmp.ne.s32.totalorder %s30, %s31
    %p45 = scmp.eq.s32.totalorder %s23, 1
    %p46 = por %p44, %p45
    %p48 = scmp.ne.s32.totalorder %s31, %s47
    %p49 = scmp.eq.s32.totalorder %s23, 0
    %p50 = por %p48, %p49
    %s51 = ssub.s32 %s17, %s24
    %p52 = scmp.eq.s32.totalorder %s51, 0
    %s54 = sadd.s32 %s53, 1
    %s55 = scalar_select %p52, %s53, %s54
    %p58 = pneg %p52
    %p59 = scmp.eq.s32.totalorder %s17, 1
    %p60 = por %p58, %p59
    %p61 = scmp.ne.s32.totalorder %s53, %s56
    %p62 = scmp.eq.s32.totalorder %s17, 0
    %p63 = por %p61, %p62
    %p64 = scmp.ne.s32.totalorder %s53, %s56
    %p65 = scmp.eq.s32.totalorder %s22, 1
    %p66 = por %p64, %p65
    %p67 = scmp.ne.s32.totalorder %s56, %s57
    %p68 = scmp.eq.s32.totalorder %s22, 0
    %p69 = por %p67, %p68
    %p70 = scmp.ne.s32.totalorder %s56, %s57
    %p71 = scmp.eq.s32.totalorder %s23, 1
    %p72 = por %p70, %p71
    %p74 = scmp.ne.s32.totalorder %s57, %s73
    %p75 = scmp.eq.s32.totalorder %s23, 0
    %p76 = por %p74, %p75
    %s78 = sadd.s32 %s77, 1
    %p81 = scmp.eq.s32.totalorder %s17, 1
    %p82 = scmp.ne.s32.totalorder %s77, %s79
    %p83 = scmp.eq.s32.totalorder %s17, 0
    %p84 = por %p82, %p83
    %p85 = scmp.ne.s32.totalorder %s77, %s79
    %p86 = scmp.eq.s32.totalorder %s22, 1
    %p87 = por %p85, %p86
    %p88 = scmp.ne.s32.totalorder %s79, %s80
    %p89 = scmp.eq.s32.totalorder %s22, 0
    %p90 = por %p88, %p89
    %p91 = scmp.ne.s32.totalorder %s79, %s80
    %p92 = scmp.eq.s32.totalorder %s23, 1
    %p93 = por %p91, %p92
    %p95 = scmp.ne.s32.totalorder %s80, %s94
    %p96 = scmp.eq.s32.totalorder %s23, 0
    %p97 = por %p95, %p96
    %s99 = sadd.s32 %s98, 1
    %p102 = scmp.eq.s32.totalorder %s17, 1
    %p103 = scmp.ne.s32.totalorder %s98, %s100
    %p104 = scmp.eq.s32.totalorder %s17, 0
    %p105 = por %p103, %p104
    %p106 = scmp.ne.s32.totalorder %s98, %s100
    %p107 = scmp.eq.s32.totalorder %s22, 1
    %p108 = por %p106, %p107
    %p109 = scmp.ne.s32.totalorder %s100, %s101
    %p110 = scmp.eq.s32.totalorder %s22, 0
    %p111 = por %p109, %p110
    %p112 = scmp.ne.s32.totalorder %s100, %s101
    %p113 = scmp.eq.s32.totalorder %s23, 1
    %p114 = por %p112, %p113
    %p116 = scmp.ne.s32.totalorder %s101, %s115
    %p117 = scmp.eq.s32.totalorder %s23, 0
    %p118 = por %p116, %p117
    %s120 = sadd.s32 %s119, 1
    %p123 = scmp.eq.s32.totalorder %s17, 1
    %p124 = scmp.ne.s32.totalorder %s119, %s121
    %p125 = scmp.eq.s32.totalorder %s17, 0
    %p126 = por %p124, %p125
    %p127 = scmp.ne.s32.totalorder %s119, %s121
    %p128 = scmp.eq.s32.totalorder %s22, 1
    %p129 = por %p127, %p128
    %p130 = scmp.ne.s32.totalorder %s121, %s122
    %p131 = scmp.eq.s32.totalorder %s22, 0
    %p132 = por %p130, %p131
    %p133 = scmp.ne.s32.totalorder %s121, %s122
    %p134 = scmp.eq.s32.totalorder %s23, 1
    %p135 = por %p133, %p134
    %p137 = scmp.ne.s32.totalorder %s122, %s136
    %p138 = scmp.eq.s32.totalorder %s23, 0
    %p139 = por %p137, %p138
    %s141 = sadd.s32 %s140, 1
    %p144 = scmp.eq.s32.totalorder %s17, 1
    %p145 = scmp.ne.s32.totalorder %s140, %s142
    %p146 = scmp.eq.s32.totalorder %s17, 0
    %p147 = por %p145, %p146
    %p148 = scmp.ne.s32.totalorder %s140, %s142
    %p149 = scmp.eq.s32.totalorder %s22, 1
    %p150 = por %p148, %p149
    %p151 = scmp.ne.s32.totalorder %s142, %s143
    %p152 = scmp.eq.s32.totalorder %s22, 0
    %p153 = por %p151, %p152
    %p154 = scmp.ne.s32.totalorder %s142, %s143
    %p155 = scmp.eq.s32.totalorder %s23, 1
    %p156 = por %p154, %p155
    %p158 = scmp.ne.s32.totalorder %s143, %s157
    %p159 = scmp.eq.s32.totalorder %s23, 0
    %p160 = por %p158, %p159
    %s162 = sadd.s32 %s161, 1
    %p165 = scmp.eq.s32.totalorder %s17, 1
    %p166 = scmp.ne.s32.totalorder %s161, %s163
    %p167 = scmp.eq.s32.totalorder %s17, 0
    %p168 = por %p166, %p167
    %p169 = scmp.ne.s32.totalorder %s161, %s163
    %p170 = scmp.eq.s32.totalorder %s22, 1
    %p171 = por %p169, %p170
    %p172 = scmp.ne.s32.totalorder %s163, %s164
    %p173 = scmp.eq.s32.totalorder %s22, 0
    %p174 = por %p172, %p173
    %p175 = scmp.ne.s32.totalorder %s163, %s164
    %p176 = scmp.eq.s32.totalorder %s23, 1
    %p177 = por %p175, %p176
    %p179 = scmp.ne.s32.totalorder %s164, %s178
    %p180 = scmp.eq.s32.totalorder %s23, 0
    %p181 = por %p179, %p180
    %s183 = sadd.s32 %s182, 1
    %p186 = scmp.eq.s32.totalorder %s17, 1
    %p187 = scmp.ne.s32.totalorder %s182, %s184
    %p188 = scmp.eq.s32.totalorder %s17, 0
    %p189 = por %p187, %p188
    %p190 = scmp.ne.s32.totalorder %s182, %s184
    %p191 = scmp.eq.s32.totalorder %s22, 1
    %p192 = por %p190, %p191
    %p193 = scmp.ne.s32.totalorder %s184, %s185
    %p194 = scmp.eq.s32.totalorder %s22, 0
    %p195 = por %p193, %p194
    %p196 = scmp.ne.s32.totalorder %s184, %s185
    %p197 = scmp.eq.s32.totalorder %s23, 1
    %p198 = por %p196, %p197
    %p200 = scmp.ne.s32.totalorder %s185, %s199
    %p201 = scmp.eq.s32.totalorder %s23, 0
    %p202 = por %p200, %p201
    %s204 = sadd.s32 %s203, 1
    %p207 = scmp.eq.s32.totalorder %s17, 1
    %p208 = scmp.ne.s32.totalorder %s203, %s205
    %p209 = scmp.eq.s32.totalorder %s17, 0
    %p210 = por %p208, %p209
    %p211 = scmp.ne.s32.totalorder %s203, %s205
    %p212 = scmp.eq.s32.totalorder %s22, 1
    %p213 = por %p211, %p212
    %p214 = scmp.ne.s32.totalorder %s205, %s206
    %p215 = scmp.eq.s32.totalorder %s22, 0
    %p216 = por %p214, %p215
    %p217 = scmp.ne.s32.totalorder %s205, %s206
    %p218 = scmp.eq.s32.totalorder %s23, 1
    %p219 = por %p217, %p218
    %p221 = scmp.ne.s32.totalorder %s206, %s220
    %p222 = scmp.eq.s32.totalorder %s23, 0
    %p223 = por %p221, %p222
    %s225 = sadd.s32 %s224, 1
    %p228 = scmp.eq.s32.totalorder %s17, 1
    %p229 = scmp.ne.s32.totalorder %s224, %s226
    %p230 = scmp.eq.s32.totalorder %s17, 0
    %p231 = por %p229, %p230
    %p232 = scmp.ne.s32.totalorder %s224, %s226
    %p233 = scmp.eq.s32.totalorder %s22, 1
    %p234 = por %p232, %p233
    %p235 = scmp.ne.s32.totalorder %s226, %s227
    %p236 = scmp.eq.s32.totalorder %s22, 0
    %p237 = por %p235, %p236
    %p238 = scmp.ne.s32.totalorder %s226, %s227
    %p239 = scmp.eq.s32.totalorder %s23, 1
    %p240 = por %p238, %p239
    %p242 = scmp.ne.s32.totalorder %s227, %s241
    %p243 = scmp.eq.s32.totalorder %s23, 0
    %p244 = por %p242, %p243
    %s246 = sadd.s32 %s245, 1
    %p249 = scmp.eq.s32.totalorder %s17, 1
    %p250 = scmp.ne.s32.totalorder %s245, %s247
    %p251 = scmp.eq.s32.totalorder %s17, 0
    %p252 = por %p250, %p251
    %p253 = scmp.ne.s32.totalorder %s245, %s247
    %p254 = scmp.eq.s32.totalorder %s22, 1
    %p255 = por %p253, %p254
    %p256 = scmp.ne.s32.totalorder %s247, %s248
    %p257 = scmp.eq.s32.totalorder %s22, 0
    %p258 = por %p256, %p257
    %p259 = scmp.ne.s32.totalorder %s247, %s248
    %p260 = scmp.eq.s32.totalorder %s23, 1
    %p261 = por %p259, %p260
    %p263 = scmp.ne.s32.totalorder %s248, %s262
    %p264 = scmp.eq.s32.totalorder %s23, 0
    %p265 = por %p263, %p264
    %s266 = ssub.s32 %s17, %s24
    %p267 = scmp.eq.s32.totalorder %s266, 0
    %s269 = sadd.s32 %s268, 1
    %s270 = scalar_select %p267, %s268, %s269
    %p273 = pneg %p267
    %p274 = scmp.eq.s32.totalorder %s17, 1
    %p275 = por %p273, %p274
    %p276 = scmp.ne.s32.totalorder %s268, %s271
    %p277 = scmp.eq.s32.totalorder %s17, 0
    %p278 = por %p276, %p277
    %p279 = scmp.ne.s32.totalorder %s268, %s271
    %p280 = scmp.eq.s32.totalorder %s22, 1
    %p281 = por %p279, %p280
    %p282 = scmp.ne.s32.totalorder %s271, %s272
    %p283 = scmp.eq.s32.totalorder %s22, 0
    %p284 = por %p282, %p283
    %p285 = scmp.ne.s32.totalorder %s271, %s272
    %p286 = scmp.eq.s32.totalorder %s23, 1
    %p287 = por %p285, %p286
    %p289 = scmp.ne.s32.totalorder %s272, %s288
    %p290 = scmp.eq.s32.totalorder %s23, 0
    %p291 = por %p289, %p290
    %p292 = scmp.le.s32.totalorder 1, %s17
    %p293 = scmp.lt.s32.totalorder %s17, 3
    %p294 = pnand %p292, %p293
    %p295 = pneg %p294
    // Predicated region
    $region9: #{discriminator_img_forward.2} parent=5 // pred_check
      _
    $region10: #{discriminator_img_forward.2} parent=5 // pred_check_branch
      %297 = sbr.rel (%p294) target = $region12
    $region11: #{discriminator_img_forward.2} parent=5 // pred_region
      %s298 = ssub.s32 %s17, 1
      // Predicated region
      $region13: #{discriminator_img_forward.2} parent=11 // pred_check
        %p299 = pneg %p90
      $region14: #{discriminator_img_forward.2} parent=11 // pred_check_branch
        %301 = sbr.rel (%p299) target = $region16
      $region15: #{discriminator_img_forward.2} parent=11 // pred_region
        _
      $region16: #{discriminator_img_forward.2} parent=11 // pred_fallthru
        _
      // Predicated region
      $region17: #{discriminator_img_forward.2} parent=11 // pred_check
        %p302 = pneg %p111
      $region18: #{discriminator_img_forward.2} parent=11 // pred_check_branch
        %304 = sbr.rel (%p302) target = $region20
      $region19: #{discriminator_img_forward.2} parent=11 // pred_region
        _
      $region20: #{discriminator_img_forward.2} parent=11 // pred_fallthru
        _
      // Predicated region
      $region21: #{discriminator_img_forward.2} parent=11 // pred_check
        %p305 = pneg %p132
      $region22: #{discriminator_img_forward.2} parent=11 // pred_check_branch
        %307 = sbr.rel (%p305) target = $region24
      $region23: #{discriminator_img_forward.2} parent=11 // pred_region
        _
      $region24: #{discriminator_img_forward.2} parent=11 // pred_fallthru
        _
      // Predicated region
      $region25: #{discriminator_img_forward.2} parent=11 // pred_check
        %p308 = pneg %p153
      $region26: #{discriminator_img_forward.2} parent=11 // pred_check_branch
        %310 = sbr.rel (%p308) target = $region28
      $region27: #{discriminator_img_forward.2} parent=11 // pred_region
        _
      $region28: #{discriminator_img_forward.2} parent=11 // pred_fallthru
        _
      // Predicated region
      $region29: #{discriminator_img_forward.2} parent=11 // pred_check
        %p311 = pneg %p174
      $region30: #{discriminator_img_forward.2} parent=11 // pred_check_branch
        %313 = sbr.rel (%p311) target = $region32
      $region31: #{discriminator_img_forward.2} parent=11 // pred_region
        _
      $region32: #{discriminator_img_forward.2} parent=11 // pred_fallthru
        _
      // Predicated region
      $region33: #{discriminator_img_forward.2} parent=11 // pred_check
        %p314 = pneg %p195
      $region34: #{discriminator_img_forward.2} parent=11 // pred_check_branch
        %316 = sbr.rel (%p314) target = $region36
      $region35: #{discriminator_img_forward.2} parent=11 // pred_region
        _
      $region36: #{discriminator_img_forward.2} parent=11 // pred_fallthru
        _
      // Predicated region
      $region37: #{discriminator_img_forward.2} parent=11 // pred_check
        %p317 = pneg %p216
      $region38: #{discriminator_img_forward.2} parent=11 // pred_check_branch
        %319 = sbr.rel (%p317) target = $region40
      $region39: #{discriminator_img_forward.2} parent=11 // pred_region
        _
      $region40: #{discriminator_img_forward.2} parent=11 // pred_fallthru
        _
      // Predicated region
      $region41: #{discriminator_img_forward.2} parent=11 // pred_check
        %p320 = pneg %p237
      $region42: #{discriminator_img_forward.2} parent=11 // pred_check_branch
        %322 = sbr.rel (%p320) target = $region44
      $region43: #{discriminator_img_forward.2} parent=11 // pred_region
        _
      $region44: #{discriminator_img_forward.2} parent=11 // pred_fallthru
        _
      // Predicated region
      $region45: #{discriminator_img_forward.2} parent=11 // pred_check
        %p323 = pneg %p258
      $region46: #{discriminator_img_forward.2} parent=11 // pred_check_branch
        %325 = sbr.rel (%p323) target = $region48
      $region47: #{discriminator_img_forward.2} parent=11 // pred_region
        _
      $region48: #{discriminator_img_forward.2} parent=11 // pred_fallthru
        _
    $region12: #{discriminator_img_forward.2} parent=5 // pred_fallthru
      _
    %p326 = scmp.lt.s32.totalorder %s17, 2
    // Predicated region
    $region49: #{discriminator_img_forward.2} parent=5 // pred_check
      %p327 = pneg %p326
    $region50: #{discriminator_img_forward.2} parent=5 // pred_check_branch
      %329 = sbr.rel (%p327) target = $region52
    $region51: #{discriminator_img_forward.2} parent=5 // pred_region
      // Predicated region
      $region53: #{discriminator_img_forward.2} parent=51 // pred_check
        %p330 = pneg %p37
      $region54: #{discriminator_img_forward.2} parent=51 // pred_check_branch
        %332 = sbr.rel (%p330) target = $region56
      $region55: #{discriminator_img_forward.2} parent=51 // pred_region
        %p333 = scmp.lt.s32.totalorder %s17, 1
        %s334 = scalar_select %p333, %s17, 1
        %s335 = smul.addr %s334, 64
        %s336 = smul.addr %s335, 4
        %s337 = scalar_lea.vmem %s0, %s336
      $region56: #{discriminator_img_forward.2} parent=51 // pred_fallthru
        _
      // Predicated region
      $region57: #{discriminator_img_forward.2} parent=51 // pred_check
        %p338 = pneg %p63
      $region58: #{discriminator_img_forward.2} parent=51 // pred_check_branch
        %340 = sbr.rel (%p338) target = $region60
      $region59: #{discriminator_img_forward.2} parent=51 // pred_region
        %p341 = scmp.lt.s32.totalorder %s17, 1
        %s342 = scalar_select %p341, %s17, 1
        %s343 = scalar_lea.vmem %s1, %s342
      $region60: #{discriminator_img_forward.2} parent=51 // pred_fallthru
        _
    $region52: #{discriminator_img_forward.2} parent=5 // pred_fallthru
      _
    %p344 = scmp.le.s32.totalorder 1, %s17
    %p345 = scmp.lt.s32.totalorder %s17, 3
    %p346 = pnand %p344, %p345
    %p347 = pneg %p346
    // Predicated region
    $region61: #{discriminator_img_forward.2} parent=5 // pred_check
      _
    $region62: #{discriminator_img_forward.2} parent=5 // pred_check_branch
      %349 = sbr.rel (%p346) target = $region64
    $region63: #{discriminator_img_forward.2} parent=5 // pred_region
      %s350 = ssub.s32 %s17, 1
      %p351 = scmp.lt.s32.totalorder %s22, 1
      %s352 = scalar_select %p351, %s22, 1
      %s353 = smul.addr %s352, 64
      %s354 = smul.addr %s353, 4
      %s355 = scalar_lea.vmem %s0, %s354
      %p356 = pneg %p43
      %p357 = pneg %p40
      %p358 = scmp.lt.s32.totalorder %s22, 1
      %s359 = scalar_select %p358, %s22, 1
      %s360 = scalar_lea.vmem %s1, %s359
      %p361 = pneg %p69
      %p362 = pneg %p66
      %p363 = pneg %p90
      %p364 = pneg %p87
      %p365 = pneg %p111
      %p366 = pneg %p108
      %p367 = pneg %p132
      %p368 = pneg %p129
      %p369 = pneg %p153
      %p370 = pneg %p150
      %p371 = pneg %p174
      %p372 = pneg %p171
      %p373 = pneg %p195
      %p374 = pneg %p192
      %p375 = pneg %p216
      %p376 = pneg %p213
      %p377 = pneg %p237
      %p378 = pneg %p234
      %p379 = pneg %p258
      %p380 = pneg %p255
      %p381 = pneg %p284
      %p382 = pneg %p281
      %p383 = scmp.lt.s32.totalorder %s22, 1
      %s384 = scalar_select %p383, %s22, 1
      %s385 = smul.addr %s384, 16
      %s386 = smul.addr %s385, 4
      %s387 = scalar_lea.vmem %s11, %s386
      %p388 = scmp.lt.s32.totalorder %s22, 1
      %s389 = scalar_select %p388, %s22, 1
      %s390 = smul.addr %s389, 64
      %s391 = smul.addr %s390, 4
      %s392 = scalar_lea.vmem %s0, %s391
      %p393 = scmp.lt.s32.totalorder %s22, 1
      %s394 = scalar_select %p393, %s22, 1
      %s395 = scalar_lea.vmem %s1, %s394
      %p396 = scmp.lt.s32.totalorder %s22, 1
      %s397 = scalar_select %p396, %s22, 1
      %s398 = smul.addr %s397, 16
      %s399 = smul.addr %s398, 4
      %s400 = scalar_lea.vmem %s11, %s399
      %v402 = vld [vmem:[%s2] sm:$0xf]
      %v403 = vld [vmem:[%s2 + $0x4] sm:$0xf]
      %v404 = vld [vmem:[%s392] sm:$0xff]
      %v405 = vld [vmem:[%s392 + $0x8] sm:$0xff]
      %v406 = vld [vmem:[%s392 + $0x10] sm:$0xff]
      %v407 = vld [vmem:[%s392 + $0x18] sm:$0xff]
      %v408 = vld [vmem:[%s392 + $0x20] sm:$0xff]
      %v409 = vld [vmem:[%s392 + $0x28] sm:$0xff]
      %v410 = vld [vmem:[%s392 + $0x30] sm:$0xff]
      %v411 = vld [vmem:[%s392 + $0x38] sm:$0xff]
      %v412 = vld [vmem:[%s392 + $0x40] sm:$0xff]
      %v413 = vld [vmem:[%s392 + $0x48] sm:$0xff]
      %v414 = vld [vmem:[%s392 + $0x50] sm:$0xff]
      %v415 = vld [vmem:[%s392 + $0x58] sm:$0xff]
      %v416 = vld [vmem:[%s392 + $0x60] sm:$0xff]
      %v417 = vld [vmem:[%s392 + $0x68] sm:$0xff]
      %v418 = vld [vmem:[%s392 + $0x70] sm:$0xff]
      %v419 = vld [vmem:[%s392 + $0x78] sm:$0xff]
      %v420 = vld [vmem:[%s392 + $0x80] sm:$0x33]
      %v421 = vld [vmem:[%s392 + $0x88] sm:$0x33]
      %v422 = vld [vmem:[%s392 + $0x90] sm:$0x33]
      %v423 = vld [vmem:[%s392 + $0x98] sm:$0x33]
      %v424 = vld [vmem:[%s392 + $0xa0] sm:$0x33]
      %v425 = vld [vmem:[%s392 + $0xa8] sm:$0x33]
      %v426 = vld [vmem:[%s392 + $0xb0] sm:$0x33]
      %v427 = vld [vmem:[%s392 + $0xb8] sm:$0x33]
      %v428 = vld [vmem:[%s392 + $0xc0] sm:$0x33]
      %v429 = vld [vmem:[%s392 + $0xc8] sm:$0x33]
      %v430 = vld [vmem:[%s392 + $0xd0] sm:$0x33]
      %v431 = vld [vmem:[%s392 + $0xd8] sm:$0x33]
      %v432 = vld [vmem:[%s392 + $0xe0] sm:$0x33]
      %v433 = vld [vmem:[%s392 + $0xe8] sm:$0x33]
      %v434 = vld [vmem:[%s392 + $0xf0] sm:$0x33]
      %v435 = vld [vmem:[%s392 + $0xf8] sm:$0x33]
      %v436 = vld [vmem:[%s3] sm:$0xff]
      %v437 = vld [vmem:[%s3 + $0x8] sm:$0xff]
      %439 = vset.pattern.permute.xlu0 0
      %440 = vperm.xlu0 %439, %v436
      %v441 = vpop.permute.xlu0 %440
      %444 = vset.pattern.permute.xlu0 0
      %445 = vperm.xlu0 %444, %v437
      %v446 = vpop.permute.xlu0 %445
      %v450 = vunpack.c.l.b16 %v402
      %v451 = vunpack.c.l.b16 %v403
      %v452 = vpack.c.b16 %v451, %v450
      %v485 = vunpack.c.l.b16 %v404
      %v486 = vunpack.c.h.b16 %v404
      %v487 = vunpack.c.l.b16 %v405
      %v488 = vunpack.c.h.b16 %v405
      %v489 = vunpack.c.l.b16 %v406
      %v490 = vunpack.c.h.b16 %v406
      %v491 = vunpack.c.l.b16 %v407
      %v492 = vunpack.c.h.b16 %v407
      %v493 = vunpack.c.l.b16 %v408
      %v494 = vunpack.c.h.b16 %v408
      %v495 = vunpack.c.l.b16 %v409
      %v496 = vunpack.c.h.b16 %v409
      %v497 = vunpack.c.l.b16 %v410
      %v498 = vunpack.c.h.b16 %v410
      %v499 = vunpack.c.l.b16 %v411
      %v500 = vunpack.c.h.b16 %v411
      %v501 = vunpack.c.l.b16 %v412
      %v502 = vunpack.c.h.b16 %v412
      %v503 = vunpack.c.l.b16 %v413
      %v504 = vunpack.c.h.b16 %v413
      %v505 = vunpack.c.l.b16 %v414
      %v506 = vunpack.c.h.b16 %v414
      %v507 = vunpack.c.l.b16 %v415
      %v508 = vunpack.c.h.b16 %v415
      %v509 = vunpack.c.l.b16 %v416
      %v510 = vunpack.c.h.b16 %v416
      %v511 = vunpack.c.l.b16 %v417
      %v512 = vunpack.c.h.b16 %v417
      %v513 = vunpack.c.l.b16 %v418
      %v514 = vunpack.c.h.b16 %v418
      %v515 = vunpack.c.l.b16 %v419
      %v516 = vunpack.c.h.b16 %v419
      %v517 = vunpack.c.l.b16 %v420
      %v518 = vunpack.c.h.b16 %v420
      %v519 = vunpack.c.l.b16 %v421
      %v520 = vunpack.c.h.b16 %v421
      %v521 = vunpack.c.l.b16 %v422
      %v522 = vunpack.c.h.b16 %v422
      %v523 = vunpack.c.l.b16 %v423
      %v524 = vunpack.c.h.b16 %v423
      %v525 = vunpack.c.l.b16 %v424
      %v526 = vunpack.c.h.b16 %v424
      %v527 = vunpack.c.l.b16 %v425
      %v528 = vunpack.c.h.b16 %v425
      %v529 = vunpack.c.l.b16 %v426
      %v530 = vunpack.c.h.b16 %v426
      %v531 = vunpack.c.l.b16 %v427
      %v532 = vunpack.c.h.b16 %v427
      %v533 = vunpack.c.l.b16 %v428
      %v534 = vunpack.c.h.b16 %v428
      %v535 = vunpack.c.l.b16 %v429
      %v536 = vunpack.c.h.b16 %v429
      %v537 = vunpack.c.l.b16 %v430
      %v538 = vunpack.c.h.b16 %v430
      %v539 = vunpack.c.l.b16 %v431
      %v540 = vunpack.c.h.b16 %v431
      %v541 = vunpack.c.l.b16 %v432
      %v542 = vunpack.c.h.b16 %v432
      %v543 = vunpack.c.l.b16 %v433
      %v544 = vunpack.c.h.b16 %v433
      %v545 = vunpack.c.l.b16 %v434
      %v546 = vunpack.c.h.b16 %v434
      %v547 = vunpack.c.l.b16 %v435
      %v548 = vunpack.c.h.b16 %v435
      %v549 = vpack.c.b16 %v517, %v485
      %v550 = vpack.c.b16 %v518, %v486
      %v551 = vpack.c.b16 %v519, %v487
      %v552 = vpack.c.b16 %v520, %v488
      %v553 = vpack.c.b16 %v521, %v489
      %v554 = vpack.c.b16 %v522, %v490
      %v555 = vpack.c.b16 %v523, %v491
      %v556 = vpack.c.b16 %v524, %v492
      %v557 = vpack.c.b16 %v525, %v493
      %v558 = vpack.c.b16 %v526, %v494
      %v559 = vpack.c.b16 %v527, %v495
      %v560 = vpack.c.b16 %v528, %v496
      %v561 = vpack.c.b16 %v529, %v497
      %v562 = vpack.c.b16 %v530, %v498
      %v563 = vpack.c.b16 %v531, %v499
      %v564 = vpack.c.b16 %v532, %v500
      %v565 = vpack.c.b16 %v533, %v501
      %v566 = vpack.c.b16 %v534, %v502
      %v567 = vpack.c.b16 %v535, %v503
      %v568 = vpack.c.b16 %v536, %v504
      %v569 = vpack.c.b16 %v537, %v505
      %v570 = vpack.c.b16 %v538, %v506
      %v571 = vpack.c.b16 %v539, %v507
      %v572 = vpack.c.b16 %v540, %v508
      %v573 = vpack.c.b16 %v541, %v509
      %v574 = vpack.c.b16 %v542, %v510
      %v575 = vpack.c.b16 %v543, %v511
      %v576 = vpack.c.b16 %v544, %v512
      %v577 = vpack.c.b16 %v545, %v513
      %v578 = vpack.c.b16 %v546, %v514
      %v579 = vpack.c.b16 %v547, %v515
      %v580 = vpack.c.b16 %v548, %v516
      %vm581 = vcmask 97280
      %v583 = vsel %vm581, %v452, 0
      %vm585 = vcmask 1045504
      %v587 = vsel %vm585, %v549, 0
      %v590 = vsel %vm585, %v550, 0
      %v593 = vsel %vm585, %v551, 0
      %v596 = vsel %vm585, %v552, 0
      %v599 = vsel %vm585, %v553, 0
      %v602 = vsel %vm585, %v554, 0
      %v605 = vsel %vm585, %v555, 0
      %v608 = vsel %vm585, %v556, 0
      %v611 = vsel %vm585, %v557, 0
      %v614 = vsel %vm585, %v558, 0
      %v617 = vsel %vm585, %v559, 0
      %v620 = vsel %vm585, %v560, 0
      %v623 = vsel %vm585, %v561, 0
      %v626 = vsel %vm585, %v562, 0
      %v629 = vsel %vm585, %v563, 0
      %v632 = vsel %vm585, %v564, 0
      %v635 = vsel %vm585, %v565, 0
      %v638 = vsel %vm585, %v566, 0
      %v641 = vsel %vm585, %v567, 0
      %v644 = vsel %vm585, %v568, 0
      %v647 = vsel %vm585, %v569, 0
      %v650 = vsel %vm585, %v570, 0
      %v653 = vsel %vm585, %v571, 0
      %v656 = vsel %vm585, %v572, 0
      %v659 = vsel %vm585, %v573, 0
      %v662 = vsel %vm585, %v574, 0
      %v665 = vsel %vm585, %v575, 0
      %v668 = vsel %vm585, %v576, 0
      %v671 = vsel %vm585, %v577, 0
      %v674 = vsel %vm585, %v578, 0
      %v677 = vsel %vm585, %v579, 0
      %v680 = vsel %vm585, %v580, 0
      %682 = vmatpush.bf16.msra.mxu0 0
      %683 = vmatpush.bf16.msra.mxu0 0
      %684 = vmatpush.bf16.msra.mxu0 0
      %685 = vmatpush.bf16.msra.mxu0 0
      %686 = vmatpush.bf16.msra.mxu0 0
      %687 = vmatpush.bf16.msra.mxu0 0
      %688 = vmatpush.bf16.msra.mxu0 0
      %689 = vmatpush.bf16.msra.mxu0 %v587
      %690 = vmatmul.bf16.gmra.mxu0 %v583
      %v691 = vpop.f32.mrf.mxu0
      %v692 = vadd.f32 %v441, %v691
      %v693 = vpop.f32.mrf.mxu0
      %v694 = vadd.f32 %v446, %v693
      %695 = vdwg.mxu0
      %696 = vmatpush.bf16.msra.mxu0 0
      %697 = vmatpush.bf16.msra.mxu0 0
      %698 = vmatpush.bf16.msra.mxu0 0
      %699 = vmatpush.bf16.msra.mxu0 0
      %700 = vmatpush.bf16.msra.mxu0 0
      %701 = vmatpush.bf16.msra.mxu0 0
      %702 = vmatpush.bf16.msra.mxu0 0
      %703 = vmatpush.bf16.msra.mxu0 %v590
      %704 = vmatmul.bf16.gmra.mxu0 %v583
      %v705 = vpop.f32.mrf.mxu0
      %v706 = vadd.f32 %v441, %v705
      %v707 = vpop.f32.mrf.mxu0
      %v708 = vadd.f32 %v446, %v707
      %709 = vdwg.mxu0
      %710 = vmatpush.bf16.msra.mxu0 0
      %711 = vmatpush.bf16.msra.mxu0 0
      %712 = vmatpush.bf16.msra.mxu0 0
      %713 = vmatpush.bf16.msra.mxu0 0
      %714 = vmatpush.bf16.msra.mxu0 0
      %715 = vmatpush.bf16.msra.mxu0 0
      %716 = vmatpush.bf16.msra.mxu0 0
      %717 = vmatpush.bf16.msra.mxu0 %v593
      %718 = vmatmul.bf16.gmra.mxu0 %v583
      %v719 = vpop.f32.mrf.mxu0
      %v720 = vadd.f32 %v441, %v719
      %v721 = vpop.f32.mrf.mxu0
      %v722 = vadd.f32 %v446, %v721
      %723 = vdwg.mxu0
      %724 = vmatpush.bf16.msra.mxu0 0
      %725 = vmatpush.bf16.msra.mxu0 0
      %726 = vmatpush.bf16.msra.mxu0 0
      %727 = vmatpush.bf16.msra.mxu0 0
      %728 = vmatpush.bf16.msra.mxu0 0
      %729 = vmatpush.bf16.msra.mxu0 0
      %730 = vmatpush.bf16.msra.mxu0 0
      %731 = vmatpush.bf16.msra.mxu0 %v596
      %732 = vmatmul.bf16.gmra.mxu0 %v583
      %v733 = vpop.f32.mrf.mxu0
      %v734 = vadd.f32 %v441, %v733
      %v735 = vpop.f32.mrf.mxu0
      %v736 = vadd.f32 %v446, %v735
      %737 = vdwg.mxu0
      %738 = vmatpush.bf16.msra.mxu0 0
      %739 = vmatpush.bf16.msra.mxu0 0
      %740 = vmatpush.bf16.msra.mxu0 0
      %741 = vmatpush.bf16.msra.mxu0 0
      %742 = vmatpush.bf16.msra.mxu0 0
      %743 = vmatpush.bf16.msra.mxu0 0
      %744 = vmatpush.bf16.msra.mxu0 0
      %745 = vmatpush.bf16.msra.mxu0 %v599
      %746 = vmatmul.bf16.gmra.mxu0 %v583
      %v747 = vpop.f32.mrf.mxu0
      %v748 = vadd.f32 %v441, %v747
      %v749 = vpop.f32.mrf.mxu0
      %v750 = vadd.f32 %v446, %v749
      %751 = vdwg.mxu0
      %752 = vmatpush.bf16.msra.mxu0 0
      %753 = vmatpush.bf16.msra.mxu0 0
      %754 = vmatpush.bf16.msra.mxu0 0
      %755 = vmatpush.bf16.msra.mxu0 0
      %756 = vmatpush.bf16.msra.mxu0 0
      %757 = vmatpush.bf16.msra.mxu0 0
      %758 = vmatpush.bf16.msra.mxu0 0
      %759 = vmatpush.bf16.msra.mxu0 %v602
      %760 = vmatmul.bf16.gmra.mxu0 %v583
      %v761 = vpop.f32.mrf.mxu0
      %v762 = vadd.f32 %v441, %v761
      %v763 = vpop.f32.mrf.mxu0
      %v764 = vadd.f32 %v446, %v763
      %765 = vdwg.mxu0
      %766 = vmatpush.bf16.msra.mxu0 0
      %767 = vmatpush.bf16.msra.mxu0 0
      %768 = vmatpush.bf16.msra.mxu0 0
      %769 = vmatpush.bf16.msra.mxu0 0
      %770 = vmatpush.bf16.msra.mxu0 0
      %771 = vmatpush.bf16.msra.mxu0 0
      %772 = vmatpush.bf16.msra.mxu0 0
      %773 = vmatpush.bf16.msra.mxu0 %v605
      %774 = vmatmul.bf16.gmra.mxu0 %v583
      %v775 = vpop.f32.mrf.mxu0
      %v776 = vadd.f32 %v441, %v775
      %v777 = vpop.f32.mrf.mxu0
      %v778 = vadd.f32 %v446, %v777
      %779 = vdwg.mxu0
      %780 = vmatpush.bf16.msra.mxu0 0
      %781 = vmatpush.bf16.msra.mxu0 0
      %782 = vmatpush.bf16.msra.mxu0 0
      %783 = vmatpush.bf16.msra.mxu0 0
      %784 = vmatpush.bf16.msra.mxu0 0
      %785 = vmatpush.bf16.msra.mxu0 0
      %786 = vmatpush.bf16.msra.mxu0 0
      %787 = vmatpush.bf16.msra.mxu0 %v608
      %788 = vmatmul.bf16.gmra.mxu0 %v583
      %v789 = vpop.f32.mrf.mxu0
      %v790 = vadd.f32 %v441, %v789
      %v791 = vpop.f32.mrf.mxu0
      %v792 = vadd.f32 %v446, %v791
      %793 = vdwg.mxu0
      %794 = vmatpush.bf16.msra.mxu0 0
      %795 = vmatpush.bf16.msra.mxu0 0
      %796 = vmatpush.bf16.msra.mxu0 0
      %797 = vmatpush.bf16.msra.mxu0 0
      %798 = vmatpush.bf16.msra.mxu0 0
      %799 = vmatpush.bf16.msra.mxu0 0
      %800 = vmatpush.bf16.msra.mxu0 0
      %801 = vmatpush.bf16.msra.mxu0 %v611
      %802 = vmatmul.bf16.gmra.mxu0 %v583
      %v803 = vpop.f32.mrf.mxu0
      %v804 = vadd.f32 %v441, %v803
      %v805 = vpop.f32.mrf.mxu0
      %v806 = vadd.f32 %v446, %v805
      %807 = vdwg.mxu0
      %808 = vmatpush.bf16.msra.mxu0 0
      %809 = vmatpush.bf16.msra.mxu0 0
      %810 = vmatpush.bf16.msra.mxu0 0
      %811 = vmatpush.bf16.msra.mxu0 0
      %812 = vmatpush.bf16.msra.mxu0 0
      %813 = vmatpush.bf16.msra.mxu0 0
      %814 = vmatpush.bf16.msra.mxu0 0
      %815 = vmatpush.bf16.msra.mxu0 %v614
      %816 = vmatmul.bf16.gmra.mxu0 %v583
      %v817 = vpop.f32.mrf.mxu0
      %v818 = vadd.f32 %v441, %v817
      %v819 = vpop.f32.mrf.mxu0
      %v820 = vadd.f32 %v446, %v819
      %821 = vdwg.mxu0
      %822 = vmatpush.bf16.msra.mxu0 0
      %823 = vmatpush.bf16.msra.mxu0 0
      %824 = vmatpush.bf16.msra.mxu0 0
      %825 = vmatpush.bf16.msra.mxu0 0
      %826 = vmatpush.bf16.msra.mxu0 0
      %827 = vmatpush.bf16.msra.mxu0 0
      %828 = vmatpush.bf16.msra.mxu0 0
      %829 = vmatpush.bf16.msra.mxu0 %v617
      %830 = vmatmul.bf16.gmra.mxu0 %v583
      %v831 = vpop.f32.mrf.mxu0
      %v832 = vadd.f32 %v441, %v831
      %v833 = vpop.f32.mrf.mxu0
      %v834 = vadd.f32 %v446, %v833
      %835 = vdwg.mxu0
      %836 = vmatpush.bf16.msra.mxu0 0
      %837 = vmatpush.bf16.msra.mxu0 0
      %838 = vmatpush.bf16.msra.mxu0 0
      %839 = vmatpush.bf16.msra.mxu0 0
      %840 = vmatpush.bf16.msra.mxu0 0
      %841 = vmatpush.bf16.msra.mxu0 0
      %842 = vmatpush.bf16.msra.mxu0 0
      %843 = vmatpush.bf16.msra.mxu0 %v620
      %844 = vmatmul.bf16.gmra.mxu0 %v583
      %v845 = vpop.f32.mrf.mxu0
      %v846 = vadd.f32 %v441, %v845
      %v847 = vpop.f32.mrf.mxu0
      %v848 = vadd.f32 %v446, %v847
      %849 = vdwg.mxu0
      %850 = vmatpush.bf16.msra.mxu0 0
      %851 = vmatpush.bf16.msra.mxu0 0
      %852 = vmatpush.bf16.msra.mxu0 0
      %853 = vmatpush.bf16.msra.mxu0 0
      %854 = vmatpush.bf16.msra.mxu0 0
      %855 = vmatpush.bf16.msra.mxu0 0
      %856 = vmatpush.bf16.msra.mxu0 0
      %857 = vmatpush.bf16.msra.mxu0 %v623
      %858 = vmatmul.bf16.gmra.mxu0 %v583
      %v859 = vpop.f32.mrf.mxu0
      %v860 = vadd.f32 %v441, %v859
      %v861 = vpop.f32.mrf.mxu0
      %v862 = vadd.f32 %v446, %v861
      %863 = vdwg.mxu0
      %864 = vmatpush.bf16.msra.mxu0 0
      %865 = vmatpush.bf16.msra.mxu0 0
      %866 = vmatpush.bf16.msra.mxu0 0
      %867 = vmatpush.bf16.msra.mxu0 0
      %868 = vmatpush.bf16.msra.mxu0 0
      %869 = vmatpush.bf16.msra.mxu0 0
      %870 = vmatpush.bf16.msra.mxu0 0
      %871 = vmatpush.bf16.msra.mxu0 %v626
      %872 = vmatmul.bf16.gmra.mxu0 %v583
      %v873 = vpop.f32.mrf.mxu0
      %v874 = vadd.f32 %v441, %v873
      %v875 = vpop.f32.mrf.mxu0
      %v876 = vadd.f32 %v446, %v875
      %877 = vdwg.mxu0
      %878 = vmatpush.bf16.msra.mxu0 0
      %879 = vmatpush.bf16.msra.mxu0 0
      %880 = vmatpush.bf16.msra.mxu0 0
      %881 = vmatpush.bf16.msra.mxu0 0
      %882 = vmatpush.bf16.msra.mxu0 0
      %883 = vmatpush.bf16.msra.mxu0 0
      %884 = vmatpush.bf16.msra.mxu0 0
      %885 = vmatpush.bf16.msra.mxu0 %v629
      %886 = vmatmul.bf16.gmra.mxu0 %v583
      %v887 = vpop.f32.mrf.mxu0
      %v888 = vadd.f32 %v441, %v887
      %v889 = vpop.f32.mrf.mxu0
      %v890 = vadd.f32 %v446, %v889
      %891 = vdwg.mxu0
      %892 = vmatpush.bf16.msra.mxu0 0
      %893 = vmatpush.bf16.msra.mxu0 0
      %894 = vmatpush.bf16.msra.mxu0 0
      %895 = vmatpush.bf16.msra.mxu0 0
      %896 = vmatpush.bf16.msra.mxu0 0
      %897 = vmatpush.bf16.msra.mxu0 0
      %898 = vmatpush.bf16.msra.mxu0 0
      %899 = vmatpush.bf16.msra.mxu0 %v632
      %900 = vmatmul.bf16.gmra.mxu0 %v583
      %v901 = vpop.f32.mrf.mxu0
      %v902 = vadd.f32 %v441, %v901
      %v903 = vpop.f32.mrf.mxu0
      %v904 = vadd.f32 %v446, %v903
      %905 = vdwg.mxu0
      %906 = vmatpush.bf16.msra.mxu0 0
      %907 = vmatpush.bf16.msra.mxu0 0
      %908 = vmatpush.bf16.msra.mxu0 0
      %909 = vmatpush.bf16.msra.mxu0 0
      %910 = vmatpush.bf16.msra.mxu0 0
      %911 = vmatpush.bf16.msra.mxu0 0
      %912 = vmatpush.bf16.msra.mxu0 0
      %913 = vmatpush.bf16.msra.mxu0 %v635
      %914 = vmatmul.bf16.gmra.mxu0 %v583
      %v915 = vpop.f32.mrf.mxu0
      %v916 = vadd.f32 %v441, %v915
      %v917 = vpop.f32.mrf.mxu0
      %v918 = vadd.f32 %v446, %v917
      %919 = vdwg.mxu0
      %920 = vmatpush.bf16.msra.mxu0 0
      %921 = vmatpush.bf16.msra.mxu0 0
      %922 = vmatpush.bf16.msra.mxu0 0
      %923 = vmatpush.bf16.msra.mxu0 0
      %924 = vmatpush.bf16.msra.mxu0 0
      %925 = vmatpush.bf16.msra.mxu0 0
      %926 = vmatpush.bf16.msra.mxu0 0
      %927 = vmatpush.bf16.msra.mxu0 %v638
      %928 = vmatmul.bf16.gmra.mxu0 %v583
      %v929 = vpop.f32.mrf.mxu0
      %v930 = vadd.f32 %v441, %v929
      %v931 = vpop.f32.mrf.mxu0
      %v932 = vadd.f32 %v446, %v931
      %933 = vdwg.mxu0
      %934 = vmatpush.bf16.msra.mxu0 0
      %935 = vmatpush.bf16.msra.mxu0 0
      %936 = vmatpush.bf16.msra.mxu0 0
      %937 = vmatpush.bf16.msra.mxu0 0
      %938 = vmatpush.bf16.msra.mxu0 0
      %939 = vmatpush.bf16.msra.mxu0 0
      %940 = vmatpush.bf16.msra.mxu0 0
      %941 = vmatpush.bf16.msra.mxu0 %v641
      %942 = vmatmul.bf16.gmra.mxu0 %v583
      %v943 = vpop.f32.mrf.mxu0
      %v944 = vadd.f32 %v441, %v943
      %v945 = vpop.f32.mrf.mxu0
      %v946 = vadd.f32 %v446, %v945
      %947 = vdwg.mxu0
      %948 = vmatpush.bf16.msra.mxu0 0
      %949 = vmatpush.bf16.msra.mxu0 0
      %950 = vmatpush.bf16.msra.mxu0 0
      %951 = vmatpush.bf16.msra.mxu0 0
      %952 = vmatpush.bf16.msra.mxu0 0
      %953 = vmatpush.bf16.msra.mxu0 0
      %954 = vmatpush.bf16.msra.mxu0 0
      %955 = vmatpush.bf16.msra.mxu0 %v644
      %956 = vmatmul.bf16.gmra.mxu0 %v583
      %v957 = vpop.f32.mrf.mxu0
      %v958 = vadd.f32 %v441, %v957
      %v959 = vpop.f32.mrf.mxu0
      %v960 = vadd.f32 %v446, %v959
      %961 = vdwg.mxu0
      %962 = vmatpush.bf16.msra.mxu0 0
      %963 = vmatpush.bf16.msra.mxu0 0
      %964 = vmatpush.bf16.msra.mxu0 0
      %965 = vmatpush.bf16.msra.mxu0 0
      %966 = vmatpush.bf16.msra.mxu0 0
      %967 = vmatpush.bf16.msra.mxu0 0
      %968 = vmatpush.bf16.msra.mxu0 0
      %969 = vmatpush.bf16.msra.mxu0 %v647
      %970 = vmatmul.bf16.gmra.mxu0 %v583
      %v971 = vpop.f32.mrf.mxu0
      %v972 = vadd.f32 %v441, %v971
      %v973 = vpop.f32.mrf.mxu0
      %v974 = vadd.f32 %v446, %v973
      %975 = vdwg.mxu0
      %976 = vmatpush.bf16.msra.mxu0 0
      %977 = vmatpush.bf16.msra.mxu0 0
      %978 = vmatpush.bf16.msra.mxu0 0
      %979 = vmatpush.bf16.msra.mxu0 0
      %980 = vmatpush.bf16.msra.mxu0 0
      %981 = vmatpush.bf16.msra.mxu0 0
      %982 = vmatpush.bf16.msra.mxu0 0
      %983 = vmatpush.bf16.msra.mxu0 %v650
      %984 = vmatmul.bf16.gmra.mxu0 %v583
      %v985 = vpop.f32.mrf.mxu0
      %v986 = vadd.f32 %v441, %v985
      %v987 = vpop.f32.mrf.mxu0
      %v988 = vadd.f32 %v446, %v987
      %989 = vdwg.mxu0
      %990 = vmatpush.bf16.msra.mxu0 0
      %991 = vmatpush.bf16.msra.mxu0 0
      %992 = vmatpush.bf16.msra.mxu0 0
      %993 = vmatpush.bf16.msra.mxu0 0
      %994 = vmatpush.bf16.msra.mxu0 0
      %995 = vmatpush.bf16.msra.mxu0 0
      %996 = vmatpush.bf16.msra.mxu0 0
      %997 = vmatpush.bf16.msra.mxu0 %v653
      %998 = vmatmul.bf16.gmra.mxu0 %v583
      %v999 = vpop.f32.mrf.mxu0
      %v1000 = vadd.f32 %v441, %v999
      %v1001 = vpop.f32.mrf.mxu0
      %v1002 = vadd.f32 %v446, %v1001
      %1003 = vdwg.mxu0
      %1004 = vmatpush.bf16.msra.mxu0 0
      %1005 = vmatpush.bf16.msra.mxu0 0
      %1006 = vmatpush.bf16.msra.mxu0 0
      %1007 = vmatpush.bf16.msra.mxu0 0
      %1008 = vmatpush.bf16.msra.mxu0 0
      %1009 = vmatpush.bf16.msra.mxu0 0
      %1010 = vmatpush.bf16.msra.mxu0 0
      %1011 = vmatpush.bf16.msra.mxu0 %v656
      %1012 = vmatmul.bf16.gmra.mxu0 %v583
      %v1013 = vpop.f32.mrf.mxu0
      %v1014 = vadd.f32 %v441, %v1013
      %v1015 = vpop.f32.mrf.mxu0
      %v1016 = vadd.f32 %v446, %v1015
      %1017 = vdwg.mxu0
      %1018 = vmatpush.bf16.msra.mxu0 0
      %1019 = vmatpush.bf16.msra.mxu0 0
      %1020 = vmatpush.bf16.msra.mxu0 0
      %1021 = vmatpush.bf16.msra.mxu0 0
      %1022 = vmatpush.bf16.msra.mxu0 0
      %1023 = vmatpush.bf16.msra.mxu0 0
      %1024 = vmatpush.bf16.msra.mxu0 0
      %1025 = vmatpush.bf16.msra.mxu0 %v659
      %1026 = vmatmul.bf16.gmra.mxu0 %v583
      %v1027 = vpop.f32.mrf.mxu0
      %v1028 = vadd.f32 %v441, %v1027
      %v1029 = vpop.f32.mrf.mxu0
      %v1030 = vadd.f32 %v446, %v1029
      %1031 = vdwg.mxu0
      %1032 = vmatpush.bf16.msra.mxu0 0
      %1033 = vmatpush.bf16.msra.mxu0 0
      %1034 = vmatpush.bf16.msra.mxu0 0
      %1035 = vmatpush.bf16.msra.mxu0 0
      %1036 = vmatpush.bf16.msra.mxu0 0
      %1037 = vmatpush.bf16.msra.mxu0 0
      %1038 = vmatpush.bf16.msra.mxu0 0
      %1039 = vmatpush.bf16.msra.mxu0 %v662
      %1040 = vmatmul.bf16.gmra.mxu0 %v583
      %v1041 = vpop.f32.mrf.mxu0
      %v1042 = vadd.f32 %v441, %v1041
      %v1043 = vpop.f32.mrf.mxu0
      %v1044 = vadd.f32 %v446, %v1043
      %1045 = vdwg.mxu0
      %1046 = vmatpush.bf16.msra.mxu0 0
      %1047 = vmatpush.bf16.msra.mxu0 0
      %1048 = vmatpush.bf16.msra.mxu0 0
      %1049 = vmatpush.bf16.msra.mxu0 0
      %1050 = vmatpush.bf16.msra.mxu0 0
      %1051 = vmatpush.bf16.msra.mxu0 0
      %1052 = vmatpush.bf16.msra.mxu0 0
      %1053 = vmatpush.bf16.msra.mxu0 %v665
      %1054 = vmatmul.bf16.gmra.mxu0 %v583
      %v1055 = vpop.f32.mrf.mxu0
      %v1056 = vadd.f32 %v441, %v1055
      %v1057 = vpop.f32.mrf.mxu0
      %v1058 = vadd.f32 %v446, %v1057
      %1059 = vdwg.mxu0
      %1060 = vmatpush.bf16.msra.mxu0 0
      %1061 = vmatpush.bf16.msra.mxu0 0
      %1062 = vmatpush.bf16.msra.mxu0 0
      %1063 = vmatpush.bf16.msra.mxu0 0
      %1064 = vmatpush.bf16.msra.mxu0 0
      %1065 = vmatpush.bf16.msra.mxu0 0
      %1066 = vmatpush.bf16.msra.mxu0 0
      %1067 = vmatpush.bf16.msra.mxu0 %v668
      %1068 = vmatmul.bf16.gmra.mxu0 %v583
      %v1069 = vpop.f32.mrf.mxu0
      %v1070 = vadd.f32 %v441, %v1069
      %v1071 = vpop.f32.mrf.mxu0
      %v1072 = vadd.f32 %v446, %v1071
      %1073 = vdwg.mxu0
      %1074 = vmatpush.bf16.msra.mxu0 0
      %1075 = vmatpush.bf16.msra.mxu0 0
      %1076 = vmatpush.bf16.msra.mxu0 0
      %1077 = vmatpush.bf16.msra.mxu0 0
      %1078 = vmatpush.bf16.msra.mxu0 0
      %1079 = vmatpush.bf16.msra.mxu0 0
      %1080 = vmatpush.bf16.msra.mxu0 0
      %1081 = vmatpush.bf16.msra.mxu0 %v671
      %1082 = vmatmul.bf16.gmra.mxu0 %v583
      %v1083 = vpop.f32.mrf.mxu0
      %v1084 = vadd.f32 %v441, %v1083
      %v1085 = vpop.f32.mrf.mxu0
      %v1086 = vadd.f32 %v446, %v1085
      %1087 = vdwg.mxu0
      %1088 = vmatpush.bf16.msra.mxu0 0
      %1089 = vmatpush.bf16.msra.mxu0 0
      %1090 = vmatpush.bf16.msra.mxu0 0
      %1091 = vmatpush.bf16.msra.mxu0 0
      %1092 = vmatpush.bf16.msra.mxu0 0
      %1093 = vmatpush.bf16.msra.mxu0 0
      %1094 = vmatpush.bf16.msra.mxu0 0
      %1095 = vmatpush.bf16.msra.mxu0 %v674
      %1096 = vmatmul.bf16.gmra.mxu0 %v583
      %v1097 = vpop.f32.mrf.mxu0
      %v1098 = vadd.f32 %v441, %v1097
      %v1099 = vpop.f32.mrf.mxu0
      %v1100 = vadd.f32 %v446, %v1099
      %1101 = vdwg.mxu0
      %1102 = vmatpush.bf16.msra.mxu0 0
      %1103 = vmatpush.bf16.msra.mxu0 0
      %1104 = vmatpush.bf16.msra.mxu0 0
      %1105 = vmatpush.bf16.msra.mxu0 0
      %1106 = vmatpush.bf16.msra.mxu0 0
      %1107 = vmatpush.bf16.msra.mxu0 0
      %1108 = vmatpush.bf16.msra.mxu0 0
      %1109 = vmatpush.bf16.msra.mxu0 %v677
      %1110 = vmatmul.bf16.gmra.mxu0 %v583
      %v1111 = vpop.f32.mrf.mxu0
      %v1112 = vadd.f32 %v441, %v1111
      %v1113 = vpop.f32.mrf.mxu0
      %v1114 = vadd.f32 %v446, %v1113
      %1115 = vdwg.mxu0
      %1116 = vmatpush.bf16.msra.mxu0 0
      %1117 = vmatpush.bf16.msra.mxu0 0
      %1118 = vmatpush.bf16.msra.mxu0 0
      %1119 = vmatpush.bf16.msra.mxu0 0
      %1120 = vmatpush.bf16.msra.mxu0 0
      %1121 = vmatpush.bf16.msra.mxu0 0
      %1122 = vmatpush.bf16.msra.mxu0 0
      %1123 = vmatpush.bf16.msra.mxu0 %v680
      %1124 = vmatmul.bf16.gmra.mxu0 %v583
      %v1125 = vpop.f32.mrf.mxu0
      %v1126 = vadd.f32 %v441, %v1125
      %v1127 = vpop.f32.mrf.mxu0
      %v1128 = vadd.f32 %v446, %v1127
      %1129 = vdwg.mxu0
      %v1130 = vmax.f32 %v692, 0.0
      %v1131 = vmax.f32 %v706, 0.0
      %v1132 = vmax.f32 %v720, 0.0
      %v1133 = vmax.f32 %v734, 0.0
      %v1134 = vmax.f32 %v748, 0.0
      %v1135 = vmax.f32 %v762, 0.0
      %v1136 = vmax.f32 %v776, 0.0
      %v1137 = vmax.f32 %v790, 0.0
      %v1138 = vmax.f32 %v804, 0.0
      %v1139 = vmax.f32 %v818, 0.0
      %v1140 = vmax.f32 %v832, 0.0
      %v1141 = vmax.f32 %v846, 0.0
      %v1142 = vmax.f32 %v860, 0.0
      %v1143 = vmax.f32 %v874, 0.0
      %v1144 = vmax.f32 %v888, 0.0
      %v1145 = vmax.f32 %v902, 0.0
      %v1146 = vmax.f32 %v916, 0.0
      %v1147 = vmax.f32 %v930, 0.0
      %v1148 = vmax.f32 %v944, 0.0
      %v1149 = vmax.f32 %v958, 0.0
      %v1150 = vmax.f32 %v972, 0.0
      %v1151 = vmax.f32 %v986, 0.0
      %v1152 = vmax.f32 %v1000, 0.0
      %v1153 = vmax.f32 %v1014, 0.0
      %v1154 = vmax.f32 %v1028, 0.0
      %v1155 = vmax.f32 %v1042, 0.0
      %v1156 = vmax.f32 %v1056, 0.0
      %v1157 = vmax.f32 %v1070, 0.0
      %v1158 = vmax.f32 %v1084, 0.0
      %v1159 = vmax.f32 %v1098, 0.0
      %v1160 = vmax.f32 %v1112, 0.0
      %v1161 = vmax.f32 %v1126, 0.0
      %v1162 = vmax.f32 %v694, 0.0
      %v1163 = vmax.f32 %v708, 0.0
      %v1164 = vmax.f32 %v722, 0.0
      %v1165 = vmax.f32 %v736, 0.0
      %v1166 = vmax.f32 %v750, 0.0
      %v1167 = vmax.f32 %v764, 0.0
      %v1168 = vmax.f32 %v778, 0.0
      %v1169 = vmax.f32 %v792, 0.0
      %v1170 = vmax.f32 %v806, 0.0
      %v1171 = vmax.f32 %v820, 0.0
      %v1172 = vmax.f32 %v834, 0.0
      %v1173 = vmax.f32 %v848, 0.0
      %v1174 = vmax.f32 %v862, 0.0
      %v1175 = vmax.f32 %v876, 0.0
      %v1176 = vmax.f32 %v890, 0.0
      %v1177 = vmax.f32 %v904, 0.0
      %v1178 = vmax.f32 %v918, 0.0
      %v1179 = vmax.f32 %v932, 0.0
      %v1180 = vmax.f32 %v946, 0.0
      %v1181 = vmax.f32 %v960, 0.0
      %v1182 = vmax.f32 %v974, 0.0
      %v1183 = vmax.f32 %v988, 0.0
      %v1184 = vmax.f32 %v1002, 0.0
      %v1185 = vmax.f32 %v1016, 0.0
      %v1186 = vmax.f32 %v1030, 0.0
      %v1187 = vmax.f32 %v1044, 0.0
      %v1188 = vmax.f32 %v1058, 0.0
      %v1189 = vmax.f32 %v1072, 0.0
      %v1190 = vmax.f32 %v1086, 0.0
      %v1191 = vmax.f32 %v1100, 0.0
      %v1192 = vmax.f32 %v1114, 0.0
      %v1193 = vmax.f32 %v1128, 0.0
      %v1194 = vpack.c.bf16 %v1131, %v1130
      %v1195 = vpack.c.bf16 %v1133, %v1132
      %v1196 = vpack.c.bf16 %v1135, %v1134
      %v1197 = vpack.c.bf16 %v1137, %v1136
      %v1198 = vpack.c.bf16 %v1139, %v1138
      %v1199 = vpack.c.bf16 %v1141, %v1140
      %v1200 = vpack.c.bf16 %v1143, %v1142
      %v1201 = vpack.c.bf16 %v1145, %v1144
      %v1202 = vpack.c.bf16 %v1147, %v1146
      %v1203 = vpack.c.bf16 %v1149, %v1148
      %v1204 = vpack.c.bf16 %v1151, %v1150
      %v1205 = vpack.c.bf16 %v1153, %v1152
      %v1206 = vpack.c.bf16 %v1155, %v1154
      %v1207 = vpack.c.bf16 %v1157, %v1156
      %v1208 = vpack.c.bf16 %v1159, %v1158
      %v1209 = vpack.c.bf16 %v1161, %v1160
      %v1210 = vpack.c.bf16 %v1163, %v1162
      %v1211 = vpack.c.bf16 %v1165, %v1164
      %v1212 = vpack.c.bf16 %v1167, %v1166
      %v1213 = vpack.c.bf16 %v1169, %v1168
      %v1214 = vpack.c.bf16 %v1171, %v1170
      %v1215 = vpack.c.bf16 %v1173, %v1172
      %v1216 = vpack.c.bf16 %v1175, %v1174
      %v1217 = vpack.c.bf16 %v1177, %v1176
      %v1218 = vpack.c.bf16 %v1179, %v1178
      %v1219 = vpack.c.bf16 %v1181, %v1180
      %v1220 = vpack.c.bf16 %v1183, %v1182
      %v1221 = vpack.c.bf16 %v1185, %v1184
      %v1222 = vpack.c.bf16 %v1187, %v1186
      %v1223 = vpack.c.bf16 %v1189, %v1188
      %v1224 = vpack.c.bf16 %v1191, %v1190
      %v1225 = vpack.c.bf16 %v1193, %v1192
      %1226 = vst [vmem:[#allocation2] sm:$0xff] %v1194
      %1227 = vst [vmem:[#allocation2 + $0x8] sm:$0xff] %v1195
      %1228 = vst [vmem:[#allocation2 + $0x10] sm:$0xff] %v1196
      %1229 = vst [vmem:[#allocation2 + $0x18] sm:$0xff] %v1197
      %1230 = vst [vmem:[#allocation2 + $0x20] sm:$0xff] %v1198
      %1231 = vst [vmem:[#allocation2 + $0x28] sm:$0xff] %v1199
      %1232 = vst [vmem:[#allocation2 + $0x30] sm:$0xff] %v1200
      %1233 = vst [vmem:[#allocation2 + $0x38] sm:$0xff] %v1201
      %1234 = vst [vmem:[#allocation2 + $0x40] sm:$0xff] %v1202
      %1235 = vst [vmem:[#allocation2 + $0x48] sm:$0xff] %v1203
      %1236 = vst [vmem:[#allocation2 + $0x50] sm:$0xff] %v1204
      %1237 = vst [vmem:[#allocation2 + $0x58] sm:$0xff] %v1205
      %1238 = vst [vmem:[#allocation2 + $0x60] sm:$0xff] %v1206
      %1239 = vst [vmem:[#allocation2 + $0x68] sm:$0xff] %v1207
      %1240 = vst [vmem:[#allocation2 + $0x70] sm:$0xff] %v1208
      %1241 = vst [vmem:[#allocation2 + $0x78] sm:$0xff] %v1209
      %1242 = vst [vmem:[#allocation2 + $0x80] sm:$0xff] %v1210
      %1243 = vst [vmem:[#allocation2 + $0x88] sm:$0xff] %v1211
      %1244 = vst [vmem:[#allocation2 + $0x90] sm:$0xff] %v1212
      %1245 = vst [vmem:[#allocation2 + $0x98] sm:$0xff] %v1213
      %1246 = vst [vmem:[#allocation2 + $0xa0] sm:$0xff] %v1214
      %1247 = vst [vmem:[#allocation2 + $0xa8] sm:$0xff] %v1215
      %1248 = vst [vmem:[#allocation2 + $0xb0] sm:$0xff] %v1216
      %1249 = vst [vmem:[#allocation2 + $0xb8] sm:$0xff] %v1217
      %1250 = vst [vmem:[#allocation2 + $0xc0] sm:$0xff] %v1218
      %1251 = vst [vmem:[#allocation2 + $0xc8] sm:$0xff] %v1219
      %1252 = vst [vmem:[#allocation2 + $0xd0] sm:$0xff] %v1220
      %1253 = vst [vmem:[#allocation2 + $0xd8] sm:$0xff] %v1221
      %1254 = vst [vmem:[#allocation2 + $0xe0] sm:$0xff] %v1222
      %1255 = vst [vmem:[#allocation2 + $0xe8] sm:$0xff] %v1223
      %1256 = vst [vmem:[#allocation2 + $0xf0] sm:$0xff] %v1224
      %1257 = vst [vmem:[#allocation2 + $0xf8] sm:$0xff] %v1225
      %v1258 = vld [vmem:[%s4] sm:$0xff]
      %v1259 = vld [vmem:[%s4 + $0x8] sm:$0xff]
      %v1260 = vld [vmem:[%s4 + $0x10] sm:$0xff]
      %v1261 = vld [vmem:[%s4 + $0x18] sm:$0xff]
      %v1262 = vld [vmem:[%s395] sm:$0x1]
      %v1264 = vperm.slane %v1262, 0
      %v1266 = vmul.f32 %v1258, %v1264
      %v1267 = vmul.f32 %v1259, %v1264
      %v1268 = vmul.f32 %v1260, %v1264
      %v1269 = vmul.f32 %v1261, %v1264
      %v1270 = vsel %vm581, %v1266, 0.0
      %1271 = vadd.xlane.f32.xlu0 %v1270
      %v1272 = vpop.xlane.xlu0 %1271
      %v1273 = vsel %vm581, %v1267, 0.0
      %1274 = vadd.xlane.f32.xlu0 %v1273
      %v1275 = vpop.xlane.xlu0 %1274
      %v1276 = vsel %vm581, %v1268, 0.0
      %1277 = vadd.xlane.f32.xlu0 %v1276
      %v1278 = vpop.xlane.xlu0 %1277
      %v1279 = vsel %vm581, %v1269, 0.0
      %1280 = vadd.xlane.f32.xlu0 %v1279
      %v1281 = vpop.xlane.xlu0 %1280
      %v1282 = vld [vmem:[%s5] sm:$0xf]
      %v1283 = vld [vmem:[%s5 + $0x4] sm:$0xf]
      %v1284 = vld [vmem:[%s5 + $0x8] sm:$0xf]
      %v1285 = vld [vmem:[%s5 + $0xc] sm:$0xf]
      %v1286 = vld [vmem:[#allocation2] sm:$0xff]
      %v1287 = vld [vmem:[#allocation2 + $0x8] sm:$0xff]
      %v1288 = vld [vmem:[#allocation2 + $0x10] sm:$0xff]
      %v1289 = vld [vmem:[#allocation2 + $0x18] sm:$0xff]
      %v1290 = vld [vmem:[#allocation2 + $0x80] sm:$0xff]
      %v1291 = vld [vmem:[#allocation2 + $0x88] sm:$0xff]
      %v1292 = vld [vmem:[#allocation2 + $0x90] sm:$0xff]
      %v1293 = vld [vmem:[#allocation2 + $0x98] sm:$0xff]
      %s1294 = scalar_lea.vmem %s5, 16
      %v1295 = vld [vmem:[%s1294] sm:$0xf]
      %v1296 = vld [vmem:[%s1294 + $0x4] sm:$0xf]
      %v1297 = vld [vmem:[%s1294 + $0x8] sm:$0xf]
      %v1298 = vld [vmem:[%s1294 + $0xc] sm:$0xf]
      %v1299 = vld [vmem:[#allocation2 + $0x20] sm:$0xff]
      %v1300 = vld [vmem:[#allocation2 + $0x28] sm:$0xff]
      %v1301 = vld [vmem:[#allocation2 + $0x30] sm:$0xff]
      %v1302 = vld [vmem:[#allocation2 + $0x38] sm:$0xff]
      %v1303 = vld [vmem:[#allocation2 + $0xa0] sm:$0xff]
      %v1304 = vld [vmem:[#allocation2 + $0xa8] sm:$0xff]
      %v1305 = vld [vmem:[#allocation2 + $0xb0] sm:$0xff]
      %v1306 = vld [vmem:[#allocation2 + $0xb8] sm:$0xff]
      %v1311 = vunpack.c.l.b16 %v1295
      %v1312 = vunpack.c.l.b16 %v1296
      %v1313 = vunpack.c.l.b16 %v1297
      %v1314 = vunpack.c.l.b16 %v1298
      %v1315 = vpack.c.b16 %v1312, %v1311
      %v1316 = vpack.c.b16 %v1314, %v1313
      %v1325 = vunpack.c.l.b16 %v1299
      %v1326 = vunpack.c.h.b16 %v1299
      %v1327 = vunpack.c.l.b16 %v1300
      %v1328 = vunpack.c.h.b16 %v1300
      %v1329 = vunpack.c.l.b16 %v1301
      %v1330 = vunpack.c.h.b16 %v1301
      %v1331 = vunpack.c.l.b16 %v1302
      %v1332 = vunpack.c.h.b16 %v1302
      %v1333 = vunpack.c.l.b16 %v1303
      %v1334 = vunpack.c.h.b16 %v1303
      %v1335 = vunpack.c.l.b16 %v1304
      %v1336 = vunpack.c.h.b16 %v1304
      %v1337 = vunpack.c.l.b16 %v1305
      %v1338 = vunpack.c.h.b16 %v1305
      %v1339 = vunpack.c.l.b16 %v1306
      %v1340 = vunpack.c.h.b16 %v1306
      %v1341 = vpack.c.b16 %v1333, %v1325
      %v1342 = vpack.c.b16 %v1334, %v1326
      %v1343 = vpack.c.b16 %v1335, %v1327
      %v1344 = vpack.c.b16 %v1336, %v1328
      %v1345 = vpack.c.b16 %v1337, %v1329
      %v1346 = vpack.c.b16 %v1338, %v1330
      %v1347 = vpack.c.b16 %v1339, %v1331
      %v1348 = vpack.c.b16 %v1340, %v1332
      %vm1357 = vcmask 130048
      %v1359 = vsel %vm1357, %v1315, 0
      %v1362 = vsel %vm1357, %v1316, 0
      %1364 = vmatpush.bf16.msra.mxu0 0
      %1365 = vmatpush.bf16.msra.mxu0 0
      %1366 = vmatpush.bf16.msra.mxu0 0
      %1367 = vmatpush.bf16.msra.mxu0 0
      %1368 = vmatpush.bf16.msra.mxu0 0
      %1369 = vmatpush.bf16.msra.mxu0 0
      %1370 = vmatpush.bf16.msra.mxu0 0
      %1371 = vmatpush.bf16.msra.mxu0 %v1341
      %1372 = vmatmul.bf16.gmra.mxu0 %v1359
      %v1373 = vpop.f32.mrf.mxu0
      %v1374 = vadd.f32 0.0, %v1373
      %v1375 = vpop.f32.mrf.mxu0
      %v1376 = vadd.f32 0.0, %v1375
      %1377 = vmatmul.bf16.gmra.mxu0 %v1362
      %v1378 = vpop.f32.mrf.mxu0
      %v1379 = vadd.f32 0.0, %v1378
      %v1380 = vpop.f32.mrf.mxu0
      %v1381 = vadd.f32 0.0, %v1380
      %1382 = vdwg.mxu0
      %1383 = vmatpush.bf16.msra.mxu0 0
      %1384 = vmatpush.bf16.msra.mxu0 0
      %1385 = vmatpush.bf16.msra.mxu0 0
      %1386 = vmatpush.bf16.msra.mxu0 0
      %1387 = vmatpush.bf16.msra.mxu0 0
      %1388 = vmatpush.bf16.msra.mxu0 0
      %1389 = vmatpush.bf16.msra.mxu0 0
      %1390 = vmatpush.bf16.msra.mxu0 %v1342
      %1391 = vmatmul.bf16.gmra.mxu0 %v1359
      %v1392 = vpop.f32.mrf.mxu0
      %v1393 = vadd.f32 0.0, %v1392
      %v1394 = vpop.f32.mrf.mxu0
      %v1395 = vadd.f32 0.0, %v1394
      %1396 = vmatmul.bf16.gmra.mxu0 %v1362
      %v1397 = vpop.f32.mrf.mxu0
      %v1398 = vadd.f32 0.0, %v1397
      %v1399 = vpop.f32.mrf.mxu0
      %v1400 = vadd.f32 0.0, %v1399
      %1401 = vdwg.mxu0
      %1402 = vmatpush.bf16.msra.mxu0 0
      %1403 = vmatpush.bf16.msra.mxu0 0
      %1404 = vmatpush.bf16.msra.mxu0 0
      %1405 = vmatpush.bf16.msra.mxu0 0
      %1406 = vmatpush.bf16.msra.mxu0 0
      %1407 = vmatpush.bf16.msra.mxu0 0
      %1408 = vmatpush.bf16.msra.mxu0 0
      %1409 = vmatpush.bf16.msra.mxu0 %v1343
      %1410 = vmatmul.bf16.gmra.mxu0 %v1359
      %v1411 = vpop.f32.mrf.mxu0
      %v1412 = vadd.f32 0.0, %v1411
      %v1413 = vpop.f32.mrf.mxu0
      %v1414 = vadd.f32 0.0, %v1413
      %1415 = vmatmul.bf16.gmra.mxu0 %v1362
      %v1416 = vpop.f32.mrf.mxu0
      %v1417 = vadd.f32 0.0, %v1416
      %v1418 = vpop.f32.mrf.mxu0
      %v1419 = vadd.f32 0.0, %v1418
      %1420 = vdwg.mxu0
      %1421 = vmatpush.bf16.msra.mxu0 0
      %1422 = vmatpush.bf16.msra.mxu0 0
      %1423 = vmatpush.bf16.msra.mxu0 0
      %1424 = vmatpush.bf16.msra.mxu0 0
      %1425 = vmatpush.bf16.msra.mxu0 0
      %1426 = vmatpush.bf16.msra.mxu0 0
      %1427 = vmatpush.bf16.msra.mxu0 0
      %1428 = vmatpush.bf16.msra.mxu0 %v1344
      %1429 = vmatmul.bf16.gmra.mxu0 %v1359
      %v1430 = vpop.f32.mrf.mxu0
      %v1431 = vadd.f32 0.0, %v1430
      %v1432 = vpop.f32.mrf.mxu0
      %v1433 = vadd.f32 0.0, %v1432
      %1434 = vmatmul.bf16.gmra.mxu0 %v1362
      %v1435 = vpop.f32.mrf.mxu0
      %v1436 = vadd.f32 0.0, %v1435
      %v1437 = vpop.f32.mrf.mxu0
      %v1438 = vadd.f32 0.0, %v1437
      %1439 = vdwg.mxu0
      %1440 = vmatpush.bf16.msra.mxu0 0
      %1441 = vmatpush.bf16.msra.mxu0 0
      %1442 = vmatpush.bf16.msra.mxu0 0
      %1443 = vmatpush.bf16.msra.mxu0 0
      %1444 = vmatpush.bf16.msra.mxu0 0
      %1445 = vmatpush.bf16.msra.mxu0 0
      %1446 = vmatpush.bf16.msra.mxu0 0
      %1447 = vmatpush.bf16.msra.mxu0 %v1345
      %1448 = vmatmul.bf16.gmra.mxu0 %v1359
      %v1449 = vpop.f32.mrf.mxu0
      %v1450 = vadd.f32 0.0, %v1449
      %v1451 = vpop.f32.mrf.mxu0
      %v1452 = vadd.f32 0.0, %v1451
      %1453 = vmatmul.bf16.gmra.mxu0 %v1362
      %v1454 = vpop.f32.mrf.mxu0
      %v1455 = vadd.f32 0.0, %v1454
      %v1456 = vpop.f32.mrf.mxu0
      %v1457 = vadd.f32 0.0, %v1456
      %1458 = vdwg.mxu0
      %1459 = vmatpush.bf16.msra.mxu0 0
      %1460 = vmatpush.bf16.msra.mxu0 0
      %1461 = vmatpush.bf16.msra.mxu0 0
      %1462 = vmatpush.bf16.msra.mxu0 0
      %1463 = vmatpush.bf16.msra.mxu0 0
      %1464 = vmatpush.bf16.msra.mxu0 0
      %1465 = vmatpush.bf16.msra.mxu0 0
      %1466 = vmatpush.bf16.msra.mxu0 %v1346
      %1467 = vmatmul.bf16.gmra.mxu0 %v1359
      %v1468 = vpop.f32.mrf.mxu0
      %v1469 = vadd.f32 0.0, %v1468
      %v1470 = vpop.f32.mrf.mxu0
      %v1471 = vadd.f32 0.0, %v1470
      %1472 = vmatmul.bf16.gmra.mxu0 %v1362
      %v1473 = vpop.f32.mrf.mxu0
      %v1474 = vadd.f32 0.0, %v1473
      %v1475 = vpop.f32.mrf.mxu0
      %v1476 = vadd.f32 0.0, %v1475
      %1477 = vdwg.mxu0
      %1478 = vmatpush.bf16.msra.mxu0 0
      %1479 = vmatpush.bf16.msra.mxu0 0
      %1480 = vmatpush.bf16.msra.mxu0 0
      %1481 = vmatpush.bf16.msra.mxu0 0
      %1482 = vmatpush.bf16.msra.mxu0 0
      %1483 = vmatpush.bf16.msra.mxu0 0
      %1484 = vmatpush.bf16.msra.mxu0 0
      %1485 = vmatpush.bf16.msra.mxu0 %v1347
      %1486 = vmatmul.bf16.gmra.mxu0 %v1359
      %v1487 = vpop.f32.mrf.mxu0
      %v1488 = vadd.f32 0.0, %v1487
      %v1489 = vpop.f32.mrf.mxu0
      %v1490 = vadd.f32 0.0, %v1489
      %1491 = vmatmul.bf16.gmra.mxu0 %v1362
      %v1492 = vpop.f32.mrf.mxu0
      %v1493 = vadd.f32 0.0, %v1492
      %v1494 = vpop.f32.mrf.mxu0
      %v1495 = vadd.f32 0.0, %v1494
      %1496 = vdwg.mxu0
      %1497 = vmatpush.bf16.msra.mxu0 0
      %1498 = vmatpush.bf16.msra.mxu0 0
      %1499 = vmatpush.bf16.msra.mxu0 0
      %1500 = vmatpush.bf16.msra.mxu0 0
      %1501 = vmatpush.bf16.msra.mxu0 0
      %1502 = vmatpush.bf16.msra.mxu0 0
      %1503 = vmatpush.bf16.msra.mxu0 0
      %1504 = vmatpush.bf16.msra.mxu0 %v1348
      %1505 = vmatmul.bf16.gmra.mxu0 %v1359
      %v1506 = vpop.f32.mrf.mxu0
      %v1507 = vadd.f32 0.0, %v1506
      %v1508 = vpop.f32.mrf.mxu0
      %v1509 = vadd.f32 0.0, %v1508
      %1510 = vmatmul.bf16.gmra.mxu0 %v1362
      %v1511 = vpop.f32.mrf.mxu0
      %v1512 = vadd.f32 0.0, %v1511
      %v1513 = vpop.f32.mrf.mxu0
      %v1514 = vadd.f32 0.0, %v1513
      %1515 = vdwg.mxu0
      %v1520 = vunpack.c.l.b16 %v1282
      %v1521 = vunpack.c.l.b16 %v1283
      %v1522 = vunpack.c.l.b16 %v1284
      %v1523 = vunpack.c.l.b16 %v1285
      %v1524 = vpack.c.b16 %v1521, %v1520
      %v1525 = vpack.c.b16 %v1523, %v1522
      %v1534 = vunpack.c.l.b16 %v1286
      %v1535 = vunpack.c.h.b16 %v1286
      %v1536 = vunpack.c.l.b16 %v1287
      %v1537 = vunpack.c.h.b16 %v1287
      %v1538 = vunpack.c.l.b16 %v1288
      %v1539 = vunpack.c.h.b16 %v1288
      %v1540 = vunpack.c.l.b16 %v1289
      %v1541 = vunpack.c.h.b16 %v1289
      %v1542 = vunpack.c.l.b16 %v1290
      %v1543 = vunpack.c.h.b16 %v1290
      %v1544 = vunpack.c.l.b16 %v1291
      %v1545 = vunpack.c.h.b16 %v1291
      %v1546 = vunpack.c.l.b16 %v1292
      %v1547 = vunpack.c.h.b16 %v1292
      %v1548 = vunpack.c.l.b16 %v1293
      %v1549 = vunpack.c.h.b16 %v1293
      %v1550 = vpack.c.b16 %v1542, %v1534
      %v1551 = vpack.c.b16 %v1543, %v1535
      %v1552 = vpack.c.b16 %v1544, %v1536
      %v1553 = vpack.c.b16 %v1545, %v1537
      %v1554 = vpack.c.b16 %v1546, %v1538
      %v1555 = vpack.c.b16 %v1547, %v1539
      %v1556 = vpack.c.b16 %v1548, %v1540
      %v1557 = vpack.c.b16 %v1549, %v1541
      %v1567 = vsel %vm1357, %v1524, 0
      %v1570 = vsel %vm1357, %v1525, 0
      %1572 = vmatpush.bf16.msra.mxu0 0
      %1573 = vmatpush.bf16.msra.mxu0 0
      %1574 = vmatpush.bf16.msra.mxu0 0
      %1575 = vmatpush.bf16.msra.mxu0 0
      %1576 = vmatpush.bf16.msra.mxu0 0
      %1577 = vmatpush.bf16.msra.mxu0 0
      %1578 = vmatpush.bf16.msra.mxu0 0
      %1579 = vmatpush.bf16.msra.mxu0 %v1550
      %1580 = vmatmul.bf16.gmra.mxu0 %v1567
      %v1581 = vpop.f32.mrf.mxu0
      %v1582 = vadd.f32 %v1374, %v1581
      %v1583 = vpop.f32.mrf.mxu0
      %v1584 = vadd.f32 %v1376, %v1583
      %1585 = vmatmul.bf16.gmra.mxu0 %v1570
      %v1586 = vpop.f32.mrf.mxu0
      %v1587 = vadd.f32 %v1379, %v1586
      %v1588 = vpop.f32.mrf.mxu0
      %v1589 = vadd.f32 %v1381, %v1588
      %1590 = vdwg.mxu0
      %1591 = vmatpush.bf16.msra.mxu0 0
      %1592 = vmatpush.bf16.msra.mxu0 0
      %1593 = vmatpush.bf16.msra.mxu0 0
      %1594 = vmatpush.bf16.msra.mxu0 0
      %1595 = vmatpush.bf16.msra.mxu0 0
      %1596 = vmatpush.bf16.msra.mxu0 0
      %1597 = vmatpush.bf16.msra.mxu0 0
      %1598 = vmatpush.bf16.msra.mxu0 %v1551
      %1599 = vmatmul.bf16.gmra.mxu0 %v1567
      %v1600 = vpop.f32.mrf.mxu0
      %v1601 = vadd.f32 %v1393, %v1600
      %v1602 = vpop.f32.mrf.mxu0
      %v1603 = vadd.f32 %v1395, %v1602
      %1604 = vmatmul.bf16.gmra.mxu0 %v1570
      %v1605 = vpop.f32.mrf.mxu0
      %v1606 = vadd.f32 %v1398, %v1605
      %v1607 = vpop.f32.mrf.mxu0
      %v1608 = vadd.f32 %v1400, %v1607
      %1609 = vdwg.mxu0
      %1610 = vmatpush.bf16.msra.mxu0 0
      %1611 = vmatpush.bf16.msra.mxu0 0
      %1612 = vmatpush.bf16.msra.mxu0 0
      %1613 = vmatpush.bf16.msra.mxu0 0
      %1614 = vmatpush.bf16.msra.mxu0 0
      %1615 = vmatpush.bf16.msra.mxu0 0
      %1616 = vmatpush.bf16.msra.mxu0 0
      %1617 = vmatpush.bf16.msra.mxu0 %v1552
      %1618 = vmatmul.bf16.gmra.mxu0 %v1567
      %v1619 = vpop.f32.mrf.mxu0
      %v1620 = vadd.f32 %v1412, %v1619
      %v1621 = vpop.f32.mrf.mxu0
      %v1622 = vadd.f32 %v1414, %v1621
      %1623 = vmatmul.bf16.gmra.mxu0 %v1570
      %v1624 = vpop.f32.mrf.mxu0
      %v1625 = vadd.f32 %v1417, %v1624
      %v1626 = vpop.f32.mrf.mxu0
      %v1627 = vadd.f32 %v1419, %v1626
      %1628 = vdwg.mxu0
      %1629 = vmatpush.bf16.msra.mxu0 0
      %1630 = vmatpush.bf16.msra.mxu0 0
      %1631 = vmatpush.bf16.msra.mxu0 0
      %1632 = vmatpush.bf16.msra.mxu0 0
      %1633 = vmatpush.bf16.msra.mxu0 0
      %1634 = vmatpush.bf16.msra.mxu0 0
      %1635 = vmatpush.bf16.msra.mxu0 0
      %1636 = vmatpush.bf16.msra.mxu0 %v1553
      %1637 = vmatmul.bf16.gmra.mxu0 %v1567
      %v1638 = vpop.f32.mrf.mxu0
      %v1639 = vadd.f32 %v1431, %v1638
      %v1640 = vpop.f32.mrf.mxu0
      %v1641 = vadd.f32 %v1433, %v1640
      %1642 = vmatmul.bf16.gmra.mxu0 %v1570
      %v1643 = vpop.f32.mrf.mxu0
      %v1644 = vadd.f32 %v1436, %v1643
      %v1645 = vpop.f32.mrf.mxu0
      %v1646 = vadd.f32 %v1438, %v1645
      %1647 = vdwg.mxu0
      %1648 = vmatpush.bf16.msra.mxu0 0
      %1649 = vmatpush.bf16.msra.mxu0 0
      %1650 = vmatpush.bf16.msra.mxu0 0
      %1651 = vmatpush.bf16.msra.mxu0 0
      %1652 = vmatpush.bf16.msra.mxu0 0
      %1653 = vmatpush.bf16.msra.mxu0 0
      %1654 = vmatpush.bf16.msra.mxu0 0
      %1655 = vmatpush.bf16.msra.mxu0 %v1554
      %1656 = vmatmul.bf16.gmra.mxu0 %v1567
      %v1657 = vpop.f32.mrf.mxu0
      %v1658 = vadd.f32 %v1450, %v1657
      %v1659 = vpop.f32.mrf.mxu0
      %v1660 = vadd.f32 %v1452, %v1659
      %1661 = vmatmul.bf16.gmra.mxu0 %v1570
      %v1662 = vpop.f32.mrf.mxu0
      %v1663 = vadd.f32 %v1455, %v1662
      %v1664 = vpop.f32.mrf.mxu0
      %v1665 = vadd.f32 %v1457, %v1664
      %1666 = vdwg.mxu0
      %1667 = vmatpush.bf16.msra.mxu0 0
      %1668 = vmatpush.bf16.msra.mxu0 0
      %1669 = vmatpush.bf16.msra.mxu0 0
      %1670 = vmatpush.bf16.msra.mxu0 0
      %1671 = vmatpush.bf16.msra.mxu0 0
      %1672 = vmatpush.bf16.msra.mxu0 0
      %1673 = vmatpush.bf16.msra.mxu0 0
      %1674 = vmatpush.bf16.msra.mxu0 %v1555
      %1675 = vmatmul.bf16.gmra.mxu0 %v1567
      %v1676 = vpop.f32.mrf.mxu0
      %v1677 = vadd.f32 %v1469, %v1676
      %v1678 = vpop.f32.mrf.mxu0
      %v1679 = vadd.f32 %v1471, %v1678
      %1680 = vmatmul.bf16.gmra.mxu0 %v1570
      %v1681 = vpop.f32.mrf.mxu0
      %v1682 = vadd.f32 %v1474, %v1681
      %v1683 = vpop.f32.mrf.mxu0
      %v1684 = vadd.f32 %v1476, %v1683
      %1685 = vdwg.mxu0
      %1686 = vmatpush.bf16.msra.mxu0 0
      %1687 = vmatpush.bf16.msra.mxu0 0
      %1688 = vmatpush.bf16.msra.mxu0 0
      %1689 = vmatpush.bf16.msra.mxu0 0
      %1690 = vmatpush.bf16.msra.mxu0 0
      %1691 = vmatpush.bf16.msra.mxu0 0
      %1692 = vmatpush.bf16.msra.mxu0 0
      %1693 = vmatpush.bf16.msra.mxu0 %v1556
      %1694 = vmatmul.bf16.gmra.mxu0 %v1567
      %v1695 = vpop.f32.mrf.mxu0
      %v1696 = vadd.f32 %v1488, %v1695
      %v1697 = vpop.f32.mrf.mxu0
      %v1698 = vadd.f32 %v1490, %v1697
      %1699 = vmatmul.bf16.gmra.mxu0 %v1570
      %v1700 = vpop.f32.mrf.mxu0
      %v1701 = vadd.f32 %v1493, %v1700
      %v1702 = vpop.f32.mrf.mxu0
      %v1703 = vadd.f32 %v1495, %v1702
      %1704 = vdwg.mxu0
      %1705 = vmatpush.bf16.msra.mxu0 0
      %1706 = vmatpush.bf16.msra.mxu0 0
      %1707 = vmatpush.bf16.msra.mxu0 0
      %1708 = vmatpush.bf16.msra.mxu0 0
      %1709 = vmatpush.bf16.msra.mxu0 0
      %1710 = vmatpush.bf16.msra.mxu0 0
      %1711 = vmatpush.bf16.msra.mxu0 0
      %1712 = vmatpush.bf16.msra.mxu0 %v1557
      %1713 = vmatmul.bf16.gmra.mxu0 %v1567
      %v1714 = vpop.f32.mrf.mxu0
      %v1715 = vadd.f32 %v1507, %v1714
      %v1716 = vpop.f32.mrf.mxu0
      %v1717 = vadd.f32 %v1509, %v1716
      %1718 = vmatmul.bf16.gmra.mxu0 %v1570
      %v1719 = vpop.f32.mrf.mxu0
      %v1720 = vadd.f32 %v1512, %v1719
      %v1721 = vpop.f32.mrf.mxu0
      %v1722 = vadd.f32 %v1514, %v1721
      %1723 = vdwg.mxu0
      %s1724 = scalar_lea.vmem %s5, 32
      %v1725 = vld [vmem:[%s1724] sm:$0xf]
      %v1726 = vld [vmem:[%s1724 + $0x4] sm:$0xf]
      %v1727 = vld [vmem:[%s1724 + $0x8] sm:$0xf]
      %v1728 = vld [vmem:[%s1724 + $0xc] sm:$0xf]
      %v1729 = vld [vmem:[#allocation2 + $0x40] sm:$0xff]
      %v1730 = vld [vmem:[#allocation2 + $0x48] sm:$0xff]
      %v1731 = vld [vmem:[#allocation2 + $0x50] sm:$0xff]
      %v1732 = vld [vmem:[#allocation2 + $0x58] sm:$0xff]
      %v1733 = vld [vmem:[#allocation2 + $0xc0] sm:$0xff]
      %v1734 = vld [vmem:[#allocation2 + $0xc8] sm:$0xff]
      %v1735 = vld [vmem:[#allocation2 + $0xd0] sm:$0xff]
      %v1736 = vld [vmem:[#allocation2 + $0xd8] sm:$0xff]
      %v1741 = vunpack.c.l.b16 %v1725
      %v1742 = vunpack.c.l.b16 %v1726
      %v1743 = vunpack.c.l.b16 %v1727
      %v1744 = vunpack.c.l.b16 %v1728
      %v1745 = vpack.c.b16 %v1742, %v1741
      %v1746 = vpack.c.b16 %v1744, %v1743
      %v1755 = vunpack.c.l.b16 %v1729
      %v1756 = vunpack.c.h.b16 %v1729
      %v1757 = vunpack.c.l.b16 %v1730
      %v1758 = vunpack.c.h.b16 %v1730
      %v1759 = vunpack.c.l.b16 %v1731
      %v1760 = vunpack.c.h.b16 %v1731
      %v1761 = vunpack.c.l.b16 %v1732
      %v1762 = vunpack.c.h.b16 %v1732
      %v1763 = vunpack.c.l.b16 %v1733
      %v1764 = vunpack.c.h.b16 %v1733
      %v1765 = vunpack.c.l.b16 %v1734
      %v1766 = vunpack.c.h.b16 %v1734
      %v1767 = vunpack.c.l.b16 %v1735
      %v1768 = vunpack.c.h.b16 %v1735
      %v1769 = vunpack.c.l.b16 %v1736
      %v1770 = vunpack.c.h.b16 %v1736
      %v1771 = vpack.c.b16 %v1763, %v1755
      %v1772 = vpack.c.b16 %v1764, %v1756
      %v1773 = vpack.c.b16 %v1765, %v1757
      %v1774 = vpack.c.b16 %v1766, %v1758
      %v1775 = vpack.c.b16 %v1767, %v1759
      %v1776 = vpack.c.b16 %v1768, %v1760
      %v1777 = vpack.c.b16 %v1769, %v1761
      %v1778 = vpack.c.b16 %v1770, %v1762
      %v1788 = vsel %vm1357, %v1745, 0
      %v1791 = vsel %vm1357, %v1746, 0
      %1793 = vmatpush.bf16.msra.mxu0 0
      %1794 = vmatpush.bf16.msra.mxu0 0
      %1795 = vmatpush.bf16.msra.mxu0 0
      %1796 = vmatpush.bf16.msra.mxu0 0
      %1797 = vmatpush.bf16.msra.mxu0 0
      %1798 = vmatpush.bf16.msra.mxu0 0
      %1799 = vmatpush.bf16.msra.mxu0 0
      %1800 = vmatpush.bf16.msra.mxu0 %v1771
      %1801 = vmatmul.bf16.gmra.mxu0 %v1788
      %v1802 = vpop.f32.mrf.mxu0
      %v1803 = vadd.f32 0.0, %v1802
      %v1804 = vpop.f32.mrf.mxu0
      %v1805 = vadd.f32 0.0, %v1804
      %1806 = vmatmul.bf16.gmra.mxu0 %v1791
      %v1807 = vpop.f32.mrf.mxu0
      %v1808 = vadd.f32 0.0, %v1807
      %v1809 = vpop.f32.mrf.mxu0
      %v1810 = vadd.f32 0.0, %v1809
      %1811 = vdwg.mxu0
      %1812 = vmatpush.bf16.msra.mxu0 0
      %1813 = vmatpush.bf16.msra.mxu0 0
      %1814 = vmatpush.bf16.msra.mxu0 0
      %1815 = vmatpush.bf16.msra.mxu0 0
      %1816 = vmatpush.bf16.msra.mxu0 0
      %1817 = vmatpush.bf16.msra.mxu0 0
      %1818 = vmatpush.bf16.msra.mxu0 0
      %1819 = vmatpush.bf16.msra.mxu0 %v1772
      %1820 = vmatmul.bf16.gmra.mxu0 %v1788
      %v1821 = vpop.f32.mrf.mxu0
      %v1822 = vadd.f32 0.0, %v1821
      %v1823 = vpop.f32.mrf.mxu0
      %v1824 = vadd.f32 0.0, %v1823
      %1825 = vmatmul.bf16.gmra.mxu0 %v1791
      %v1826 = vpop.f32.mrf.mxu0
      %v1827 = vadd.f32 0.0, %v1826
      %v1828 = vpop.f32.mrf.mxu0
      %v1829 = vadd.f32 0.0, %v1828
      %1830 = vdwg.mxu0
      %1831 = vmatpush.bf16.msra.mxu0 0
      %1832 = vmatpush.bf16.msra.mxu0 0
      %1833 = vmatpush.bf16.msra.mxu0 0
      %1834 = vmatpush.bf16.msra.mxu0 0
      %1835 = vmatpush.bf16.msra.mxu0 0
      %1836 = vmatpush.bf16.msra.mxu0 0
      %1837 = vmatpush.bf16.msra.mxu0 0
      %1838 = vmatpush.bf16.msra.mxu0 %v1773
      %1839 = vmatmul.bf16.gmra.mxu0 %v1788
      %v1840 = vpop.f32.mrf.mxu0
      %v1841 = vadd.f32 0.0, %v1840
      %v1842 = vpop.f32.mrf.mxu0
      %v1843 = vadd.f32 0.0, %v1842
      %1844 = vmatmul.bf16.gmra.mxu0 %v1791
      %v1845 = vpop.f32.mrf.mxu0
      %v1846 = vadd.f32 0.0, %v1845
      %v1847 = vpop.f32.mrf.mxu0
      %v1848 = vadd.f32 0.0, %v1847
      %1849 = vdwg.mxu0
      %1850 = vmatpush.bf16.msra.mxu0 0
      %1851 = vmatpush.bf16.msra.mxu0 0
      %1852 = vmatpush.bf16.msra.mxu0 0
      %1853 = vmatpush.bf16.msra.mxu0 0
      %1854 = vmatpush.bf16.msra.mxu0 0
      %1855 = vmatpush.bf16.msra.mxu0 0
      %1856 = vmatpush.bf16.msra.mxu0 0
      %1857 = vmatpush.bf16.msra.mxu0 %v1774
      %1858 = vmatmul.bf16.gmra.mxu0 %v1788
      %v1859 = vpop.f32.mrf.mxu0
      %v1860 = vadd.f32 0.0, %v1859
      %v1861 = vpop.f32.mrf.mxu0
      %v1862 = vadd.f32 0.0, %v1861
      %1863 = vmatmul.bf16.gmra.mxu0 %v1791
      %v1864 = vpop.f32.mrf.mxu0
      %v1865 = vadd.f32 0.0, %v1864
      %v1866 = vpop.f32.mrf.mxu0
      %v1867 = vadd.f32 0.0, %v1866
      %1868 = vdwg.mxu0
      %1869 = vmatpush.bf16.msra.mxu0 0
      %1870 = vmatpush.bf16.msra.mxu0 0
      %1871 = vmatpush.bf16.msra.mxu0 0
      %1872 = vmatpush.bf16.msra.mxu0 0
      %1873 = vmatpush.bf16.msra.mxu0 0
      %1874 = vmatpush.bf16.msra.mxu0 0
      %1875 = vmatpush.bf16.msra.mxu0 0
      %1876 = vmatpush.bf16.msra.mxu0 %v1775
      %1877 = vmatmul.bf16.gmra.mxu0 %v1788
      %v1878 = vpop.f32.mrf.mxu0
      %v1879 = vadd.f32 0.0, %v1878
      %v1880 = vpop.f32.mrf.mxu0
      %v1881 = vadd.f32 0.0, %v1880
      %1882 = vmatmul.bf16.gmra.mxu0 %v1791
      %v1883 = vpop.f32.mrf.mxu0
      %v1884 = vadd.f32 0.0, %v1883
      %v1885 = vpop.f32.mrf.mxu0
      %v1886 = vadd.f32 0.0, %v1885
      %1887 = vdwg.mxu0
      %1888 = vmatpush.bf16.msra.mxu0 0
      %1889 = vmatpush.bf16.msra.mxu0 0
      %1890 = vmatpush.bf16.msra.mxu0 0
      %1891 = vmatpush.bf16.msra.mxu0 0
      %1892 = vmatpush.bf16.msra.mxu0 0
      %1893 = vmatpush.bf16.msra.mxu0 0
      %1894 = vmatpush.bf16.msra.mxu0 0
      %1895 = vmatpush.bf16.msra.mxu0 %v1776
      %1896 = vmatmul.bf16.gmra.mxu0 %v1788
      %v1897 = vpop.f32.mrf.mxu0
      %v1898 = vadd.f32 0.0, %v1897
      %v1899 = vpop.f32.mrf.mxu0
      %v1900 = vadd.f32 0.0, %v1899
      %1901 = vmatmul.bf16.gmra.mxu0 %v1791
      %v1902 = vpop.f32.mrf.mxu0
      %v1903 = vadd.f32 0.0, %v1902
      %v1904 = vpop.f32.mrf.mxu0
      %v1905 = vadd.f32 0.0, %v1904
      %1906 = vdwg.mxu0
      %1907 = vmatpush.bf16.msra.mxu0 0
      %1908 = vmatpush.bf16.msra.mxu0 0
      %1909 = vmatpush.bf16.msra.mxu0 0
      %1910 = vmatpush.bf16.msra.mxu0 0
      %1911 = vmatpush.bf16.msra.mxu0 0
      %1912 = vmatpush.bf16.msra.mxu0 0
      %1913 = vmatpush.bf16.msra.mxu0 0
      %1914 = vmatpush.bf16.msra.mxu0 %v1777
      %1915 = vmatmul.bf16.gmra.mxu0 %v1788
      %v1916 = vpop.f32.mrf.mxu0
      %v1917 = vadd.f32 0.0, %v1916
      %v1918 = vpop.f32.mrf.mxu0
      %v1919 = vadd.f32 0.0, %v1918
      %1920 = vmatmul.bf16.gmra.mxu0 %v1791
      %v1921 = vpop.f32.mrf.mxu0
      %v1922 = vadd.f32 0.0, %v1921
      %v1923 = vpop.f32.mrf.mxu0
      %v1924 = vadd.f32 0.0, %v1923
      %1925 = vdwg.mxu0
      %1926 = vmatpush.bf16.msra.mxu0 0
      %1927 = vmatpush.bf16.msra.mxu0 0
      %1928 = vmatpush.bf16.msra.mxu0 0
      %1929 = vmatpush.bf16.msra.mxu0 0
      %1930 = vmatpush.bf16.msra.mxu0 0
      %1931 = vmatpush.bf16.msra.mxu0 0
      %1932 = vmatpush.bf16.msra.mxu0 0
      %1933 = vmatpush.bf16.msra.mxu0 %v1778
      %1934 = vmatmul.bf16.gmra.mxu0 %v1788
      %v1935 = vpop.f32.mrf.mxu0
      %v1936 = vadd.f32 0.0, %v1935
      %v1937 = vpop.f32.mrf.mxu0
      %v1938 = vadd.f32 0.0, %v1937
      %1939 = vmatmul.bf16.gmra.mxu0 %v1791
      %v1940 = vpop.f32.mrf.mxu0
      %v1941 = vadd.f32 0.0, %v1940
      %v1942 = vpop.f32.mrf.mxu0
      %v1943 = vadd.f32 0.0, %v1942
      %1944 = vdwg.mxu0
      %v1945 = vadd.f32 %v1582, %v1803
      %v1946 = vadd.f32 %v1601, %v1822
      %v1947 = vadd.f32 %v1620, %v1841
      %v1948 = vadd.f32 %v1639, %v1860
      %v1949 = vadd.f32 %v1658, %v1879
      %v1950 = vadd.f32 %v1677, %v1898
      %v1951 = vadd.f32 %v1696, %v1917
      %v1952 = vadd.f32 %v1715, %v1936
      %v1953 = vadd.f32 %v1584, %v1805
      %v1954 = vadd.f32 %v1603, %v1824
      %v1955 = vadd.f32 %v1622, %v1843
      %v1956 = vadd.f32 %v1641, %v1862
      %v1957 = vadd.f32 %v1660, %v1881
      %v1958 = vadd.f32 %v1679, %v1900
      %v1959 = vadd.f32 %v1698, %v1919
      %v1960 = vadd.f32 %v1717, %v1938
      %v1961 = vadd.f32 %v1587, %v1808
      %v1962 = vadd.f32 %v1606, %v1827
      %v1963 = vadd.f32 %v1625, %v1846
      %v1964 = vadd.f32 %v1644, %v1865
      %v1965 = vadd.f32 %v1663, %v1884
      %v1966 = vadd.f32 %v1682, %v1903
      %v1967 = vadd.f32 %v1701, %v1922
      %v1968 = vadd.f32 %v1720, %v1941
      %v1969 = vadd.f32 %v1589, %v1810
      %v1970 = vadd.f32 %v1608, %v1829
      %v1971 = vadd.f32 %v1627, %v1848
      %v1972 = vadd.f32 %v1646, %v1867
      %v1973 = vadd.f32 %v1665, %v1886
      %v1974 = vadd.f32 %v1684, %v1905
      %v1975 = vadd.f32 %v1703, %v1924
      %v1976 = vadd.f32 %v1722, %v1943
      %s1977 = scalar_lea.vmem %s5, 48
      %v1978 = vld [vmem:[%s1977] sm:$0xf]
      %v1979 = vld [vmem:[%s1977 + $0x4] sm:$0xf]
      %v1980 = vld [vmem:[%s1977 + $0x8] sm:$0xf]
      %v1981 = vld [vmem:[%s1977 + $0xc] sm:$0xf]
      %v1982 = vld [vmem:[#allocation2 + $0x60] sm:$0xff]
      %v1983 = vld [vmem:[#allocation2 + $0x68] sm:$0xff]
      %v1984 = vld [vmem:[#allocation2 + $0x70] sm:$0xff]
      %v1985 = vld [vmem:[#allocation2 + $0x78] sm:$0xff]
      %v1986 = vld [vmem:[#allocation2 + $0xe0] sm:$0xff]
      %v1987 = vld [vmem:[#allocation2 + $0xe8] sm:$0xff]
      %v1988 = vld [vmem:[#allocation2 + $0xf0] sm:$0xff]
      %v1989 = vld [vmem:[#allocation2 + $0xf8] sm:$0xff]
      %v1994 = vunpack.c.l.b16 %v1978
      %v1995 = vunpack.c.l.b16 %v1979
      %v1996 = vunpack.c.l.b16 %v1980
      %v1997 = vunpack.c.l.b16 %v1981
      %v1998 = vpack.c.b16 %v1995, %v1994
      %v1999 = vpack.c.b16 %v1997, %v1996
      %v2008 = vunpack.c.l.b16 %v1982
      %v2009 = vunpack.c.h.b16 %v1982
      %v2010 = vunpack.c.l.b16 %v1983
      %v2011 = vunpack.c.h.b16 %v1983
      %v2012 = vunpack.c.l.b16 %v1984
      %v2013 = vunpack.c.h.b16 %v1984
      %v2014 = vunpack.c.l.b16 %v1985
      %v2015 = vunpack.c.h.b16 %v1985
      %v2016 = vunpack.c.l.b16 %v1986
      %v2017 = vunpack.c.h.b16 %v1986
      %v2018 = vunpack.c.l.b16 %v1987
      %v2019 = vunpack.c.h.b16 %v1987
      %v2020 = vunpack.c.l.b16 %v1988
      %v2021 = vunpack.c.h.b16 %v1988
      %v2022 = vunpack.c.l.b16 %v1989
      %v2023 = vunpack.c.h.b16 %v1989
      %v2024 = vpack.c.b16 %v2016, %v2008
      %v2025 = vpack.c.b16 %v2017, %v2009
      %v2026 = vpack.c.b16 %v2018, %v2010
      %v2027 = vpack.c.b16 %v2019, %v2011
      %v2028 = vpack.c.b16 %v2020, %v2012
      %v2029 = vpack.c.b16 %v2021, %v2013
      %v2030 = vpack.c.b16 %v2022, %v2014
      %v2031 = vpack.c.b16 %v2023, %v2015
      %v2041 = vsel %vm1357, %v1998, 0
      %v2044 = vsel %vm1357, %v1999, 0
      %2046 = vmatpush.bf16.msra.mxu0 0
      %2047 = vmatpush.bf16.msra.mxu0 0
      %2048 = vmatpush.bf16.msra.mxu0 0
      %2049 = vmatpush.bf16.msra.mxu0 0
      %2050 = vmatpush.bf16.msra.mxu0 0
      %2051 = vmatpush.bf16.msra.mxu0 0
      %2052 = vmatpush.bf16.msra.mxu0 0
      %2053 = vmatpush.bf16.msra.mxu0 %v2024
      %2054 = vmatmul.bf16.gmra.mxu0 %v2041
      %v2055 = vpop.f32.mrf.mxu0
      %v2056 = vadd.f32 0.0, %v2055
      %v2057 = vpop.f32.mrf.mxu0
      %v2058 = vadd.f32 0.0, %v2057
      %2059 = vmatmul.bf16.gmra.mxu0 %v2044
      %v2060 = vpop.f32.mrf.mxu0
      %v2061 = vadd.f32 0.0, %v2060
      %v2062 = vpop.f32.mrf.mxu0
      %v2063 = vadd.f32 0.0, %v2062
      %2064 = vdwg.mxu0
      %2065 = vmatpush.bf16.msra.mxu0 0
      %2066 = vmatpush.bf16.msra.mxu0 0
      %2067 = vmatpush.bf16.msra.mxu0 0
      %2068 = vmatpush.bf16.msra.mxu0 0
      %2069 = vmatpush.bf16.msra.mxu0 0
      %2070 = vmatpush.bf16.msra.mxu0 0
      %2071 = vmatpush.bf16.msra.mxu0 0
      %2072 = vmatpush.bf16.msra.mxu0 %v2025
      %2073 = vmatmul.bf16.gmra.mxu0 %v2041
      %v2074 = vpop.f32.mrf.mxu0
      %v2075 = vadd.f32 0.0, %v2074
      %v2076 = vpop.f32.mrf.mxu0
      %v2077 = vadd.f32 0.0, %v2076
      %2078 = vmatmul.bf16.gmra.mxu0 %v2044
      %v2079 = vpop.f32.mrf.mxu0
      %v2080 = vadd.f32 0.0, %v2079
      %v2081 = vpop.f32.mrf.mxu0
      %v2082 = vadd.f32 0.0, %v2081
      %2083 = vdwg.mxu0
      %2084 = vmatpush.bf16.msra.mxu0 0
      %2085 = vmatpush.bf16.msra.mxu0 0
      %2086 = vmatpush.bf16.msra.mxu0 0
      %2087 = vmatpush.bf16.msra.mxu0 0
      %2088 = vmatpush.bf16.msra.mxu0 0
      %2089 = vmatpush.bf16.msra.mxu0 0
      %2090 = vmatpush.bf16.msra.mxu0 0
      %2091 = vmatpush.bf16.msra.mxu0 %v2026
      %2092 = vmatmul.bf16.gmra.mxu0 %v2041
      %v2093 = vpop.f32.mrf.mxu0
      %v2094 = vadd.f32 0.0, %v2093
      %v2095 = vpop.f32.mrf.mxu0
      %v2096 = vadd.f32 0.0, %v2095
      %2097 = vmatmul.bf16.gmra.mxu0 %v2044
      %v2098 = vpop.f32.mrf.mxu0
      %v2099 = vadd.f32 0.0, %v2098
      %v2100 = vpop.f32.mrf.mxu0
      %v2101 = vadd.f32 0.0, %v2100
      %2102 = vdwg.mxu0
      %2103 = vmatpush.bf16.msra.mxu0 0
      %2104 = vmatpush.bf16.msra.mxu0 0
      %2105 = vmatpush.bf16.msra.mxu0 0
      %2106 = vmatpush.bf16.msra.mxu0 0
      %2107 = vmatpush.bf16.msra.mxu0 0
      %2108 = vmatpush.bf16.msra.mxu0 0
      %2109 = vmatpush.bf16.msra.mxu0 0
      %2110 = vmatpush.bf16.msra.mxu0 %v2027
      %2111 = vmatmul.bf16.gmra.mxu0 %v2041
      %v2112 = vpop.f32.mrf.mxu0
      %v2113 = vadd.f32 0.0, %v2112
      %v2114 = vpop.f32.mrf.mxu0
      %v2115 = vadd.f32 0.0, %v2114
      %2116 = vmatmul.bf16.gmra.mxu0 %v2044
      %v2117 = vpop.f32.mrf.mxu0
      %v2118 = vadd.f32 0.0, %v2117
      %v2119 = vpop.f32.mrf.mxu0
      %v2120 = vadd.f32 0.0, %v2119
      %2121 = vdwg.mxu0
      %2122 = vmatpush.bf16.msra.mxu0 0
      %2123 = vmatpush.bf16.msra.mxu0 0
      %2124 = vmatpush.bf16.msra.mxu0 0
      %2125 = vmatpush.bf16.msra.mxu0 0
      %2126 = vmatpush.bf16.msra.mxu0 0
      %2127 = vmatpush.bf16.msra.mxu0 0
      %2128 = vmatpush.bf16.msra.mxu0 0
      %2129 = vmatpush.bf16.msra.mxu0 %v2028
      %2130 = vmatmul.bf16.gmra.mxu0 %v2041
      %v2131 = vpop.f32.mrf.mxu0
      %v2132 = vadd.f32 0.0, %v2131
      %v2133 = vpop.f32.mrf.mxu0
      %v2134 = vadd.f32 0.0, %v2133
      %2135 = vmatmul.bf16.gmra.mxu0 %v2044
      %v2136 = vpop.f32.mrf.mxu0
      %v2137 = vadd.f32 0.0, %v2136
      %v2138 = vpop.f32.mrf.mxu0
      %v2139 = vadd.f32 0.0, %v2138
      %2140 = vdwg.mxu0
      %2141 = vmatpush.bf16.msra.mxu0 0
      %2142 = vmatpush.bf16.msra.mxu0 0
      %2143 = vmatpush.bf16.msra.mxu0 0
      %2144 = vmatpush.bf16.msra.mxu0 0
      %2145 = vmatpush.bf16.msra.mxu0 0
      %2146 = vmatpush.bf16.msra.mxu0 0
      %2147 = vmatpush.bf16.msra.mxu0 0
      %2148 = vmatpush.bf16.msra.mxu0 %v2029
      %2149 = vmatmul.bf16.gmra.mxu0 %v2041
      %v2150 = vpop.f32.mrf.mxu0
      %v2151 = vadd.f32 0.0, %v2150
      %v2152 = vpop.f32.mrf.mxu0
      %v2153 = vadd.f32 0.0, %v2152
      %2154 = vmatmul.bf16.gmra.mxu0 %v2044
      %v2155 = vpop.f32.mrf.mxu0
      %v2156 = vadd.f32 0.0, %v2155
      %v2157 = vpop.f32.mrf.mxu0
      %v2158 = vadd.f32 0.0, %v2157
      %2159 = vdwg.mxu0
      %2160 = vmatpush.bf16.msra.mxu0 0
      %2161 = vmatpush.bf16.msra.mxu0 0
      %2162 = vmatpush.bf16.msra.mxu0 0
      %2163 = vmatpush.bf16.msra.mxu0 0
      %2164 = vmatpush.bf16.msra.mxu0 0
      %2165 = vmatpush.bf16.msra.mxu0 0
      %2166 = vmatpush.bf16.msra.mxu0 0
      %2167 = vmatpush.bf16.msra.mxu0 %v2030
      %2168 = vmatmul.bf16.gmra.mxu0 %v2041
      %v2169 = vpop.f32.mrf.mxu0
      %v2170 = vadd.f32 0.0, %v2169
      %v2171 = vpop.f32.mrf.mxu0
      %v2172 = vadd.f32 0.0, %v2171
      %2173 = vmatmul.bf16.gmra.mxu0 %v2044
      %v2174 = vpop.f32.mrf.mxu0
      %v2175 = vadd.f32 0.0, %v2174
      %v2176 = vpop.f32.mrf.mxu0
      %v2177 = vadd.f32 0.0, %v2176
      %2178 = vdwg.mxu0
      %2179 = vmatpush.bf16.msra.mxu0 0
      %2180 = vmatpush.bf16.msra.mxu0 0
      %2181 = vmatpush.bf16.msra.mxu0 0
      %2182 = vmatpush.bf16.msra.mxu0 0
      %2183 = vmatpush.bf16.msra.mxu0 0
      %2184 = vmatpush.bf16.msra.mxu0 0
      %2185 = vmatpush.bf16.msra.mxu0 0
      %2186 = vmatpush.bf16.msra.mxu0 %v2031
      %2187 = vmatmul.bf16.gmra.mxu0 %v2041
      %v2188 = vpop.f32.mrf.mxu0
      %v2189 = vadd.f32 0.0, %v2188
      %v2190 = vpop.f32.mrf.mxu0
      %v2191 = vadd.f32 0.0, %v2190
      %2192 = vmatmul.bf16.gmra.mxu0 %v2044
      %v2193 = vpop.f32.mrf.mxu0
      %v2194 = vadd.f32 0.0, %v2193
      %v2195 = vpop.f32.mrf.mxu0
      %v2196 = vadd.f32 0.0, %v2195
      %2197 = vdwg.mxu0
      %v2198 = vadd.f32 %v1945, %v2056
      %v2199 = vadd.f32 %v1946, %v2075
      %v2200 = vadd.f32 %v1947, %v2094
      %v2201 = vadd.f32 %v1948, %v2113
      %v2202 = vadd.f32 %v1949, %v2132
      %v2203 = vadd.f32 %v1950, %v2151
      %v2204 = vadd.f32 %v1951, %v2170
      %v2205 = vadd.f32 %v1952, %v2189
      %v2206 = vadd.f32 %v1953, %v2058
      %v2207 = vadd.f32 %v1954, %v2077
      %v2208 = vadd.f32 %v1955, %v2096
      %v2209 = vadd.f32 %v1956, %v2115
      %v2210 = vadd.f32 %v1957, %v2134
      %v2211 = vadd.f32 %v1958, %v2153
      %v2212 = vadd.f32 %v1959, %v2172
      %v2213 = vadd.f32 %v1960, %v2191
      %v2214 = vadd.f32 %v1961, %v2061
      %v2215 = vadd.f32 %v1962, %v2080
      %v2216 = vadd.f32 %v1963, %v2099
      %v2217 = vadd.f32 %v1964, %v2118
      %v2218 = vadd.f32 %v1965, %v2137
      %v2219 = vadd.f32 %v1966, %v2156
      %v2220 = vadd.f32 %v1967, %v2175
      %v2221 = vadd.f32 %v1968, %v2194
      %v2222 = vadd.f32 %v1969, %v2063
      %v2223 = vadd.f32 %v1970, %v2082
      %v2224 = vadd.f32 %v1971, %v2101
      %v2225 = vadd.f32 %v1972, %v2120
      %v2226 = vadd.f32 %v1973, %v2139
      %v2227 = vadd.f32 %v1974, %v2158
      %v2228 = vadd.f32 %v1975, %v2177
      %v2229 = vadd.f32 %v1976, %v2196
      %v2230 = vld [vmem:[%s6] sm:$0xff]
      %v2231 = vld [vmem:[%s6 + $0x8] sm:$0xff]
      %v2232 = vld [vmem:[%s6 + $0x10] sm:$0xff]
      %v2233 = vld [vmem:[%s6 + $0x18] sm:$0xff]
      %2235 = vset.pattern.permute.xlu0 0
      %2236 = vperm.xlu0 %2235, %v2230
      %v2237 = vpop.permute.xlu0 %2236
      %2240 = vset.pattern.permute.xlu0 0
      %2241 = vperm.xlu0 %2240, %v2231
      %v2242 = vpop.permute.xlu0 %2241
      %2245 = vset.pattern.permute.xlu0 0
      %2246 = vperm.xlu0 %2245, %v2232
      %v2247 = vpop.permute.xlu0 %2246
      %2250 = vset.pattern.permute.xlu0 0
      %2251 = vperm.xlu0 %2250, %v2233
      %v2252 = vpop.permute.xlu0 %2251
      %v2254 = vadd.f32 %v2198, %v2237
      %v2255 = vadd.f32 %v2199, %v2237
      %v2256 = vadd.f32 %v2200, %v2237
      %v2257 = vadd.f32 %v2201, %v2237
      %v2258 = vadd.f32 %v2202, %v2237
      %v2259 = vadd.f32 %v2203, %v2237
      %v2260 = vadd.f32 %v2204, %v2237
      %v2261 = vadd.f32 %v2205, %v2237
      %v2262 = vadd.f32 %v2206, %v2242
      %v2263 = vadd.f32 %v2207, %v2242
      %v2264 = vadd.f32 %v2208, %v2242
      %v2265 = vadd.f32 %v2209, %v2242
      %v2266 = vadd.f32 %v2210, %v2242
      %v2267 = vadd.f32 %v2211, %v2242
      %v2268 = vadd.f32 %v2212, %v2242
      %v2269 = vadd.f32 %v2213, %v2242
      %v2270 = vadd.f32 %v2214, %v2247
      %v2271 = vadd.f32 %v2215, %v2247
      %v2272 = vadd.f32 %v2216, %v2247
      %v2273 = vadd.f32 %v2217, %v2247
      %v2274 = vadd.f32 %v2218, %v2247
      %v2275 = vadd.f32 %v2219, %v2247
      %v2276 = vadd.f32 %v2220, %v2247
      %v2277 = vadd.f32 %v2221, %v2247
      %v2278 = vadd.f32 %v2222, %v2252
      %v2279 = vadd.f32 %v2223, %v2252
      %v2280 = vadd.f32 %v2224, %v2252
      %v2281 = vadd.f32 %v2225, %v2252
      %v2282 = vadd.f32 %v2226, %v2252
      %v2283 = vadd.f32 %v2227, %v2252
      %v2284 = vadd.f32 %v2228, %v2252
      %v2285 = vadd.f32 %v2229, %v2252
      %v2286 = vadd.f32 %v2254, %v1272
      %v2287 = vadd.f32 %v2255, %v1272
      %v2288 = vadd.f32 %v2256, %v1272
      %v2289 = vadd.f32 %v2257, %v1272
      %v2290 = vadd.f32 %v2258, %v1272
      %v2291 = vadd.f32 %v2259, %v1272
      %v2292 = vadd.f32 %v2260, %v1272
      %v2293 = vadd.f32 %v2261, %v1272
      %v2294 = vadd.f32 %v2262, %v1275
      %v2295 = vadd.f32 %v2263, %v1275
      %v2296 = vadd.f32 %v2264, %v1275
      %v2297 = vadd.f32 %v2265, %v1275
      %v2298 = vadd.f32 %v2266, %v1275
      %v2299 = vadd.f32 %v2267, %v1275
      %v2300 = vadd.f32 %v2268, %v1275
      %v2301 = vadd.f32 %v2269, %v1275
      %v2302 = vadd.f32 %v2270, %v1278
      %v2303 = vadd.f32 %v2271, %v1278
      %v2304 = vadd.f32 %v2272, %v1278
      %v2305 = vadd.f32 %v2273, %v1278
      %v2306 = vadd.f32 %v2274, %v1278
      %v2307 = vadd.f32 %v2275, %v1278
      %v2308 = vadd.f32 %v2276, %v1278
      %v2309 = vadd.f32 %v2277, %v1278
      %v2310 = vadd.f32 %v2278, %v1281
      %v2311 = vadd.f32 %v2279, %v1281
      %v2312 = vadd.f32 %v2280, %v1281
      %v2313 = vadd.f32 %v2281, %v1281
      %v2314 = vadd.f32 %v2282, %v1281
      %v2315 = vadd.f32 %v2283, %v1281
      %v2316 = vadd.f32 %v2284, %v1281
      %v2317 = vadd.f32 %v2285, %v1281
      %v2318 = vmax.f32 %v2286, 0.0
      %v2319 = vmax.f32 %v2287, 0.0
      %v2320 = vmax.f32 %v2288, 0.0
      %v2321 = vmax.f32 %v2289, 0.0
      %v2322 = vmax.f32 %v2290, 0.0
      %v2323 = vmax.f32 %v2291, 0.0
      %v2324 = vmax.f32 %v2292, 0.0
      %v2325 = vmax.f32 %v2293, 0.0
      %v2326 = vmax.f32 %v2294, 0.0
      %v2327 = vmax.f32 %v2295, 0.0
      %v2328 = vmax.f32 %v2296, 0.0
      %v2329 = vmax.f32 %v2297, 0.0
      %v2330 = vmax.f32 %v2298, 0.0
      %v2331 = vmax.f32 %v2299, 0.0
      %v2332 = vmax.f32 %v2300, 0.0
      %v2333 = vmax.f32 %v2301, 0.0
      %v2334 = vmax.f32 %v2302, 0.0
      %v2335 = vmax.f32 %v2303, 0.0
      %v2336 = vmax.f32 %v2304, 0.0
      %v2337 = vmax.f32 %v2305, 0.0
      %v2338 = vmax.f32 %v2306, 0.0
      %v2339 = vmax.f32 %v2307, 0.0
      %v2340 = vmax.f32 %v2308, 0.0
      %v2341 = vmax.f32 %v2309, 0.0
      %v2342 = vmax.f32 %v2310, 0.0
      %v2343 = vmax.f32 %v2311, 0.0
      %v2344 = vmax.f32 %v2312, 0.0
      %v2345 = vmax.f32 %v2313, 0.0
      %v2346 = vmax.f32 %v2314, 0.0
      %v2347 = vmax.f32 %v2315, 0.0
      %v2348 = vmax.f32 %v2316, 0.0
      %v2349 = vmax.f32 %v2317, 0.0
      %v2350 = vpack.c.bf16 %v2319, %v2318
      %v2351 = vpack.c.bf16 %v2321, %v2320
      %v2352 = vpack.c.bf16 %v2323, %v2322
      %v2353 = vpack.c.bf16 %v2325, %v2324
      %v2354 = vpack.c.bf16 %v2327, %v2326
      %v2355 = vpack.c.bf16 %v2329, %v2328
      %v2356 = vpack.c.bf16 %v2331, %v2330
      %v2357 = vpack.c.bf16 %v2333, %v2332
      %v2358 = vpack.c.bf16 %v2335, %v2334
      %v2359 = vpack.c.bf16 %v2337, %v2336
      %v2360 = vpack.c.bf16 %v2339, %v2338
      %v2361 = vpack.c.bf16 %v2341, %v2340
      %v2362 = vpack.c.bf16 %v2343, %v2342
      %v2363 = vpack.c.bf16 %v2345, %v2344
      %v2364 = vpack.c.bf16 %v2347, %v2346
      %v2365 = vpack.c.bf16 %v2349, %v2348
      %2366 = vst [vmem:[#allocation3] sm:$0xff] %v2350
      %2367 = vst [vmem:[#allocation3 + $0x8] sm:$0xff] %v2351
      %2368 = vst [vmem:[#allocation3 + $0x10] sm:$0xff] %v2352
      %2369 = vst [vmem:[#allocation3 + $0x18] sm:$0xff] %v2353
      %2370 = vst [vmem:[#allocation3 + $0x20] sm:$0xff] %v2354
      %2371 = vst [vmem:[#allocation3 + $0x28] sm:$0xff] %v2355
      %2372 = vst [vmem:[#allocation3 + $0x30] sm:$0xff] %v2356
      %2373 = vst [vmem:[#allocation3 + $0x38] sm:$0xff] %v2357
      %2374 = vst [vmem:[#allocation3 + $0x40] sm:$0xff] %v2358
      %2375 = vst [vmem:[#allocation3 + $0x48] sm:$0xff] %v2359
      %2376 = vst [vmem:[#allocation3 + $0x50] sm:$0xff] %v2360
      %2377 = vst [vmem:[#allocation3 + $0x58] sm:$0xff] %v2361
      %2378 = vst [vmem:[#allocation3 + $0x60] sm:$0xff] %v2362
      %2379 = vst [vmem:[#allocation3 + $0x68] sm:$0xff] %v2363
      %2380 = vst [vmem:[#allocation3 + $0x70] sm:$0xff] %v2364
      %2381 = vst [vmem:[#allocation3 + $0x78] sm:$0xff] %v2365
      %v2382 = vld [vmem:[%s7] sm:$0xf]
      %v2383 = vld [vmem:[%s7 + $0x4] sm:$0xf]
      %v2384 = vld [vmem:[%s7 + $0x8] sm:$0xf]
      %v2385 = vld [vmem:[%s7 + $0xc] sm:$0xf]
      %v2386 = vld [vmem:[%s7 + $0x10] sm:$0xf]
      %v2387 = vld [vmem:[%s7 + $0x14] sm:$0xf]
      %v2388 = vld [vmem:[%s7 + $0x18] sm:$0xf]
      %v2389 = vld [vmem:[%s7 + $0x1c] sm:$0xf]
      %v2390 = vld [vmem:[#allocation3] sm:$0xff]
      %v2391 = vld [vmem:[#allocation3 + $0x20] sm:$0xff]
      %v2392 = vld [vmem:[#allocation3 + $0x40] sm:$0xff]
      %v2393 = vld [vmem:[#allocation3 + $0x60] sm:$0xff]
      %s2394 = scalar_lea.vmem %s7, 32
      %v2395 = vld [vmem:[%s2394] sm:$0xf]
      %v2396 = vld [vmem:[%s2394 + $0x4] sm:$0xf]
      %v2397 = vld [vmem:[%s2394 + $0x8] sm:$0xf]
      %v2398 = vld [vmem:[%s2394 + $0xc] sm:$0xf]
      %v2399 = vld [vmem:[%s2394 + $0x10] sm:$0xf]
      %v2400 = vld [vmem:[%s2394 + $0x14] sm:$0xf]
      %v2401 = vld [vmem:[%s2394 + $0x18] sm:$0xf]
      %v2402 = vld [vmem:[%s2394 + $0x1c] sm:$0xf]
      %v2403 = vld [vmem:[#allocation3 + $0x8] sm:$0xff]
      %v2404 = vld [vmem:[#allocation3 + $0x28] sm:$0xff]
      %v2405 = vld [vmem:[#allocation3 + $0x48] sm:$0xff]
      %v2406 = vld [vmem:[#allocation3 + $0x68] sm:$0xff]
      %v2415 = vunpack.c.l.b16 %v2395
      %v2416 = vunpack.c.l.b16 %v2396
      %v2417 = vunpack.c.l.b16 %v2397
      %v2418 = vunpack.c.l.b16 %v2398
      %v2419 = vunpack.c.l.b16 %v2399
      %v2420 = vunpack.c.l.b16 %v2400
      %v2421 = vunpack.c.l.b16 %v2401
      %v2422 = vunpack.c.l.b16 %v2402
      %v2423 = vpack.c.b16 %v2416, %v2415
      %v2424 = vpack.c.b16 %v2418, %v2417
      %v2425 = vpack.c.b16 %v2420, %v2419
      %v2426 = vpack.c.b16 %v2422, %v2421
      %v2431 = vunpack.c.l.b16 %v2403
      %v2432 = vunpack.c.h.b16 %v2403
      %v2433 = vunpack.c.l.b16 %v2404
      %v2434 = vunpack.c.h.b16 %v2404
      %v2435 = vunpack.c.l.b16 %v2405
      %v2436 = vunpack.c.h.b16 %v2405
      %v2437 = vunpack.c.l.b16 %v2406
      %v2438 = vunpack.c.h.b16 %v2406
      %v2439 = vpack.c.b16 %v2433, %v2431
      %v2440 = vpack.c.b16 %v2434, %v2432
      %v2441 = vpack.c.b16 %v2437, %v2435
      %v2442 = vpack.c.b16 %v2438, %v2436
      %vm2447 = vcmask 261120
      %v2449 = vsel %vm2447, %v2423, 0
      %v2452 = vsel %vm2447, %v2424, 0
      %v2455 = vsel %vm2447, %v2425, 0
      %v2458 = vsel %vm2447, %v2426, 0
      %2460 = vmatpush.bf16.msra.mxu0 0
      %2461 = vmatpush.bf16.msra.mxu0 0
      %2462 = vmatpush.bf16.msra.mxu0 0
      %2463 = vmatpush.bf16.msra.mxu0 0
      %2464 = vmatpush.bf16.msra.mxu0 0
      %2465 = vmatpush.bf16.msra.mxu0 0
      %2466 = vmatpush.bf16.msra.mxu0 %v2441
      %2467 = vmatpush.bf16.msra.mxu0 %v2439
      %2468 = vmatmul.bf16.gmra.mxu0 %v2449
      %v2469 = vpop.f32.mrf.mxu0
      %v2470 = vadd.f32 0.0, %v2469
      %v2471 = vpop.f32.mrf.mxu0
      %v2472 = vadd.f32 0.0, %v2471
      %2473 = vmatmul.bf16.gmra.mxu0 %v2452
      %v2474 = vpop.f32.mrf.mxu0
      %v2475 = vadd.f32 0.0, %v2474
      %v2476 = vpop.f32.mrf.mxu0
      %v2477 = vadd.f32 0.0, %v2476
      %2478 = vmatmul.bf16.gmra.mxu0 %v2455
      %v2479 = vpop.f32.mrf.mxu0
      %v2480 = vadd.f32 0.0, %v2479
      %v2481 = vpop.f32.mrf.mxu0
      %v2482 = vadd.f32 0.0, %v2481
      %2483 = vmatmul.bf16.gmra.mxu0 %v2458
      %v2484 = vpop.f32.mrf.mxu0
      %v2485 = vadd.f32 0.0, %v2484
      %v2486 = vpop.f32.mrf.mxu0
      %v2487 = vadd.f32 0.0, %v2486
      %2488 = vdwg.mxu0
      %2489 = vmatpush.bf16.msra.mxu0 0
      %2490 = vmatpush.bf16.msra.mxu0 0
      %2491 = vmatpush.bf16.msra.mxu0 0
      %2492 = vmatpush.bf16.msra.mxu0 0
      %2493 = vmatpush.bf16.msra.mxu0 0
      %2494 = vmatpush.bf16.msra.mxu0 0
      %2495 = vmatpush.bf16.msra.mxu0 %v2442
      %2496 = vmatpush.bf16.msra.mxu0 %v2440
      %2497 = vmatmul.bf16.gmra.mxu0 %v2449
      %v2498 = vpop.f32.mrf.mxu0
      %v2499 = vadd.f32 0.0, %v2498
      %v2500 = vpop.f32.mrf.mxu0
      %v2501 = vadd.f32 0.0, %v2500
      %2502 = vmatmul.bf16.gmra.mxu0 %v2452
      %v2503 = vpop.f32.mrf.mxu0
      %v2504 = vadd.f32 0.0, %v2503
      %v2505 = vpop.f32.mrf.mxu0
      %v2506 = vadd.f32 0.0, %v2505
      %2507 = vmatmul.bf16.gmra.mxu0 %v2455
      %v2508 = vpop.f32.mrf.mxu0
      %v2509 = vadd.f32 0.0, %v2508
      %v2510 = vpop.f32.mrf.mxu0
      %v2511 = vadd.f32 0.0, %v2510
      %2512 = vmatmul.bf16.gmra.mxu0 %v2458
      %v2513 = vpop.f32.mrf.mxu0
      %v2514 = vadd.f32 0.0, %v2513
      %v2515 = vpop.f32.mrf.mxu0
      %v2516 = vadd.f32 0.0, %v2515
      %2517 = vdwg.mxu0
      %v2526 = vunpack.c.l.b16 %v2382
      %v2527 = vunpack.c.l.b16 %v2383
      %v2528 = vunpack.c.l.b16 %v2384
      %v2529 = vunpack.c.l.b16 %v2385
      %v2530 = vunpack.c.l.b16 %v2386
      %v2531 = vunpack.c.l.b16 %v2387
      %v2532 = vunpack.c.l.b16 %v2388
      %v2533 = vunpack.c.l.b16 %v2389
      %v2534 = vpack.c.b16 %v2527, %v2526
      %v2535 = vpack.c.b16 %v2529, %v2528
      %v2536 = vpack.c.b16 %v2531, %v2530
      %v2537 = vpack.c.b16 %v2533, %v2532
      %v2542 = vunpack.c.l.b16 %v2390
      %v2543 = vunpack.c.h.b16 %v2390
      %v2544 = vunpack.c.l.b16 %v2391
      %v2545 = vunpack.c.h.b16 %v2391
      %v2546 = vunpack.c.l.b16 %v2392
      %v2547 = vunpack.c.h.b16 %v2392
      %v2548 = vunpack.c.l.b16 %v2393
      %v2549 = vunpack.c.h.b16 %v2393
      %v2550 = vpack.c.b16 %v2544, %v2542
      %v2551 = vpack.c.b16 %v2545, %v2543
      %v2552 = vpack.c.b16 %v2548, %v2546
      %v2553 = vpack.c.b16 %v2549, %v2547
      %v2559 = vsel %vm2447, %v2534, 0
      %v2562 = vsel %vm2447, %v2535, 0
      %v2565 = vsel %vm2447, %v2536, 0
      %v2568 = vsel %vm2447, %v2537, 0
      %2570 = vmatpush.bf16.msra.mxu0 0
      %2571 = vmatpush.bf16.msra.mxu0 0
      %2572 = vmatpush.bf16.msra.mxu0 0
      %2573 = vmatpush.bf16.msra.mxu0 0
      %2574 = vmatpush.bf16.msra.mxu0 0
      %2575 = vmatpush.bf16.msra.mxu0 0
      %2576 = vmatpush.bf16.msra.mxu0 %v2552
      %2577 = vmatpush.bf16.msra.mxu0 %v2550
      %2578 = vmatmul.bf16.gmra.mxu0 %v2559
      %v2579 = vpop.f32.mrf.mxu0
      %v2580 = vadd.f32 %v2470, %v2579
      %v2581 = vpop.f32.mrf.mxu0
      %v2582 = vadd.f32 %v2472, %v2581
      %2583 = vmatmul.bf16.gmra.mxu0 %v2562
      %v2584 = vpop.f32.mrf.mxu0
      %v2585 = vadd.f32 %v2475, %v2584
      %v2586 = vpop.f32.mrf.mxu0
      %v2587 = vadd.f32 %v2477, %v2586
      %2588 = vmatmul.bf16.gmra.mxu0 %v2565
      %v2589 = vpop.f32.mrf.mxu0
      %v2590 = vadd.f32 %v2480, %v2589
      %v2591 = vpop.f32.mrf.mxu0
      %v2592 = vadd.f32 %v2482, %v2591
      %2593 = vmatmul.bf16.gmra.mxu0 %v2568
      %v2594 = vpop.f32.mrf.mxu0
      %v2595 = vadd.f32 %v2485, %v2594
      %v2596 = vpop.f32.mrf.mxu0
      %v2597 = vadd.f32 %v2487, %v2596
      %2598 = vdwg.mxu0
      %2599 = vmatpush.bf16.msra.mxu0 0
      %2600 = vmatpush.bf16.msra.mxu0 0
      %2601 = vmatpush.bf16.msra.mxu0 0
      %2602 = vmatpush.bf16.msra.mxu0 0
      %2603 = vmatpush.bf16.msra.mxu0 0
      %2604 = vmatpush.bf16.msra.mxu0 0
      %2605 = vmatpush.bf16.msra.mxu0 %v2553
      %2606 = vmatpush.bf16.msra.mxu0 %v2551
      %2607 = vmatmul.bf16.gmra.mxu0 %v2559
      %v2608 = vpop.f32.mrf.mxu0
      %v2609 = vadd.f32 %v2499, %v2608
      %v2610 = vpop.f32.mrf.mxu0
      %v2611 = vadd.f32 %v2501, %v2610
      %2612 = vmatmul.bf16.gmra.mxu0 %v2562
      %v2613 = vpop.f32.mrf.mxu0
      %v2614 = vadd.f32 %v2504, %v2613
      %v2615 = vpop.f32.mrf.mxu0
      %v2616 = vadd.f32 %v2506, %v2615
      %2617 = vmatmul.bf16.gmra.mxu0 %v2565
      %v2618 = vpop.f32.mrf.mxu0
      %v2619 = vadd.f32 %v2509, %v2618
      %v2620 = vpop.f32.mrf.mxu0
      %v2621 = vadd.f32 %v2511, %v2620
      %2622 = vmatmul.bf16.gmra.mxu0 %v2568
      %v2623 = vpop.f32.mrf.mxu0
      %v2624 = vadd.f32 %v2514, %v2623
      %v2625 = vpop.f32.mrf.mxu0
      %v2626 = vadd.f32 %v2516, %v2625
      %2627 = vdwg.mxu0
      %s2628 = scalar_lea.vmem %s7, 64
      %v2629 = vld [vmem:[%s2628] sm:$0xf]
      %v2630 = vld [vmem:[%s2628 + $0x4] sm:$0xf]
      %v2631 = vld [vmem:[%s2628 + $0x8] sm:$0xf]
      %v2632 = vld [vmem:[%s2628 + $0xc] sm:$0xf]
      %v2633 = vld [vmem:[%s2628 + $0x10] sm:$0xf]
      %v2634 = vld [vmem:[%s2628 + $0x14] sm:$0xf]
      %v2635 = vld [vmem:[%s2628 + $0x18] sm:$0xf]
      %v2636 = vld [vmem:[%s2628 + $0x1c] sm:$0xf]
      %v2637 = vld [vmem:[#allocation3 + $0x10] sm:$0xff]
      %v2638 = vld [vmem:[#allocation3 + $0x30] sm:$0xff]
      %v2639 = vld [vmem:[#allocation3 + $0x50] sm:$0xff]
      %v2640 = vld [vmem:[#allocation3 + $0x70] sm:$0xff]
      %v2649 = vunpack.c.l.b16 %v2629
      %v2650 = vunpack.c.l.b16 %v2630
      %v2651 = vunpack.c.l.b16 %v2631
      %v2652 = vunpack.c.l.b16 %v2632
      %v2653 = vunpack.c.l.b16 %v2633
      %v2654 = vunpack.c.l.b16 %v2634
      %v2655 = vunpack.c.l.b16 %v2635
      %v2656 = vunpack.c.l.b16 %v2636
      %v2657 = vpack.c.b16 %v2650, %v2649
      %v2658 = vpack.c.b16 %v2652, %v2651
      %v2659 = vpack.c.b16 %v2654, %v2653
      %v2660 = vpack.c.b16 %v2656, %v2655
      %v2665 = vunpack.c.l.b16 %v2637
      %v2666 = vunpack.c.h.b16 %v2637
      %v2667 = vunpack.c.l.b16 %v2638
      %v2668 = vunpack.c.h.b16 %v2638
      %v2669 = vunpack.c.l.b16 %v2639
      %v2670 = vunpack.c.h.b16 %v2639
      %v2671 = vunpack.c.l.b16 %v2640
      %v2672 = vunpack.c.h.b16 %v2640
      %v2673 = vpack.c.b16 %v2667, %v2665
      %v2674 = vpack.c.b16 %v2668, %v2666
      %v2675 = vpack.c.b16 %v2671, %v2669
      %v2676 = vpack.c.b16 %v2672, %v2670
      %v2682 = vsel %vm2447, %v2657, 0
      %v2685 = vsel %vm2447, %v2658, 0
      %v2688 = vsel %vm2447, %v2659, 0
      %v2691 = vsel %vm2447, %v2660, 0
      %2693 = vmatpush.bf16.msra.mxu0 0
      %2694 = vmatpush.bf16.msra.mxu0 0
      %2695 = vmatpush.bf16.msra.mxu0 0
      %2696 = vmatpush.bf16.msra.mxu0 0
      %2697 = vmatpush.bf16.msra.mxu0 0
      %2698 = vmatpush.bf16.msra.mxu0 0
      %2699 = vmatpush.bf16.msra.mxu0 %v2675
      %2700 = vmatpush.bf16.msra.mxu0 %v2673
      %2701 = vmatmul.bf16.gmra.mxu0 %v2682
      %v2702 = vpop.f32.mrf.mxu0
      %v2703 = vadd.f32 0.0, %v2702
      %v2704 = vpop.f32.mrf.mxu0
      %v2705 = vadd.f32 0.0, %v2704
      %2706 = vmatmul.bf16.gmra.mxu0 %v2685
      %v2707 = vpop.f32.mrf.mxu0
      %v2708 = vadd.f32 0.0, %v2707
      %v2709 = vpop.f32.mrf.mxu0
      %v2710 = vadd.f32 0.0, %v2709
      %2711 = vmatmul.bf16.gmra.mxu0 %v2688
      %v2712 = vpop.f32.mrf.mxu0
      %v2713 = vadd.f32 0.0, %v2712
      %v2714 = vpop.f32.mrf.mxu0
      %v2715 = vadd.f32 0.0, %v2714
      %2716 = vmatmul.bf16.gmra.mxu0 %v2691
      %v2717 = vpop.f32.mrf.mxu0
      %v2718 = vadd.f32 0.0, %v2717
      %v2719 = vpop.f32.mrf.mxu0
      %v2720 = vadd.f32 0.0, %v2719
      %2721 = vdwg.mxu0
      %2722 = vmatpush.bf16.msra.mxu0 0
      %2723 = vmatpush.bf16.msra.mxu0 0
      %2724 = vmatpush.bf16.msra.mxu0 0
      %2725 = vmatpush.bf16.msra.mxu0 0
      %2726 = vmatpush.bf16.msra.mxu0 0
      %2727 = vmatpush.bf16.msra.mxu0 0
      %2728 = vmatpush.bf16.msra.mxu0 %v2676
      %2729 = vmatpush.bf16.msra.mxu0 %v2674
      %2730 = vmatmul.bf16.gmra.mxu0 %v2682
      %v2731 = vpop.f32.mrf.mxu0
      %v2732 = vadd.f32 0.0, %v2731
      %v2733 = vpop.f32.mrf.mxu0
      %v2734 = vadd.f32 0.0, %v2733
      %2735 = vmatmul.bf16.gmra.mxu0 %v2685
      %v2736 = vpop.f32.mrf.mxu0
      %v2737 = vadd.f32 0.0, %v2736
      %v2738 = vpop.f32.mrf.mxu0
      %v2739 = vadd.f32 0.0, %v2738
      %2740 = vmatmul.bf16.gmra.mxu0 %v2688
      %v2741 = vpop.f32.mrf.mxu0
      %v2742 = vadd.f32 0.0, %v2741
      %v2743 = vpop.f32.mrf.mxu0
      %v2744 = vadd.f32 0.0, %v2743
      %2745 = vmatmul.bf16.gmra.mxu0 %v2691
      %v2746 = vpop.f32.mrf.mxu0
      %v2747 = vadd.f32 0.0, %v2746
      %v2748 = vpop.f32.mrf.mxu0
      %v2749 = vadd.f32 0.0, %v2748
      %2750 = vdwg.mxu0
      %v2751 = vadd.f32 %v2580, %v2703
      %v2752 = vadd.f32 %v2609, %v2732
      %v2753 = vadd.f32 %v2582, %v2705
      %v2754 = vadd.f32 %v2611, %v2734
      %v2755 = vadd.f32 %v2585, %v2708
      %v2756 = vadd.f32 %v2614, %v2737
      %v2757 = vadd.f32 %v2587, %v2710
      %v2758 = vadd.f32 %v2616, %v2739
      %v2759 = vadd.f32 %v2590, %v2713
      %v2760 = vadd.f32 %v2619, %v2742
      %v2761 = vadd.f32 %v2592, %v2715
      %v2762 = vadd.f32 %v2621, %v2744
      %v2763 = vadd.f32 %v2595, %v2718
      %v2764 = vadd.f32 %v2624, %v2747
      %v2765 = vadd.f32 %v2597, %v2720
      %v2766 = vadd.f32 %v2626, %v2749
      %s2767 = scalar_lea.vmem %s7, 96
      %v2768 = vld [vmem:[%s2767] sm:$0xf]
      %v2769 = vld [vmem:[%s2767 + $0x4] sm:$0xf]
      %v2770 = vld [vmem:[%s2767 + $0x8] sm:$0xf]
      %v2771 = vld [vmem:[%s2767 + $0xc] sm:$0xf]
      %v2772 = vld [vmem:[%s2767 + $0x10] sm:$0xf]
      %v2773 = vld [vmem:[%s2767 + $0x14] sm:$0xf]
      %v2774 = vld [vmem:[%s2767 + $0x18] sm:$0xf]
      %v2775 = vld [vmem:[%s2767 + $0x1c] sm:$0xf]
      %v2776 = vld [vmem:[#allocation3 + $0x18] sm:$0xff]
      %v2777 = vld [vmem:[#allocation3 + $0x38] sm:$0xff]
      %v2778 = vld [vmem:[#allocation3 + $0x58] sm:$0xff]
      %v2779 = vld [vmem:[#allocation3 + $0x78] sm:$0xff]
      %v2788 = vunpack.c.l.b16 %v2768
      %v2789 = vunpack.c.l.b16 %v2769
      %v2790 = vunpack.c.l.b16 %v2770
      %v2791 = vunpack.c.l.b16 %v2771
      %v2792 = vunpack.c.l.b16 %v2772
      %v2793 = vunpack.c.l.b16 %v2773
      %v2794 = vunpack.c.l.b16 %v2774
      %v2795 = vunpack.c.l.b16 %v2775
      %v2796 = vpack.c.b16 %v2789, %v2788
      %v2797 = vpack.c.b16 %v2791, %v2790
      %v2798 = vpack.c.b16 %v2793, %v2792
      %v2799 = vpack.c.b16 %v2795, %v2794
      %v2804 = vunpack.c.l.b16 %v2776
      %v2805 = vunpack.c.h.b16 %v2776
      %v2806 = vunpack.c.l.b16 %v2777
      %v2807 = vunpack.c.h.b16 %v2777
      %v2808 = vunpack.c.l.b16 %v2778
      %v2809 = vunpack.c.h.b16 %v2778
      %v2810 = vunpack.c.l.b16 %v2779
      %v2811 = vunpack.c.h.b16 %v2779
      %v2812 = vpack.c.b16 %v2806, %v2804
      %v2813 = vpack.c.b16 %v2807, %v2805
      %v2814 = vpack.c.b16 %v2810, %v2808
      %v2815 = vpack.c.b16 %v2811, %v2809
      %v2821 = vsel %vm2447, %v2796, 0
      %v2824 = vsel %vm2447, %v2797, 0
      %v2827 = vsel %vm2447, %v2798, 0
      %v2830 = vsel %vm2447, %v2799, 0
      %2832 = vmatpush.bf16.msra.mxu0 0
      %2833 = vmatpush.bf16.msra.mxu0 0
      %2834 = vmatpush.bf16.msra.mxu0 0
      %2835 = vmatpush.bf16.msra.mxu0 0
      %2836 = vmatpush.bf16.msra.mxu0 0
      %2837 = vmatpush.bf16.msra.mxu0 0
      %2838 = vmatpush.bf16.msra.mxu0 %v2814
      %2839 = vmatpush.bf16.msra.mxu0 %v2812
      %2840 = vmatmul.bf16.gmra.mxu0 %v2821
      %v2841 = vpop.f32.mrf.mxu0
      %v2842 = vadd.f32 0.0, %v2841
      %v2843 = vpop.f32.mrf.mxu0
      %v2844 = vadd.f32 0.0, %v2843
      %2845 = vmatmul.bf16.gmra.mxu0 %v2824
      %v2846 = vpop.f32.mrf.mxu0
      %v2847 = vadd.f32 0.0, %v2846
      %v2848 = vpop.f32.mrf.mxu0
      %v2849 = vadd.f32 0.0, %v2848
      %2850 = vmatmul.bf16.gmra.mxu0 %v2827
      %v2851 = vpop.f32.mrf.mxu0
      %v2852 = vadd.f32 0.0, %v2851
      %v2853 = vpop.f32.mrf.mxu0
      %v2854 = vadd.f32 0.0, %v2853
      %2855 = vmatmul.bf16.gmra.mxu0 %v2830
      %v2856 = vpop.f32.mrf.mxu0
      %v2857 = vadd.f32 0.0, %v2856
      %v2858 = vpop.f32.mrf.mxu0
      %v2859 = vadd.f32 0.0, %v2858
      %2860 = vdwg.mxu0
      %2861 = vmatpush.bf16.msra.mxu0 0
      %2862 = vmatpush.bf16.msra.mxu0 0
      %2863 = vmatpush.bf16.msra.mxu0 0
      %2864 = vmatpush.bf16.msra.mxu0 0
      %2865 = vmatpush.bf16.msra.mxu0 0
      %2866 = vmatpush.bf16.msra.mxu0 0
      %2867 = vmatpush.bf16.msra.mxu0 %v2815
      %2868 = vmatpush.bf16.msra.mxu0 %v2813
      %2869 = vmatmul.bf16.gmra.mxu0 %v2821
      %v2870 = vpop.f32.mrf.mxu0
      %v2871 = vadd.f32 0.0, %v2870
      %v2872 = vpop.f32.mrf.mxu0
      %v2873 = vadd.f32 0.0, %v2872
      %2874 = vmatmul.bf16.gmra.mxu0 %v2824
      %v2875 = vpop.f32.mrf.mxu0
      %v2876 = vadd.f32 0.0, %v2875
      %v2877 = vpop.f32.mrf.mxu0
      %v2878 = vadd.f32 0.0, %v2877
      %2879 = vmatmul.bf16.gmra.mxu0 %v2827
      %v2880 = vpop.f32.mrf.mxu0
      %v2881 = vadd.f32 0.0, %v2880
      %v2882 = vpop.f32.mrf.mxu0
      %v2883 = vadd.f32 0.0, %v2882
      %2884 = vmatmul.bf16.gmra.mxu0 %v2830
      %v2885 = vpop.f32.mrf.mxu0
      %v2886 = vadd.f32 0.0, %v2885
      %v2887 = vpop.f32.mrf.mxu0
      %v2888 = vadd.f32 0.0, %v2887
      %2889 = vdwg.mxu0
      %v2890 = vadd.f32 %v2751, %v2842
      %v2891 = vadd.f32 %v2752, %v2871
      %v2892 = vadd.f32 %v2753, %v2844
      %v2893 = vadd.f32 %v2754, %v2873
      %v2894 = vadd.f32 %v2755, %v2847
      %v2895 = vadd.f32 %v2756, %v2876
      %v2896 = vadd.f32 %v2757, %v2849
      %v2897 = vadd.f32 %v2758, %v2878
      %v2898 = vadd.f32 %v2759, %v2852
      %v2899 = vadd.f32 %v2760, %v2881
      %v2900 = vadd.f32 %v2761, %v2854
      %v2901 = vadd.f32 %v2762, %v2883
      %v2902 = vadd.f32 %v2763, %v2857
      %v2903 = vadd.f32 %v2764, %v2886
      %v2904 = vadd.f32 %v2765, %v2859
      %v2905 = vadd.f32 %v2766, %v2888
      %v2906 = vld [vmem:[%s8] sm:$0xff]
      %v2907 = vld [vmem:[%s8 + $0x8] sm:$0xff]
      %v2908 = vld [vmem:[%s8 + $0x10] sm:$0xff]
      %v2909 = vld [vmem:[%s8 + $0x18] sm:$0xff]
      %v2910 = vld [vmem:[%s8 + $0x20] sm:$0xff]
      %v2911 = vld [vmem:[%s8 + $0x28] sm:$0xff]
      %v2912 = vld [vmem:[%s8 + $0x30] sm:$0xff]
      %v2913 = vld [vmem:[%s8 + $0x38] sm:$0xff]
      %2915 = vset.pattern.permute.xlu0 0
      %2916 = vperm.xlu0 %2915, %v2906
      %v2917 = vpop.permute.xlu0 %2916
      %2920 = vset.pattern.permute.xlu0 0
      %2921 = vperm.xlu0 %2920, %v2907
      %v2922 = vpop.permute.xlu0 %2921
      %2925 = vset.pattern.permute.xlu0 0
      %2926 = vperm.xlu0 %2925, %v2908
      %v2927 = vpop.permute.xlu0 %2926
      %2930 = vset.pattern.permute.xlu0 0
      %2931 = vperm.xlu0 %2930, %v2909
      %v2932 = vpop.permute.xlu0 %2931
      %2935 = vset.pattern.permute.xlu0 0
      %2936 = vperm.xlu0 %2935, %v2910
      %v2937 = vpop.permute.xlu0 %2936
      %2940 = vset.pattern.permute.xlu0 0
      %2941 = vperm.xlu0 %2940, %v2911
      %v2942 = vpop.permute.xlu0 %2941
      %2945 = vset.pattern.permute.xlu0 0
      %2946 = vperm.xlu0 %2945, %v2912
      %v2947 = vpop.permute.xlu0 %2946
      %2950 = vset.pattern.permute.xlu0 0
      %2951 = vperm.xlu0 %2950, %v2913
      %v2952 = vpop.permute.xlu0 %2951
      %v2954 = vadd.f32 %v2890, %v2917
      %v2955 = vadd.f32 %v2891, %v2917
      %v2956 = vadd.f32 %v2892, %v2922
      %v2957 = vadd.f32 %v2893, %v2922
      %v2958 = vadd.f32 %v2894, %v2927
      %v2959 = vadd.f32 %v2895, %v2927
      %v2960 = vadd.f32 %v2896, %v2932
      %v2961 = vadd.f32 %v2897, %v2932
      %v2962 = vadd.f32 %v2898, %v2937
      %v2963 = vadd.f32 %v2899, %v2937
      %v2964 = vadd.f32 %v2900, %v2942
      %v2965 = vadd.f32 %v2901, %v2942
      %v2966 = vadd.f32 %v2902, %v2947
      %v2967 = vadd.f32 %v2903, %v2947
      %v2968 = vadd.f32 %v2904, %v2952
      %v2969 = vadd.f32 %v2905, %v2952
      %v2970 = vmax.f32 %v2954, 0.0
      %v2971 = vmax.f32 %v2955, 0.0
      %v2972 = vmax.f32 %v2956, 0.0
      %v2973 = vmax.f32 %v2957, 0.0
      %v2974 = vmax.f32 %v2958, 0.0
      %v2975 = vmax.f32 %v2959, 0.0
      %v2976 = vmax.f32 %v2960, 0.0
      %v2977 = vmax.f32 %v2961, 0.0
      %v2978 = vmax.f32 %v2962, 0.0
      %v2979 = vmax.f32 %v2963, 0.0
      %v2980 = vmax.f32 %v2964, 0.0
      %v2981 = vmax.f32 %v2965, 0.0
      %v2982 = vmax.f32 %v2966, 0.0
      %v2983 = vmax.f32 %v2967, 0.0
      %v2984 = vmax.f32 %v2968, 0.0
      %v2985 = vmax.f32 %v2969, 0.0
      %v2986 = vld [vmem:[%s9] sm:$0xf]
      %v2987 = vld [vmem:[%s9 + $0x4] sm:$0xf]
      %v2988 = vld [vmem:[%s9 + $0x8] sm:$0xf]
      %v2989 = vld [vmem:[%s9 + $0xc] sm:$0xf]
      %v2990 = vld [vmem:[%s9 + $0x10] sm:$0xf]
      %v2991 = vld [vmem:[%s9 + $0x14] sm:$0xf]
      %v2992 = vld [vmem:[%s9 + $0x18] sm:$0xf]
      %v2993 = vld [vmem:[%s9 + $0x1c] sm:$0xf]
      %v2994 = vld [vmem:[%s9 + $0x20] sm:$0xf]
      %v2995 = vld [vmem:[%s9 + $0x24] sm:$0xf]
      %v2996 = vld [vmem:[%s9 + $0x28] sm:$0xf]
      %v2997 = vld [vmem:[%s9 + $0x2c] sm:$0xf]
      %v2998 = vld [vmem:[%s9 + $0x30] sm:$0xf]
      %v2999 = vld [vmem:[%s9 + $0x34] sm:$0xf]
      %v3000 = vld [vmem:[%s9 + $0x38] sm:$0xf]
      %v3001 = vld [vmem:[%s9 + $0x3c] sm:$0xf]
      %v3002 = vpack.c.bf16 %v2972, %v2970
      %v3003 = vpack.c.bf16 %v2976, %v2974
      %v3004 = vpack.c.bf16 %v2980, %v2978
      %v3005 = vpack.c.bf16 %v2984, %v2982
      %s3006 = scalar_lea.vmem %s9, 64
      %v3007 = vld [vmem:[%s3006] sm:$0xf]
      %v3008 = vld [vmem:[%s3006 + $0x4] sm:$0xf]
      %v3009 = vld [vmem:[%s3006 + $0x8] sm:$0xf]
      %v3010 = vld [vmem:[%s3006 + $0xc] sm:$0xf]
      %v3011 = vld [vmem:[%s3006 + $0x10] sm:$0xf]
      %v3012 = vld [vmem:[%s3006 + $0x14] sm:$0xf]
      %v3013 = vld [vmem:[%s3006 + $0x18] sm:$0xf]
      %v3014 = vld [vmem:[%s3006 + $0x1c] sm:$0xf]
      %v3015 = vld [vmem:[%s3006 + $0x20] sm:$0xf]
      %v3016 = vld [vmem:[%s3006 + $0x24] sm:$0xf]
      %v3017 = vld [vmem:[%s3006 + $0x28] sm:$0xf]
      %v3018 = vld [vmem:[%s3006 + $0x2c] sm:$0xf]
      %v3019 = vld [vmem:[%s3006 + $0x30] sm:$0xf]
      %v3020 = vld [vmem:[%s3006 + $0x34] sm:$0xf]
      %v3021 = vld [vmem:[%s3006 + $0x38] sm:$0xf]
      %v3022 = vld [vmem:[%s3006 + $0x3c] sm:$0xf]
      %v3039 = vunpack.c.l.b16 %v3007
      %v3040 = vunpack.c.l.b16 %v3008
      %v3041 = vunpack.c.l.b16 %v3009
      %v3042 = vunpack.c.l.b16 %v3010
      %v3043 = vunpack.c.l.b16 %v3011
      %v3044 = vunpack.c.l.b16 %v3012
      %v3045 = vunpack.c.l.b16 %v3013
      %v3046 = vunpack.c.l.b16 %v3014
      %v3047 = vunpack.c.l.b16 %v3015
      %v3048 = vunpack.c.l.b16 %v3016
      %v3049 = vunpack.c.l.b16 %v3017
      %v3050 = vunpack.c.l.b16 %v3018
      %v3051 = vunpack.c.l.b16 %v3019
      %v3052 = vunpack.c.l.b16 %v3020
      %v3053 = vunpack.c.l.b16 %v3021
      %v3054 = vunpack.c.l.b16 %v3022
      %v3055 = vpack.c.b16 %v3040, %v3039
      %v3056 = vpack.c.b16 %v3042, %v3041
      %v3057 = vpack.c.b16 %v3044, %v3043
      %v3058 = vpack.c.b16 %v3046, %v3045
      %v3059 = vpack.c.b16 %v3048, %v3047
      %v3060 = vpack.c.b16 %v3050, %v3049
      %v3061 = vpack.c.b16 %v3052, %v3051
      %v3062 = vpack.c.b16 %v3054, %v3053
      %3067 = vrot.lane.b32.xlu0 %v3002, 64
      %v3068 = vpop.permute.xlu0 %3067
      %3069 = vrot.lane.b32.xlu0 %v3003, 64
      %v3070 = vpop.permute.xlu0 %3069
      %3071 = vrot.lane.b32.xlu0 %v3004, 64
      %v3072 = vpop.permute.xlu0 %3071
      %3073 = vrot.lane.b32.xlu0 %v3005, 64
      %v3074 = vpop.permute.xlu0 %3073
      %vm3079 = vcmask 523264
      %v3081 = vsel %vm3079, %v3055, 0
      %v3084 = vsel %vm3079, %v3056, 0
      %v3087 = vsel %vm3079, %v3057, 0
      %v3090 = vsel %vm3079, %v3058, 0
      %v3093 = vsel %vm3079, %v3059, 0
      %v3096 = vsel %vm3079, %v3060, 0
      %v3099 = vsel %vm3079, %v3061, 0
      %v3102 = vsel %vm3079, %v3062, 0
      %3104 = vmatpush.bf16.msra.mxu0 0
      %3105 = vmatpush.bf16.msra.mxu0 0
      %3106 = vmatpush.bf16.msra.mxu0 0
      %3107 = vmatpush.bf16.msra.mxu0 0
      %3108 = vmatpush.bf16.msra.mxu0 %v3074
      %3109 = vmatpush.bf16.msra.mxu0 %v3072
      %3110 = vmatpush.bf16.msra.mxu0 %v3070
      %3111 = vmatpush.bf16.msra.mxu0 %v3068
      %3112 = vmatmul.bf16.gmra.mxu0 %v3081
      %v3113 = vpop.f32.mrf.mxu0
      %v3114 = vadd.f32 0.0, %v3113
      %v3115 = vpop.f32.mrf.mxu0
      %v3116 = vadd.f32 0.0, %v3115
      %3117 = vmatmul.bf16.gmra.mxu0 %v3084
      %v3118 = vpop.f32.mrf.mxu0
      %v3119 = vadd.f32 0.0, %v3118
      %v3120 = vpop.f32.mrf.mxu0
      %v3121 = vadd.f32 0.0, %v3120
      %3122 = vmatmul.bf16.gmra.mxu0 %v3087
      %v3123 = vpop.f32.mrf.mxu0
      %v3124 = vadd.f32 0.0, %v3123
      %v3125 = vpop.f32.mrf.mxu0
      %v3126 = vadd.f32 0.0, %v3125
      %3127 = vmatmul.bf16.gmra.mxu0 %v3090
      %v3128 = vpop.f32.mrf.mxu0
      %v3129 = vadd.f32 0.0, %v3128
      %v3130 = vpop.f32.mrf.mxu0
      %v3131 = vadd.f32 0.0, %v3130
      %3132 = vmatmul.bf16.gmra.mxu0 %v3093
      %v3133 = vpop.f32.mrf.mxu0
      %v3134 = vadd.f32 0.0, %v3133
      %v3135 = vpop.f32.mrf.mxu0
      %v3136 = vadd.f32 0.0, %v3135
      %3137 = vmatmul.bf16.gmra.mxu0 %v3096
      %v3138 = vpop.f32.mrf.mxu0
      %v3139 = vadd.f32 0.0, %v3138
      %v3140 = vpop.f32.mrf.mxu0
      %v3141 = vadd.f32 0.0, %v3140
      %3142 = vmatmul.bf16.gmra.mxu0 %v3099
      %v3143 = vpop.f32.mrf.mxu0
      %v3144 = vadd.f32 0.0, %v3143
      %v3145 = vpop.f32.mrf.mxu0
      %v3146 = vadd.f32 0.0, %v3145
      %3147 = vmatmul.bf16.gmra.mxu0 %v3102
      %v3148 = vpop.f32.mrf.mxu0
      %v3149 = vadd.f32 0.0, %v3148
      %v3150 = vpop.f32.mrf.mxu0
      %v3151 = vadd.f32 0.0, %v3150
      %3152 = vdwg.mxu0
      %v3169 = vunpack.c.l.b16 %v2986
      %v3170 = vunpack.c.l.b16 %v2987
      %v3171 = vunpack.c.l.b16 %v2988
      %v3172 = vunpack.c.l.b16 %v2989
      %v3173 = vunpack.c.l.b16 %v2990
      %v3174 = vunpack.c.l.b16 %v2991
      %v3175 = vunpack.c.l.b16 %v2992
      %v3176 = vunpack.c.l.b16 %v2993
      %v3177 = vunpack.c.l.b16 %v2994
      %v3178 = vunpack.c.l.b16 %v2995
      %v3179 = vunpack.c.l.b16 %v2996
      %v3180 = vunpack.c.l.b16 %v2997
      %v3181 = vunpack.c.l.b16 %v2998
      %v3182 = vunpack.c.l.b16 %v2999
      %v3183 = vunpack.c.l.b16 %v3000
      %v3184 = vunpack.c.l.b16 %v3001
      %v3185 = vpack.c.b16 %v3170, %v3169
      %v3186 = vpack.c.b16 %v3172, %v3171
      %v3187 = vpack.c.b16 %v3174, %v3173
      %v3188 = vpack.c.b16 %v3176, %v3175
      %v3189 = vpack.c.b16 %v3178, %v3177
      %v3190 = vpack.c.b16 %v3180, %v3179
      %v3191 = vpack.c.b16 %v3182, %v3181
      %v3192 = vpack.c.b16 %v3184, %v3183
      %v3194 = vsel %vm3079, %v3185, 0
      %v3197 = vsel %vm3079, %v3186, 0
      %v3200 = vsel %vm3079, %v3187, 0
      %v3203 = vsel %vm3079, %v3188, 0
      %v3206 = vsel %vm3079, %v3189, 0
      %v3209 = vsel %vm3079, %v3190, 0
      %v3212 = vsel %vm3079, %v3191, 0
      %v3215 = vsel %vm3079, %v3192, 0
      %3217 = vmatpush.bf16.msra.mxu0 0
      %3218 = vmatpush.bf16.msra.mxu0 0
      %3219 = vmatpush.bf16.msra.mxu0 0
      %3220 = vmatpush.bf16.msra.mxu0 0
      %3221 = vmatpush.bf16.msra.mxu0 %v3005
      %3222 = vmatpush.bf16.msra.mxu0 %v3004
      %3223 = vmatpush.bf16.msra.mxu0 %v3003
      %3224 = vmatpush.bf16.msra.mxu0 %v3002
      %3225 = vmatmul.bf16.gmra.mxu0 %v3194
      %v3226 = vpop.f32.mrf.mxu0
      %v3227 = vadd.f32 %v3114, %v3226
      %v3228 = vpop.f32.mrf.mxu0
      %v3229 = vadd.f32 %v3116, %v3228
      %3230 = vmatmul.bf16.gmra.mxu0 %v3197
      %v3231 = vpop.f32.mrf.mxu0
      %v3232 = vadd.f32 %v3119, %v3231
      %v3233 = vpop.f32.mrf.mxu0
      %v3234 = vadd.f32 %v3121, %v3233
      %3235 = vmatmul.bf16.gmra.mxu0 %v3200
      %v3236 = vpop.f32.mrf.mxu0
      %v3237 = vadd.f32 %v3124, %v3236
      %v3238 = vpop.f32.mrf.mxu0
      %v3239 = vadd.f32 %v3126, %v3238
      %3240 = vmatmul.bf16.gmra.mxu0 %v3203
      %v3241 = vpop.f32.mrf.mxu0
      %v3242 = vadd.f32 %v3129, %v3241
      %v3243 = vpop.f32.mrf.mxu0
      %v3244 = vadd.f32 %v3131, %v3243
      %3245 = vmatmul.bf16.gmra.mxu0 %v3206
      %v3246 = vpop.f32.mrf.mxu0
      %v3247 = vadd.f32 %v3134, %v3246
      %v3248 = vpop.f32.mrf.mxu0
      %v3249 = vadd.f32 %v3136, %v3248
      %3250 = vmatmul.bf16.gmra.mxu0 %v3209
      %v3251 = vpop.f32.mrf.mxu0
      %v3252 = vadd.f32 %v3139, %v3251
      %v3253 = vpop.f32.mrf.mxu0
      %v3254 = vadd.f32 %v3141, %v3253
      %3255 = vmatmul.bf16.gmra.mxu0 %v3212
      %v3256 = vpop.f32.mrf.mxu0
      %v3257 = vadd.f32 %v3144, %v3256
      %v3258 = vpop.f32.mrf.mxu0
      %v3259 = vadd.f32 %v3146, %v3258
      %3260 = vmatmul.bf16.gmra.mxu0 %v3215
      %v3261 = vpop.f32.mrf.mxu0
      %v3262 = vadd.f32 %v3149, %v3261
      %v3263 = vpop.f32.mrf.mxu0
      %v3264 = vadd.f32 %v3151, %v3263
      %3265 = vdwg.mxu0
      %s3266 = scalar_lea.vmem %s9, 128
      %v3267 = vld [vmem:[%s3266] sm:$0xf]
      %v3268 = vld [vmem:[%s3266 + $0x4] sm:$0xf]
      %v3269 = vld [vmem:[%s3266 + $0x8] sm:$0xf]
      %v3270 = vld [vmem:[%s3266 + $0xc] sm:$0xf]
      %v3271 = vld [vmem:[%s3266 + $0x10] sm:$0xf]
      %v3272 = vld [vmem:[%s3266 + $0x14] sm:$0xf]
      %v3273 = vld [vmem:[%s3266 + $0x18] sm:$0xf]
      %v3274 = vld [vmem:[%s3266 + $0x1c] sm:$0xf]
      %v3275 = vld [vmem:[%s3266 + $0x20] sm:$0xf]
      %v3276 = vld [vmem:[%s3266 + $0x24] sm:$0xf]
      %v3277 = vld [vmem:[%s3266 + $0x28] sm:$0xf]
      %v3278 = vld [vmem:[%s3266 + $0x2c] sm:$0xf]
      %v3279 = vld [vmem:[%s3266 + $0x30] sm:$0xf]
      %v3280 = vld [vmem:[%s3266 + $0x34] sm:$0xf]
      %v3281 = vld [vmem:[%s3266 + $0x38] sm:$0xf]
      %v3282 = vld [vmem:[%s3266 + $0x3c] sm:$0xf]
      %v3283 = vpack.c.bf16 %v2973, %v2971
      %v3284 = vpack.c.bf16 %v2977, %v2975
      %v3285 = vpack.c.bf16 %v2981, %v2979
      %v3286 = vpack.c.bf16 %v2985, %v2983
      %v3303 = vunpack.c.l.b16 %v3267
      %v3304 = vunpack.c.l.b16 %v3268
      %v3305 = vunpack.c.l.b16 %v3269
      %v3306 = vunpack.c.l.b16 %v3270
      %v3307 = vunpack.c.l.b16 %v3271
      %v3308 = vunpack.c.l.b16 %v3272
      %v3309 = vunpack.c.l.b16 %v3273
      %v3310 = vunpack.c.l.b16 %v3274
      %v3311 = vunpack.c.l.b16 %v3275
      %v3312 = vunpack.c.l.b16 %v3276
      %v3313 = vunpack.c.l.b16 %v3277
      %v3314 = vunpack.c.l.b16 %v3278
      %v3315 = vunpack.c.l.b16 %v3279
      %v3316 = vunpack.c.l.b16 %v3280
      %v3317 = vunpack.c.l.b16 %v3281
      %v3318 = vunpack.c.l.b16 %v3282
      %v3319 = vpack.c.b16 %v3304, %v3303
      %v3320 = vpack.c.b16 %v3306, %v3305
      %v3321 = vpack.c.b16 %v3308, %v3307
      %v3322 = vpack.c.b16 %v3310, %v3309
      %v3323 = vpack.c.b16 %v3312, %v3311
      %v3324 = vpack.c.b16 %v3314, %v3313
      %v3325 = vpack.c.b16 %v3316, %v3315
      %v3326 = vpack.c.b16 %v3318, %v3317
      %v3328 = vsel %vm3079, %v3319, 0
      %v3331 = vsel %vm3079, %v3320, 0
      %v3334 = vsel %vm3079, %v3321, 0
      %v3337 = vsel %vm3079, %v3322, 0
      %v3340 = vsel %vm3079, %v3323, 0
      %v3343 = vsel %vm3079, %v3324, 0
      %v3346 = vsel %vm3079, %v3325, 0
      %v3349 = vsel %vm3079, %v3326, 0
      %3351 = vmatpush.bf16.msra.mxu0 0
      %3352 = vmatpush.bf16.msra.mxu0 0
      %3353 = vmatpush.bf16.msra.mxu0 0
      %3354 = vmatpush.bf16.msra.mxu0 0
      %3355 = vmatpush.bf16.msra.mxu0 %v3286
      %3356 = vmatpush.bf16.msra.mxu0 %v3285
      %3357 = vmatpush.bf16.msra.mxu0 %v3284
      %3358 = vmatpush.bf16.msra.mxu0 %v3283
      %3359 = vmatmul.bf16.gmra.mxu0 %v3328
      %v3360 = vpop.f32.mrf.mxu0
      %v3361 = vadd.f32 0.0, %v3360
      %v3362 = vpop.f32.mrf.mxu0
      %v3363 = vadd.f32 0.0, %v3362
      %3364 = vmatmul.bf16.gmra.mxu0 %v3331
      %v3365 = vpop.f32.mrf.mxu0
      %v3366 = vadd.f32 0.0, %v3365
      %v3367 = vpop.f32.mrf.mxu0
      %v3368 = vadd.f32 0.0, %v3367
      %3369 = vmatmul.bf16.gmra.mxu0 %v3334
      %v3370 = vpop.f32.mrf.mxu0
      %v3371 = vadd.f32 0.0, %v3370
      %v3372 = vpop.f32.mrf.mxu0
      %v3373 = vadd.f32 0.0, %v3372
      %3374 = vmatmul.bf16.gmra.mxu0 %v3337
      %v3375 = vpop.f32.mrf.mxu0
      %v3376 = vadd.f32 0.0, %v3375
      %v3377 = vpop.f32.mrf.mxu0
      %v3378 = vadd.f32 0.0, %v3377
      %3379 = vmatmul.bf16.gmra.mxu0 %v3340
      %v3380 = vpop.f32.mrf.mxu0
      %v3381 = vadd.f32 0.0, %v3380
      %v3382 = vpop.f32.mrf.mxu0
      %v3383 = vadd.f32 0.0, %v3382
      %3384 = vmatmul.bf16.gmra.mxu0 %v3343
      %v3385 = vpop.f32.mrf.mxu0
      %v3386 = vadd.f32 0.0, %v3385
      %v3387 = vpop.f32.mrf.mxu0
      %v3388 = vadd.f32 0.0, %v3387
      %3389 = vmatmul.bf16.gmra.mxu0 %v3346
      %v3390 = vpop.f32.mrf.mxu0
      %v3391 = vadd.f32 0.0, %v3390
      %v3392 = vpop.f32.mrf.mxu0
      %v3393 = vadd.f32 0.0, %v3392
      %3394 = vmatmul.bf16.gmra.mxu0 %v3349
      %v3395 = vpop.f32.mrf.mxu0
      %v3396 = vadd.f32 0.0, %v3395
      %v3397 = vpop.f32.mrf.mxu0
      %v3398 = vadd.f32 0.0, %v3397
      %3399 = vdwg.mxu0
      %v3400 = vadd.f32 %v3227, %v3361
      %v3401 = vadd.f32 %v3229, %v3363
      %v3402 = vadd.f32 %v3232, %v3366
      %v3403 = vadd.f32 %v3234, %v3368
      %v3404 = vadd.f32 %v3237, %v3371
      %v3405 = vadd.f32 %v3239, %v3373
      %v3406 = vadd.f32 %v3242, %v3376
      %v3407 = vadd.f32 %v3244, %v3378
      %v3408 = vadd.f32 %v3247, %v3381
      %v3409 = vadd.f32 %v3249, %v3383
      %v3410 = vadd.f32 %v3252, %v3386
      %v3411 = vadd.f32 %v3254, %v3388
      %v3412 = vadd.f32 %v3257, %v3391
      %v3413 = vadd.f32 %v3259, %v3393
      %v3414 = vadd.f32 %v3262, %v3396
      %v3415 = vadd.f32 %v3264, %v3398
      %s3416 = scalar_lea.vmem %s9, 192
      %v3417 = vld [vmem:[%s3416] sm:$0xf]
      %v3418 = vld [vmem:[%s3416 + $0x4] sm:$0xf]
      %v3419 = vld [vmem:[%s3416 + $0x8] sm:$0xf]
      %v3420 = vld [vmem:[%s3416 + $0xc] sm:$0xf]
      %v3421 = vld [vmem:[%s3416 + $0x10] sm:$0xf]
      %v3422 = vld [vmem:[%s3416 + $0x14] sm:$0xf]
      %v3423 = vld [vmem:[%s3416 + $0x18] sm:$0xf]
      %v3424 = vld [vmem:[%s3416 + $0x1c] sm:$0xf]
      %v3425 = vld [vmem:[%s3416 + $0x20] sm:$0xf]
      %v3426 = vld [vmem:[%s3416 + $0x24] sm:$0xf]
      %v3427 = vld [vmem:[%s3416 + $0x28] sm:$0xf]
      %v3428 = vld [vmem:[%s3416 + $0x2c] sm:$0xf]
      %v3429 = vld [vmem:[%s3416 + $0x30] sm:$0xf]
      %v3430 = vld [vmem:[%s3416 + $0x34] sm:$0xf]
      %v3431 = vld [vmem:[%s3416 + $0x38] sm:$0xf]
      %v3432 = vld [vmem:[%s3416 + $0x3c] sm:$0xf]
      %v3449 = vunpack.c.l.b16 %v3417
      %v3450 = vunpack.c.l.b16 %v3418
      %v3451 = vunpack.c.l.b16 %v3419
      %v3452 = vunpack.c.l.b16 %v3420
      %v3453 = vunpack.c.l.b16 %v3421
      %v3454 = vunpack.c.l.b16 %v3422
      %v3455 = vunpack.c.l.b16 %v3423
      %v3456 = vunpack.c.l.b16 %v3424
      %v3457 = vunpack.c.l.b16 %v3425
      %v3458 = vunpack.c.l.b16 %v3426
      %v3459 = vunpack.c.l.b16 %v3427
      %v3460 = vunpack.c.l.b16 %v3428
      %v3461 = vunpack.c.l.b16 %v3429
      %v3462 = vunpack.c.l.b16 %v3430
      %v3463 = vunpack.c.l.b16 %v3431
      %v3464 = vunpack.c.l.b16 %v3432
      %v3465 = vpack.c.b16 %v3450, %v3449
      %v3466 = vpack.c.b16 %v3452, %v3451
      %v3467 = vpack.c.b16 %v3454, %v3453
      %v3468 = vpack.c.b16 %v3456, %v3455
      %v3469 = vpack.c.b16 %v3458, %v3457
      %v3470 = vpack.c.b16 %v3460, %v3459
      %v3471 = vpack.c.b16 %v3462, %v3461
      %v3472 = vpack.c.b16 %v3464, %v3463
      %3477 = vrot.lane.b32.xlu0 %v3283, 64
      %v3478 = vpop.permute.xlu0 %3477
      %3479 = vrot.lane.b32.xlu0 %v3284, 64
      %v3480 = vpop.permute.xlu0 %3479
      %3481 = vrot.lane.b32.xlu0 %v3285, 64
      %v3482 = vpop.permute.xlu0 %3481
      %3483 = vrot.lane.b32.xlu0 %v3286, 64
      %v3484 = vpop.permute.xlu0 %3483
      %v3490 = vsel %vm3079, %v3465, 0
      %v3493 = vsel %vm3079, %v3466, 0
      %v3496 = vsel %vm3079, %v3467, 0
      %v3499 = vsel %vm3079, %v3468, 0
      %v3502 = vsel %vm3079, %v3469, 0
      %v3505 = vsel %vm3079, %v3470, 0
      %v3508 = vsel %vm3079, %v3471, 0
      %v3511 = vsel %vm3079, %v3472, 0
      %3513 = vmatpush.bf16.msra.mxu0 0
      %3514 = vmatpush.bf16.msra.mxu0 0
      %3515 = vmatpush.bf16.msra.mxu0 0
      %3516 = vmatpush.bf16.msra.mxu0 0
      %3517 = vmatpush.bf16.msra.mxu0 %v3484
      %3518 = vmatpush.bf16.msra.mxu0 %v3482
      %3519 = vmatpush.bf16.msra.mxu0 %v3480
      %3520 = vmatpush.bf16.msra.mxu0 %v3478
      %3521 = vmatmul.bf16.gmra.mxu0 %v3490
      %v3522 = vpop.f32.mrf.mxu0
      %v3523 = vadd.f32 0.0, %v3522
      %v3524 = vpop.f32.mrf.mxu0
      %v3525 = vadd.f32 0.0, %v3524
      %3526 = vmatmul.bf16.gmra.mxu0 %v3493
      %v3527 = vpop.f32.mrf.mxu0
      %v3528 = vadd.f32 0.0, %v3527
      %v3529 = vpop.f32.mrf.mxu0
      %v3530 = vadd.f32 0.0, %v3529
      %3531 = vmatmul.bf16.gmra.mxu0 %v3496
      %v3532 = vpop.f32.mrf.mxu0
      %v3533 = vadd.f32 0.0, %v3532
      %v3534 = vpop.f32.mrf.mxu0
      %v3535 = vadd.f32 0.0, %v3534
      %3536 = vmatmul.bf16.gmra.mxu0 %v3499
      %v3537 = vpop.f32.mrf.mxu0
      %v3538 = vadd.f32 0.0, %v3537
      %v3539 = vpop.f32.mrf.mxu0
      %v3540 = vadd.f32 0.0, %v3539
      %3541 = vmatmul.bf16.gmra.mxu0 %v3502
      %v3542 = vpop.f32.mrf.mxu0
      %v3543 = vadd.f32 0.0, %v3542
      %v3544 = vpop.f32.mrf.mxu0
      %v3545 = vadd.f32 0.0, %v3544
      %3546 = vmatmul.bf16.gmra.mxu0 %v3505
      %v3547 = vpop.f32.mrf.mxu0
      %v3548 = vadd.f32 0.0, %v3547
      %v3549 = vpop.f32.mrf.mxu0
      %v3550 = vadd.f32 0.0, %v3549
      %3551 = vmatmul.bf16.gmra.mxu0 %v3508
      %v3552 = vpop.f32.mrf.mxu0
      %v3553 = vadd.f32 0.0, %v3552
      %v3554 = vpop.f32.mrf.mxu0
      %v3555 = vadd.f32 0.0, %v3554
      %3556 = vmatmul.bf16.gmra.mxu0 %v3511
      %v3557 = vpop.f32.mrf.mxu0
      %v3558 = vadd.f32 0.0, %v3557
      %v3559 = vpop.f32.mrf.mxu0
      %v3560 = vadd.f32 0.0, %v3559
      %3561 = vdwg.mxu0
      %v3562 = vadd.f32 %v3400, %v3523
      %v3563 = vadd.f32 %v3401, %v3525
      %v3564 = vadd.f32 %v3402, %v3528
      %v3565 = vadd.f32 %v3403, %v3530
      %v3566 = vadd.f32 %v3404, %v3533
      %v3567 = vadd.f32 %v3405, %v3535
      %v3568 = vadd.f32 %v3406, %v3538
      %v3569 = vadd.f32 %v3407, %v3540
      %v3570 = vadd.f32 %v3408, %v3543
      %v3571 = vadd.f32 %v3409, %v3545
      %v3572 = vadd.f32 %v3410, %v3548
      %v3573 = vadd.f32 %v3411, %v3550
      %v3574 = vadd.f32 %v3412, %v3553
      %v3575 = vadd.f32 %v3413, %v3555
      %v3576 = vadd.f32 %v3414, %v3558
      %v3577 = vadd.f32 %v3415, %v3560
      %v3578 = vld [vmem:[%s10] sm:$0xff]
      %v3579 = vld [vmem:[%s10 + $0x8] sm:$0xff]
      %v3580 = vld [vmem:[%s10 + $0x10] sm:$0xff]
      %v3581 = vld [vmem:[%s10 + $0x18] sm:$0xff]
      %v3582 = vld [vmem:[%s10 + $0x20] sm:$0xff]
      %v3583 = vld [vmem:[%s10 + $0x28] sm:$0xff]
      %v3584 = vld [vmem:[%s10 + $0x30] sm:$0xff]
      %v3585 = vld [vmem:[%s10 + $0x38] sm:$0xff]
      %v3586 = vld [vmem:[%s10 + $0x40] sm:$0xff]
      %v3587 = vld [vmem:[%s10 + $0x48] sm:$0xff]
      %v3588 = vld [vmem:[%s10 + $0x50] sm:$0xff]
      %v3589 = vld [vmem:[%s10 + $0x58] sm:$0xff]
      %v3590 = vld [vmem:[%s10 + $0x60] sm:$0xff]
      %v3591 = vld [vmem:[%s10 + $0x68] sm:$0xff]
      %v3592 = vld [vmem:[%s10 + $0x70] sm:$0xff]
      %v3593 = vld [vmem:[%s10 + $0x78] sm:$0xff]
      %3595 = vset.pattern.permute.xlu0 0
      %3596 = vperm.xlu0 %3595, %v3578
      %v3597 = vpop.permute.xlu0 %3596
      %3600 = vset.pattern.permute.xlu0 0
      %3601 = vperm.xlu0 %3600, %v3579
      %v3602 = vpop.permute.xlu0 %3601
      %3605 = vset.pattern.permute.xlu0 0
      %3606 = vperm.xlu0 %3605, %v3580
      %v3607 = vpop.permute.xlu0 %3606
      %3610 = vset.pattern.permute.xlu0 0
      %3611 = vperm.xlu0 %3610, %v3581
      %v3612 = vpop.permute.xlu0 %3611
      %3615 = vset.pattern.permute.xlu0 0
      %3616 = vperm.xlu0 %3615, %v3582
      %v3617 = vpop.permute.xlu0 %3616
      %3620 = vset.pattern.permute.xlu0 0
      %3621 = vperm.xlu0 %3620, %v3583
      %v3622 = vpop.permute.xlu0 %3621
      %3625 = vset.pattern.permute.xlu0 0
      %3626 = vperm.xlu0 %3625, %v3584
      %v3627 = vpop.permute.xlu0 %3626
      %3630 = vset.pattern.permute.xlu0 0
      %3631 = vperm.xlu0 %3630, %v3585
      %v3632 = vpop.permute.xlu0 %3631
      %3635 = vset.pattern.permute.xlu0 0
      %3636 = vperm.xlu0 %3635, %v3586
      %v3637 = vpop.permute.xlu0 %3636
      %3640 = vset.pattern.permute.xlu0 0
      %3641 = vperm.xlu0 %3640, %v3587
      %v3642 = vpop.permute.xlu0 %3641
      %3645 = vset.pattern.permute.xlu0 0
      %3646 = vperm.xlu0 %3645, %v3588
      %v3647 = vpop.permute.xlu0 %3646
      %3650 = vset.pattern.permute.xlu0 0
      %3651 = vperm.xlu0 %3650, %v3589
      %v3652 = vpop.permute.xlu0 %3651
      %3655 = vset.pattern.permute.xlu0 0
      %3656 = vperm.xlu0 %3655, %v3590
      %v3657 = vpop.permute.xlu0 %3656
      %3660 = vset.pattern.permute.xlu0 0
      %3661 = vperm.xlu0 %3660, %v3591
      %v3662 = vpop.permute.xlu0 %3661
      %3665 = vset.pattern.permute.xlu0 0
      %3666 = vperm.xlu0 %3665, %v3592
      %v3667 = vpop.permute.xlu0 %3666
      %3670 = vset.pattern.permute.xlu0 0
      %3671 = vperm.xlu0 %3670, %v3593
      %v3672 = vpop.permute.xlu0 %3671
      %v3674 = vadd.f32 %v3562, %v3597
      %v3675 = vadd.f32 %v3563, %v3602
      %v3676 = vadd.f32 %v3564, %v3607
      %v3677 = vadd.f32 %v3565, %v3612
      %v3678 = vadd.f32 %v3566, %v3617
      %v3679 = vadd.f32 %v3567, %v3622
      %v3680 = vadd.f32 %v3568, %v3627
      %v3681 = vadd.f32 %v3569, %v3632
      %v3682 = vadd.f32 %v3570, %v3637
      %v3683 = vadd.f32 %v3571, %v3642
      %v3684 = vadd.f32 %v3572, %v3647
      %v3685 = vadd.f32 %v3573, %v3652
      %v3686 = vadd.f32 %v3574, %v3657
      %v3687 = vadd.f32 %v3575, %v3662
      %v3688 = vadd.f32 %v3576, %v3667
      %v3689 = vadd.f32 %v3577, %v3672
      %v3690 = vmax.f32 %v3674, 0.0
      %v3691 = vmax.f32 %v3675, 0.0
      %v3692 = vmax.f32 %v3676, 0.0
      %v3693 = vmax.f32 %v3677, 0.0
      %v3694 = vmax.f32 %v3678, 0.0
      %v3695 = vmax.f32 %v3679, 0.0
      %v3696 = vmax.f32 %v3680, 0.0
      %v3697 = vmax.f32 %v3681, 0.0
      %v3698 = vmax.f32 %v3682, 0.0
      %v3699 = vmax.f32 %v3683, 0.0
      %v3700 = vmax.f32 %v3684, 0.0
      %v3701 = vmax.f32 %v3685, 0.0
      %v3702 = vmax.f32 %v3686, 0.0
      %v3703 = vmax.f32 %v3687, 0.0
      %v3704 = vmax.f32 %v3688, 0.0
      %v3705 = vmax.f32 %v3689, 0.0
      %v3706 = vpack.c.bf16 %v3690, %v3690
      %v3707 = vpack.c.bf16 %v3691, %v3691
      %v3708 = vpack.c.bf16 %v3692, %v3692
      %v3709 = vpack.c.bf16 %v3693, %v3693
      %v3710 = vpack.c.bf16 %v3694, %v3694
      %v3711 = vpack.c.bf16 %v3695, %v3695
      %v3712 = vpack.c.bf16 %v3696, %v3696
      %v3713 = vpack.c.bf16 %v3697, %v3697
      %v3714 = vpack.c.bf16 %v3698, %v3698
      %v3715 = vpack.c.bf16 %v3699, %v3699
      %v3716 = vpack.c.bf16 %v3700, %v3700
      %v3717 = vpack.c.bf16 %v3701, %v3701
      %v3718 = vpack.c.bf16 %v3702, %v3702
      %v3719 = vpack.c.bf16 %v3703, %v3703
      %v3720 = vpack.c.bf16 %v3704, %v3704
      %v3721 = vpack.c.bf16 %v3705, %v3705
      %vm3722 = vcmask 519168
      %3723 = vst.msk [vmem:[%s400] sm:$0xf] %vm3722, %v3706
      %3724 = vst.msk [vmem:[%s400 + $0x4] sm:$0xf] %vm3722, %v3707
      %3725 = vst.msk [vmem:[%s400 + $0x8] sm:$0xf] %vm3722, %v3708
      %3726 = vst.msk [vmem:[%s400 + $0xc] sm:$0xf] %vm3722, %v3709
      %3727 = vst.msk [vmem:[%s400 + $0x10] sm:$0xf] %vm3722, %v3710
      %3728 = vst.msk [vmem:[%s400 + $0x14] sm:$0xf] %vm3722, %v3711
      %3729 = vst.msk [vmem:[%s400 + $0x18] sm:$0xf] %vm3722, %v3712
      %3730 = vst.msk [vmem:[%s400 + $0x1c] sm:$0xf] %vm3722, %v3713
      %3731 = vst.msk [vmem:[%s400 + $0x20] sm:$0xf] %vm3722, %v3714
      %3732 = vst.msk [vmem:[%s400 + $0x24] sm:$0xf] %vm3722, %v3715
      %3733 = vst.msk [vmem:[%s400 + $0x28] sm:$0xf] %vm3722, %v3716
      %3734 = vst.msk [vmem:[%s400 + $0x2c] sm:$0xf] %vm3722, %v3717
      %3735 = vst.msk [vmem:[%s400 + $0x30] sm:$0xf] %vm3722, %v3718
      %3736 = vst.msk [vmem:[%s400 + $0x34] sm:$0xf] %vm3722, %v3719
      %3737 = vst.msk [vmem:[%s400 + $0x38] sm:$0xf] %vm3722, %v3720
      %3738 = vst.msk [vmem:[%s400 + $0x3c] sm:$0xf] %vm3722, %v3721
      %p3739 = scmp.lt.s32.totalorder %s22, 1
      %s3740 = scalar_select %p3739, %s22, 1
      %s3741 = smul.addr %s3740, 16
      %s3742 = smul.addr %s3741, 4
      %s3743 = scalar_lea.vmem %s11, %s3742
      // Predicated region
      $region65: #{discriminator_img_forward.2} parent=63 // pred_check
        %p3744 = pneg %p281
      $region66: #{discriminator_img_forward.2} parent=63 // pred_check_branch
        %3746 = sbr.rel (%p3744) target = $region68
      $region67: #{discriminator_img_forward.2} parent=63 // pred_region
        _
      $region68: #{discriminator_img_forward.2} parent=63 // pred_fallthru
        _
    $region64: #{discriminator_img_forward.2} parent=5 // pred_fallthru
      _
    %p3747 = scmp.le.s32.totalorder 2, %s17
    // Predicated region
    $region69: #{discriminator_img_forward.2} parent=5 // pred_check
      %p3748 = pneg %p3747
    $region70: #{discriminator_img_forward.2} parent=5 // pred_check_branch
      %3750 = sbr.rel (%p3748) target = $region72
    $region71: #{discriminator_img_forward.2} parent=5 // pred_region
      %s3751 = ssub.s32 %s17, 2
      // Predicated region
      $region73: #{discriminator_img_forward.2} parent=71 // pred_check
        %p3752 = pneg %p287
      $region74: #{discriminator_img_forward.2} parent=71 // pred_check_branch
        %3754 = sbr.rel (%p3752) target = $region76
      $region75: #{discriminator_img_forward.2} parent=71 // pred_region
        %p3755 = scmp.lt.s32.totalorder %s23, 1
        %s3756 = scalar_select %p3755, %s23, 1
        %s3757 = smul.addr %s3756, 16
        %s3758 = smul.addr %s3757, 4
        %s3759 = scalar_lea.vmem %s11, %s3758
      $region76: #{discriminator_img_forward.2} parent=71 // pred_fallthru
        _
    $region72: #{discriminator_img_forward.2} parent=5 // pred_fallthru
      _
  $region6: #{discriminator_img_forward.2} parent=0 // loop_footer
    %s21 = sadd.s32 1, %s17
  $region7: #{discriminator_img_forward.2} parent=0 // loop_footer_branch
    %16 = sbr.rel target = $region3
  $region8: #{discriminator_img_forward.2} parent=0 // loop_exit
    _

// kernel: discriminator_img_forward.3
$region0: #{discriminator_img_forward.3}
  #allocation0 [shape = 'u32[]', space=smem, size = 0x4, offset = 0x4, fixed_abs, tag = 'smem constant byte address 0x4 - core index']
  #allocation1 [shape = 'u32[72,128]{1,0:T(1,128)}', space=vmem, size = 0x9000, scoped, tag = 'internal scratch']
  #allocation2 [shape = 'f32[8,1024]{1,0:T(8,128)}', space=vmem, size = 0x8000, scoped, tag = 'scratch operand']
  %s0 = inlined_call_operand.vmem [shape: bf16[8,8192], index: 0, kind: input, shape index: {}]
  %s1 = inlined_call_operand.vmem [shape: bf16[8192,1024], index: 1, kind: input, shape index: {}]
  %s2 = inlined_call_operand.vmem [shape: f32[1,1024], index: 2, kind: input, shape index: {}]
  %s3 = inlined_call_operand.vmem [shape: bf16[1024,128], index: 3, kind: input, shape index: {}]
  %s4 = inlined_call_operand.vmem [shape: f32[1,128], index: 4, kind: input, shape index: {}]
  %s5 = inlined_call_operand.vmem [shape: f32[8,128], index: 5, kind: output, shape index: {}]
  %s6 = sld [smem:[#allocation0]]
  $region61: #{discriminator_img_forward.3} parent=0
    _
  %s8 = ssub.s32 1, %s6
  %s9 = scalar_select 0, %s8, %s6
  loop: start=0, step=1, limit=6
  $region2: #{discriminator_img_forward.3} parent=0 // loop_pre_header
    _
  $region3: #{discriminator_img_forward.3} parent=0 // loop_header
    %s11 = sphi 0, %s15
    %p12 = scmp.ge.s32.totalorder %s11, 6
    %s21 = sphi 0, %s23
    %s24 = sphi 0, %s21
    %s25 = sphi 0, %s24
    %s41 = sphi 0, %s25
    %s47 = sphi 0, %s49
    %s50 = sphi 0, %s47
    %s51 = sphi 0, %s50
    %s67 = sphi 0, %s51
    %s71 = sphi 0, %s71
    %s73 = sphi 0, %s71
    %s74 = sphi 0, %s73
    %s88 = sphi 0, %s74
    %s92 = sphi 0, %s92
    %s94 = sphi 0, %s92
    %s95 = sphi 0, %s94
    %s109 = sphi 0, %s95
    %s113 = sphi 0, %s113
    %s115 = sphi 0, %s113
    %s116 = sphi 0, %s115
    %s130 = sphi 0, %s116
    %s134 = sphi 0, %s134
    %s136 = sphi 0, %s134
    %s137 = sphi 0, %s136
    %s151 = sphi 0, %s137
  $region4: #{discriminator_img_forward.3} parent=0 // loop_header_branch
    %14 = sbr.rel (%p12) target = $region8
  $region5: #{discriminator_img_forward.3} parent=0 // loop_body
    %s16 = ssub.s32 %s11, 1
    %s17 = ssub.s32 %s11, 2
    %s18 = sadd.s32 %s11, 1
    %s19 = ssub.s32 %s11, %s18
    %p20 = scmp.eq.s32.totalorder %s19, 0
    %s22 = sadd.s32 %s21, 1
    %s23 = scalar_select %p20, %s21, %s22
    %p26 = pneg %p20
    %p27 = scmp.eq.s32.totalorder %s11, 3
    %p28 = por %p26, %p27
    %p29 = scmp.ne.s32.totalorder %s21, %s24
    %p30 = scmp.eq.s32.totalorder %s11, 0
    %p31 = por %p29, %p30
    %p32 = scmp.ne.s32.totalorder %s21, %s24
    %p33 = scmp.eq.s32.totalorder %s16, 3
    %p34 = por %p32, %p33
    %p35 = scmp.ne.s32.totalorder %s24, %s25
    %p36 = scmp.eq.s32.totalorder %s16, 0
    %p37 = por %p35, %p36
    %p38 = scmp.ne.s32.totalorder %s24, %s25
    %p39 = scmp.eq.s32.totalorder %s17, 3
    %p40 = por %p38, %p39
    %p42 = scmp.ne.s32.totalorder %s25, %s41
    %p43 = scmp.eq.s32.totalorder %s17, 0
    %p44 = por %p42, %p43
    %s45 = ssub.s32 %s11, %s18
    %p46 = scmp.eq.s32.totalorder %s45, 0
    %s48 = sadd.s32 %s47, 1
    %s49 = scalar_select %p46, %s47, %s48
    %p52 = pneg %p46
    %p53 = scmp.eq.s32.totalorder %s11, 3
    %p54 = por %p52, %p53
    %p55 = scmp.ne.s32.totalorder %s47, %s50
    %p56 = scmp.eq.s32.totalorder %s11, 0
    %p57 = por %p55, %p56
    %p58 = scmp.ne.s32.totalorder %s47, %s50
    %p59 = scmp.eq.s32.totalorder %s16, 3
    %p60 = por %p58, %p59
    %p61 = scmp.ne.s32.totalorder %s50, %s51
    %p62 = scmp.eq.s32.totalorder %s16, 0
    %p63 = por %p61, %p62
    %p64 = scmp.ne.s32.totalorder %s50, %s51
    %p65 = scmp.eq.s32.totalorder %s17, 3
    %p66 = por %p64, %p65
    %p68 = scmp.ne.s32.totalorder %s51, %s67
    %p69 = scmp.eq.s32.totalorder %s17, 0
    %p70 = por %p68, %p69
    %s72 = sadd.s32 %s71, 1
    %p75 = scmp.eq.s32.totalorder %s11, 3
    %p76 = scmp.ne.s32.totalorder %s71, %s73
    %p77 = scmp.eq.s32.totalorder %s11, 0
    %p78 = por %p76, %p77
    %p79 = scmp.ne.s32.totalorder %s71, %s73
    %p80 = scmp.eq.s32.totalorder %s16, 3
    %p81 = por %p79, %p80
    %p82 = scmp.ne.s32.totalorder %s73, %s74
    %p83 = scmp.eq.s32.totalorder %s16, 0
    %p84 = por %p82, %p83
    %p85 = scmp.ne.s32.totalorder %s73, %s74
    %p86 = scmp.eq.s32.totalorder %s17, 3
    %p87 = por %p85, %p86
    %p89 = scmp.ne.s32.totalorder %s74, %s88
    %p90 = scmp.eq.s32.totalorder %s17, 0
    %p91 = por %p89, %p90
    %s93 = sadd.s32 %s92, 1
    %p96 = scmp.eq.s32.totalorder %s11, 3
    %p97 = scmp.ne.s32.totalorder %s92, %s94
    %p98 = scmp.eq.s32.totalorder %s11, 0
    %p99 = por %p97, %p98
    %p100 = scmp.ne.s32.totalorder %s92, %s94
    %p101 = scmp.eq.s32.totalorder %s16, 3
    %p102 = por %p100, %p101
    %p103 = scmp.ne.s32.totalorder %s94, %s95
    %p104 = scmp.eq.s32.totalorder %s16, 0
    %p105 = por %p103, %p104
    %p106 = scmp.ne.s32.totalorder %s94, %s95
    %p107 = scmp.eq.s32.totalorder %s17, 3
    %p108 = por %p106, %p107
    %p110 = scmp.ne.s32.totalorder %s95, %s109
    %p111 = scmp.eq.s32.totalorder %s17, 0
    %p112 = por %p110, %p111
    %s114 = sadd.s32 %s113, 1
    %p117 = scmp.eq.s32.totalorder %s11, 3
    %p118 = scmp.ne.s32.totalorder %s113, %s115
    %p119 = scmp.eq.s32.totalorder %s11, 0
    %p120 = por %p118, %p119
    %p121 = scmp.ne.s32.totalorder %s113, %s115
    %p122 = scmp.eq.s32.totalorder %s16, 3
    %p123 = por %p121, %p122
    %p124 = scmp.ne.s32.totalorder %s115, %s116
    %p125 = scmp.eq.s32.totalorder %s16, 0
    %p126 = por %p124, %p125
    %p127 = scmp.ne.s32.totalorder %s115, %s116
    %p128 = scmp.eq.s32.totalorder %s17, 3
    %p129 = por %p127, %p128
    %p131 = scmp.ne.s32.totalorder %s116, %s130
    %p132 = scmp.eq.s32.totalorder %s17, 0
    %p133 = por %p131, %p132
    %s135 = sadd.s32 %s134, 1
    %p138 = scmp.eq.s32.totalorder %s11, 3
    %p139 = scmp.ne.s32.totalorder %s134, %s136
    %p140 = scmp.eq.s32.totalorder %s11, 0
    %p141 = por %p139, %p140
    %p142 = scmp.ne.s32.totalorder %s134, %s136
    %p143 = scmp.eq.s32.totalorder %s16, 3
    %p144 = por %p142, %p143
    %p145 = scmp.ne.s32.totalorder %s136, %s137
    %p146 = scmp.eq.s32.totalorder %s16, 0
    %p147 = por %p145, %p146
    %p148 = scmp.ne.s32.totalorder %s136, %s137
    %p149 = scmp.eq.s32.totalorder %s17, 3
    %p150 = por %p148, %p149
    %p152 = scmp.ne.s32.totalorder %s137, %s151
    %p153 = scmp.eq.s32.totalorder %s17, 0
    %p154 = por %p152, %p153
    %p155 = scmp.le.s32.totalorder 1, %s11
    %p156 = scmp.lt.s32.totalorder %s11, 5
    %p157 = pnand %p155, %p156
    %p158 = pneg %p157
    // Predicated region
    $region9: #{discriminator_img_forward.3} parent=5 // pred_check
      _
    $region10: #{discriminator_img_forward.3} parent=5 // pred_check_branch
      %160 = sbr.rel (%p157) target = $region12
    $region11: #{discriminator_img_forward.3} parent=5 // pred_region
      %s161 = ssub.s32 %s11, 1
      // Predicated region
      $region13: #{discriminator_img_forward.3} parent=11 // pred_check
        %p162 = pneg %p84
      $region14: #{discriminator_img_forward.3} parent=11 // pred_check_branch
        %164 = sbr.rel (%p162) target = $region16
      $region15: #{discriminator_img_forward.3} parent=11 // pred_region
        _
      $region16: #{discriminator_img_forward.3} parent=11 // pred_fallthru
        _
      // Predicated region
      $region17: #{discriminator_img_forward.3} parent=11 // pred_check
        %p165 = pneg %p105
      $region18: #{discriminator_img_forward.3} parent=11 // pred_check_branch
        %167 = sbr.rel (%p165) target = $region20
      $region19: #{discriminator_img_forward.3} parent=11 // pred_region
        _
      $region20: #{discriminator_img_forward.3} parent=11 // pred_fallthru
        _
      // Predicated region
      $region21: #{discriminator_img_forward.3} parent=11 // pred_check
        %p168 = pneg %p126
      $region22: #{discriminator_img_forward.3} parent=11 // pred_check_branch
        %170 = sbr.rel (%p168) target = $region24
      $region23: #{discriminator_img_forward.3} parent=11 // pred_region
        _
      $region24: #{discriminator_img_forward.3} parent=11 // pred_fallthru
        _
    $region12: #{discriminator_img_forward.3} parent=5 // pred_fallthru
      _
    %p171 = scmp.lt.s32.totalorder %s11, 4
    // Predicated region
    $region25: #{discriminator_img_forward.3} parent=5 // pred_check
      %p172 = pneg %p171
    $region26: #{discriminator_img_forward.3} parent=5 // pred_check_branch
      %174 = sbr.rel (%p172) target = $region28
    $region27: #{discriminator_img_forward.3} parent=5 // pred_region
      // Predicated region
      $region29: #{discriminator_img_forward.3} parent=27 // pred_check
        %p175 = pneg %p31
      $region30: #{discriminator_img_forward.3} parent=27 // pred_check_branch
        %177 = sbr.rel (%p175) target = $region32
      $region31: #{discriminator_img_forward.3} parent=27 // pred_region
        %s178 = smul.u32 16, %s11
        %p179 = scmp.lt.s32.totalorder %s178, 63
        %s180 = scalar_select %p179, %s178, 63
        %s181 = smul.addr %s180, 4
        %s182 = scalar_lea.vmem %s0, %s181
        %s183 = smul.u32 16, %s11
      $region32: #{discriminator_img_forward.3} parent=27 // pred_fallthru
        _
      // Predicated region
      $region33: #{discriminator_img_forward.3} parent=27 // pred_check
        %p184 = pneg %p57
      $region34: #{discriminator_img_forward.3} parent=27 // pred_check_branch
        %186 = sbr.rel (%p184) target = $region36
      $region35: #{discriminator_img_forward.3} parent=27 // pred_region
        %s187 = smul.u32 256, %s11
        %p188 = scmp.lt.s32.totalorder %s187, 1023
        %s189 = scalar_select %p188, %s187, 1023
        %s190 = smul.addr %s189, 8
        %s191 = smul.addr %s190, 4
        %s192 = scalar_lea.vmem %s1, %s191
        %s193 = smul.u32 256, %s11
      $region36: #{discriminator_img_forward.3} parent=27 // pred_fallthru
        _
    $region28: #{discriminator_img_forward.3} parent=5 // pred_fallthru
      _
    %p194 = scmp.le.s32.totalorder 1, %s11
    %p195 = scmp.lt.s32.totalorder %s11, 5
    %p196 = pnand %p194, %p195
    %p197 = pneg %p196
    // Predicated region
    $region37: #{discriminator_img_forward.3} parent=5 // pred_check
      _
    $region38: #{discriminator_img_forward.3} parent=5 // pred_check_branch
      %199 = sbr.rel (%p196) target = $region40
    $region39: #{discriminator_img_forward.3} parent=5 // pred_region
      %s200 = ssub.s32 %s11, 1
      %s201 = smul.u32 16, %s16
      %p202 = scmp.lt.s32.totalorder %s201, 63
      %s203 = scalar_select %p202, %s201, 63
      %s204 = smul.addr %s203, 4
      %s205 = scalar_lea.vmem %s0, %s204
      %p206 = pneg %p37
      %p207 = pneg %p34
      %s208 = smul.u32 256, %s16
      %p209 = scmp.lt.s32.totalorder %s208, 1023
      %s210 = scalar_select %p209, %s208, 1023
      %s211 = smul.addr %s210, 8
      %s212 = smul.addr %s211, 4
      %s213 = scalar_lea.vmem %s1, %s212
      %p214 = pneg %p63
      %p215 = pneg %p60
      %p216 = pneg %p84
      %p217 = pneg %p81
      %p218 = pneg %p105
      %p219 = pneg %p102
      %p220 = pneg %p126
      %p221 = pneg %p123
      %p222 = pneg %p147
      %p223 = pneg %p144
      %s224 = smul.u32 16, %s16
      %p225 = scmp.lt.s32.totalorder %s224, 63
      %s226 = scalar_select %p225, %s224, 63
      %s227 = smul.addr %s226, 4
      %s228 = scalar_lea.vmem %s0, %s227
      %s229 = smul.u32 16, %s16
      %s230 = smul.u32 256, %s16
      %p231 = scmp.lt.s32.totalorder %s230, 1023
      %s232 = scalar_select %p231, %s230, 1023
      %s233 = smul.addr %s232, 8
      %s234 = smul.addr %s233, 4
      %s235 = scalar_lea.vmem %s1, %s234
      %s236 = smul.u32 256, %s16
      %p237 = scmp.eq.s32.totalorder %s16, 0
      // Predicated region
      $region41: #{discriminator_img_forward.3} parent=39 // pred_check
        %p238 = pneg %p237
      $region42: #{discriminator_img_forward.3} parent=39 // pred_check_branch
        %240 = sbr.rel (%p238) target = $region44
      $region43: #{discriminator_img_forward.3} parent=39 // pred_region
        %241 = vst [vmem:[#allocation2] sm:$0xff] 0.0
        %242 = vst [vmem:[#allocation2 + $0x8] sm:$0xff] 0.0
        %243 = vst [vmem:[#allocation2 + $0x10] sm:$0xff] 0.0
        %244 = vst [vmem:[#allocation2 + $0x18] sm:$0xff] 0.0
        %245 = vst [vmem:[#allocation2 + $0x20] sm:$0xff] 0.0
        %246 = vst [vmem:[#allocation2 + $0x28] sm:$0xff] 0.0
        %247 = vst [vmem:[#allocation2 + $0x30] sm:$0xff] 0.0
        %248 = vst [vmem:[#allocation2 + $0x38] sm:$0xff] 0.0
      $region44: #{discriminator_img_forward.3} parent=39 // pred_fallthru
        _
      %v249 = vld [vmem:[#allocation2] sm:$0xff]
      %v250 = vld [vmem:[#allocation2 + $0x8] sm:$0xff]
      %v251 = vld [vmem:[#allocation2 + $0x10] sm:$0xff]
      %v252 = vld [vmem:[#allocation2 + $0x18] sm:$0xff]
      %v253 = vld [vmem:[#allocation2 + $0x20] sm:$0xff]
      %v254 = vld [vmem:[#allocation2 + $0x28] sm:$0xff]
      %v255 = vld [vmem:[#allocation2 + $0x30] sm:$0xff]
      %v256 = vld [vmem:[#allocation2 + $0x38] sm:$0xff]
      %v257 = vld [vmem:[%s228] sm:$0xff]
      %v258 = vld [vmem:[%s228 + $0x8] sm:$0xff]
      %v259 = vld [vmem:[%s228 + $0x10] sm:$0xff]
      %v260 = vld [vmem:[%s228 + $0x18] sm:$0xff]
      %v261 = vld [vmem:[%s228 + $0x20] sm:$0xff]
      %v262 = vld [vmem:[%s228 + $0x28] sm:$0xff]
      %v263 = vld [vmem:[%s228 + $0x30] sm:$0xff]
      %v264 = vld [vmem:[%s228 + $0x38] sm:$0xff]
      %v265 = vld [vmem:[%s235] sm:$0xff]
      %v266 = vld [vmem:[%s235 + $0x8] sm:$0xff]
      %v267 = vld [vmem:[%s235 + $0x10] sm:$0xff]
      %v268 = vld [vmem:[%s235 + $0x18] sm:$0xff]
      %v269 = vld [vmem:[%s235 + $0x20] sm:$0xff]
      %v270 = vld [vmem:[%s235 + $0x28] sm:$0xff]
      %v271 = vld [vmem:[%s235 + $0x30] sm:$0xff]
      %v272 = vld [vmem:[%s235 + $0x38] sm:$0xff]
      %v273 = vld [vmem:[%s235 + $0x40] sm:$0xff]
      %v274 = vld [vmem:[%s235 + $0x48] sm:$0xff]
      %v275 = vld [vmem:[%s235 + $0x50] sm:$0xff]
      %v276 = vld [vmem:[%s235 + $0x58] sm:$0xff]
      %v277 = vld [vmem:[%s235 + $0x60] sm:$0xff]
      %v278 = vld [vmem:[%s235 + $0x68] sm:$0xff]
      %v279 = vld [vmem:[%s235 + $0x70] sm:$0xff]
      %v280 = vld [vmem:[%s235 + $0x78] sm:$0xff]
      %v281 = vld [vmem:[%s235 + $0x80] sm:$0xff]
      %v282 = vld [vmem:[%s235 + $0x88] sm:$0xff]
      %v283 = vld [vmem:[%s235 + $0x90] sm:$0xff]
      %v284 = vld [vmem:[%s235 + $0x98] sm:$0xff]
      %v285 = vld [vmem:[%s235 + $0xa0] sm:$0xff]
      %v286 = vld [vmem:[%s235 + $0xa8] sm:$0xff]
      %v287 = vld [vmem:[%s235 + $0xb0] sm:$0xff]
      %v288 = vld [vmem:[%s235 + $0xb8] sm:$0xff]
      %v289 = vld [vmem:[%s235 + $0xc0] sm:$0xff]
      %v290 = vld [vmem:[%s235 + $0xc8] sm:$0xff]
      %v291 = vld [vmem:[%s235 + $0xd0] sm:$0xff]
      %v292 = vld [vmem:[%s235 + $0xd8] sm:$0xff]
      %v293 = vld [vmem:[%s235 + $0xe0] sm:$0xff]
      %v294 = vld [vmem:[%s235 + $0xe8] sm:$0xff]
      %v295 = vld [vmem:[%s235 + $0xf0] sm:$0xff]
      %v296 = vld [vmem:[%s235 + $0xf8] sm:$0xff]
      %v297 = vld [vmem:[%s235 + $0x100] sm:$0xff]
      %v298 = vld [vmem:[%s235 + $0x108] sm:$0xff]
      %v299 = vld [vmem:[%s235 + $0x110] sm:$0xff]
      %v300 = vld [vmem:[%s235 + $0x118] sm:$0xff]
      %v301 = vld [vmem:[%s235 + $0x120] sm:$0xff]
      %v302 = vld [vmem:[%s235 + $0x128] sm:$0xff]
      %v303 = vld [vmem:[%s235 + $0x130] sm:$0xff]
      %v304 = vld [vmem:[%s235 + $0x138] sm:$0xff]
      %v305 = vld [vmem:[%s235 + $0x140] sm:$0xff]
      %v306 = vld [vmem:[%s235 + $0x148] sm:$0xff]
      %v307 = vld [vmem:[%s235 + $0x150] sm:$0xff]
      %v308 = vld [vmem:[%s235 + $0x158] sm:$0xff]
      %v309 = vld [vmem:[%s235 + $0x160] sm:$0xff]
      %v310 = vld [vmem:[%s235 + $0x168] sm:$0xff]
      %v311 = vld [vmem:[%s235 + $0x170] sm:$0xff]
      %v312 = vld [vmem:[%s235 + $0x178] sm:$0xff]
      %v313 = vld [vmem:[%s235 + $0x180] sm:$0xff]
      %v314 = vld [vmem:[%s235 + $0x188] sm:$0xff]
      %v315 = vld [vmem:[%s235 + $0x190] sm:$0xff]
      %v316 = vld [vmem:[%s235 + $0x198] sm:$0xff]
      %v317 = vld [vmem:[%s235 + $0x1a0] sm:$0xff]
      %v318 = vld [vmem:[%s235 + $0x1a8] sm:$0xff]
      %v319 = vld [vmem:[%s235 + $0x1b0] sm:$0xff]
      %v320 = vld [vmem:[%s235 + $0x1b8] sm:$0xff]
      %v321 = vld [vmem:[%s235 + $0x1c0] sm:$0xff]
      %v322 = vld [vmem:[%s235 + $0x1c8] sm:$0xff]
      %v323 = vld [vmem:[%s235 + $0x1d0] sm:$0xff]
      %v324 = vld [vmem:[%s235 + $0x1d8] sm:$0xff]
      %v325 = vld [vmem:[%s235 + $0x1e0] sm:$0xff]
      %v326 = vld [vmem:[%s235 + $0x1e8] sm:$0xff]
      %v327 = vld [vmem:[%s235 + $0x1f0] sm:$0xff]
      %v328 = vld [vmem:[%s235 + $0x1f8] sm:$0xff]
      %v329 = vld [vmem:[%s235 + $0x200] sm:$0xff]
      %v330 = vld [vmem:[%s235 + $0x208] sm:$0xff]
      %v331 = vld [vmem:[%s235 + $0x210] sm:$0xff]
      %v332 = vld [vmem:[%s235 + $0x218] sm:$0xff]
      %v333 = vld [vmem:[%s235 + $0x220] sm:$0xff]
      %v334 = vld [vmem:[%s235 + $0x228] sm:$0xff]
      %v335 = vld [vmem:[%s235 + $0x230] sm:$0xff]
      %v336 = vld [vmem:[%s235 + $0x238] sm:$0xff]
      %v337 = vld [vmem:[%s235 + $0x240] sm:$0xff]
      %v338 = vld [vmem:[%s235 + $0x248] sm:$0xff]
      %v339 = vld [vmem:[%s235 + $0x250] sm:$0xff]
      %v340 = vld [vmem:[%s235 + $0x258] sm:$0xff]
      %v341 = vld [vmem:[%s235 + $0x260] sm:$0xff]
      %v342 = vld [vmem:[%s235 + $0x268] sm:$0xff]
      %v343 = vld [vmem:[%s235 + $0x270] sm:$0xff]
      %v344 = vld [vmem:[%s235 + $0x278] sm:$0xff]
      %v345 = vld [vmem:[%s235 + $0x280] sm:$0xff]
      %v346 = vld [vmem:[%s235 + $0x288] sm:$0xff]
      %v347 = vld [vmem:[%s235 + $0x290] sm:$0xff]
      %v348 = vld [vmem:[%s235 + $0x298] sm:$0xff]
      %v349 = vld [vmem:[%s235 + $0x2a0] sm:$0xff]
      %v350 = vld [vmem:[%s235 + $0x2a8] sm:$0xff]
      %v351 = vld [vmem:[%s235 + $0x2b0] sm:$0xff]
      %v352 = vld [vmem:[%s235 + $0x2b8] sm:$0xff]
      %v353 = vld [vmem:[%s235 + $0x2c0] sm:$0xff]
      %v354 = vld [vmem:[%s235 + $0x2c8] sm:$0xff]
      %v355 = vld [vmem:[%s235 + $0x2d0] sm:$0xff]
      %v356 = vld [vmem:[%s235 + $0x2d8] sm:$0xff]
      %v357 = vld [vmem:[%s235 + $0x2e0] sm:$0xff]
      %v358 = vld [vmem:[%s235 + $0x2e8] sm:$0xff]
      %v359 = vld [vmem:[%s235 + $0x2f0] sm:$0xff]
      %v360 = vld [vmem:[%s235 + $0x2f8] sm:$0xff]
      %v361 = vld [vmem:[%s235 + $0x300] sm:$0xff]
      %v362 = vld [vmem:[%s235 + $0x308] sm:$0xff]
      %v363 = vld [vmem:[%s235 + $0x310] sm:$0xff]
      %v364 = vld [vmem:[%s235 + $0x318] sm:$0xff]
      %v365 = vld [vmem:[%s235 + $0x320] sm:$0xff]
      %v366 = vld [vmem:[%s235 + $0x328] sm:$0xff]
      %v367 = vld [vmem:[%s235 + $0x330] sm:$0xff]
      %v368 = vld [vmem:[%s235 + $0x338] sm:$0xff]
      %v369 = vld [vmem:[%s235 + $0x340] sm:$0xff]
      %v370 = vld [vmem:[%s235 + $0x348] sm:$0xff]
      %v371 = vld [vmem:[%s235 + $0x350] sm:$0xff]
      %v372 = vld [vmem:[%s235 + $0x358] sm:$0xff]
      %v373 = vld [vmem:[%s235 + $0x360] sm:$0xff]
      %v374 = vld [vmem:[%s235 + $0x368] sm:$0xff]
      %v375 = vld [vmem:[%s235 + $0x370] sm:$0xff]
      %v376 = vld [vmem:[%s235 + $0x378] sm:$0xff]
      %v377 = vld [vmem:[%s235 + $0x380] sm:$0xff]
      %v378 = vld [vmem:[%s235 + $0x388] sm:$0xff]
      %v379 = vld [vmem:[%s235 + $0x390] sm:$0xff]
      %v380 = vld [vmem:[%s235 + $0x398] sm:$0xff]
      %v381 = vld [vmem:[%s235 + $0x3a0] sm:$0xff]
      %v382 = vld [vmem:[%s235 + $0x3a8] sm:$0xff]
      %v383 = vld [vmem:[%s235 + $0x3b0] sm:$0xff]
      %v384 = vld [vmem:[%s235 + $0x3b8] sm:$0xff]
      %v385 = vld [vmem:[%s235 + $0x3c0] sm:$0xff]
      %v386 = vld [vmem:[%s235 + $0x3c8] sm:$0xff]
      %v387 = vld [vmem:[%s235 + $0x3d0] sm:$0xff]
      %v388 = vld [vmem:[%s235 + $0x3d8] sm:$0xff]
      %v389 = vld [vmem:[%s235 + $0x3e0] sm:$0xff]
      %v390 = vld [vmem:[%s235 + $0x3e8] sm:$0xff]
      %v391 = vld [vmem:[%s235 + $0x3f0] sm:$0xff]
      %v392 = vld [vmem:[%s235 + $0x3f8] sm:$0xff]
      %v393 = vld [vmem:[%s235 + $0x400] sm:$0xff]
      %v394 = vld [vmem:[%s235 + $0x408] sm:$0xff]
      %v395 = vld [vmem:[%s235 + $0x410] sm:$0xff]
      %v396 = vld [vmem:[%s235 + $0x418] sm:$0xff]
      %v397 = vld [vmem:[%s235 + $0x420] sm:$0xff]
      %v398 = vld [vmem:[%s235 + $0x428] sm:$0xff]
      %v399 = vld [vmem:[%s235 + $0x430] sm:$0xff]
      %v400 = vld [vmem:[%s235 + $0x438] sm:$0xff]
      %v401 = vld [vmem:[%s235 + $0x440] sm:$0xff]
      %v402 = vld [vmem:[%s235 + $0x448] sm:$0xff]
      %v403 = vld [vmem:[%s235 + $0x450] sm:$0xff]
      %v404 = vld [vmem:[%s235 + $0x458] sm:$0xff]
      %v405 = vld [vmem:[%s235 + $0x460] sm:$0xff]
      %v406 = vld [vmem:[%s235 + $0x468] sm:$0xff]
      %v407 = vld [vmem:[%s235 + $0x470] sm:$0xff]
      %v408 = vld [vmem:[%s235 + $0x478] sm:$0xff]
      %v409 = vld [vmem:[%s235 + $0x480] sm:$0xff]
      %v410 = vld [vmem:[%s235 + $0x488] sm:$0xff]
      %v411 = vld [vmem:[%s235 + $0x490] sm:$0xff]
      %v412 = vld [vmem:[%s235 + $0x498] sm:$0xff]
      %v413 = vld [vmem:[%s235 + $0x4a0] sm:$0xff]
      %v414 = vld [vmem:[%s235 + $0x4a8] sm:$0xff]
      %v415 = vld [vmem:[%s235 + $0x4b0] sm:$0xff]
      %v416 = vld [vmem:[%s235 + $0x4b8] sm:$0xff]
      %v417 = vld [vmem:[%s235 + $0x4c0] sm:$0xff]
      %v418 = vld [vmem:[%s235 + $0x4c8] sm:$0xff]
      %v419 = vld [vmem:[%s235 + $0x4d0] sm:$0xff]
      %v420 = vld [vmem:[%s235 + $0x4d8] sm:$0xff]
      %v421 = vld [vmem:[%s235 + $0x4e0] sm:$0xff]
      %v422 = vld [vmem:[%s235 + $0x4e8] sm:$0xff]
      %v423 = vld [vmem:[%s235 + $0x4f0] sm:$0xff]
      %v424 = vld [vmem:[%s235 + $0x4f8] sm:$0xff]
      %v425 = vld [vmem:[%s235 + $0x500] sm:$0xff]
      %v426 = vld [vmem:[%s235 + $0x508] sm:$0xff]
      %v427 = vld [vmem:[%s235 + $0x510] sm:$0xff]
      %v428 = vld [vmem:[%s235 + $0x518] sm:$0xff]
      %v429 = vld [vmem:[%s235 + $0x520] sm:$0xff]
      %v430 = vld [vmem:[%s235 + $0x528] sm:$0xff]
      %v431 = vld [vmem:[%s235 + $0x530] sm:$0xff]
      %v432 = vld [vmem:[%s235 + $0x538] sm:$0xff]
      %v433 = vld [vmem:[%s235 + $0x540] sm:$0xff]
      %v434 = vld [vmem:[%s235 + $0x548] sm:$0xff]
      %v435 = vld [vmem:[%s235 + $0x550] sm:$0xff]
      %v436 = vld [vmem:[%s235 + $0x558] sm:$0xff]
      %v437 = vld [vmem:[%s235 + $0x560] sm:$0xff]
      %v438 = vld [vmem:[%s235 + $0x568] sm:$0xff]
      %v439 = vld [vmem:[%s235 + $0x570] sm:$0xff]
      %v440 = vld [vmem:[%s235 + $0x578] sm:$0xff]
      %v441 = vld [vmem:[%s235 + $0x580] sm:$0xff]
      %v442 = vld [vmem:[%s235 + $0x588] sm:$0xff]
      %v443 = vld [vmem:[%s235 + $0x590] sm:$0xff]
      %v444 = vld [vmem:[%s235 + $0x598] sm:$0xff]
      %v445 = vld [vmem:[%s235 + $0x5a0] sm:$0xff]
      %v446 = vld [vmem:[%s235 + $0x5a8] sm:$0xff]
      %v447 = vld [vmem:[%s235 + $0x5b0] sm:$0xff]
      %v448 = vld [vmem:[%s235 + $0x5b8] sm:$0xff]
      %v449 = vld [vmem:[%s235 + $0x5c0] sm:$0xff]
      %v450 = vld [vmem:[%s235 + $0x5c8] sm:$0xff]
      %v451 = vld [vmem:[%s235 + $0x5d0] sm:$0xff]
      %v452 = vld [vmem:[%s235 + $0x5d8] sm:$0xff]
      %v453 = vld [vmem:[%s235 + $0x5e0] sm:$0xff]
      %v454 = vld [vmem:[%s235 + $0x5e8] sm:$0xff]
      %v455 = vld [vmem:[%s235 + $0x5f0] sm:$0xff]
      %v456 = vld [vmem:[%s235 + $0x5f8] sm:$0xff]
      %v457 = vld [vmem:[%s235 + $0x600] sm:$0xff]
      %v458 = vld [vmem:[%s235 + $0x608] sm:$0xff]
      %v459 = vld [vmem:[%s235 + $0x610] sm:$0xff]
      %v460 = vld [vmem:[%s235 + $0x618] sm:$0xff]
      %v461 = vld [vmem:[%s235 + $0x620] sm:$0xff]
      %v462 = vld [vmem:[%s235 + $0x628] sm:$0xff]
      %v463 = vld [vmem:[%s235 + $0x630] sm:$0xff]
      %v464 = vld [vmem:[%s235 + $0x638] sm:$0xff]
      %v465 = vld [vmem:[%s235 + $0x640] sm:$0xff]
      %v466 = vld [vmem:[%s235 + $0x648] sm:$0xff]
      %v467 = vld [vmem:[%s235 + $0x650] sm:$0xff]
      %v468 = vld [vmem:[%s235 + $0x658] sm:$0xff]
      %v469 = vld [vmem:[%s235 + $0x660] sm:$0xff]
      %v470 = vld [vmem:[%s235 + $0x668] sm:$0xff]
      %v471 = vld [vmem:[%s235 + $0x670] sm:$0xff]
      %v472 = vld [vmem:[%s235 + $0x678] sm:$0xff]
      %v473 = vld [vmem:[%s235 + $0x680] sm:$0xff]
      %v474 = vld [vmem:[%s235 + $0x688] sm:$0xff]
      %v475 = vld [vmem:[%s235 + $0x690] sm:$0xff]
      %v476 = vld [vmem:[%s235 + $0x698] sm:$0xff]
      %v477 = vld [vmem:[%s235 + $0x6a0] sm:$0xff]
      %v478 = vld [vmem:[%s235 + $0x6a8] sm:$0xff]
      %v479 = vld [vmem:[%s235 + $0x6b0] sm:$0xff]
      %v480 = vld [vmem:[%s235 + $0x6b8] sm:$0xff]
      %v481 = vld [vmem:[%s235 + $0x6c0] sm:$0xff]
      %v482 = vld [vmem:[%s235 + $0x6c8] sm:$0xff]
      %v483 = vld [vmem:[%s235 + $0x6d0] sm:$0xff]
      %v484 = vld [vmem:[%s235 + $0x6d8] sm:$0xff]
      %v485 = vld [vmem:[%s235 + $0x6e0] sm:$0xff]
      %v486 = vld [vmem:[%s235 + $0x6e8] sm:$0xff]
      %v487 = vld [vmem:[%s235 + $0x6f0] sm:$0xff]
      %v488 = vld [vmem:[%s235 + $0x6f8] sm:$0xff]
      %v489 = vld [vmem:[%s235 + $0x700] sm:$0xff]
      %v490 = vld [vmem:[%s235 + $0x708] sm:$0xff]
      %v491 = vld [vmem:[%s235 + $0x710] sm:$0xff]
      %v492 = vld [vmem:[%s235 + $0x718] sm:$0xff]
      %v493 = vld [vmem:[%s235 + $0x720] sm:$0xff]
      %v494 = vld [vmem:[%s235 + $0x728] sm:$0xff]
      %v495 = vld [vmem:[%s235 + $0x730] sm:$0xff]
      %v496 = vld [vmem:[%s235 + $0x738] sm:$0xff]
      %v497 = vld [vmem:[%s235 + $0x740] sm:$0xff]
      %v498 = vld [vmem:[%s235 + $0x748] sm:$0xff]
      %v499 = vld [vmem:[%s235 + $0x750] sm:$0xff]
      %v500 = vld [vmem:[%s235 + $0x758] sm:$0xff]
      %v501 = vld [vmem:[%s235 + $0x760] sm:$0xff]
      %v502 = vld [vmem:[%s235 + $0x768] sm:$0xff]
      %v503 = vld [vmem:[%s235 + $0x770] sm:$0xff]
      %v504 = vld [vmem:[%s235 + $0x778] sm:$0xff]
      %v505 = vld [vmem:[%s235 + $0x780] sm:$0xff]
      %v506 = vld [vmem:[%s235 + $0x788] sm:$0xff]
      %v507 = vld [vmem:[%s235 + $0x790] sm:$0xff]
      %v508 = vld [vmem:[%s235 + $0x798] sm:$0xff]
      %v509 = vld [vmem:[%s235 + $0x7a0] sm:$0xff]
      %v510 = vld [vmem:[%s235 + $0x7a8] sm:$0xff]
      %v511 = vld [vmem:[%s235 + $0x7b0] sm:$0xff]
      %v512 = vld [vmem:[%s235 + $0x7b8] sm:$0xff]
      %v513 = vld [vmem:[%s235 + $0x7c0] sm:$0xff]
      %v514 = vld [vmem:[%s235 + $0x7c8] sm:$0xff]
      %v515 = vld [vmem:[%s235 + $0x7d0] sm:$0xff]
      %v516 = vld [vmem:[%s235 + $0x7d8] sm:$0xff]
      %v517 = vld [vmem:[%s235 + $0x7e0] sm:$0xff]
      %v518 = vld [vmem:[%s235 + $0x7e8] sm:$0xff]
      %v519 = vld [vmem:[%s235 + $0x7f0] sm:$0xff]
      %v520 = vld [vmem:[%s235 + $0x7f8] sm:$0xff]
      %v521 = vld [vmem:[%s235 + $0x800] sm:$0xff]
      %v522 = vld [vmem:[%s235 + $0x808] sm:$0xff]
      %v523 = vld [vmem:[%s235 + $0x810] sm:$0xff]
      %v524 = vld [vmem:[%s235 + $0x818] sm:$0xff]
      %v525 = vld [vmem:[%s235 + $0x820] sm:$0xff]
      %v526 = vld [vmem:[%s235 + $0x828] sm:$0xff]
      %v527 = vld [vmem:[%s235 + $0x830] sm:$0xff]
      %v528 = vld [vmem:[%s235 + $0x838] sm:$0xff]
      %v529 = vld [vmem:[%s235 + $0x840] sm:$0xff]
      %v530 = vld [vmem:[%s235 + $0x848] sm:$0xff]
      %v531 = vld [vmem:[%s235 + $0x850] sm:$0xff]
      %v532 = vld [vmem:[%s235 + $0x858] sm:$0xff]
      %v533 = vld [vmem:[%s235 + $0x860] sm:$0xff]
      %v534 = vld [vmem:[%s235 + $0x868] sm:$0xff]
      %v535 = vld [vmem:[%s235 + $0x870] sm:$0xff]
      %v536 = vld [vmem:[%s235 + $0x878] sm:$0xff]
      %v537 = vld [vmem:[%s235 + $0x880] sm:$0xff]
      %v538 = vld [vmem:[%s235 + $0x888] sm:$0xff]
      %v539 = vld [vmem:[%s235 + $0x890] sm:$0xff]
      %v540 = vld [vmem:[%s235 + $0x898] sm:$0xff]
      %v541 = vld [vmem:[%s235 + $0x8a0] sm:$0xff]
      %v542 = vld [vmem:[%s235 + $0x8a8] sm:$0xff]
      %v543 = vld [vmem:[%s235 + $0x8b0] sm:$0xff]
      %v544 = vld [vmem:[%s235 + $0x8b8] sm:$0xff]
      %v545 = vld [vmem:[%s235 + $0x8c0] sm:$0xff]
      %v546 = vld [vmem:[%s235 + $0x8c8] sm:$0xff]
      %v547 = vld [vmem:[%s235 + $0x8d0] sm:$0xff]
      %v548 = vld [vmem:[%s235 + $0x8d8] sm:$0xff]
      %v549 = vld [vmem:[%s235 + $0x8e0] sm:$0xff]
      %v550 = vld [vmem:[%s235 + $0x8e8] sm:$0xff]
      %v551 = vld [vmem:[%s235 + $0x8f0] sm:$0xff]
      %v552 = vld [vmem:[%s235 + $0x8f8] sm:$0xff]
      %v553 = vld [vmem:[%s235 + $0x900] sm:$0xff]
      %v554 = vld [vmem:[%s235 + $0x908] sm:$0xff]
      %v555 = vld [vmem:[%s235 + $0x910] sm:$0xff]
      %v556 = vld [vmem:[%s235 + $0x918] sm:$0xff]
      %v557 = vld [vmem:[%s235 + $0x920] sm:$0xff]
      %v558 = vld [vmem:[%s235 + $0x928] sm:$0xff]
      %v559 = vld [vmem:[%s235 + $0x930] sm:$0xff]
      %v560 = vld [vmem:[%s235 + $0x938] sm:$0xff]
      %v561 = vld [vmem:[%s235 + $0x940] sm:$0xff]
      %v562 = vld [vmem:[%s235 + $0x948] sm:$0xff]
      %v563 = vld [vmem:[%s235 + $0x950] sm:$0xff]
      %v564 = vld [vmem:[%s235 + $0x958] sm:$0xff]
      %v565 = vld [vmem:[%s235 + $0x960] sm:$0xff]
      %v566 = vld [vmem:[%s235 + $0x968] sm:$0xff]
      %v567 = vld [vmem:[%s235 + $0x970] sm:$0xff]
      %v568 = vld [vmem:[%s235 + $0x978] sm:$0xff]
      %v569 = vld [vmem:[%s235 + $0x980] sm:$0xff]
      %v570 = vld [vmem:[%s235 + $0x988] sm:$0xff]
      %v571 = vld [vmem:[%s235 + $0x990] sm:$0xff]
      %v572 = vld [vmem:[%s235 + $0x998] sm:$0xff]
      %v573 = vld [vmem:[%s235 + $0x9a0] sm:$0xff]
      %v574 = vld [vmem:[%s235 + $0x9a8] sm:$0xff]
      %v575 = vld [vmem:[%s235 + $0x9b0] sm:$0xff]
      %v576 = vld [vmem:[%s235 + $0x9b8] sm:$0xff]
      %v577 = vld [vmem:[%s235 + $0x9c0] sm:$0xff]
      %v578 = vld [vmem:[%s235 + $0x9c8] sm:$0xff]
      %v579 = vld [vmem:[%s235 + $0x9d0] sm:$0xff]
      %v580 = vld [vmem:[%s235 + $0x9d8] sm:$0xff]
      %v581 = vld [vmem:[%s235 + $0x9e0] sm:$0xff]
      %v582 = vld [vmem:[%s235 + $0x9e8] sm:$0xff]
      %v583 = vld [vmem:[%s235 + $0x9f0] sm:$0xff]
      %v584 = vld [vmem:[%s235 + $0x9f8] sm:$0xff]
      %v585 = vld [vmem:[%s235 + $0xa00] sm:$0xff]
      %v586 = vld [vmem:[%s235 + $0xa08] sm:$0xff]
      %v587 = vld [vmem:[%s235 + $0xa10] sm:$0xff]
      %v588 = vld [vmem:[%s235 + $0xa18] sm:$0xff]
      %v589 = vld [vmem:[%s235 + $0xa20] sm:$0xff]
      %v590 = vld [vmem:[%s235 + $0xa28] sm:$0xff]
      %v591 = vld [vmem:[%s235 + $0xa30] sm:$0xff]
      %v592 = vld [vmem:[%s235 + $0xa38] sm:$0xff]
      %v593 = vld [vmem:[%s235 + $0xa40] sm:$0xff]
      %v594 = vld [vmem:[%s235 + $0xa48] sm:$0xff]
      %v595 = vld [vmem:[%s235 + $0xa50] sm:$0xff]
      %v596 = vld [vmem:[%s235 + $0xa58] sm:$0xff]
      %v597 = vld [vmem:[%s235 + $0xa60] sm:$0xff]
      %v598 = vld [vmem:[%s235 + $0xa68] sm:$0xff]
      %v599 = vld [vmem:[%s235 + $0xa70] sm:$0xff]
      %v600 = vld [vmem:[%s235 + $0xa78] sm:$0xff]
      %v601 = vld [vmem:[%s235 + $0xa80] sm:$0xff]
      %v602 = vld [vmem:[%s235 + $0xa88] sm:$0xff]
      %v603 = vld [vmem:[%s235 + $0xa90] sm:$0xff]
      %v604 = vld [vmem:[%s235 + $0xa98] sm:$0xff]
      %v605 = vld [vmem:[%s235 + $0xaa0] sm:$0xff]
      %v606 = vld [vmem:[%s235 + $0xaa8] sm:$0xff]
      %v607 = vld [vmem:[%s235 + $0xab0] sm:$0xff]
      %v608 = vld [vmem:[%s235 + $0xab8] sm:$0xff]
      %v609 = vld [vmem:[%s235 + $0xac0] sm:$0xff]
      %v610 = vld [vmem:[%s235 + $0xac8] sm:$0xff]
      %v611 = vld [vmem:[%s235 + $0xad0] sm:$0xff]
      %v612 = vld [vmem:[%s235 + $0xad8] sm:$0xff]
      %v613 = vld [vmem:[%s235 + $0xae0] sm:$0xff]
      %v614 = vld [vmem:[%s235 + $0xae8] sm:$0xff]
      %v615 = vld [vmem:[%s235 + $0xaf0] sm:$0xff]
      %v616 = vld [vmem:[%s235 + $0xaf8] sm:$0xff]
      %v617 = vld [vmem:[%s235 + $0xb00] sm:$0xff]
      %v618 = vld [vmem:[%s235 + $0xb08] sm:$0xff]
      %v619 = vld [vmem:[%s235 + $0xb10] sm:$0xff]
      %v620 = vld [vmem:[%s235 + $0xb18] sm:$0xff]
      %v621 = vld [vmem:[%s235 + $0xb20] sm:$0xff]
      %v622 = vld [vmem:[%s235 + $0xb28] sm:$0xff]
      %v623 = vld [vmem:[%s235 + $0xb30] sm:$0xff]
      %v624 = vld [vmem:[%s235 + $0xb38] sm:$0xff]
      %v625 = vld [vmem:[%s235 + $0xb40] sm:$0xff]
      %v626 = vld [vmem:[%s235 + $0xb48] sm:$0xff]
      %v627 = vld [vmem:[%s235 + $0xb50] sm:$0xff]
      %v628 = vld [vmem:[%s235 + $0xb58] sm:$0xff]
      %v629 = vld [vmem:[%s235 + $0xb60] sm:$0xff]
      %v630 = vld [vmem:[%s235 + $0xb68] sm:$0xff]
      %v631 = vld [vmem:[%s235 + $0xb70] sm:$0xff]
      %v632 = vld [vmem:[%s235 + $0xb78] sm:$0xff]
      %v633 = vld [vmem:[%s235 + $0xb80] sm:$0xff]
      %v634 = vld [vmem:[%s235 + $0xb88] sm:$0xff]
      %v635 = vld [vmem:[%s235 + $0xb90] sm:$0xff]
      %v636 = vld [vmem:[%s235 + $0xb98] sm:$0xff]
      %v637 = vld [vmem:[%s235 + $0xba0] sm:$0xff]
      %v638 = vld [vmem:[%s235 + $0xba8] sm:$0xff]
      %v639 = vld [vmem:[%s235 + $0xbb0] sm:$0xff]
      %v640 = vld [vmem:[%s235 + $0xbb8] sm:$0xff]
      %v641 = vld [vmem:[%s235 + $0xbc0] sm:$0xff]
      %v642 = vld [vmem:[%s235 + $0xbc8] sm:$0xff]
      %v643 = vld [vmem:[%s235 + $0xbd0] sm:$0xff]
      %v644 = vld [vmem:[%s235 + $0xbd8] sm:$0xff]
      %v645 = vld [vmem:[%s235 + $0xbe0] sm:$0xff]
      %v646 = vld [vmem:[%s235 + $0xbe8] sm:$0xff]
      %v647 = vld [vmem:[%s235 + $0xbf0] sm:$0xff]
      %v648 = vld [vmem:[%s235 + $0xbf8] sm:$0xff]
      %v649 = vld [vmem:[%s235 + $0xc00] sm:$0xff]
      %v650 = vld [vmem:[%s235 + $0xc08] sm:$0xff]
      %v651 = vld [vmem:[%s235 + $0xc10] sm:$0xff]
      %v652 = vld [vmem:[%s235 + $0xc18] sm:$0xff]
      %v653 = vld [vmem:[%s235 + $0xc20] sm:$0xff]
      %v654 = vld [vmem:[%s235 + $0xc28] sm:$0xff]
      %v655 = vld [vmem:[%s235 + $0xc30] sm:$0xff]
      %v656 = vld [vmem:[%s235 + $0xc38] sm:$0xff]
      %v657 = vld [vmem:[%s235 + $0xc40] sm:$0xff]
      %v658 = vld [vmem:[%s235 + $0xc48] sm:$0xff]
      %v659 = vld [vmem:[%s235 + $0xc50] sm:$0xff]
      %v660 = vld [vmem:[%s235 + $0xc58] sm:$0xff]
      %v661 = vld [vmem:[%s235 + $0xc60] sm:$0xff]
      %v662 = vld [vmem:[%s235 + $0xc68] sm:$0xff]
      %v663 = vld [vmem:[%s235 + $0xc70] sm:$0xff]
      %v664 = vld [vmem:[%s235 + $0xc78] sm:$0xff]
      %v665 = vld [vmem:[%s235 + $0xc80] sm:$0xff]
      %v666 = vld [vmem:[%s235 + $0xc88] sm:$0xff]
      %v667 = vld [vmem:[%s235 + $0xc90] sm:$0xff]
      %v668 = vld [vmem:[%s235 + $0xc98] sm:$0xff]
      %v669 = vld [vmem:[%s235 + $0xca0] sm:$0xff]
      %v670 = vld [vmem:[%s235 + $0xca8] sm:$0xff]
      %v671 = vld [vmem:[%s235 + $0xcb0] sm:$0xff]
      %v672 = vld [vmem:[%s235 + $0xcb8] sm:$0xff]
      %v673 = vld [vmem:[%s235 + $0xcc0] sm:$0xff]
      %v674 = vld [vmem:[%s235 + $0xcc8] sm:$0xff]
      %v675 = vld [vmem:[%s235 + $0xcd0] sm:$0xff]
      %v676 = vld [vmem:[%s235 + $0xcd8] sm:$0xff]
      %v677 = vld [vmem:[%s235 + $0xce0] sm:$0xff]
      %v678 = vld [vmem:[%s235 + $0xce8] sm:$0xff]
      %v679 = vld [vmem:[%s235 + $0xcf0] sm:$0xff]
      %v680 = vld [vmem:[%s235 + $0xcf8] sm:$0xff]
      %v681 = vld [vmem:[%s235 + $0xd00] sm:$0xff]
      %v682 = vld [vmem:[%s235 + $0xd08] sm:$0xff]
      %v683 = vld [vmem:[%s235 + $0xd10] sm:$0xff]
      %v684 = vld [vmem:[%s235 + $0xd18] sm:$0xff]
      %v685 = vld [vmem:[%s235 + $0xd20] sm:$0xff]
      %v686 = vld [vmem:[%s235 + $0xd28] sm:$0xff]
      %v687 = vld [vmem:[%s235 + $0xd30] sm:$0xff]
      %v688 = vld [vmem:[%s235 + $0xd38] sm:$0xff]
      %v689 = vld [vmem:[%s235 + $0xd40] sm:$0xff]
      %v690 = vld [vmem:[%s235 + $0xd48] sm:$0xff]
      %v691 = vld [vmem:[%s235 + $0xd50] sm:$0xff]
      %v692 = vld [vmem:[%s235 + $0xd58] sm:$0xff]
      %v693 = vld [vmem:[%s235 + $0xd60] sm:$0xff]
      %v694 = vld [vmem:[%s235 + $0xd68] sm:$0xff]
      %v695 = vld [vmem:[%s235 + $0xd70] sm:$0xff]
      %v696 = vld [vmem:[%s235 + $0xd78] sm:$0xff]
      %v697 = vld [vmem:[%s235 + $0xd80] sm:$0xff]
      %v698 = vld [vmem:[%s235 + $0xd88] sm:$0xff]
      %v699 = vld [vmem:[%s235 + $0xd90] sm:$0xff]
      %v700 = vld [vmem:[%s235 + $0xd98] sm:$0xff]
      %v701 = vld [vmem:[%s235 + $0xda0] sm:$0xff]
      %v702 = vld [vmem:[%s235 + $0xda8] sm:$0xff]
      %v703 = vld [vmem:[%s235 + $0xdb0] sm:$0xff]
      %v704 = vld [vmem:[%s235 + $0xdb8] sm:$0xff]
      %v705 = vld [vmem:[%s235 + $0xdc0] sm:$0xff]
      %v706 = vld [vmem:[%s235 + $0xdc8] sm:$0xff]
      %v707 = vld [vmem:[%s235 + $0xdd0] sm:$0xff]
      %v708 = vld [vmem:[%s235 + $0xdd8] sm:$0xff]
      %v709 = vld [vmem:[%s235 + $0xde0] sm:$0xff]
      %v710 = vld [vmem:[%s235 + $0xde8] sm:$0xff]
      %v711 = vld [vmem:[%s235 + $0xdf0] sm:$0xff]
      %v712 = vld [vmem:[%s235 + $0xdf8] sm:$0xff]
      %v713 = vld [vmem:[%s235 + $0xe00] sm:$0xff]
      %v714 = vld [vmem:[%s235 + $0xe08] sm:$0xff]
      %v715 = vld [vmem:[%s235 + $0xe10] sm:$0xff]
      %v716 = vld [vmem:[%s235 + $0xe18] sm:$0xff]
      %v717 = vld [vmem:[%s235 + $0xe20] sm:$0xff]
      %v718 = vld [vmem:[%s235 + $0xe28] sm:$0xff]
      %v719 = vld [vmem:[%s235 + $0xe30] sm:$0xff]
      %v720 = vld [vmem:[%s235 + $0xe38] sm:$0xff]
      %v721 = vld [vmem:[%s235 + $0xe40] sm:$0xff]
      %v722 = vld [vmem:[%s235 + $0xe48] sm:$0xff]
      %v723 = vld [vmem:[%s235 + $0xe50] sm:$0xff]
      %v724 = vld [vmem:[%s235 + $0xe58] sm:$0xff]
      %v725 = vld [vmem:[%s235 + $0xe60] sm:$0xff]
      %v726 = vld [vmem:[%s235 + $0xe68] sm:$0xff]
      %v727 = vld [vmem:[%s235 + $0xe70] sm:$0xff]
      %v728 = vld [vmem:[%s235 + $0xe78] sm:$0xff]
      %v729 = vld [vmem:[%s235 + $0xe80] sm:$0xff]
      %v730 = vld [vmem:[%s235 + $0xe88] sm:$0xff]
      %v731 = vld [vmem:[%s235 + $0xe90] sm:$0xff]
      %v732 = vld [vmem:[%s235 + $0xe98] sm:$0xff]
      %v733 = vld [vmem:[%s235 + $0xea0] sm:$0xff]
      %v734 = vld [vmem:[%s235 + $0xea8] sm:$0xff]
      %v735 = vld [vmem:[%s235 + $0xeb0] sm:$0xff]
      %v736 = vld [vmem:[%s235 + $0xeb8] sm:$0xff]
      %v737 = vld [vmem:[%s235 + $0xec0] sm:$0xff]
      %v738 = vld [vmem:[%s235 + $0xec8] sm:$0xff]
      %v739 = vld [vmem:[%s235 + $0xed0] sm:$0xff]
      %v740 = vld [vmem:[%s235 + $0xed8] sm:$0xff]
      %v741 = vld [vmem:[%s235 + $0xee0] sm:$0xff]
      %v742 = vld [vmem:[%s235 + $0xee8] sm:$0xff]
      %v743 = vld [vmem:[%s235 + $0xef0] sm:$0xff]
      %v744 = vld [vmem:[%s235 + $0xef8] sm:$0xff]
      %v745 = vld [vmem:[%s235 + $0xf00] sm:$0xff]
      %v746 = vld [vmem:[%s235 + $0xf08] sm:$0xff]
      %v747 = vld [vmem:[%s235 + $0xf10] sm:$0xff]
      %v748 = vld [vmem:[%s235 + $0xf18] sm:$0xff]
      %v749 = vld [vmem:[%s235 + $0xf20] sm:$0xff]
      %v750 = vld [vmem:[%s235 + $0xf28] sm:$0xff]
      %v751 = vld [vmem:[%s235 + $0xf30] sm:$0xff]
      %v752 = vld [vmem:[%s235 + $0xf38] sm:$0xff]
      %v753 = vld [vmem:[%s235 + $0xf40] sm:$0xff]
      %v754 = vld [vmem:[%s235 + $0xf48] sm:$0xff]
      %v755 = vld [vmem:[%s235 + $0xf50] sm:$0xff]
      %v756 = vld [vmem:[%s235 + $0xf58] sm:$0xff]
      %v757 = vld [vmem:[%s235 + $0xf60] sm:$0xff]
      %v758 = vld [vmem:[%s235 + $0xf68] sm:$0xff]
      %v759 = vld [vmem:[%s235 + $0xf70] sm:$0xff]
      %v760 = vld [vmem:[%s235 + $0xf78] sm:$0xff]
      %v761 = vld [vmem:[%s235 + $0xf80] sm:$0xff]
      %v762 = vld [vmem:[%s235 + $0xf88] sm:$0xff]
      %v763 = vld [vmem:[%s235 + $0xf90] sm:$0xff]
      %v764 = vld [vmem:[%s235 + $0xf98] sm:$0xff]
      %v765 = vld [vmem:[%s235 + $0xfa0] sm:$0xff]
      %v766 = vld [vmem:[%s235 + $0xfa8] sm:$0xff]
      %v767 = vld [vmem:[%s235 + $0xfb0] sm:$0xff]
      %v768 = vld [vmem:[%s235 + $0xfb8] sm:$0xff]
      %v769 = vld [vmem:[%s235 + $0xfc0] sm:$0xff]
      %v770 = vld [vmem:[%s235 + $0xfc8] sm:$0xff]
      %v771 = vld [vmem:[%s235 + $0xfd0] sm:$0xff]
      %v772 = vld [vmem:[%s235 + $0xfd8] sm:$0xff]
      %v773 = vld [vmem:[%s235 + $0xfe0] sm:$0xff]
      %v774 = vld [vmem:[%s235 + $0xfe8] sm:$0xff]
      %v775 = vld [vmem:[%s235 + $0xff0] sm:$0xff]
      %v776 = vld [vmem:[%s235 + $0xff8] sm:$0xff]
      %v777 = vld [vmem:[%s235 + $0x1000] sm:$0xff]
      %v778 = vld [vmem:[%s235 + $0x1008] sm:$0xff]
      %v779 = vld [vmem:[%s235 + $0x1010] sm:$0xff]
      %v780 = vld [vmem:[%s235 + $0x1018] sm:$0xff]
      %v781 = vld [vmem:[%s235 + $0x1020] sm:$0xff]
      %v782 = vld [vmem:[%s235 + $0x1028] sm:$0xff]
      %v783 = vld [vmem:[%s235 + $0x1030] sm:$0xff]
      %v784 = vld [vmem:[%s235 + $0x1038] sm:$0xff]
      %v785 = vld [vmem:[%s235 + $0x1040] sm:$0xff]
      %v786 = vld [vmem:[%s235 + $0x1048] sm:$0xff]
      %v787 = vld [vmem:[%s235 + $0x1050] sm:$0xff]
      %v788 = vld [vmem:[%s235 + $0x1058] sm:$0xff]
      %v789 = vld [vmem:[%s235 + $0x1060] sm:$0xff]
      %v790 = vld [vmem:[%s235 + $0x1068] sm:$0xff]
      %v791 = vld [vmem:[%s235 + $0x1070] sm:$0xff]
      %v792 = vld [vmem:[%s235 + $0x1078] sm:$0xff]
      %v793 = vld [vmem:[%s235 + $0x1080] sm:$0xff]
      %v794 = vld [vmem:[%s235 + $0x1088] sm:$0xff]
      %v795 = vld [vmem:[%s235 + $0x1090] sm:$0xff]
      %v796 = vld [vmem:[%s235 + $0x1098] sm:$0xff]
      %v797 = vld [vmem:[%s235 + $0x10a0] sm:$0xff]
      %v798 = vld [vmem:[%s235 + $0x10a8] sm:$0xff]
      %v799 = vld [vmem:[%s235 + $0x10b0] sm:$0xff]
      %v800 = vld [vmem:[%s235 + $0x10b8] sm:$0xff]
      %v801 = vld [vmem:[%s235 + $0x10c0] sm:$0xff]
      %v802 = vld [vmem:[%s235 + $0x10c8] sm:$0xff]
      %v803 = vld [vmem:[%s235 + $0x10d0] sm:$0xff]
      %v804 = vld [vmem:[%s235 + $0x10d8] sm:$0xff]
      %v805 = vld [vmem:[%s235 + $0x10e0] sm:$0xff]
      %v806 = vld [vmem:[%s235 + $0x10e8] sm:$0xff]
      %v807 = vld [vmem:[%s235 + $0x10f0] sm:$0xff]
      %v808 = vld [vmem:[%s235 + $0x10f8] sm:$0xff]
      %v809 = vld [vmem:[%s235 + $0x1100] sm:$0xff]
      %v810 = vld [vmem:[%s235 + $0x1108] sm:$0xff]
      %v811 = vld [vmem:[%s235 + $0x1110] sm:$0xff]
      %v812 = vld [vmem:[%s235 + $0x1118] sm:$0xff]
      %v813 = vld [vmem:[%s235 + $0x1120] sm:$0xff]
      %v814 = vld [vmem:[%s235 + $0x1128] sm:$0xff]
      %v815 = vld [vmem:[%s235 + $0x1130] sm:$0xff]
      %v816 = vld [vmem:[%s235 + $0x1138] sm:$0xff]
      %v817 = vld [vmem:[%s235 + $0x1140] sm:$0xff]
      %v818 = vld [vmem:[%s235 + $0x1148] sm:$0xff]
      %v819 = vld [vmem:[%s235 + $0x1150] sm:$0xff]
      %v820 = vld [vmem:[%s235 + $0x1158] sm:$0xff]
      %v821 = vld [vmem:[%s235 + $0x1160] sm:$0xff]
      %v822 = vld [vmem:[%s235 + $0x1168] sm:$0xff]
      %v823 = vld [vmem:[%s235 + $0x1170] sm:$0xff]
      %v824 = vld [vmem:[%s235 + $0x1178] sm:$0xff]
      %v825 = vld [vmem:[%s235 + $0x1180] sm:$0xff]
      %v826 = vld [vmem:[%s235 + $0x1188] sm:$0xff]
      %v827 = vld [vmem:[%s235 + $0x1190] sm:$0xff]
      %v828 = vld [vmem:[%s235 + $0x1198] sm:$0xff]
      %v829 = vld [vmem:[%s235 + $0x11a0] sm:$0xff]
      %v830 = vld [vmem:[%s235 + $0x11a8] sm:$0xff]
      %v831 = vld [vmem:[%s235 + $0x11b0] sm:$0xff]
      %v832 = vld [vmem:[%s235 + $0x11b8] sm:$0xff]
      %v833 = vld [vmem:[%s235 + $0x11c0] sm:$0xff]
      %v834 = vld [vmem:[%s235 + $0x11c8] sm:$0xff]
      %v835 = vld [vmem:[%s235 + $0x11d0] sm:$0xff]
      %v836 = vld [vmem:[%s235 + $0x11d8] sm:$0xff]
      %v837 = vld [vmem:[%s235 + $0x11e0] sm:$0xff]
      %v838 = vld [vmem:[%s235 + $0x11e8] sm:$0xff]
      %v839 = vld [vmem:[%s235 + $0x11f0] sm:$0xff]
      %v840 = vld [vmem:[%s235 + $0x11f8] sm:$0xff]
      %v841 = vld [vmem:[%s235 + $0x1200] sm:$0xff]
      %v842 = vld [vmem:[%s235 + $0x1208] sm:$0xff]
      %v843 = vld [vmem:[%s235 + $0x1210] sm:$0xff]
      %v844 = vld [vmem:[%s235 + $0x1218] sm:$0xff]
      %v845 = vld [vmem:[%s235 + $0x1220] sm:$0xff]
      %v846 = vld [vmem:[%s235 + $0x1228] sm:$0xff]
      %v847 = vld [vmem:[%s235 + $0x1230] sm:$0xff]
      %v848 = vld [vmem:[%s235 + $0x1238] sm:$0xff]
      %v849 = vld [vmem:[%s235 + $0x1240] sm:$0xff]
      %v850 = vld [vmem:[%s235 + $0x1248] sm:$0xff]
      %v851 = vld [vmem:[%s235 + $0x1250] sm:$0xff]
      %v852 = vld [vmem:[%s235 + $0x1258] sm:$0xff]
      %v853 = vld [vmem:[%s235 + $0x1260] sm:$0xff]
      %v854 = vld [vmem:[%s235 + $0x1268] sm:$0xff]
      %v855 = vld [vmem:[%s235 + $0x1270] sm:$0xff]
      %v856 = vld [vmem:[%s235 + $0x1278] sm:$0xff]
      %v857 = vld [vmem:[%s235 + $0x1280] sm:$0xff]
      %v858 = vld [vmem:[%s235 + $0x1288] sm:$0xff]
      %v859 = vld [vmem:[%s235 + $0x1290] sm:$0xff]
      %v860 = vld [vmem:[%s235 + $0x1298] sm:$0xff]
      %v861 = vld [vmem:[%s235 + $0x12a0] sm:$0xff]
      %v862 = vld [vmem:[%s235 + $0x12a8] sm:$0xff]
      %v863 = vld [vmem:[%s235 + $0x12b0] sm:$0xff]
      %v864 = vld [vmem:[%s235 + $0x12b8] sm:$0xff]
      %v865 = vld [vmem:[%s235 + $0x12c0] sm:$0xff]
      %v866 = vld [vmem:[%s235 + $0x12c8] sm:$0xff]
      %v867 = vld [vmem:[%s235 + $0x12d0] sm:$0xff]
      %v868 = vld [vmem:[%s235 + $0x12d8] sm:$0xff]
      %v869 = vld [vmem:[%s235 + $0x12e0] sm:$0xff]
      %v870 = vld [vmem:[%s235 + $0x12e8] sm:$0xff]
      %v871 = vld [vmem:[%s235 + $0x12f0] sm:$0xff]
      %v872 = vld [vmem:[%s235 + $0x12f8] sm:$0xff]
      %v873 = vld [vmem:[%s235 + $0x1300] sm:$0xff]
      %v874 = vld [vmem:[%s235 + $0x1308] sm:$0xff]
      %v875 = vld [vmem:[%s235 + $0x1310] sm:$0xff]
      %v876 = vld [vmem:[%s235 + $0x1318] sm:$0xff]
      %v877 = vld [vmem:[%s235 + $0x1320] sm:$0xff]
      %v878 = vld [vmem:[%s235 + $0x1328] sm:$0xff]
      %v879 = vld [vmem:[%s235 + $0x1330] sm:$0xff]
      %v880 = vld [vmem:[%s235 + $0x1338] sm:$0xff]
      %v881 = vld [vmem:[%s235 + $0x1340] sm:$0xff]
      %v882 = vld [vmem:[%s235 + $0x1348] sm:$0xff]
      %v883 = vld [vmem:[%s235 + $0x1350] sm:$0xff]
      %v884 = vld [vmem:[%s235 + $0x1358] sm:$0xff]
      %v885 = vld [vmem:[%s235 + $0x1360] sm:$0xff]
      %v886 = vld [vmem:[%s235 + $0x1368] sm:$0xff]
      %v887 = vld [vmem:[%s235 + $0x1370] sm:$0xff]
      %v888 = vld [vmem:[%s235 + $0x1378] sm:$0xff]
      %v889 = vld [vmem:[%s235 + $0x1380] sm:$0xff]
      %v890 = vld [vmem:[%s235 + $0x1388] sm:$0xff]
      %v891 = vld [vmem:[%s235 + $0x1390] sm:$0xff]
      %v892 = vld [vmem:[%s235 + $0x1398] sm:$0xff]
      %v893 = vld [vmem:[%s235 + $0x13a0] sm:$0xff]
      %v894 = vld [vmem:[%s235 + $0x13a8] sm:$0xff]
      %v895 = vld [vmem:[%s235 + $0x13b0] sm:$0xff]
      %v896 = vld [vmem:[%s235 + $0x13b8] sm:$0xff]
      %v897 = vld [vmem:[%s235 + $0x13c0] sm:$0xff]
      %v898 = vld [vmem:[%s235 + $0x13c8] sm:$0xff]
      %v899 = vld [vmem:[%s235 + $0x13d0] sm:$0xff]
      %v900 = vld [vmem:[%s235 + $0x13d8] sm:$0xff]
      %v901 = vld [vmem:[%s235 + $0x13e0] sm:$0xff]
      %v902 = vld [vmem:[%s235 + $0x13e8] sm:$0xff]
      %v903 = vld [vmem:[%s235 + $0x13f0] sm:$0xff]
      %v904 = vld [vmem:[%s235 + $0x13f8] sm:$0xff]
      %v905 = vld [vmem:[%s235 + $0x1400] sm:$0xff]
      %v906 = vld [vmem:[%s235 + $0x1408] sm:$0xff]
      %v907 = vld [vmem:[%s235 + $0x1410] sm:$0xff]
      %v908 = vld [vmem:[%s235 + $0x1418] sm:$0xff]
      %v909 = vld [vmem:[%s235 + $0x1420] sm:$0xff]
      %v910 = vld [vmem:[%s235 + $0x1428] sm:$0xff]
      %v911 = vld [vmem:[%s235 + $0x1430] sm:$0xff]
      %v912 = vld [vmem:[%s235 + $0x1438] sm:$0xff]
      %v913 = vld [vmem:[%s235 + $0x1440] sm:$0xff]
      %v914 = vld [vmem:[%s235 + $0x1448] sm:$0xff]
      %v915 = vld [vmem:[%s235 + $0x1450] sm:$0xff]
      %v916 = vld [vmem:[%s235 + $0x1458] sm:$0xff]
      %v917 = vld [vmem:[%s235 + $0x1460] sm:$0xff]
      %v918 = vld [vmem:[%s235 + $0x1468] sm:$0xff]
      %v919 = vld [vmem:[%s235 + $0x1470] sm:$0xff]
      %v920 = vld [vmem:[%s235 + $0x1478] sm:$0xff]
      %v921 = vld [vmem:[%s235 + $0x1480] sm:$0xff]
      %v922 = vld [vmem:[%s235 + $0x1488] sm:$0xff]
      %v923 = vld [vmem:[%s235 + $0x1490] sm:$0xff]
      %v924 = vld [vmem:[%s235 + $0x1498] sm:$0xff]
      %v925 = vld [vmem:[%s235 + $0x14a0] sm:$0xff]
      %v926 = vld [vmem:[%s235 + $0x14a8] sm:$0xff]
      %v927 = vld [vmem:[%s235 + $0x14b0] sm:$0xff]
      %v928 = vld [vmem:[%s235 + $0x14b8] sm:$0xff]
      %v929 = vld [vmem:[%s235 + $0x14c0] sm:$0xff]
      %v930 = vld [vmem:[%s235 + $0x14c8] sm:$0xff]
      %v931 = vld [vmem:[%s235 + $0x14d0] sm:$0xff]
      %v932 = vld [vmem:[%s235 + $0x14d8] sm:$0xff]
      %v933 = vld [vmem:[%s235 + $0x14e0] sm:$0xff]
      %v934 = vld [vmem:[%s235 + $0x14e8] sm:$0xff]
      %v935 = vld [vmem:[%s235 + $0x14f0] sm:$0xff]
      %v936 = vld [vmem:[%s235 + $0x14f8] sm:$0xff]
      %v937 = vld [vmem:[%s235 + $0x1500] sm:$0xff]
      %v938 = vld [vmem:[%s235 + $0x1508] sm:$0xff]
      %v939 = vld [vmem:[%s235 + $0x1510] sm:$0xff]
      %v940 = vld [vmem:[%s235 + $0x1518] sm:$0xff]
      %v941 = vld [vmem:[%s235 + $0x1520] sm:$0xff]
      %v942 = vld [vmem:[%s235 + $0x1528] sm:$0xff]
      %v943 = vld [vmem:[%s235 + $0x1530] sm:$0xff]
      %v944 = vld [vmem:[%s235 + $0x1538] sm:$0xff]
      %v945 = vld [vmem:[%s235 + $0x1540] sm:$0xff]
      %v946 = vld [vmem:[%s235 + $0x1548] sm:$0xff]
      %v947 = vld [vmem:[%s235 + $0x1550] sm:$0xff]
      %v948 = vld [vmem:[%s235 + $0x1558] sm:$0xff]
      %v949 = vld [vmem:[%s235 + $0x1560] sm:$0xff]
      %v950 = vld [vmem:[%s235 + $0x1568] sm:$0xff]
      %v951 = vld [vmem:[%s235 + $0x1570] sm:$0xff]
      %v952 = vld [vmem:[%s235 + $0x1578] sm:$0xff]
      %v953 = vld [vmem:[%s235 + $0x1580] sm:$0xff]
      %v954 = vld [vmem:[%s235 + $0x1588] sm:$0xff]
      %v955 = vld [vmem:[%s235 + $0x1590] sm:$0xff]
      %v956 = vld [vmem:[%s235 + $0x1598] sm:$0xff]
      %v957 = vld [vmem:[%s235 + $0x15a0] sm:$0xff]
      %v958 = vld [vmem:[%s235 + $0x15a8] sm:$0xff]
      %v959 = vld [vmem:[%s235 + $0x15b0] sm:$0xff]
      %v960 = vld [vmem:[%s235 + $0x15b8] sm:$0xff]
      %v961 = vld [vmem:[%s235 + $0x15c0] sm:$0xff]
      %v962 = vld [vmem:[%s235 + $0x15c8] sm:$0xff]
      %v963 = vld [vmem:[%s235 + $0x15d0] sm:$0xff]
      %v964 = vld [vmem:[%s235 + $0x15d8] sm:$0xff]
      %v965 = vld [vmem:[%s235 + $0x15e0] sm:$0xff]
      %v966 = vld [vmem:[%s235 + $0x15e8] sm:$0xff]
      %v967 = vld [vmem:[%s235 + $0x15f0] sm:$0xff]
      %v968 = vld [vmem:[%s235 + $0x15f8] sm:$0xff]
      %v969 = vld [vmem:[%s235 + $0x1600] sm:$0xff]
      %v970 = vld [vmem:[%s235 + $0x1608] sm:$0xff]
      %v971 = vld [vmem:[%s235 + $0x1610] sm:$0xff]
      %v972 = vld [vmem:[%s235 + $0x1618] sm:$0xff]
      %v973 = vld [vmem:[%s235 + $0x1620] sm:$0xff]
      %v974 = vld [vmem:[%s235 + $0x1628] sm:$0xff]
      %v975 = vld [vmem:[%s235 + $0x1630] sm:$0xff]
      %v976 = vld [vmem:[%s235 + $0x1638] sm:$0xff]
      %v977 = vld [vmem:[%s235 + $0x1640] sm:$0xff]
      %v978 = vld [vmem:[%s235 + $0x1648] sm:$0xff]
      %v979 = vld [vmem:[%s235 + $0x1650] sm:$0xff]
      %v980 = vld [vmem:[%s235 + $0x1658] sm:$0xff]
      %v981 = vld [vmem:[%s235 + $0x1660] sm:$0xff]
      %v982 = vld [vmem:[%s235 + $0x1668] sm:$0xff]
      %v983 = vld [vmem:[%s235 + $0x1670] sm:$0xff]
      %v984 = vld [vmem:[%s235 + $0x1678] sm:$0xff]
      %v985 = vld [vmem:[%s235 + $0x1680] sm:$0xff]
      %v986 = vld [vmem:[%s235 + $0x1688] sm:$0xff]
      %v987 = vld [vmem:[%s235 + $0x1690] sm:$0xff]
      %v988 = vld [vmem:[%s235 + $0x1698] sm:$0xff]
      %v989 = vld [vmem:[%s235 + $0x16a0] sm:$0xff]
      %v990 = vld [vmem:[%s235 + $0x16a8] sm:$0xff]
      %v991 = vld [vmem:[%s235 + $0x16b0] sm:$0xff]
      %v992 = vld [vmem:[%s235 + $0x16b8] sm:$0xff]
      %v993 = vld [vmem:[%s235 + $0x16c0] sm:$0xff]
      %v994 = vld [vmem:[%s235 + $0x16c8] sm:$0xff]
      %v995 = vld [vmem:[%s235 + $0x16d0] sm:$0xff]
      %v996 = vld [vmem:[%s235 + $0x16d8] sm:$0xff]
      %v997 = vld [vmem:[%s235 + $0x16e0] sm:$0xff]
      %v998 = vld [vmem:[%s235 + $0x16e8] sm:$0xff]
      %v999 = vld [vmem:[%s235 + $0x16f0] sm:$0xff]
      %v1000 = vld [vmem:[%s235 + $0x16f8] sm:$0xff]
      %v1001 = vld [vmem:[%s235 + $0x1700] sm:$0xff]
      %v1002 = vld [vmem:[%s235 + $0x1708] sm:$0xff]
      %v1003 = vld [vmem:[%s235 + $0x1710] sm:$0xff]
      %v1004 = vld [vmem:[%s235 + $0x1718] sm:$0xff]
      %v1005 = vld [vmem:[%s235 + $0x1720] sm:$0xff]
      %v1006 = vld [vmem:[%s235 + $0x1728] sm:$0xff]
      %v1007 = vld [vmem:[%s235 + $0x1730] sm:$0xff]
      %v1008 = vld [vmem:[%s235 + $0x1738] sm:$0xff]
      %v1009 = vld [vmem:[%s235 + $0x1740] sm:$0xff]
      %v1010 = vld [vmem:[%s235 + $0x1748] sm:$0xff]
      %v1011 = vld [vmem:[%s235 + $0x1750] sm:$0xff]
      %v1012 = vld [vmem:[%s235 + $0x1758] sm:$0xff]
      %v1013 = vld [vmem:[%s235 + $0x1760] sm:$0xff]
      %v1014 = vld [vmem:[%s235 + $0x1768] sm:$0xff]
      %v1015 = vld [vmem:[%s235 + $0x1770] sm:$0xff]
      %v1016 = vld [vmem:[%s235 + $0x1778] sm:$0xff]
      %v1017 = vld [vmem:[%s235 + $0x1780] sm:$0xff]
      %v1018 = vld [vmem:[%s235 + $0x1788] sm:$0xff]
      %v1019 = vld [vmem:[%s235 + $0x1790] sm:$0xff]
      %v1020 = vld [vmem:[%s235 + $0x1798] sm:$0xff]
      %v1021 = vld [vmem:[%s235 + $0x17a0] sm:$0xff]
      %v1022 = vld [vmem:[%s235 + $0x17a8] sm:$0xff]
      %v1023 = vld [vmem:[%s235 + $0x17b0] sm:$0xff]
      %v1024 = vld [vmem:[%s235 + $0x17b8] sm:$0xff]
      %v1025 = vld [vmem:[%s235 + $0x17c0] sm:$0xff]
      %v1026 = vld [vmem:[%s235 + $0x17c8] sm:$0xff]
      %v1027 = vld [vmem:[%s235 + $0x17d0] sm:$0xff]
      %v1028 = vld [vmem:[%s235 + $0x17d8] sm:$0xff]
      %v1029 = vld [vmem:[%s235 + $0x17e0] sm:$0xff]
      %v1030 = vld [vmem:[%s235 + $0x17e8] sm:$0xff]
      %v1031 = vld [vmem:[%s235 + $0x17f0] sm:$0xff]
      %v1032 = vld [vmem:[%s235 + $0x17f8] sm:$0xff]
      %v1033 = vld [vmem:[%s235 + $0x1800] sm:$0xff]
      %v1034 = vld [vmem:[%s235 + $0x1808] sm:$0xff]
      %v1035 = vld [vmem:[%s235 + $0x1810] sm:$0xff]
      %v1036 = vld [vmem:[%s235 + $0x1818] sm:$0xff]
      %v1037 = vld [vmem:[%s235 + $0x1820] sm:$0xff]
      %v1038 = vld [vmem:[%s235 + $0x1828] sm:$0xff]
      %v1039 = vld [vmem:[%s235 + $0x1830] sm:$0xff]
      %v1040 = vld [vmem:[%s235 + $0x1838] sm:$0xff]
      %v1041 = vld [vmem:[%s235 + $0x1840] sm:$0xff]
      %v1042 = vld [vmem:[%s235 + $0x1848] sm:$0xff]
      %v1043 = vld [vmem:[%s235 + $0x1850] sm:$0xff]
      %v1044 = vld [vmem:[%s235 + $0x1858] sm:$0xff]
      %v1045 = vld [vmem:[%s235 + $0x1860] sm:$0xff]
      %v1046 = vld [vmem:[%s235 + $0x1868] sm:$0xff]
      %v1047 = vld [vmem:[%s235 + $0x1870] sm:$0xff]
      %v1048 = vld [vmem:[%s235 + $0x1878] sm:$0xff]
      %v1049 = vld [vmem:[%s235 + $0x1880] sm:$0xff]
      %v1050 = vld [vmem:[%s235 + $0x1888] sm:$0xff]
      %v1051 = vld [vmem:[%s235 + $0x1890] sm:$0xff]
      %v1052 = vld [vmem:[%s235 + $0x1898] sm:$0xff]
      %v1053 = vld [vmem:[%s235 + $0x18a0] sm:$0xff]
      %v1054 = vld [vmem:[%s235 + $0x18a8] sm:$0xff]
      %v1055 = vld [vmem:[%s235 + $0x18b0] sm:$0xff]
      %v1056 = vld [vmem:[%s235 + $0x18b8] sm:$0xff]
      %v1057 = vld [vmem:[%s235 + $0x18c0] sm:$0xff]
      %v1058 = vld [vmem:[%s235 + $0x18c8] sm:$0xff]
      %v1059 = vld [vmem:[%s235 + $0x18d0] sm:$0xff]
      %v1060 = vld [vmem:[%s235 + $0x18d8] sm:$0xff]
      %v1061 = vld [vmem:[%s235 + $0x18e0] sm:$0xff]
      %v1062 = vld [vmem:[%s235 + $0x18e8] sm:$0xff]
      %v1063 = vld [vmem:[%s235 + $0x18f0] sm:$0xff]
      %v1064 = vld [vmem:[%s235 + $0x18f8] sm:$0xff]
      %v1065 = vld [vmem:[%s235 + $0x1900] sm:$0xff]
      %v1066 = vld [vmem:[%s235 + $0x1908] sm:$0xff]
      %v1067 = vld [vmem:[%s235 + $0x1910] sm:$0xff]
      %v1068 = vld [vmem:[%s235 + $0x1918] sm:$0xff]
      %v1069 = vld [vmem:[%s235 + $0x1920] sm:$0xff]
      %v1070 = vld [vmem:[%s235 + $0x1928] sm:$0xff]
      %v1071 = vld [vmem:[%s235 + $0x1930] sm:$0xff]
      %v1072 = vld [vmem:[%s235 + $0x1938] sm:$0xff]
      %v1073 = vld [vmem:[%s235 + $0x1940] sm:$0xff]
      %v1074 = vld [vmem:[%s235 + $0x1948] sm:$0xff]
      %v1075 = vld [vmem:[%s235 + $0x1950] sm:$0xff]
      %v1076 = vld [vmem:[%s235 + $0x1958] sm:$0xff]
      %v1077 = vld [vmem:[%s235 + $0x1960] sm:$0xff]
      %v1078 = vld [vmem:[%s235 + $0x1968] sm:$0xff]
      %v1079 = vld [vmem:[%s235 + $0x1970] sm:$0xff]
      %v1080 = vld [vmem:[%s235 + $0x1978] sm:$0xff]
      %v1081 = vld [vmem:[%s235 + $0x1980] sm:$0xff]
      %v1082 = vld [vmem:[%s235 + $0x1988] sm:$0xff]
      %v1083 = vld [vmem:[%s235 + $0x1990] sm:$0xff]
      %v1084 = vld [vmem:[%s235 + $0x1998] sm:$0xff]
      %v1085 = vld [vmem:[%s235 + $0x19a0] sm:$0xff]
      %v1086 = vld [vmem:[%s235 + $0x19a8] sm:$0xff]
      %v1087 = vld [vmem:[%s235 + $0x19b0] sm:$0xff]
      %v1088 = vld [vmem:[%s235 + $0x19b8] sm:$0xff]
      %v1089 = vld [vmem:[%s235 + $0x19c0] sm:$0xff]
      %v1090 = vld [vmem:[%s235 + $0x19c8] sm:$0xff]
      %v1091 = vld [vmem:[%s235 + $0x19d0] sm:$0xff]
      %v1092 = vld [vmem:[%s235 + $0x19d8] sm:$0xff]
      %v1093 = vld [vmem:[%s235 + $0x19e0] sm:$0xff]
      %v1094 = vld [vmem:[%s235 + $0x19e8] sm:$0xff]
      %v1095 = vld [vmem:[%s235 + $0x19f0] sm:$0xff]
      %v1096 = vld [vmem:[%s235 + $0x19f8] sm:$0xff]
      %v1097 = vld [vmem:[%s235 + $0x1a00] sm:$0xff]
      %v1098 = vld [vmem:[%s235 + $0x1a08] sm:$0xff]
      %v1099 = vld [vmem:[%s235 + $0x1a10] sm:$0xff]
      %v1100 = vld [vmem:[%s235 + $0x1a18] sm:$0xff]
      %v1101 = vld [vmem:[%s235 + $0x1a20] sm:$0xff]
      %v1102 = vld [vmem:[%s235 + $0x1a28] sm:$0xff]
      %v1103 = vld [vmem:[%s235 + $0x1a30] sm:$0xff]
      %v1104 = vld [vmem:[%s235 + $0x1a38] sm:$0xff]
      %v1105 = vld [vmem:[%s235 + $0x1a40] sm:$0xff]
      %v1106 = vld [vmem:[%s235 + $0x1a48] sm:$0xff]
      %v1107 = vld [vmem:[%s235 + $0x1a50] sm:$0xff]
      %v1108 = vld [vmem:[%s235 + $0x1a58] sm:$0xff]
      %v1109 = vld [vmem:[%s235 + $0x1a60] sm:$0xff]
      %v1110 = vld [vmem:[%s235 + $0x1a68] sm:$0xff]
      %v1111 = vld [vmem:[%s235 + $0x1a70] sm:$0xff]
      %v1112 = vld [vmem:[%s235 + $0x1a78] sm:$0xff]
      %v1113 = vld [vmem:[%s235 + $0x1a80] sm:$0xff]
      %v1114 = vld [vmem:[%s235 + $0x1a88] sm:$0xff]
      %v1115 = vld [vmem:[%s235 + $0x1a90] sm:$0xff]
      %v1116 = vld [vmem:[%s235 + $0x1a98] sm:$0xff]
      %v1117 = vld [vmem:[%s235 + $0x1aa0] sm:$0xff]
      %v1118 = vld [vmem:[%s235 + $0x1aa8] sm:$0xff]
      %v1119 = vld [vmem:[%s235 + $0x1ab0] sm:$0xff]
      %v1120 = vld [vmem:[%s235 + $0x1ab8] sm:$0xff]
      %v1121 = vld [vmem:[%s235 + $0x1ac0] sm:$0xff]
      %v1122 = vld [vmem:[%s235 + $0x1ac8] sm:$0xff]
      %v1123 = vld [vmem:[%s235 + $0x1ad0] sm:$0xff]
      %v1124 = vld [vmem:[%s235 + $0x1ad8] sm:$0xff]
      %v1125 = vld [vmem:[%s235 + $0x1ae0] sm:$0xff]
      %v1126 = vld [vmem:[%s235 + $0x1ae8] sm:$0xff]
      %v1127 = vld [vmem:[%s235 + $0x1af0] sm:$0xff]
      %v1128 = vld [vmem:[%s235 + $0x1af8] sm:$0xff]
      %v1129 = vld [vmem:[%s235 + $0x1b00] sm:$0xff]
      %v1130 = vld [vmem:[%s235 + $0x1b08] sm:$0xff]
      %v1131 = vld [vmem:[%s235 + $0x1b10] sm:$0xff]
      %v1132 = vld [vmem:[%s235 + $0x1b18] sm:$0xff]
      %v1133 = vld [vmem:[%s235 + $0x1b20] sm:$0xff]
      %v1134 = vld [vmem:[%s235 + $0x1b28] sm:$0xff]
      %v1135 = vld [vmem:[%s235 + $0x1b30] sm:$0xff]
      %v1136 = vld [vmem:[%s235 + $0x1b38] sm:$0xff]
      %v1137 = vld [vmem:[%s235 + $0x1b40] sm:$0xff]
      %v1138 = vld [vmem:[%s235 + $0x1b48] sm:$0xff]
      %v1139 = vld [vmem:[%s235 + $0x1b50] sm:$0xff]
      %v1140 = vld [vmem:[%s235 + $0x1b58] sm:$0xff]
      %v1141 = vld [vmem:[%s235 + $0x1b60] sm:$0xff]
      %v1142 = vld [vmem:[%s235 + $0x1b68] sm:$0xff]
      %v1143 = vld [vmem:[%s235 + $0x1b70] sm:$0xff]
      %v1144 = vld [vmem:[%s235 + $0x1b78] sm:$0xff]
      %v1145 = vld [vmem:[%s235 + $0x1b80] sm:$0xff]
      %v1146 = vld [vmem:[%s235 + $0x1b88] sm:$0xff]
      %v1147 = vld [vmem:[%s235 + $0x1b90] sm:$0xff]
      %v1148 = vld [vmem:[%s235 + $0x1b98] sm:$0xff]
      %v1149 = vld [vmem:[%s235 + $0x1ba0] sm:$0xff]
      %v1150 = vld [vmem:[%s235 + $0x1ba8] sm:$0xff]
      %v1151 = vld [vmem:[%s235 + $0x1bb0] sm:$0xff]
      %v1152 = vld [vmem:[%s235 + $0x1bb8] sm:$0xff]
      %v1153 = vld [vmem:[%s235 + $0x1bc0] sm:$0xff]
      %v1154 = vld [vmem:[%s235 + $0x1bc8] sm:$0xff]
      %v1155 = vld [vmem:[%s235 + $0x1bd0] sm:$0xff]
      %v1156 = vld [vmem:[%s235 + $0x1bd8] sm:$0xff]
      %v1157 = vld [vmem:[%s235 + $0x1be0] sm:$0xff]
      %v1158 = vld [vmem:[%s235 + $0x1be8] sm:$0xff]
      %v1159 = vld [vmem:[%s235 + $0x1bf0] sm:$0xff]
      %v1160 = vld [vmem:[%s235 + $0x1bf8] sm:$0xff]
      %v1161 = vld [vmem:[%s235 + $0x1c00] sm:$0xff]
      %v1162 = vld [vmem:[%s235 + $0x1c08] sm:$0xff]
      %v1163 = vld [vmem:[%s235 + $0x1c10] sm:$0xff]
      %v1164 = vld [vmem:[%s235 + $0x1c18] sm:$0xff]
      %v1165 = vld [vmem:[%s235 + $0x1c20] sm:$0xff]
      %v1166 = vld [vmem:[%s235 + $0x1c28] sm:$0xff]
      %v1167 = vld [vmem:[%s235 + $0x1c30] sm:$0xff]
      %v1168 = vld [vmem:[%s235 + $0x1c38] sm:$0xff]
      %v1169 = vld [vmem:[%s235 + $0x1c40] sm:$0xff]
      %v1170 = vld [vmem:[%s235 + $0x1c48] sm:$0xff]
      %v1171 = vld [vmem:[%s235 + $0x1c50] sm:$0xff]
      %v1172 = vld [vmem:[%s235 + $0x1c58] sm:$0xff]
      %v1173 = vld [vmem:[%s235 + $0x1c60] sm:$0xff]
      %v1174 = vld [vmem:[%s235 + $0x1c68] sm:$0xff]
      %v1175 = vld [vmem:[%s235 + $0x1c70] sm:$0xff]
      %v1176 = vld [vmem:[%s235 + $0x1c78] sm:$0xff]
      %v1177 = vld [vmem:[%s235 + $0x1c80] sm:$0xff]
      %v1178 = vld [vmem:[%s235 + $0x1c88] sm:$0xff]
      %v1179 = vld [vmem:[%s235 + $0x1c90] sm:$0xff]
      %v1180 = vld [vmem:[%s235 + $0x1c98] sm:$0xff]
      %v1181 = vld [vmem:[%s235 + $0x1ca0] sm:$0xff]
      %v1182 = vld [vmem:[%s235 + $0x1ca8] sm:$0xff]
      %v1183 = vld [vmem:[%s235 + $0x1cb0] sm:$0xff]
      %v1184 = vld [vmem:[%s235 + $0x1cb8] sm:$0xff]
      %v1185 = vld [vmem:[%s235 + $0x1cc0] sm:$0xff]
      %v1186 = vld [vmem:[%s235 + $0x1cc8] sm:$0xff]
      %v1187 = vld [vmem:[%s235 + $0x1cd0] sm:$0xff]
      %v1188 = vld [vmem:[%s235 + $0x1cd8] sm:$0xff]
      %v1189 = vld [vmem:[%s235 + $0x1ce0] sm:$0xff]
      %v1190 = vld [vmem:[%s235 + $0x1ce8] sm:$0xff]
      %v1191 = vld [vmem:[%s235 + $0x1cf0] sm:$0xff]
      %v1192 = vld [vmem:[%s235 + $0x1cf8] sm:$0xff]
      %v1193 = vld [vmem:[%s235 + $0x1d00] sm:$0xff]
      %v1194 = vld [vmem:[%s235 + $0x1d08] sm:$0xff]
      %v1195 = vld [vmem:[%s235 + $0x1d10] sm:$0xff]
      %v1196 = vld [vmem:[%s235 + $0x1d18] sm:$0xff]
      %v1197 = vld [vmem:[%s235 + $0x1d20] sm:$0xff]
      %v1198 = vld [vmem:[%s235 + $0x1d28] sm:$0xff]
      %v1199 = vld [vmem:[%s235 + $0x1d30] sm:$0xff]
      %v1200 = vld [vmem:[%s235 + $0x1d38] sm:$0xff]
      %v1201 = vld [vmem:[%s235 + $0x1d40] sm:$0xff]
      %v1202 = vld [vmem:[%s235 + $0x1d48] sm:$0xff]
      %v1203 = vld [vmem:[%s235 + $0x1d50] sm:$0xff]
      %v1204 = vld [vmem:[%s235 + $0x1d58] sm:$0xff]
      %v1205 = vld [vmem:[%s235 + $0x1d60] sm:$0xff]
      %v1206 = vld [vmem:[%s235 + $0x1d68] sm:$0xff]
      %v1207 = vld [vmem:[%s235 + $0x1d70] sm:$0xff]
      %v1208 = vld [vmem:[%s235 + $0x1d78] sm:$0xff]
      %v1209 = vld [vmem:[%s235 + $0x1d80] sm:$0xff]
      %v1210 = vld [vmem:[%s235 + $0x1d88] sm:$0xff]
      %v1211 = vld [vmem:[%s235 + $0x1d90] sm:$0xff]
      %v1212 = vld [vmem:[%s235 + $0x1d98] sm:$0xff]
      %v1213 = vld [vmem:[%s235 + $0x1da0] sm:$0xff]
      %v1214 = vld [vmem:[%s235 + $0x1da8] sm:$0xff]
      %v1215 = vld [vmem:[%s235 + $0x1db0] sm:$0xff]
      %v1216 = vld [vmem:[%s235 + $0x1db8] sm:$0xff]
      %v1217 = vld [vmem:[%s235 + $0x1dc0] sm:$0xff]
      %v1218 = vld [vmem:[%s235 + $0x1dc8] sm:$0xff]
      %v1219 = vld [vmem:[%s235 + $0x1dd0] sm:$0xff]
      %v1220 = vld [vmem:[%s235 + $0x1dd8] sm:$0xff]
      %v1221 = vld [vmem:[%s235 + $0x1de0] sm:$0xff]
      %v1222 = vld [vmem:[%s235 + $0x1de8] sm:$0xff]
      %v1223 = vld [vmem:[%s235 + $0x1df0] sm:$0xff]
      %v1224 = vld [vmem:[%s235 + $0x1df8] sm:$0xff]
      %v1225 = vld [vmem:[%s235 + $0x1e00] sm:$0xff]
      %v1226 = vld [vmem:[%s235 + $0x1e08] sm:$0xff]
      %v1227 = vld [vmem:[%s235 + $0x1e10] sm:$0xff]
      %v1228 = vld [vmem:[%s235 + $0x1e18] sm:$0xff]
      %v1229 = vld [vmem:[%s235 + $0x1e20] sm:$0xff]
      %v1230 = vld [vmem:[%s235 + $0x1e28] sm:$0xff]
      %v1231 = vld [vmem:[%s235 + $0x1e30] sm:$0xff]
      %v1232 = vld [vmem:[%s235 + $0x1e38] sm:$0xff]
      %v1233 = vld [vmem:[%s235 + $0x1e40] sm:$0xff]
      %v1234 = vld [vmem:[%s235 + $0x1e48] sm:$0xff]
      %v1235 = vld [vmem:[%s235 + $0x1e50] sm:$0xff]
      %v1236 = vld [vmem:[%s235 + $0x1e58] sm:$0xff]
      %v1237 = vld [vmem:[%s235 + $0x1e60] sm:$0xff]
      %v1238 = vld [vmem:[%s235 + $0x1e68] sm:$0xff]
      %v1239 = vld [vmem:[%s235 + $0x1e70] sm:$0xff]
      %v1240 = vld [vmem:[%s235 + $0x1e78] sm:$0xff]
      %v1241 = vld [vmem:[%s235 + $0x1e80] sm:$0xff]
      %v1242 = vld [vmem:[%s235 + $0x1e88] sm:$0xff]
      %v1243 = vld [vmem:[%s235 + $0x1e90] sm:$0xff]
      %v1244 = vld [vmem:[%s235 + $0x1e98] sm:$0xff]
      %v1245 = vld [vmem:[%s235 + $0x1ea0] sm:$0xff]
      %v1246 = vld [vmem:[%s235 + $0x1ea8] sm:$0xff]
      %v1247 = vld [vmem:[%s235 + $0x1eb0] sm:$0xff]
      %v1248 = vld [vmem:[%s235 + $0x1eb8] sm:$0xff]
      %v1249 = vld [vmem:[%s235 + $0x1ec0] sm:$0xff]
      %v1250 = vld [vmem:[%s235 + $0x1ec8] sm:$0xff]
      %v1251 = vld [vmem:[%s235 + $0x1ed0] sm:$0xff]
      %v1252 = vld [vmem:[%s235 + $0x1ed8] sm:$0xff]
      %v1253 = vld [vmem:[%s235 + $0x1ee0] sm:$0xff]
      %v1254 = vld [vmem:[%s235 + $0x1ee8] sm:$0xff]
      %v1255 = vld [vmem:[%s235 + $0x1ef0] sm:$0xff]
      %v1256 = vld [vmem:[%s235 + $0x1ef8] sm:$0xff]
      %v1257 = vld [vmem:[%s235 + $0x1f00] sm:$0xff]
      %v1258 = vld [vmem:[%s235 + $0x1f08] sm:$0xff]
      %v1259 = vld [vmem:[%s235 + $0x1f10] sm:$0xff]
      %v1260 = vld [vmem:[%s235 + $0x1f18] sm:$0xff]
      %v1261 = vld [vmem:[%s235 + $0x1f20] sm:$0xff]
      %v1262 = vld [vmem:[%s235 + $0x1f28] sm:$0xff]
      %v1263 = vld [vmem:[%s235 + $0x1f30] sm:$0xff]
      %v1264 = vld [vmem:[%s235 + $0x1f38] sm:$0xff]
      %v1265 = vld [vmem:[%s235 + $0x1f40] sm:$0xff]
      %v1266 = vld [vmem:[%s235 + $0x1f48] sm:$0xff]
      %v1267 = vld [vmem:[%s235 + $0x1f50] sm:$0xff]
      %v1268 = vld [vmem:[%s235 + $0x1f58] sm:$0xff]
      %v1269 = vld [vmem:[%s235 + $0x1f60] sm:$0xff]
      %v1270 = vld [vmem:[%s235 + $0x1f68] sm:$0xff]
      %v1271 = vld [vmem:[%s235 + $0x1f70] sm:$0xff]
      %v1272 = vld [vmem:[%s235 + $0x1f78] sm:$0xff]
      %v1273 = vld [vmem:[%s235 + $0x1f80] sm:$0xff]
      %v1274 = vld [vmem:[%s235 + $0x1f88] sm:$0xff]
      %v1275 = vld [vmem:[%s235 + $0x1f90] sm:$0xff]
      %v1276 = vld [vmem:[%s235 + $0x1f98] sm:$0xff]
      %v1277 = vld [vmem:[%s235 + $0x1fa0] sm:$0xff]
      %v1278 = vld [vmem:[%s235 + $0x1fa8] sm:$0xff]
      %v1279 = vld [vmem:[%s235 + $0x1fb0] sm:$0xff]
      %v1280 = vld [vmem:[%s235 + $0x1fb8] sm:$0xff]
      %v1281 = vld [vmem:[%s235 + $0x1fc0] sm:$0xff]
      %v1282 = vld [vmem:[%s235 + $0x1fc8] sm:$0xff]
      %v1283 = vld [vmem:[%s235 + $0x1fd0] sm:$0xff]
      %v1284 = vld [vmem:[%s235 + $0x1fd8] sm:$0xff]
      %v1285 = vld [vmem:[%s235 + $0x1fe0] sm:$0xff]
      %v1286 = vld [vmem:[%s235 + $0x1fe8] sm:$0xff]
      %v1287 = vld [vmem:[%s235 + $0x1ff0] sm:$0xff]
      %v1288 = vld [vmem:[%s235 + $0x1ff8] sm:$0xff]
      %v1297 = vunpack.c.l.b16 %v257
      %v1298 = vunpack.c.h.b16 %v257
      %v1299 = vunpack.c.l.b16 %v258
      %v1300 = vunpack.c.h.b16 %v258
      %v1301 = vunpack.c.l.b16 %v259
      %v1302 = vunpack.c.h.b16 %v259
      %v1303 = vunpack.c.l.b16 %v260
      %v1304 = vunpack.c.h.b16 %v260
      %v1305 = vunpack.c.l.b16 %v261
      %v1306 = vunpack.c.h.b16 %v261
      %v1307 = vunpack.c.l.b16 %v262
      %v1308 = vunpack.c.h.b16 %v262
      %v1309 = vunpack.c.l.b16 %v263
      %v1310 = vunpack.c.h.b16 %v263
      %v1311 = vunpack.c.l.b16 %v264
      %v1312 = vunpack.c.h.b16 %v264
      %v1313 = vpack.c.b16 %v1297, %v1297
      %v1314 = vpack.c.b16 %v1298, %v1298
      %v1315 = vpack.c.b16 %v1299, %v1299
      %v1316 = vpack.c.b16 %v1300, %v1300
      %v1317 = vpack.c.b16 %v1301, %v1301
      %v1318 = vpack.c.b16 %v1302, %v1302
      %v1319 = vpack.c.b16 %v1303, %v1303
      %v1320 = vpack.c.b16 %v1304, %v1304
      %v1321 = vpack.c.b16 %v1305, %v1305
      %v1322 = vpack.c.b16 %v1306, %v1306
      %v1323 = vpack.c.b16 %v1307, %v1307
      %v1324 = vpack.c.b16 %v1308, %v1308
      %v1325 = vpack.c.b16 %v1309, %v1309
      %v1326 = vpack.c.b16 %v1310, %v1310
      %v1327 = vpack.c.b16 %v1311, %v1311
      %v1328 = vpack.c.b16 %v1312, %v1312
      %v2369 = vunpack.c.l.b16 %v265
      %v2370 = vunpack.c.h.b16 %v265
      %v2371 = vunpack.c.l.b16 %v266
      %v2372 = vunpack.c.h.b16 %v266
      %v2373 = vunpack.c.l.b16 %v267
      %v2374 = vunpack.c.h.b16 %v267
      %v2375 = vunpack.c.l.b16 %v268
      %v2376 = vunpack.c.h.b16 %v268
      %v2377 = vunpack.c.l.b16 %v269
      %v2378 = vunpack.c.h.b16 %v269
      %v2379 = vunpack.c.l.b16 %v270
      %v2380 = vunpack.c.h.b16 %v270
      %v2381 = vunpack.c.l.b16 %v271
      %v2382 = vunpack.c.h.b16 %v271
      %v2383 = vunpack.c.l.b16 %v272
      %v2384 = vunpack.c.h.b16 %v272
      %v2385 = vunpack.c.l.b16 %v273
      %v2386 = vunpack.c.h.b16 %v273
      %v2387 = vunpack.c.l.b16 %v274
      %v2388 = vunpack.c.h.b16 %v274
      %v2389 = vunpack.c.l.b16 %v275
      %v2390 = vunpack.c.h.b16 %v275
      %v2391 = vunpack.c.l.b16 %v276
      %v2392 = vunpack.c.h.b16 %v276
      %v2393 = vunpack.c.l.b16 %v277
      %v2394 = vunpack.c.h.b16 %v277
      %v2395 = vunpack.c.l.b16 %v278
      %v2396 = vunpack.c.h.b16 %v278
      %v2397 = vunpack.c.l.b16 %v279
      %v2398 = vunpack.c.h.b16 %v279
      %v2399 = vunpack.c.l.b16 %v280
      %v2400 = vunpack.c.h.b16 %v280
      %v2401 = vunpack.c.l.b16 %v281
      %v2402 = vunpack.c.h.b16 %v281
      %v2403 = vunpack.c.l.b16 %v282
      %v2404 = vunpack.c.h.b16 %v282
      %v2405 = vunpack.c.l.b16 %v283
      %v2406 = vunpack.c.h.b16 %v283
      %v2407 = vunpack.c.l.b16 %v284
      %v2408 = vunpack.c.h.b16 %v284
      %v2409 = vunpack.c.l.b16 %v285
      %v2410 = vunpack.c.h.b16 %v285
      %v2411 = vunpack.c.l.b16 %v286
      %v2412 = vunpack.c.h.b16 %v286
      %v2413 = vunpack.c.l.b16 %v287
      %v2414 = vunpack.c.h.b16 %v287
      %v2415 = vunpack.c.l.b16 %v288
      %v2416 = vunpack.c.h.b16 %v288
      %v2417 = vunpack.c.l.b16 %v289
      %v2418 = vunpack.c.h.b16 %v289
      %v2419 = vunpack.c.l.b16 %v290
      %v2420 = vunpack.c.h.b16 %v290
      %v2421 = vunpack.c.l.b16 %v291
      %v2422 = vunpack.c.h.b16 %v291
      %v2423 = vunpack.c.l.b16 %v292
      %v2424 = vunpack.c.h.b16 %v292
      %v2425 = vunpack.c.l.b16 %v293
      %v2426 = vunpack.c.h.b16 %v293
      %v2427 = vunpack.c.l.b16 %v294
      %v2428 = vunpack.c.h.b16 %v294
      %v2429 = vunpack.c.l.b16 %v295
      %v2430 = vunpack.c.h.b16 %v295
      %v2431 = vunpack.c.l.b16 %v296
      %v2432 = vunpack.c.h.b16 %v296
      %v2433 = vunpack.c.l.b16 %v297
      %v2434 = vunpack.c.h.b16 %v297
      %v2435 = vunpack.c.l.b16 %v298
      %v2436 = vunpack.c.h.b16 %v298
      %v2437 = vunpack.c.l.b16 %v299
      %v2438 = vunpack.c.h.b16 %v299
      %v2439 = vunpack.c.l.b16 %v300
      %v2440 = vunpack.c.h.b16 %v300
      %v2441 = vunpack.c.l.b16 %v301
      %v2442 = vunpack.c.h.b16 %v301
      %v2443 = vunpack.c.l.b16 %v302
      %v2444 = vunpack.c.h.b16 %v302
      %v2445 = vunpack.c.l.b16 %v303
      %v2446 = vunpack.c.h.b16 %v303
      %v2447 = vunpack.c.l.b16 %v304
      %v2448 = vunpack.c.h.b16 %v304
      %v2449 = vunpack.c.l.b16 %v305
      %v2450 = vunpack.c.h.b16 %v305
      %v2451 = vunpack.c.l.b16 %v306
      %v2452 = vunpack.c.h.b16 %v306
      %v2453 = vunpack.c.l.b16 %v307
      %v2454 = vunpack.c.h.b16 %v307
      %v2455 = vunpack.c.l.b16 %v308
      %v2456 = vunpack.c.h.b16 %v308
      %v2457 = vunpack.c.l.b16 %v309
      %v2458 = vunpack.c.h.b16 %v309
      %v2459 = vunpack.c.l.b16 %v310
      %v2460 = vunpack.c.h.b16 %v310
      %v2461 = vunpack.c.l.b16 %v311
      %v2462 = vunpack.c.h.b16 %v311
      %v2463 = vunpack.c.l.b16 %v312
      %v2464 = vunpack.c.h.b16 %v312
      %v2465 = vunpack.c.l.b16 %v313
      %v2466 = vunpack.c.h.b16 %v313
      %v2467 = vunpack.c.l.b16 %v314
      %v2468 = vunpack.c.h.b16 %v314
      %v2469 = vunpack.c.l.b16 %v315
      %v2470 = vunpack.c.h.b16 %v315
      %v2471 = vunpack.c.l.b16 %v316
      %v2472 = vunpack.c.h.b16 %v316
      %v2473 = vunpack.c.l.b16 %v317
      %v2474 = vunpack.c.h.b16 %v317
      %v2475 = vunpack.c.l.b16 %v318
      %v2476 = vunpack.c.h.b16 %v318
      %v2477 = vunpack.c.l.b16 %v319
      %v2478 = vunpack.c.h.b16 %v319
      %v2479 = vunpack.c.l.b16 %v320
      %v2480 = vunpack.c.h.b16 %v320
      %v2481 = vunpack.c.l.b16 %v321
      %v2482 = vunpack.c.h.b16 %v321
      %v2483 = vunpack.c.l.b16 %v322
      %v2484 = vunpack.c.h.b16 %v322
      %v2485 = vunpack.c.l.b16 %v323
      %v2486 = vunpack.c.h.b16 %v323
      %v2487 = vunpack.c.l.b16 %v324
      %v2488 = vunpack.c.h.b16 %v324
      %v2489 = vunpack.c.l.b16 %v325
      %v2490 = vunpack.c.h.b16 %v325
      %v2491 = vunpack.c.l.b16 %v326
      %v2492 = vunpack.c.h.b16 %v326
      %v2493 = vunpack.c.l.b16 %v327
      %v2494 = vunpack.c.h.b16 %v327
      %v2495 = vunpack.c.l.b16 %v328
      %v2496 = vunpack.c.h.b16 %v328
      %v2497 = vunpack.c.l.b16 %v329
      %v2498 = vunpack.c.h.b16 %v329
      %v2499 = vunpack.c.l.b16 %v330
      %v2500 = vunpack.c.h.b16 %v330
      %v2501 = vunpack.c.l.b16 %v331
      %v2502 = vunpack.c.h.b16 %v331
      %v2503 = vunpack.c.l.b16 %v332
      %v2504 = vunpack.c.h.b16 %v332
      %v2505 = vunpack.c.l.b16 %v333
      %v2506 = vunpack.c.h.b16 %v333
      %v2507 = vunpack.c.l.b16 %v334
      %v2508 = vunpack.c.h.b16 %v334
      %v2509 = vunpack.c.l.b16 %v335
      %v2510 = vunpack.c.h.b16 %v335
      %v2511 = vunpack.c.l.b16 %v336
      %v2512 = vunpack.c.h.b16 %v336
      %v2513 = vunpack.c.l.b16 %v337
      %v2514 = vunpack.c.h.b16 %v337
      %v2515 = vunpack.c.l.b16 %v338
      %v2516 = vunpack.c.h.b16 %v338
      %v2517 = vunpack.c.l.b16 %v339
      %v2518 = vunpack.c.h.b16 %v339
      %v2519 = vunpack.c.l.b16 %v340
      %v2520 = vunpack.c.h.b16 %v340
      %v2521 = vunpack.c.l.b16 %v341
      %v2522 = vunpack.c.h.b16 %v341
      %v2523 = vunpack.c.l.b16 %v342
      %v2524 = vunpack.c.h.b16 %v342
      %v2525 = vunpack.c.l.b16 %v343
      %v2526 = vunpack.c.h.b16 %v343
      %v2527 = vunpack.c.l.b16 %v344
      %v2528 = vunpack.c.h.b16 %v344
      %v2529 = vunpack.c.l.b16 %v345
      %v2530 = vunpack.c.h.b16 %v345
      %v2531 = vunpack.c.l.b16 %v346
      %v2532 = vunpack.c.h.b16 %v346
      %v2533 = vunpack.c.l.b16 %v347
      %v2534 = vunpack.c.h.b16 %v347
      %v2535 = vunpack.c.l.b16 %v348
      %v2536 = vunpack.c.h.b16 %v348
      %v2537 = vunpack.c.l.b16 %v349
      %v2538 = vunpack.c.h.b16 %v349
      %v2539 = vunpack.c.l.b16 %v350
      %v2540 = vunpack.c.h.b16 %v350
      %v2541 = vunpack.c.l.b16 %v351
      %v2542 = vunpack.c.h.b16 %v351
      %v2543 = vunpack.c.l.b16 %v352
      %v2544 = vunpack.c.h.b16 %v352
      %v2545 = vunpack.c.l.b16 %v353
      %v2546 = vunpack.c.h.b16 %v353
      %v2547 = vunpack.c.l.b16 %v354
      %v2548 = vunpack.c.h.b16 %v354
      %v2549 = vunpack.c.l.b16 %v355
      %v2550 = vunpack.c.h.b16 %v355
      %v2551 = vunpack.c.l.b16 %v356
      %v2552 = vunpack.c.h.b16 %v356
      %v2553 = vunpack.c.l.b16 %v357
      %v2554 = vunpack.c.h.b16 %v357
      %v2555 = vunpack.c.l.b16 %v358
      %v2556 = vunpack.c.h.b16 %v358
      %v2557 = vunpack.c.l.b16 %v359
      %v2558 = vunpack.c.h.b16 %v359
      %v2559 = vunpack.c.l.b16 %v360
      %v2560 = vunpack.c.h.b16 %v360
      %v2561 = vunpack.c.l.b16 %v361
      %v2562 = vunpack.c.h.b16 %v361
      %v2563 = vunpack.c.l.b16 %v362
      %v2564 = vunpack.c.h.b16 %v362
      %v2565 = vunpack.c.l.b16 %v363
      %v2566 = vunpack.c.h.b16 %v363
      %v2567 = vunpack.c.l.b16 %v364
      %v2568 = vunpack.c.h.b16 %v364
      %v2569 = vunpack.c.l.b16 %v365
      %v2570 = vunpack.c.h.b16 %v365
      %v2571 = vunpack.c.l.b16 %v366
      %v2572 = vunpack.c.h.b16 %v366
      %v2573 = vunpack.c.l.b16 %v367
      %v2574 = vunpack.c.h.b16 %v367
      %v2575 = vunpack.c.l.b16 %v368
      %v2576 = vunpack.c.h.b16 %v368
      %v2577 = vunpack.c.l.b16 %v369
      %v2578 = vunpack.c.h.b16 %v369
      %v2579 = vunpack.c.l.b16 %v370
      %v2580 = vunpack.c.h.b16 %v370
      %v2581 = vunpack.c.l.b16 %v371
      %v2582 = vunpack.c.h.b16 %v371
      %v2583 = vunpack.c.l.b16 %v372
      %v2584 = vunpack.c.h.b16 %v372
      %v2585 = vunpack.c.l.b16 %v373
      %v2586 = vunpack.c.h.b16 %v373
      %v2587 = vunpack.c.l.b16 %v374
      %v2588 = vunpack.c.h.b16 %v374
      %v2589 = vunpack.c.l.b16 %v375
      %v2590 = vunpack.c.h.b16 %v375
      %v2591 = vunpack.c.l.b16 %v376
      %v2592 = vunpack.c.h.b16 %v376
      %v2593 = vunpack.c.l.b16 %v377
      %v2594 = vunpack.c.h.b16 %v377
      %v2595 = vunpack.c.l.b16 %v378
      %v2596 = vunpack.c.h.b16 %v378
      %v2597 = vunpack.c.l.b16 %v379
      %v2598 = vunpack.c.h.b16 %v379
      %v2599 = vunpack.c.l.b16 %v380
      %v2600 = vunpack.c.h.b16 %v380
      %v2601 = vunpack.c.l.b16 %v381
      %v2602 = vunpack.c.h.b16 %v381
      %v2603 = vunpack.c.l.b16 %v382
      %v2604 = vunpack.c.h.b16 %v382
      %v2605 = vunpack.c.l.b16 %v383
      %v2606 = vunpack.c.h.b16 %v383
      %v2607 = vunpack.c.l.b16 %v384
      %v2608 = vunpack.c.h.b16 %v384
      %v2609 = vunpack.c.l.b16 %v385
      %v2610 = vunpack.c.h.b16 %v385
      %v2611 = vunpack.c.l.b16 %v386
      %v2612 = vunpack.c.h.b16 %v386
      %v2613 = vunpack.c.l.b16 %v387
      %v2614 = vunpack.c.h.b16 %v387
      %v2615 = vunpack.c.l.b16 %v388
      %v2616 = vunpack.c.h.b16 %v388
      %v2617 = vunpack.c.l.b16 %v389
      %v2618 = vunpack.c.h.b16 %v389
      %v2619 = vunpack.c.l.b16 %v390
      %v2620 = vunpack.c.h.b16 %v390
      %v2621 = vunpack.c.l.b16 %v391
      %v2622 = vunpack.c.h.b16 %v391
      %v2623 = vunpack.c.l.b16 %v392
      %v2624 = vunpack.c.h.b16 %v392
      %v2625 = vunpack.c.l.b16 %v393
      %v2626 = vunpack.c.h.b16 %v393
      %v2627 = vunpack.c.l.b16 %v394
      %v2628 = vunpack.c.h.b16 %v394
      %v2629 = vunpack.c.l.b16 %v395
      %v2630 = vunpack.c.h.b16 %v395
      %v2631 = vunpack.c.l.b16 %v396
      %v2632 = vunpack.c.h.b16 %v396
      %v2633 = vunpack.c.l.b16 %v397
      %v2634 = vunpack.c.h.b16 %v397
      %v2635 = vunpack.c.l.b16 %v398
      %v2636 = vunpack.c.h.b16 %v398
      %v2637 = vunpack.c.l.b16 %v399
      %v2638 = vunpack.c.h.b16 %v399
      %v2639 = vunpack.c.l.b16 %v400
      %v2640 = vunpack.c.h.b16 %v400
      %v2641 = vunpack.c.l.b16 %v401
      %v2642 = vunpack.c.h.b16 %v401
      %v2643 = vunpack.c.l.b16 %v402
      %v2644 = vunpack.c.h.b16 %v402
      %v2645 = vunpack.c.l.b16 %v403
      %v2646 = vunpack.c.h.b16 %v403
      %v2647 = vunpack.c.l.b16 %v404
      %v2648 = vunpack.c.h.b16 %v404
      %v2649 = vunpack.c.l.b16 %v405
      %v2650 = vunpack.c.h.b16 %v405
      %v2651 = vunpack.c.l.b16 %v406
      %v2652 = vunpack.c.h.b16 %v406
      %v2653 = vunpack.c.l.b16 %v407
      %v2654 = vunpack.c.h.b16 %v407
      %v2655 = vunpack.c.l.b16 %v408
      %v2656 = vunpack.c.h.b16 %v408
      %v2657 = vunpack.c.l.b16 %v409
      %v2658 = vunpack.c.h.b16 %v409
      %v2659 = vunpack.c.l.b16 %v410
      %v2660 = vunpack.c.h.b16 %v410
      %v2661 = vunpack.c.l.b16 %v411
      %v2662 = vunpack.c.h.b16 %v411
      %v2663 = vunpack.c.l.b16 %v412
      %v2664 = vunpack.c.h.b16 %v412
      %v2665 = vunpack.c.l.b16 %v413
      %v2666 = vunpack.c.h.b16 %v413
      %v2667 = vunpack.c.l.b16 %v414
      %v2668 = vunpack.c.h.b16 %v414
      %v2669 = vunpack.c.l.b16 %v415
      %v2670 = vunpack.c.h.b16 %v415
      %v2671 = vunpack.c.l.b16 %v416
      %v2672 = vunpack.c.h.b16 %v416
      %v2673 = vunpack.c.l.b16 %v417
      %v2674 = vunpack.c.h.b16 %v417
      %v2675 = vunpack.c.l.b16 %v418
      %v2676 = vunpack.c.h.b16 %v418
      %v2677 = vunpack.c.l.b16 %v419
      %v2678 = vunpack.c.h.b16 %v419
      %v2679 = vunpack.c.l.b16 %v420
      %v2680 = vunpack.c.h.b16 %v420
      %v2681 = vunpack.c.l.b16 %v421
      %v2682 = vunpack.c.h.b16 %v421
      %v2683 = vunpack.c.l.b16 %v422
      %v2684 = vunpack.c.h.b16 %v422
      %v2685 = vunpack.c.l.b16 %v423
      %v2686 = vunpack.c.h.b16 %v423
      %v2687 = vunpack.c.l.b16 %v424
      %v2688 = vunpack.c.h.b16 %v424
      %v2689 = vunpack.c.l.b16 %v425
      %v2690 = vunpack.c.h.b16 %v425
      %v2691 = vunpack.c.l.b16 %v426
      %v2692 = vunpack.c.h.b16 %v426
      %v2693 = vunpack.c.l.b16 %v427
      %v2694 = vunpack.c.h.b16 %v427
      %v2695 = vunpack.c.l.b16 %v428
      %v2696 = vunpack.c.h.b16 %v428
      %v2697 = vunpack.c.l.b16 %v429
      %v2698 = vunpack.c.h.b16 %v429
      %v2699 = vunpack.c.l.b16 %v430
      %v2700 = vunpack.c.h.b16 %v430
      %v2701 = vunpack.c.l.b16 %v431
      %v2702 = vunpack.c.h.b16 %v431
      %v2703 = vunpack.c.l.b16 %v432
      %v2704 = vunpack.c.h.b16 %v432
      %v2705 = vunpack.c.l.b16 %v433
      %v2706 = vunpack.c.h.b16 %v433
      %v2707 = vunpack.c.l.b16 %v434
      %v2708 = vunpack.c.h.b16 %v434
      %v2709 = vunpack.c.l.b16 %v435
      %v2710 = vunpack.c.h.b16 %v435
      %v2711 = vunpack.c.l.b16 %v436
      %v2712 = vunpack.c.h.b16 %v436
      %v2713 = vunpack.c.l.b16 %v437
      %v2714 = vunpack.c.h.b16 %v437
      %v2715 = vunpack.c.l.b16 %v438
      %v2716 = vunpack.c.h.b16 %v438
      %v2717 = vunpack.c.l.b16 %v439
      %v2718 = vunpack.c.h.b16 %v439
      %v2719 = vunpack.c.l.b16 %v440
      %v2720 = vunpack.c.h.b16 %v440
      %v2721 = vunpack.c.l.b16 %v441
      %v2722 = vunpack.c.h.b16 %v441
      %v2723 = vunpack.c.l.b16 %v442
      %v2724 = vunpack.c.h.b16 %v442
      %v2725 = vunpack.c.l.b16 %v443
      %v2726 = vunpack.c.h.b16 %v443
      %v2727 = vunpack.c.l.b16 %v444
      %v2728 = vunpack.c.h.b16 %v444
      %v2729 = vunpack.c.l.b16 %v445
      %v2730 = vunpack.c.h.b16 %v445
      %v2731 = vunpack.c.l.b16 %v446
      %v2732 = vunpack.c.h.b16 %v446
      %v2733 = vunpack.c.l.b16 %v447
      %v2734 = vunpack.c.h.b16 %v447
      %v2735 = vunpack.c.l.b16 %v448
      %v2736 = vunpack.c.h.b16 %v448
      %v2737 = vunpack.c.l.b16 %v449
      %v2738 = vunpack.c.h.b16 %v449
      %v2739 = vunpack.c.l.b16 %v450
      %v2740 = vunpack.c.h.b16 %v450
      %v2741 = vunpack.c.l.b16 %v451
      %v2742 = vunpack.c.h.b16 %v451
      %v2743 = vunpack.c.l.b16 %v452
      %v2744 = vunpack.c.h.b16 %v452
      %v2745 = vunpack.c.l.b16 %v453
      %v2746 = vunpack.c.h.b16 %v453
      %v2747 = vunpack.c.l.b16 %v454
      %v2748 = vunpack.c.h.b16 %v454
      %v2749 = vunpack.c.l.b16 %v455
      %v2750 = vunpack.c.h.b16 %v455
      %v2751 = vunpack.c.l.b16 %v456
      %v2752 = vunpack.c.h.b16 %v456
      %v2753 = vunpack.c.l.b16 %v457
      %v2754 = vunpack.c.h.b16 %v457
      %v2755 = vunpack.c.l.b16 %v458
      %v2756 = vunpack.c.h.b16 %v458
      %v2757 = vunpack.c.l.b16 %v459
      %v2758 = vunpack.c.h.b16 %v459
      %v2759 = vunpack.c.l.b16 %v460
      %v2760 = vunpack.c.h.b16 %v460
      %v2761 = vunpack.c.l.b16 %v461
      %v2762 = vunpack.c.h.b16 %v461
      %v2763 = vunpack.c.l.b16 %v462
      %v2764 = vunpack.c.h.b16 %v462
      %v2765 = vunpack.c.l.b16 %v463
      %v2766 = vunpack.c.h.b16 %v463
      %v2767 = vunpack.c.l.b16 %v464
      %v2768 = vunpack.c.h.b16 %v464
      %v2769 = vunpack.c.l.b16 %v465
      %v2770 = vunpack.c.h.b16 %v465
      %v2771 = vunpack.c.l.b16 %v466
      %v2772 = vunpack.c.h.b16 %v466
      %v2773 = vunpack.c.l.b16 %v467
      %v2774 = vunpack.c.h.b16 %v467
      %v2775 = vunpack.c.l.b16 %v468
      %v2776 = vunpack.c.h.b16 %v468
      %v2777 = vunpack.c.l.b16 %v469
      %v2778 = vunpack.c.h.b16 %v469
      %v2779 = vunpack.c.l.b16 %v470
      %v2780 = vunpack.c.h.b16 %v470
      %v2781 = vunpack.c.l.b16 %v471
      %v2782 = vunpack.c.h.b16 %v471
      %v2783 = vunpack.c.l.b16 %v472
      %v2784 = vunpack.c.h.b16 %v472
      %v2785 = vunpack.c.l.b16 %v473
      %v2786 = vunpack.c.h.b16 %v473
      %v2787 = vunpack.c.l.b16 %v474
      %v2788 = vunpack.c.h.b16 %v474
      %v2789 = vunpack.c.l.b16 %v475
      %v2790 = vunpack.c.h.b16 %v475
      %v2791 = vunpack.c.l.b16 %v476
      %v2792 = vunpack.c.h.b16 %v476
      %v2793 = vunpack.c.l.b16 %v477
      %v2794 = vunpack.c.h.b16 %v477
      %v2795 = vunpack.c.l.b16 %v478
      %v2796 = vunpack.c.h.b16 %v478
      %v2797 = vunpack.c.l.b16 %v479
      %v2798 = vunpack.c.h.b16 %v479
      %v2799 = vunpack.c.l.b16 %v480
      %v2800 = vunpack.c.h.b16 %v480
      %v2801 = vunpack.c.l.b16 %v481
      %v2802 = vunpack.c.h.b16 %v481
      %v2803 = vunpack.c.l.b16 %v482
      %v2804 = vunpack.c.h.b16 %v482
      %v2805 = vunpack.c.l.b16 %v483
      %v2806 = vunpack.c.h.b16 %v483
      %v2807 = vunpack.c.l.b16 %v484
      %v2808 = vunpack.c.h.b16 %v484
      %v2809 = vunpack.c.l.b16 %v485
      %v2810 = vunpack.c.h.b16 %v485
      %v2811 = vunpack.c.l.b16 %v486
      %v2812 = vunpack.c.h.b16 %v486
      %v2813 = vunpack.c.l.b16 %v487
      %v2814 = vunpack.c.h.b16 %v487
      %v2815 = vunpack.c.l.b16 %v488
      %v2816 = vunpack.c.h.b16 %v488
      %v2817 = vunpack.c.l.b16 %v489
      %v2818 = vunpack.c.h.b16 %v489
      %v2819 = vunpack.c.l.b16 %v490
      %v2820 = vunpack.c.h.b16 %v490
      %v2821 = vunpack.c.l.b16 %v491
      %v2822 = vunpack.c.h.b16 %v491
      %v2823 = vunpack.c.l.b16 %v492
      %v2824 = vunpack.c.h.b16 %v492
      %v2825 = vunpack.c.l.b16 %v493
      %v2826 = vunpack.c.h.b16 %v493
      %v2827 = vunpack.c.l.b16 %v494
      %v2828 = vunpack.c.h.b16 %v494
      %v2829 = vunpack.c.l.b16 %v495
      %v2830 = vunpack.c.h.b16 %v495
      %v2831 = vunpack.c.l.b16 %v496
      %v2832 = vunpack.c.h.b16 %v496
      %v2833 = vunpack.c.l.b16 %v497
      %v2834 = vunpack.c.h.b16 %v497
      %v2835 = vunpack.c.l.b16 %v498
      %v2836 = vunpack.c.h.b16 %v498
      %v2837 = vunpack.c.l.b16 %v499
      %v2838 = vunpack.c.h.b16 %v499
      %v2839 = vunpack.c.l.b16 %v500
      %v2840 = vunpack.c.h.b16 %v500
      %v2841 = vunpack.c.l.b16 %v501
      %v2842 = vunpack.c.h.b16 %v501
      %v2843 = vunpack.c.l.b16 %v502
      %v2844 = vunpack.c.h.b16 %v502
      %v2845 = vunpack.c.l.b16 %v503
      %v2846 = vunpack.c.h.b16 %v503
      %v2847 = vunpack.c.l.b16 %v504
      %v2848 = vunpack.c.h.b16 %v504
      %v2849 = vunpack.c.l.b16 %v505
      %v2850 = vunpack.c.h.b16 %v505
      %v2851 = vunpack.c.l.b16 %v506
      %v2852 = vunpack.c.h.b16 %v506
      %v2853 = vunpack.c.l.b16 %v507
      %v2854 = vunpack.c.h.b16 %v507
      %v2855 = vunpack.c.l.b16 %v508
      %v2856 = vunpack.c.h.b16 %v508
      %v2857 = vunpack.c.l.b16 %v509
      %v2858 = vunpack.c.h.b16 %v509
      %v2859 = vunpack.c.l.b16 %v510
      %v2860 = vunpack.c.h.b16 %v510
      %v2861 = vunpack.c.l.b16 %v511
      %v2862 = vunpack.c.h.b16 %v511
      %v2863 = vunpack.c.l.b16 %v512
      %v2864 = vunpack.c.h.b16 %v512
      %v2865 = vunpack.c.l.b16 %v513
      %v2866 = vunpack.c.h.b16 %v513
      %v2867 = vunpack.c.l.b16 %v514
      %v2868 = vunpack.c.h.b16 %v514
      %v2869 = vunpack.c.l.b16 %v515
      %v2870 = vunpack.c.h.b16 %v515
      %v2871 = vunpack.c.l.b16 %v516
      %v2872 = vunpack.c.h.b16 %v516
      %v2873 = vunpack.c.l.b16 %v517
      %v2874 = vunpack.c.h.b16 %v517
      %v2875 = vunpack.c.l.b16 %v518
      %v2876 = vunpack.c.h.b16 %v518
      %v2877 = vunpack.c.l.b16 %v519
      %v2878 = vunpack.c.h.b16 %v519
      %v2879 = vunpack.c.l.b16 %v520
      %v2880 = vunpack.c.h.b16 %v520
      %v2881 = vunpack.c.l.b16 %v521
      %v2882 = vunpack.c.h.b16 %v521
      %v2883 = vunpack.c.l.b16 %v522
      %v2884 = vunpack.c.h.b16 %v522
      %v2885 = vunpack.c.l.b16 %v523
      %v2886 = vunpack.c.h.b16 %v523
      %v2887 = vunpack.c.l.b16 %v524
      %v2888 = vunpack.c.h.b16 %v524
      %v2889 = vunpack.c.l.b16 %v525
      %v2890 = vunpack.c.h.b16 %v525
      %v2891 = vunpack.c.l.b16 %v526
      %v2892 = vunpack.c.h.b16 %v526
      %v2893 = vunpack.c.l.b16 %v527
      %v2894 = vunpack.c.h.b16 %v527
      %v2895 = vunpack.c.l.b16 %v528
      %v2896 = vunpack.c.h.b16 %v528
      %v2897 = vunpack.c.l.b16 %v529
      %v2898 = vunpack.c.h.b16 %v529
      %v2899 = vunpack.c.l.b16 %v530
      %v2900 = vunpack.c.h.b16 %v530
      %v2901 = vunpack.c.l.b16 %v531
      %v2902 = vunpack.c.h.b16 %v531
      %v2903 = vunpack.c.l.b16 %v532
      %v2904 = vunpack.c.h.b16 %v532
      %v2905 = vunpack.c.l.b16 %v533
      %v2906 = vunpack.c.h.b16 %v533
      %v2907 = vunpack.c.l.b16 %v534
      %v2908 = vunpack.c.h.b16 %v534
      %v2909 = vunpack.c.l.b16 %v535
      %v2910 = vunpack.c.h.b16 %v535
      %v2911 = vunpack.c.l.b16 %v536
      %v2912 = vunpack.c.h.b16 %v536
      %v2913 = vunpack.c.l.b16 %v537
      %v2914 = vunpack.c.h.b16 %v537
      %v2915 = vunpack.c.l.b16 %v538
      %v2916 = vunpack.c.h.b16 %v538
      %v2917 = vunpack.c.l.b16 %v539
      %v2918 = vunpack.c.h.b16 %v539
      %v2919 = vunpack.c.l.b16 %v540
      %v2920 = vunpack.c.h.b16 %v540
      %v2921 = vunpack.c.l.b16 %v541
      %v2922 = vunpack.c.h.b16 %v541
      %v2923 = vunpack.c.l.b16 %v542
      %v2924 = vunpack.c.h.b16 %v542
      %v2925 = vunpack.c.l.b16 %v543
      %v2926 = vunpack.c.h.b16 %v543
      %v2927 = vunpack.c.l.b16 %v544
      %v2928 = vunpack.c.h.b16 %v544
      %v2929 = vunpack.c.l.b16 %v545
      %v2930 = vunpack.c.h.b16 %v545
      %v2931 = vunpack.c.l.b16 %v546
      %v2932 = vunpack.c.h.b16 %v546
      %v2933 = vunpack.c.l.b16 %v547
      %v2934 = vunpack.c.h.b16 %v547
      %v2935 = vunpack.c.l.b16 %v548
      %v2936 = vunpack.c.h.b16 %v548
      %v2937 = vunpack.c.l.b16 %v549
      %v2938 = vunpack.c.h.b16 %v549
      %v2939 = vunpack.c.l.b16 %v550
      %v2940 = vunpack.c.h.b16 %v550
      %v2941 = vunpack.c.l.b16 %v551
      %v2942 = vunpack.c.h.b16 %v551
      %v2943 = vunpack.c.l.b16 %v552
      %v2944 = vunpack.c.h.b16 %v552
      %v2945 = vunpack.c.l.b16 %v553
      %v2946 = vunpack.c.h.b16 %v553
      %v2947 = vunpack.c.l.b16 %v554
      %v2948 = vunpack.c.h.b16 %v554
      %v2949 = vunpack.c.l.b16 %v555
      %v2950 = vunpack.c.h.b16 %v555
      %v2951 = vunpack.c.l.b16 %v556
      %v2952 = vunpack.c.h.b16 %v556
      %v2953 = vunpack.c.l.b16 %v557
      %v2954 = vunpack.c.h.b16 %v557
      %v2955 = vunpack.c.l.b16 %v558
      %v2956 = vunpack.c.h.b16 %v558
      %v2957 = vunpack.c.l.b16 %v559
      %v2958 = vunpack.c.h.b16 %v559
      %v2959 = vunpack.c.l.b16 %v560
      %v2960 = vunpack.c.h.b16 %v560
      %v2961 = vunpack.c.l.b16 %v561
      %v2962 = vunpack.c.h.b16 %v561
      %v2963 = vunpack.c.l.b16 %v562
      %v2964 = vunpack.c.h.b16 %v562
      %v2965 = vunpack.c.l.b16 %v563
      %v2966 = vunpack.c.h.b16 %v563
      %v2967 = vunpack.c.l.b16 %v564
      %v2968 = vunpack.c.h.b16 %v564
      %v2969 = vunpack.c.l.b16 %v565
      %v2970 = vunpack.c.h.b16 %v565
      %v2971 = vunpack.c.l.b16 %v566
      %v2972 = vunpack.c.h.b16 %v566
      %v2973 = vunpack.c.l.b16 %v567
      %v2974 = vunpack.c.h.b16 %v567
      %v2975 = vunpack.c.l.b16 %v568
      %v2976 = vunpack.c.h.b16 %v568
      %v2977 = vunpack.c.l.b16 %v569
      %v2978 = vunpack.c.h.b16 %v569
      %v2979 = vunpack.c.l.b16 %v570
      %v2980 = vunpack.c.h.b16 %v570
      %v2981 = vunpack.c.l.b16 %v571
      %v2982 = vunpack.c.h.b16 %v571
      %v2983 = vunpack.c.l.b16 %v572
      %v2984 = vunpack.c.h.b16 %v572
      %v2985 = vunpack.c.l.b16 %v573
      %v2986 = vunpack.c.h.b16 %v573
      %v2987 = vunpack.c.l.b16 %v574
      %v2988 = vunpack.c.h.b16 %v574
      %v2989 = vunpack.c.l.b16 %v575
      %v2990 = vunpack.c.h.b16 %v575
      %v2991 = vunpack.c.l.b16 %v576
      %v2992 = vunpack.c.h.b16 %v576
      %v2993 = vunpack.c.l.b16 %v577
      %v2994 = vunpack.c.h.b16 %v577
      %v2995 = vunpack.c.l.b16 %v578
      %v2996 = vunpack.c.h.b16 %v578
      %v2997 = vunpack.c.l.b16 %v579
      %v2998 = vunpack.c.h.b16 %v579
      %v2999 = vunpack.c.l.b16 %v580
      %v3000 = vunpack.c.h.b16 %v580
      %v3001 = vunpack.c.l.b16 %v581
      %v3002 = vunpack.c.h.b16 %v581
      %v3003 = vunpack.c.l.b16 %v582
      %v3004 = vunpack.c.h.b16 %v582
      %v3005 = vunpack.c.l.b16 %v583
      %v3006 = vunpack.c.h.b16 %v583
      %v3007 = vunpack.c.l.b16 %v584
      %v3008 = vunpack.c.h.b16 %v584
      %v3009 = vunpack.c.l.b16 %v585
      %v3010 = vunpack.c.h.b16 %v585
      %v3011 = vunpack.c.l.b16 %v586
      %v3012 = vunpack.c.h.b16 %v586
      %v3013 = vunpack.c.l.b16 %v587
      %v3014 = vunpack.c.h.b16 %v587
      %v3015 = vunpack.c.l.b16 %v588
      %v3016 = vunpack.c.h.b16 %v588
      %v3017 = vunpack.c.l.b16 %v589
      %v3018 = vunpack.c.h.b16 %v589
      %v3019 = vunpack.c.l.b16 %v590
      %v3020 = vunpack.c.h.b16 %v590
      %v3021 = vunpack.c.l.b16 %v591
      %v3022 = vunpack.c.h.b16 %v591
      %v3023 = vunpack.c.l.b16 %v592
      %v3024 = vunpack.c.h.b16 %v592
      %v3025 = vunpack.c.l.b16 %v593
      %v3026 = vunpack.c.h.b16 %v593
      %v3027 = vunpack.c.l.b16 %v594
      %v3028 = vunpack.c.h.b16 %v594
      %v3029 = vunpack.c.l.b16 %v595
      %v3030 = vunpack.c.h.b16 %v595
      %v3031 = vunpack.c.l.b16 %v596
      %v3032 = vunpack.c.h.b16 %v596
      %v3033 = vunpack.c.l.b16 %v597
      %v3034 = vunpack.c.h.b16 %v597
      %v3035 = vunpack.c.l.b16 %v598
      %v3036 = vunpack.c.h.b16 %v598
      %v3037 = vunpack.c.l.b16 %v599
      %v3038 = vunpack.c.h.b16 %v599
      %v3039 = vunpack.c.l.b16 %v600
      %v3040 = vunpack.c.h.b16 %v600
      %v3041 = vunpack.c.l.b16 %v601
      %v3042 = vunpack.c.h.b16 %v601
      %v3043 = vunpack.c.l.b16 %v602
      %v3044 = vunpack.c.h.b16 %v602
      %v3045 = vunpack.c.l.b16 %v603
      %v3046 = vunpack.c.h.b16 %v603
      %v3047 = vunpack.c.l.b16 %v604
      %v3048 = vunpack.c.h.b16 %v604
      %v3049 = vunpack.c.l.b16 %v605
      %v3050 = vunpack.c.h.b16 %v605
      %v3051 = vunpack.c.l.b16 %v606
      %v3052 = vunpack.c.h.b16 %v606
      %v3053 = vunpack.c.l.b16 %v607
      %v3054 = vunpack.c.h.b16 %v607
      %v3055 = vunpack.c.l.b16 %v608
      %v3056 = vunpack.c.h.b16 %v608
      %v3057 = vunpack.c.l.b16 %v609
      %v3058 = vunpack.c.h.b16 %v609
      %v3059 = vunpack.c.l.b16 %v610
      %v3060 = vunpack.c.h.b16 %v610
      %v3061 = vunpack.c.l.b16 %v611
      %v3062 = vunpack.c.h.b16 %v611
      %v3063 = vunpack.c.l.b16 %v612
      %v3064 = vunpack.c.h.b16 %v612
      %v3065 = vunpack.c.l.b16 %v613
      %v3066 = vunpack.c.h.b16 %v613
      %v3067 = vunpack.c.l.b16 %v614
      %v3068 = vunpack.c.h.b16 %v614
      %v3069 = vunpack.c.l.b16 %v615
      %v3070 = vunpack.c.h.b16 %v615
      %v3071 = vunpack.c.l.b16 %v616
      %v3072 = vunpack.c.h.b16 %v616
      %v3073 = vunpack.c.l.b16 %v617
      %v3074 = vunpack.c.h.b16 %v617
      %v3075 = vunpack.c.l.b16 %v618
      %v3076 = vunpack.c.h.b16 %v618
      %v3077 = vunpack.c.l.b16 %v619
      %v3078 = vunpack.c.h.b16 %v619
      %v3079 = vunpack.c.l.b16 %v620
      %v3080 = vunpack.c.h.b16 %v620
      %v3081 = vunpack.c.l.b16 %v621
      %v3082 = vunpack.c.h.b16 %v621
      %v3083 = vunpack.c.l.b16 %v622
      %v3084 = vunpack.c.h.b16 %v622
      %v3085 = vunpack.c.l.b16 %v623
      %v3086 = vunpack.c.h.b16 %v623
      %v3087 = vunpack.c.l.b16 %v624
      %v3088 = vunpack.c.h.b16 %v624
      %v3089 = vunpack.c.l.b16 %v625
      %v3090 = vunpack.c.h.b16 %v625
      %v3091 = vunpack.c.l.b16 %v626
      %v3092 = vunpack.c.h.b16 %v626
      %v3093 = vunpack.c.l.b16 %v627
      %v3094 = vunpack.c.h.b16 %v627
      %v3095 = vunpack.c.l.b16 %v628
      %v3096 = vunpack.c.h.b16 %v628
      %v3097 = vunpack.c.l.b16 %v629
      %v3098 = vunpack.c.h.b16 %v629
      %v3099 = vunpack.c.l.b16 %v630
      %v3100 = vunpack.c.h.b16 %v630
      %v3101 = vunpack.c.l.b16 %v631
      %v3102 = vunpack.c.h.b16 %v631
      %v3103 = vunpack.c.l.b16 %v632
      %v3104 = vunpack.c.h.b16 %v632
      %v3105 = vunpack.c.l.b16 %v633
      %v3106 = vunpack.c.h.b16 %v633
      %v3107 = vunpack.c.l.b16 %v634
      %v3108 = vunpack.c.h.b16 %v634
      %v3109 = vunpack.c.l.b16 %v635
      %v3110 = vunpack.c.h.b16 %v635
      %v3111 = vunpack.c.l.b16 %v636
      %v3112 = vunpack.c.h.b16 %v636
      %v3113 = vunpack.c.l.b16 %v637
      %v3114 = vunpack.c.h.b16 %v637
      %v3115 = vunpack.c.l.b16 %v638
      %v3116 = vunpack.c.h.b16 %v638
      %v3117 = vunpack.c.l.b16 %v639
      %v3118 = vunpack.c.h.b16 %v639
      %v3119 = vunpack.c.l.b16 %v640
      %v3120 = vunpack.c.h.b16 %v640
      %v3121 = vunpack.c.l.b16 %v641
      %v3122 = vunpack.c.h.b16 %v641
      %v3123 = vunpack.c.l.b16 %v642
      %v3124 = vunpack.c.h.b16 %v642
      %v3125 = vunpack.c.l.b16 %v643
      %v3126 = vunpack.c.h.b16 %v643
      %v3127 = vunpack.c.l.b16 %v644
      %v3128 = vunpack.c.h.b16 %v644
      %v3129 = vunpack.c.l.b16 %v645
      %v3130 = vunpack.c.h.b16 %v645
      %v3131 = vunpack.c.l.b16 %v646
      %v3132 = vunpack.c.h.b16 %v646
      %v3133 = vunpack.c.l.b16 %v647
      %v3134 = vunpack.c.h.b16 %v647
      %v3135 = vunpack.c.l.b16 %v648
      %v3136 = vunpack.c.h.b16 %v648
      %v3137 = vunpack.c.l.b16 %v649
      %v3138 = vunpack.c.h.b16 %v649
      %v3139 = vunpack.c.l.b16 %v650
      %v3140 = vunpack.c.h.b16 %v650
      %v3141 = vunpack.c.l.b16 %v651
      %v3142 = vunpack.c.h.b16 %v651
      %v3143 = vunpack.c.l.b16 %v652
      %v3144 = vunpack.c.h.b16 %v652
      %v3145 = vunpack.c.l.b16 %v653
      %v3146 = vunpack.c.h.b16 %v653
      %v3147 = vunpack.c.l.b16 %v654
      %v3148 = vunpack.c.h.b16 %v654
      %v3149 = vunpack.c.l.b16 %v655
      %v3150 = vunpack.c.h.b16 %v655
      %v3151 = vunpack.c.l.b16 %v656
      %v3152 = vunpack.c.h.b16 %v656
      %v3153 = vunpack.c.l.b16 %v657
      %v3154 = vunpack.c.h.b16 %v657
      %v3155 = vunpack.c.l.b16 %v658
      %v3156 = vunpack.c.h.b16 %v658
      %v3157 = vunpack.c.l.b16 %v659
      %v3158 = vunpack.c.h.b16 %v659
      %v3159 = vunpack.c.l.b16 %v660
      %v3160 = vunpack.c.h.b16 %v660
      %v3161 = vunpack.c.l.b16 %v661
      %v3162 = vunpack.c.h.b16 %v661
      %v3163 = vunpack.c.l.b16 %v662
      %v3164 = vunpack.c.h.b16 %v662
      %v3165 = vunpack.c.l.b16 %v663
      %v3166 = vunpack.c.h.b16 %v663
      %v3167 = vunpack.c.l.b16 %v664
      %v3168 = vunpack.c.h.b16 %v664
      %v3169 = vunpack.c.l.b16 %v665
      %v3170 = vunpack.c.h.b16 %v665
      %v3171 = vunpack.c.l.b16 %v666
      %v3172 = vunpack.c.h.b16 %v666
      %v3173 = vunpack.c.l.b16 %v667
      %v3174 = vunpack.c.h.b16 %v667
      %v3175 = vunpack.c.l.b16 %v668
      %v3176 = vunpack.c.h.b16 %v668
      %v3177 = vunpack.c.l.b16 %v669
      %v3178 = vunpack.c.h.b16 %v669
      %v3179 = vunpack.c.l.b16 %v670
      %v3180 = vunpack.c.h.b16 %v670
      %v3181 = vunpack.c.l.b16 %v671
      %v3182 = vunpack.c.h.b16 %v671
      %v3183 = vunpack.c.l.b16 %v672
      %v3184 = vunpack.c.h.b16 %v672
      %v3185 = vunpack.c.l.b16 %v673
      %v3186 = vunpack.c.h.b16 %v673
      %v3187 = vunpack.c.l.b16 %v674
      %v3188 = vunpack.c.h.b16 %v674
      %v3189 = vunpack.c.l.b16 %v675
      %v3190 = vunpack.c.h.b16 %v675
      %v3191 = vunpack.c.l.b16 %v676
      %v3192 = vunpack.c.h.b16 %v676
      %v3193 = vunpack.c.l.b16 %v677
      %v3194 = vunpack.c.h.b16 %v677
      %v3195 = vunpack.c.l.b16 %v678
      %v3196 = vunpack.c.h.b16 %v678
      %v3197 = vunpack.c.l.b16 %v679
      %v3198 = vunpack.c.h.b16 %v679
      %v3199 = vunpack.c.l.b16 %v680
      %v3200 = vunpack.c.h.b16 %v680
      %v3201 = vunpack.c.l.b16 %v681
      %v3202 = vunpack.c.h.b16 %v681
      %v3203 = vunpack.c.l.b16 %v682
      %v3204 = vunpack.c.h.b16 %v682
      %v3205 = vunpack.c.l.b16 %v683
      %v3206 = vunpack.c.h.b16 %v683
      %v3207 = vunpack.c.l.b16 %v684
      %v3208 = vunpack.c.h.b16 %v684
      %v3209 = vunpack.c.l.b16 %v685
      %v3210 = vunpack.c.h.b16 %v685
      %v3211 = vunpack.c.l.b16 %v686
      %v3212 = vunpack.c.h.b16 %v686
      %v3213 = vunpack.c.l.b16 %v687
      %v3214 = vunpack.c.h.b16 %v687
      %v3215 = vunpack.c.l.b16 %v688
      %v3216 = vunpack.c.h.b16 %v688
      %v3217 = vunpack.c.l.b16 %v689
      %v3218 = vunpack.c.h.b16 %v689
      %v3219 = vunpack.c.l.b16 %v690
      %v3220 = vunpack.c.h.b16 %v690
      %v3221 = vunpack.c.l.b16 %v691
      %v3222 = vunpack.c.h.b16 %v691
      %v3223 = vunpack.c.l.b16 %v692
      %v3224 = vunpack.c.h.b16 %v692
      %v3225 = vunpack.c.l.b16 %v693
      %v3226 = vunpack.c.h.b16 %v693
      %v3227 = vunpack.c.l.b16 %v694
      %v3228 = vunpack.c.h.b16 %v694
      %v3229 = vunpack.c.l.b16 %v695
      %v3230 = vunpack.c.h.b16 %v695
      %v3231 = vunpack.c.l.b16 %v696
      %v3232 = vunpack.c.h.b16 %v696
      %v3233 = vunpack.c.l.b16 %v697
      %v3234 = vunpack.c.h.b16 %v697
      %v3235 = vunpack.c.l.b16 %v698
      %v3236 = vunpack.c.h.b16 %v698
      %v3237 = vunpack.c.l.b16 %v699
      %v3238 = vunpack.c.h.b16 %v699
      %v3239 = vunpack.c.l.b16 %v700
      %v3240 = vunpack.c.h.b16 %v700
      %v3241 = vunpack.c.l.b16 %v701
      %v3242 = vunpack.c.h.b16 %v701
      %v3243 = vunpack.c.l.b16 %v702
      %v3244 = vunpack.c.h.b16 %v702
      %v3245 = vunpack.c.l.b16 %v703
      %v3246 = vunpack.c.h.b16 %v703
      %v3247 = vunpack.c.l.b16 %v704
      %v3248 = vunpack.c.h.b16 %v704
      %v3249 = vunpack.c.l.b16 %v705
      %v3250 = vunpack.c.h.b16 %v705
      %v3251 = vunpack.c.l.b16 %v706
      %v3252 = vunpack.c.h.b16 %v706
      %v3253 = vunpack.c.l.b16 %v707
      %v3254 = vunpack.c.h.b16 %v707
      %v3255 = vunpack.c.l.b16 %v708
      %v3256 = vunpack.c.h.b16 %v708
      %v3257 = vunpack.c.l.b16 %v709
      %v3258 = vunpack.c.h.b16 %v709
      %v3259 = vunpack.c.l.b16 %v710
      %v3260 = vunpack.c.h.b16 %v710
      %v3261 = vunpack.c.l.b16 %v711
      %v3262 = vunpack.c.h.b16 %v711
      %v3263 = vunpack.c.l.b16 %v712
      %v3264 = vunpack.c.h.b16 %v712
      %v3265 = vunpack.c.l.b16 %v713
      %v3266 = vunpack.c.h.b16 %v713
      %v3267 = vunpack.c.l.b16 %v714
      %v3268 = vunpack.c.h.b16 %v714
      %v3269 = vunpack.c.l.b16 %v715
      %v3270 = vunpack.c.h.b16 %v715
      %v3271 = vunpack.c.l.b16 %v716
      %v3272 = vunpack.c.h.b16 %v716
      %v3273 = vunpack.c.l.b16 %v717
      %v3274 = vunpack.c.h.b16 %v717
      %v3275 = vunpack.c.l.b16 %v718
      %v3276 = vunpack.c.h.b16 %v718
      %v3277 = vunpack.c.l.b16 %v719
      %v3278 = vunpack.c.h.b16 %v719
      %v3279 = vunpack.c.l.b16 %v720
      %v3280 = vunpack.c.h.b16 %v720
      %v3281 = vunpack.c.l.b16 %v721
      %v3282 = vunpack.c.h.b16 %v721
      %v3283 = vunpack.c.l.b16 %v722
      %v3284 = vunpack.c.h.b16 %v722
      %v3285 = vunpack.c.l.b16 %v723
      %v3286 = vunpack.c.h.b16 %v723
      %v3287 = vunpack.c.l.b16 %v724
      %v3288 = vunpack.c.h.b16 %v724
      %v3289 = vunpack.c.l.b16 %v725
      %v3290 = vunpack.c.h.b16 %v725
      %v3291 = vunpack.c.l.b16 %v726
      %v3292 = vunpack.c.h.b16 %v726
      %v3293 = vunpack.c.l.b16 %v727
      %v3294 = vunpack.c.h.b16 %v727
      %v3295 = vunpack.c.l.b16 %v728
      %v3296 = vunpack.c.h.b16 %v728
      %v3297 = vunpack.c.l.b16 %v729
      %v3298 = vunpack.c.h.b16 %v729
      %v3299 = vunpack.c.l.b16 %v730
      %v3300 = vunpack.c.h.b16 %v730
      %v3301 = vunpack.c.l.b16 %v731
      %v3302 = vunpack.c.h.b16 %v731
      %v3303 = vunpack.c.l.b16 %v732
      %v3304 = vunpack.c.h.b16 %v732
      %v3305 = vunpack.c.l.b16 %v733
      %v3306 = vunpack.c.h.b16 %v733
      %v3307 = vunpack.c.l.b16 %v734
      %v3308 = vunpack.c.h.b16 %v734
      %v3309 = vunpack.c.l.b16 %v735
      %v3310 = vunpack.c.h.b16 %v735
      %v3311 = vunpack.c.l.b16 %v736
      %v3312 = vunpack.c.h.b16 %v736
      %v3313 = vunpack.c.l.b16 %v737
      %v3314 = vunpack.c.h.b16 %v737
      %v3315 = vunpack.c.l.b16 %v738
      %v3316 = vunpack.c.h.b16 %v738
      %v3317 = vunpack.c.l.b16 %v739
      %v3318 = vunpack.c.h.b16 %v739
      %v3319 = vunpack.c.l.b16 %v740
      %v3320 = vunpack.c.h.b16 %v740
      %v3321 = vunpack.c.l.b16 %v741
      %v3322 = vunpack.c.h.b16 %v741
      %v3323 = vunpack.c.l.b16 %v742
      %v3324 = vunpack.c.h.b16 %v742
      %v3325 = vunpack.c.l.b16 %v743
      %v3326 = vunpack.c.h.b16 %v743
      %v3327 = vunpack.c.l.b16 %v744
      %v3328 = vunpack.c.h.b16 %v744
      %v3329 = vunpack.c.l.b16 %v745
      %v3330 = vunpack.c.h.b16 %v745
      %v3331 = vunpack.c.l.b16 %v746
      %v3332 = vunpack.c.h.b16 %v746
      %v3333 = vunpack.c.l.b16 %v747
      %v3334 = vunpack.c.h.b16 %v747
      %v3335 = vunpack.c.l.b16 %v748
      %v3336 = vunpack.c.h.b16 %v748
      %v3337 = vunpack.c.l.b16 %v749
      %v3338 = vunpack.c.h.b16 %v749
      %v3339 = vunpack.c.l.b16 %v750
      %v3340 = vunpack.c.h.b16 %v750
      %v3341 = vunpack.c.l.b16 %v751
      %v3342 = vunpack.c.h.b16 %v751
      %v3343 = vunpack.c.l.b16 %v752
      %v3344 = vunpack.c.h.b16 %v752
      %v3345 = vunpack.c.l.b16 %v753
      %v3346 = vunpack.c.h.b16 %v753
      %v3347 = vunpack.c.l.b16 %v754
      %v3348 = vunpack.c.h.b16 %v754
      %v3349 = vunpack.c.l.b16 %v755
      %v3350 = vunpack.c.h.b16 %v755
      %v3351 = vunpack.c.l.b16 %v756
      %v3352 = vunpack.c.h.b16 %v756
      %v3353 = vunpack.c.l.b16 %v757
      %v3354 = vunpack.c.h.b16 %v757
      %v3355 = vunpack.c.l.b16 %v758
      %v3356 = vunpack.c.h.b16 %v758
      %v3357 = vunpack.c.l.b16 %v759
      %v3358 = vunpack.c.h.b16 %v759
      %v3359 = vunpack.c.l.b16 %v760
      %v3360 = vunpack.c.h.b16 %v760
      %v3361 = vunpack.c.l.b16 %v761
      %v3362 = vunpack.c.h.b16 %v761
      %v3363 = vunpack.c.l.b16 %v762
      %v3364 = vunpack.c.h.b16 %v762
      %v3365 = vunpack.c.l.b16 %v763
      %v3366 = vunpack.c.h.b16 %v763
      %v3367 = vunpack.c.l.b16 %v764
      %v3368 = vunpack.c.h.b16 %v764
      %v3369 = vunpack.c.l.b16 %v765
      %v3370 = vunpack.c.h.b16 %v765
      %v3371 = vunpack.c.l.b16 %v766
      %v3372 = vunpack.c.h.b16 %v766
      %v3373 = vunpack.c.l.b16 %v767
      %v3374 = vunpack.c.h.b16 %v767
      %v3375 = vunpack.c.l.b16 %v768
      %v3376 = vunpack.c.h.b16 %v768
      %v3377 = vunpack.c.l.b16 %v769
      %v3378 = vunpack.c.h.b16 %v769
      %v3379 = vunpack.c.l.b16 %v770
      %v3380 = vunpack.c.h.b16 %v770
      %v3381 = vunpack.c.l.b16 %v771
      %v3382 = vunpack.c.h.b16 %v771
      %v3383 = vunpack.c.l.b16 %v772
      %v3384 = vunpack.c.h.b16 %v772
      %v3385 = vunpack.c.l.b16 %v773
      %v3386 = vunpack.c.h.b16 %v773
      %v3387 = vunpack.c.l.b16 %v774
      %v3388 = vunpack.c.h.b16 %v774
      %v3389 = vunpack.c.l.b16 %v775
      %v3390 = vunpack.c.h.b16 %v775
      %v3391 = vunpack.c.l.b16 %v776
      %v3392 = vunpack.c.h.b16 %v776
      %v3393 = vunpack.c.l.b16 %v777
      %v3394 = vunpack.c.h.b16 %v777
      %v3395 = vunpack.c.l.b16 %v778
      %v3396 = vunpack.c.h.b16 %v778
      %v3397 = vunpack.c.l.b16 %v779
      %v3398 = vunpack.c.h.b16 %v779
      %v3399 = vunpack.c.l.b16 %v780
      %v3400 = vunpack.c.h.b16 %v780
      %v3401 = vunpack.c.l.b16 %v781
      %v3402 = vunpack.c.h.b16 %v781
      %v3403 = vunpack.c.l.b16 %v782
      %v3404 = vunpack.c.h.b16 %v782
      %v3405 = vunpack.c.l.b16 %v783
      %v3406 = vunpack.c.h.b16 %v783
      %v3407 = vunpack.c.l.b16 %v784
      %v3408 = vunpack.c.h.b16 %v784
      %v3409 = vunpack.c.l.b16 %v785
      %v3410 = vunpack.c.h.b16 %v785
      %v3411 = vunpack.c.l.b16 %v786
      %v3412 = vunpack.c.h.b16 %v786
      %v3413 = vunpack.c.l.b16 %v787
      %v3414 = vunpack.c.h.b16 %v787
      %v3415 = vunpack.c.l.b16 %v788
      %v3416 = vunpack.c.h.b16 %v788
      %v3417 = vunpack.c.l.b16 %v789
      %v3418 = vunpack.c.h.b16 %v789
      %v3419 = vunpack.c.l.b16 %v790
      %v3420 = vunpack.c.h.b16 %v790
      %v3421 = vunpack.c.l.b16 %v791
      %v3422 = vunpack.c.h.b16 %v791
      %v3423 = vunpack.c.l.b16 %v792
      %v3424 = vunpack.c.h.b16 %v792
      %v3425 = vunpack.c.l.b16 %v793
      %v3426 = vunpack.c.h.b16 %v793
      %v3427 = vunpack.c.l.b16 %v794
      %v3428 = vunpack.c.h.b16 %v794
      %v3429 = vunpack.c.l.b16 %v795
      %v3430 = vunpack.c.h.b16 %v795
      %v3431 = vunpack.c.l.b16 %v796
      %v3432 = vunpack.c.h.b16 %v796
      %v3433 = vunpack.c.l.b16 %v797
      %v3434 = vunpack.c.h.b16 %v797
      %v3435 = vunpack.c.l.b16 %v798
      %v3436 = vunpack.c.h.b16 %v798
      %v3437 = vunpack.c.l.b16 %v799
      %v3438 = vunpack.c.h.b16 %v799
      %v3439 = vunpack.c.l.b16 %v800
      %v3440 = vunpack.c.h.b16 %v800
      %v3441 = vunpack.c.l.b16 %v801
      %v3442 = vunpack.c.h.b16 %v801
      %v3443 = vunpack.c.l.b16 %v802
      %v3444 = vunpack.c.h.b16 %v802
      %v3445 = vunpack.c.l.b16 %v803
      %v3446 = vunpack.c.h.b16 %v803
      %v3447 = vunpack.c.l.b16 %v804
      %v3448 = vunpack.c.h.b16 %v804
      %v3449 = vunpack.c.l.b16 %v805
      %v3450 = vunpack.c.h.b16 %v805
      %v3451 = vunpack.c.l.b16 %v806
      %v3452 = vunpack.c.h.b16 %v806
      %v3453 = vunpack.c.l.b16 %v807
      %v3454 = vunpack.c.h.b16 %v807
      %v3455 = vunpack.c.l.b16 %v808
      %v3456 = vunpack.c.h.b16 %v808
      %v3457 = vunpack.c.l.b16 %v809
      %v3458 = vunpack.c.h.b16 %v809
      %v3459 = vunpack.c.l.b16 %v810
      %v3460 = vunpack.c.h.b16 %v810
      %v3461 = vunpack.c.l.b16 %v811
      %v3462 = vunpack.c.h.b16 %v811
      %v3463 = vunpack.c.l.b16 %v812
      %v3464 = vunpack.c.h.b16 %v812
      %v3465 = vunpack.c.l.b16 %v813
      %v3466 = vunpack.c.h.b16 %v813
      %v3467 = vunpack.c.l.b16 %v814
      %v3468 = vunpack.c.h.b16 %v814
      %v3469 = vunpack.c.l.b16 %v815
      %v3470 = vunpack.c.h.b16 %v815
      %v3471 = vunpack.c.l.b16 %v816
      %v3472 = vunpack.c.h.b16 %v816
      %v3473 = vunpack.c.l.b16 %v817
      %v3474 = vunpack.c.h.b16 %v817
      %v3475 = vunpack.c.l.b16 %v818
      %v3476 = vunpack.c.h.b16 %v818
      %v3477 = vunpack.c.l.b16 %v819
      %v3478 = vunpack.c.h.b16 %v819
      %v3479 = vunpack.c.l.b16 %v820
      %v3480 = vunpack.c.h.b16 %v820
      %v3481 = vunpack.c.l.b16 %v821
      %v3482 = vunpack.c.h.b16 %v821
      %v3483 = vunpack.c.l.b16 %v822
      %v3484 = vunpack.c.h.b16 %v822
      %v3485 = vunpack.c.l.b16 %v823
      %v3486 = vunpack.c.h.b16 %v823
      %v3487 = vunpack.c.l.b16 %v824
      %v3488 = vunpack.c.h.b16 %v824
      %v3489 = vunpack.c.l.b16 %v825
      %v3490 = vunpack.c.h.b16 %v825
      %v3491 = vunpack.c.l.b16 %v826
      %v3492 = vunpack.c.h.b16 %v826
      %v3493 = vunpack.c.l.b16 %v827
      %v3494 = vunpack.c.h.b16 %v827
      %v3495 = vunpack.c.l.b16 %v828
      %v3496 = vunpack.c.h.b16 %v828
      %v3497 = vunpack.c.l.b16 %v829
      %v3498 = vunpack.c.h.b16 %v829
      %v3499 = vunpack.c.l.b16 %v830
      %v3500 = vunpack.c.h.b16 %v830
      %v3501 = vunpack.c.l.b16 %v831
      %v3502 = vunpack.c.h.b16 %v831
      %v3503 = vunpack.c.l.b16 %v832
      %v3504 = vunpack.c.h.b16 %v832
      %v3505 = vunpack.c.l.b16 %v833
      %v3506 = vunpack.c.h.b16 %v833
      %v3507 = vunpack.c.l.b16 %v834
      %v3508 = vunpack.c.h.b16 %v834
      %v3509 = vunpack.c.l.b16 %v835
      %v3510 = vunpack.c.h.b16 %v835
      %v3511 = vunpack.c.l.b16 %v836
      %v3512 = vunpack.c.h.b16 %v836
      %v3513 = vunpack.c.l.b16 %v837
      %v3514 = vunpack.c.h.b16 %v837
      %v3515 = vunpack.c.l.b16 %v838
      %v3516 = vunpack.c.h.b16 %v838
      %v3517 = vunpack.c.l.b16 %v839
      %v3518 = vunpack.c.h.b16 %v839
      %v3519 = vunpack.c.l.b16 %v840
      %v3520 = vunpack.c.h.b16 %v840
      %v3521 = vunpack.c.l.b16 %v841
      %v3522 = vunpack.c.h.b16 %v841
      %v3523 = vunpack.c.l.b16 %v842
      %v3524 = vunpack.c.h.b16 %v842
      %v3525 = vunpack.c.l.b16 %v843
      %v3526 = vunpack.c.h.b16 %v843
      %v3527 = vunpack.c.l.b16 %v844
      %v3528 = vunpack.c.h.b16 %v844
      %v3529 = vunpack.c.l.b16 %v845
      %v3530 = vunpack.c.h.b16 %v845
      %v3531 = vunpack.c.l.b16 %v846
      %v3532 = vunpack.c.h.b16 %v846
      %v3533 = vunpack.c.l.b16 %v847
      %v3534 = vunpack.c.h.b16 %v847
      %v3535 = vunpack.c.l.b16 %v848
      %v3536 = vunpack.c.h.b16 %v848
      %v3537 = vunpack.c.l.b16 %v849
      %v3538 = vunpack.c.h.b16 %v849
      %v3539 = vunpack.c.l.b16 %v850
      %v3540 = vunpack.c.h.b16 %v850
      %v3541 = vunpack.c.l.b16 %v851
      %v3542 = vunpack.c.h.b16 %v851
      %v3543 = vunpack.c.l.b16 %v852
      %v3544 = vunpack.c.h.b16 %v852
      %v3545 = vunpack.c.l.b16 %v853
      %v3546 = vunpack.c.h.b16 %v853
      %v3547 = vunpack.c.l.b16 %v854
      %v3548 = vunpack.c.h.b16 %v854
      %v3549 = vunpack.c.l.b16 %v855
      %v3550 = vunpack.c.h.b16 %v855
      %v3551 = vunpack.c.l.b16 %v856
      %v3552 = vunpack.c.h.b16 %v856
      %v3553 = vunpack.c.l.b16 %v857
      %v3554 = vunpack.c.h.b16 %v857
      %v3555 = vunpack.c.l.b16 %v858
      %v3556 = vunpack.c.h.b16 %v858
      %v3557 = vunpack.c.l.b16 %v859
      %v3558 = vunpack.c.h.b16 %v859
      %v3559 = vunpack.c.l.b16 %v860
      %v3560 = vunpack.c.h.b16 %v860
      %v3561 = vunpack.c.l.b16 %v861
      %v3562 = vunpack.c.h.b16 %v861
      %v3563 = vunpack.c.l.b16 %v862
      %v3564 = vunpack.c.h.b16 %v862
      %v3565 = vunpack.c.l.b16 %v863
      %v3566 = vunpack.c.h.b16 %v863
      %v3567 = vunpack.c.l.b16 %v864
      %v3568 = vunpack.c.h.b16 %v864
      %v3569 = vunpack.c.l.b16 %v865
      %v3570 = vunpack.c.h.b16 %v865
      %v3571 = vunpack.c.l.b16 %v866
      %v3572 = vunpack.c.h.b16 %v866
      %v3573 = vunpack.c.l.b16 %v867
      %v3574 = vunpack.c.h.b16 %v867
      %v3575 = vunpack.c.l.b16 %v868
      %v3576 = vunpack.c.h.b16 %v868
      %v3577 = vunpack.c.l.b16 %v869
      %v3578 = vunpack.c.h.b16 %v869
      %v3579 = vunpack.c.l.b16 %v870
      %v3580 = vunpack.c.h.b16 %v870
      %v3581 = vunpack.c.l.b16 %v871
      %v3582 = vunpack.c.h.b16 %v871
      %v3583 = vunpack.c.l.b16 %v872
      %v3584 = vunpack.c.h.b16 %v872
      %v3585 = vunpack.c.l.b16 %v873
      %v3586 = vunpack.c.h.b16 %v873
      %v3587 = vunpack.c.l.b16 %v874
      %v3588 = vunpack.c.h.b16 %v874
      %v3589 = vunpack.c.l.b16 %v875
      %v3590 = vunpack.c.h.b16 %v875
      %v3591 = vunpack.c.l.b16 %v876
      %v3592 = vunpack.c.h.b16 %v876
      %v3593 = vunpack.c.l.b16 %v877
      %v3594 = vunpack.c.h.b16 %v877
      %v3595 = vunpack.c.l.b16 %v878
      %v3596 = vunpack.c.h.b16 %v878
      %v3597 = vunpack.c.l.b16 %v879
      %v3598 = vunpack.c.h.b16 %v879
      %v3599 = vunpack.c.l.b16 %v880
      %v3600 = vunpack.c.h.b16 %v880
      %v3601 = vunpack.c.l.b16 %v881
      %v3602 = vunpack.c.h.b16 %v881
      %v3603 = vunpack.c.l.b16 %v882
      %v3604 = vunpack.c.h.b16 %v882
      %v3605 = vunpack.c.l.b16 %v883
      %v3606 = vunpack.c.h.b16 %v883
      %v3607 = vunpack.c.l.b16 %v884
      %v3608 = vunpack.c.h.b16 %v884
      %v3609 = vunpack.c.l.b16 %v885
      %v3610 = vunpack.c.h.b16 %v885
      %v3611 = vunpack.c.l.b16 %v886
      %v3612 = vunpack.c.h.b16 %v886
      %v3613 = vunpack.c.l.b16 %v887
      %v3614 = vunpack.c.h.b16 %v887
      %v3615 = vunpack.c.l.b16 %v888
      %v3616 = vunpack.c.h.b16 %v888
      %v3617 = vunpack.c.l.b16 %v889
      %v3618 = vunpack.c.h.b16 %v889
      %v3619 = vunpack.c.l.b16 %v890
      %v3620 = vunpack.c.h.b16 %v890
      %v3621 = vunpack.c.l.b16 %v891
      %v3622 = vunpack.c.h.b16 %v891
      %v3623 = vunpack.c.l.b16 %v892
      %v3624 = vunpack.c.h.b16 %v892
      %v3625 = vunpack.c.l.b16 %v893
      %v3626 = vunpack.c.h.b16 %v893
      %v3627 = vunpack.c.l.b16 %v894
      %v3628 = vunpack.c.h.b16 %v894
      %v3629 = vunpack.c.l.b16 %v895
      %v3630 = vunpack.c.h.b16 %v895
      %v3631 = vunpack.c.l.b16 %v896
      %v3632 = vunpack.c.h.b16 %v896
      %v3633 = vunpack.c.l.b16 %v897
      %v3634 = vunpack.c.h.b16 %v897
      %v3635 = vunpack.c.l.b16 %v898
      %v3636 = vunpack.c.h.b16 %v898
      %v3637 = vunpack.c.l.b16 %v899
      %v3638 = vunpack.c.h.b16 %v899
      %v3639 = vunpack.c.l.b16 %v900
      %v3640 = vunpack.c.h.b16 %v900
      %v3641 = vunpack.c.l.b16 %v901
      %v3642 = vunpack.c.h.b16 %v901
      %v3643 = vunpack.c.l.b16 %v902
      %v3644 = vunpack.c.h.b16 %v902
      %v3645 = vunpack.c.l.b16 %v903
      %v3646 = vunpack.c.h.b16 %v903
      %v3647 = vunpack.c.l.b16 %v904
      %v3648 = vunpack.c.h.b16 %v904
      %v3649 = vunpack.c.l.b16 %v905
      %v3650 = vunpack.c.h.b16 %v905
      %v3651 = vunpack.c.l.b16 %v906
      %v3652 = vunpack.c.h.b16 %v906
      %v3653 = vunpack.c.l.b16 %v907
      %v3654 = vunpack.c.h.b16 %v907
      %v3655 = vunpack.c.l.b16 %v908
      %v3656 = vunpack.c.h.b16 %v908
      %v3657 = vunpack.c.l.b16 %v909
      %v3658 = vunpack.c.h.b16 %v909
      %v3659 = vunpack.c.l.b16 %v910
      %v3660 = vunpack.c.h.b16 %v910
      %v3661 = vunpack.c.l.b16 %v911
      %v3662 = vunpack.c.h.b16 %v911
      %v3663 = vunpack.c.l.b16 %v912
      %v3664 = vunpack.c.h.b16 %v912
      %v3665 = vunpack.c.l.b16 %v913
      %v3666 = vunpack.c.h.b16 %v913
      %v3667 = vunpack.c.l.b16 %v914
      %v3668 = vunpack.c.h.b16 %v914
      %v3669 = vunpack.c.l.b16 %v915
      %v3670 = vunpack.c.h.b16 %v915
      %v3671 = vunpack.c.l.b16 %v916
      %v3672 = vunpack.c.h.b16 %v916
      %v3673 = vunpack.c.l.b16 %v917
      %v3674 = vunpack.c.h.b16 %v917
      %v3675 = vunpack.c.l.b16 %v918
      %v3676 = vunpack.c.h.b16 %v918
      %v3677 = vunpack.c.l.b16 %v919
      %v3678 = vunpack.c.h.b16 %v919
      %v3679 = vunpack.c.l.b16 %v920
      %v3680 = vunpack.c.h.b16 %v920
      %v3681 = vunpack.c.l.b16 %v921
      %v3682 = vunpack.c.h.b16 %v921
      %v3683 = vunpack.c.l.b16 %v922
      %v3684 = vunpack.c.h.b16 %v922
      %v3685 = vunpack.c.l.b16 %v923
      %v3686 = vunpack.c.h.b16 %v923
      %v3687 = vunpack.c.l.b16 %v924
      %v3688 = vunpack.c.h.b16 %v924
      %v3689 = vunpack.c.l.b16 %v925
      %v3690 = vunpack.c.h.b16 %v925
      %v3691 = vunpack.c.l.b16 %v926
      %v3692 = vunpack.c.h.b16 %v926
      %v3693 = vunpack.c.l.b16 %v927
      %v3694 = vunpack.c.h.b16 %v927
      %v3695 = vunpack.c.l.b16 %v928
      %v3696 = vunpack.c.h.b16 %v928
      %v3697 = vunpack.c.l.b16 %v929
      %v3698 = vunpack.c.h.b16 %v929
      %v3699 = vunpack.c.l.b16 %v930
      %v3700 = vunpack.c.h.b16 %v930
      %v3701 = vunpack.c.l.b16 %v931
      %v3702 = vunpack.c.h.b16 %v931
      %v3703 = vunpack.c.l.b16 %v932
      %v3704 = vunpack.c.h.b16 %v932
      %v3705 = vunpack.c.l.b16 %v933
      %v3706 = vunpack.c.h.b16 %v933
      %v3707 = vunpack.c.l.b16 %v934
      %v3708 = vunpack.c.h.b16 %v934
      %v3709 = vunpack.c.l.b16 %v935
      %v3710 = vunpack.c.h.b16 %v935
      %v3711 = vunpack.c.l.b16 %v936
      %v3712 = vunpack.c.h.b16 %v936
      %v3713 = vunpack.c.l.b16 %v937
      %v3714 = vunpack.c.h.b16 %v937
      %v3715 = vunpack.c.l.b16 %v938
      %v3716 = vunpack.c.h.b16 %v938
      %v3717 = vunpack.c.l.b16 %v939
      %v3718 = vunpack.c.h.b16 %v939
      %v3719 = vunpack.c.l.b16 %v940
      %v3720 = vunpack.c.h.b16 %v940
      %v3721 = vunpack.c.l.b16 %v941
      %v3722 = vunpack.c.h.b16 %v941
      %v3723 = vunpack.c.l.b16 %v942
      %v3724 = vunpack.c.h.b16 %v942
      %v3725 = vunpack.c.l.b16 %v943
      %v3726 = vunpack.c.h.b16 %v943
      %v3727 = vunpack.c.l.b16 %v944
      %v3728 = vunpack.c.h.b16 %v944
      %v3729 = vunpack.c.l.b16 %v945
      %v3730 = vunpack.c.h.b16 %v945
      %v3731 = vunpack.c.l.b16 %v946
      %v3732 = vunpack.c.h.b16 %v946
      %v3733 = vunpack.c.l.b16 %v947
      %v3734 = vunpack.c.h.b16 %v947
      %v3735 = vunpack.c.l.b16 %v948
      %v3736 = vunpack.c.h.b16 %v948
      %v3737 = vunpack.c.l.b16 %v949
      %v3738 = vunpack.c.h.b16 %v949
      %v3739 = vunpack.c.l.b16 %v950
      %v3740 = vunpack.c.h.b16 %v950
      %v3741 = vunpack.c.l.b16 %v951
      %v3742 = vunpack.c.h.b16 %v951
      %v3743 = vunpack.c.l.b16 %v952
      %v3744 = vunpack.c.h.b16 %v952
      %v3745 = vunpack.c.l.b16 %v953
      %v3746 = vunpack.c.h.b16 %v953
      %v3747 = vunpack.c.l.b16 %v954
      %v3748 = vunpack.c.h.b16 %v954
      %v3749 = vunpack.c.l.b16 %v955
      %v3750 = vunpack.c.h.b16 %v955
      %v3751 = vunpack.c.l.b16 %v956
      %v3752 = vunpack.c.h.b16 %v956
      %v3753 = vunpack.c.l.b16 %v957
      %v3754 = vunpack.c.h.b16 %v957
      %v3755 = vunpack.c.l.b16 %v958
      %v3756 = vunpack.c.h.b16 %v958
      %v3757 = vunpack.c.l.b16 %v959
      %v3758 = vunpack.c.h.b16 %v959
      %v3759 = vunpack.c.l.b16 %v960
      %v3760 = vunpack.c.h.b16 %v960
      %v3761 = vunpack.c.l.b16 %v961
      %v3762 = vunpack.c.h.b16 %v961
      %v3763 = vunpack.c.l.b16 %v962
      %v3764 = vunpack.c.h.b16 %v962
      %v3765 = vunpack.c.l.b16 %v963
      %v3766 = vunpack.c.h.b16 %v963
      %v3767 = vunpack.c.l.b16 %v964
      %v3768 = vunpack.c.h.b16 %v964
      %v3769 = vunpack.c.l.b16 %v965
      %v3770 = vunpack.c.h.b16 %v965
      %v3771 = vunpack.c.l.b16 %v966
      %v3772 = vunpack.c.h.b16 %v966
      %v3773 = vunpack.c.l.b16 %v967
      %v3774 = vunpack.c.h.b16 %v967
      %v3775 = vunpack.c.l.b16 %v968
      %v3776 = vunpack.c.h.b16 %v968
      %v3777 = vunpack.c.l.b16 %v969
      %v3778 = vunpack.c.h.b16 %v969
      %v3779 = vunpack.c.l.b16 %v970
      %v3780 = vunpack.c.h.b16 %v970
      %v3781 = vunpack.c.l.b16 %v971
      %v3782 = vunpack.c.h.b16 %v971
      %v3783 = vunpack.c.l.b16 %v972
      %v3784 = vunpack.c.h.b16 %v972
      %v3785 = vunpack.c.l.b16 %v973
      %v3786 = vunpack.c.h.b16 %v973
      %v3787 = vunpack.c.l.b16 %v974
      %v3788 = vunpack.c.h.b16 %v974
      %v3789 = vunpack.c.l.b16 %v975
      %v3790 = vunpack.c.h.b16 %v975
      %v3791 = vunpack.c.l.b16 %v976
      %v3792 = vunpack.c.h.b16 %v976
      %v3793 = vunpack.c.l.b16 %v977
      %v3794 = vunpack.c.h.b16 %v977
      %v3795 = vunpack.c.l.b16 %v978
      %v3796 = vunpack.c.h.b16 %v978
      %v3797 = vunpack.c.l.b16 %v979
      %v3798 = vunpack.c.h.b16 %v979
      %v3799 = vunpack.c.l.b16 %v980
      %v3800 = vunpack.c.h.b16 %v980
      %v3801 = vunpack.c.l.b16 %v981
      %v3802 = vunpack.c.h.b16 %v981
      %v3803 = vunpack.c.l.b16 %v982
      %v3804 = vunpack.c.h.b16 %v982
      %v3805 = vunpack.c.l.b16 %v983
      %v3806 = vunpack.c.h.b16 %v983
      %v3807 = vunpack.c.l.b16 %v984
      %v3808 = vunpack.c.h.b16 %v984
      %v3809 = vunpack.c.l.b16 %v985
      %v3810 = vunpack.c.h.b16 %v985
      %v3811 = vunpack.c.l.b16 %v986
      %v3812 = vunpack.c.h.b16 %v986
      %v3813 = vunpack.c.l.b16 %v987
      %v3814 = vunpack.c.h.b16 %v987
      %v3815 = vunpack.c.l.b16 %v988
      %v3816 = vunpack.c.h.b16 %v988
      %v3817 = vunpack.c.l.b16 %v989
      %v3818 = vunpack.c.h.b16 %v989
      %v3819 = vunpack.c.l.b16 %v990
      %v3820 = vunpack.c.h.b16 %v990
      %v3821 = vunpack.c.l.b16 %v991
      %v3822 = vunpack.c.h.b16 %v991
      %v3823 = vunpack.c.l.b16 %v992
      %v3824 = vunpack.c.h.b16 %v992
      %v3825 = vunpack.c.l.b16 %v993
      %v3826 = vunpack.c.h.b16 %v993
      %v3827 = vunpack.c.l.b16 %v994
      %v3828 = vunpack.c.h.b16 %v994
      %v3829 = vunpack.c.l.b16 %v995
      %v3830 = vunpack.c.h.b16 %v995
      %v3831 = vunpack.c.l.b16 %v996
      %v3832 = vunpack.c.h.b16 %v996
      %v3833 = vunpack.c.l.b16 %v997
      %v3834 = vunpack.c.h.b16 %v997
      %v3835 = vunpack.c.l.b16 %v998
      %v3836 = vunpack.c.h.b16 %v998
      %v3837 = vunpack.c.l.b16 %v999
      %v3838 = vunpack.c.h.b16 %v999
      %v3839 = vunpack.c.l.b16 %v1000
      %v3840 = vunpack.c.h.b16 %v1000
      %v3841 = vunpack.c.l.b16 %v1001
      %v3842 = vunpack.c.h.b16 %v1001
      %v3843 = vunpack.c.l.b16 %v1002
      %v3844 = vunpack.c.h.b16 %v1002
      %v3845 = vunpack.c.l.b16 %v1003
      %v3846 = vunpack.c.h.b16 %v1003
      %v3847 = vunpack.c.l.b16 %v1004
      %v3848 = vunpack.c.h.b16 %v1004
      %v3849 = vunpack.c.l.b16 %v1005
      %v3850 = vunpack.c.h.b16 %v1005
      %v3851 = vunpack.c.l.b16 %v1006
      %v3852 = vunpack.c.h.b16 %v1006
      %v3853 = vunpack.c.l.b16 %v1007
      %v3854 = vunpack.c.h.b16 %v1007
      %v3855 = vunpack.c.l.b16 %v1008
      %v3856 = vunpack.c.h.b16 %v1008
      %v3857 = vunpack.c.l.b16 %v1009
      %v3858 = vunpack.c.h.b16 %v1009
      %v3859 = vunpack.c.l.b16 %v1010
      %v3860 = vunpack.c.h.b16 %v1010
      %v3861 = vunpack.c.l.b16 %v1011
      %v3862 = vunpack.c.h.b16 %v1011
      %v3863 = vunpack.c.l.b16 %v1012
      %v3864 = vunpack.c.h.b16 %v1012
      %v3865 = vunpack.c.l.b16 %v1013
      %v3866 = vunpack.c.h.b16 %v1013
      %v3867 = vunpack.c.l.b16 %v1014
      %v3868 = vunpack.c.h.b16 %v1014
      %v3869 = vunpack.c.l.b16 %v1015
      %v3870 = vunpack.c.h.b16 %v1015
      %v3871 = vunpack.c.l.b16 %v1016
      %v3872 = vunpack.c.h.b16 %v1016
      %v3873 = vunpack.c.l.b16 %v1017
      %v3874 = vunpack.c.h.b16 %v1017
      %v3875 = vunpack.c.l.b16 %v1018
      %v3876 = vunpack.c.h.b16 %v1018
      %v3877 = vunpack.c.l.b16 %v1019
      %v3878 = vunpack.c.h.b16 %v1019
      %v3879 = vunpack.c.l.b16 %v1020
      %v3880 = vunpack.c.h.b16 %v1020
      %v3881 = vunpack.c.l.b16 %v1021
      %v3882 = vunpack.c.h.b16 %v1021
      %v3883 = vunpack.c.l.b16 %v1022
      %v3884 = vunpack.c.h.b16 %v1022
      %v3885 = vunpack.c.l.b16 %v1023
      %v3886 = vunpack.c.h.b16 %v1023
      %v3887 = vunpack.c.l.b16 %v1024
      %v3888 = vunpack.c.h.b16 %v1024
      %v3889 = vunpack.c.l.b16 %v1025
      %v3890 = vunpack.c.h.b16 %v1025
      %v3891 = vunpack.c.l.b16 %v1026
      %v3892 = vunpack.c.h.b16 %v1026
      %v3893 = vunpack.c.l.b16 %v1027
      %v3894 = vunpack.c.h.b16 %v1027
      %v3895 = vunpack.c.l.b16 %v1028
      %v3896 = vunpack.c.h.b16 %v1028
      %v3897 = vunpack.c.l.b16 %v1029
      %v3898 = vunpack.c.h.b16 %v1029
      %v3899 = vunpack.c.l.b16 %v1030
      %v3900 = vunpack.c.h.b16 %v1030
      %v3901 = vunpack.c.l.b16 %v1031
      %v3902 = vunpack.c.h.b16 %v1031
      %v3903 = vunpack.c.l.b16 %v1032
      %v3904 = vunpack.c.h.b16 %v1032
      %v3905 = vunpack.c.l.b16 %v1033
      %v3906 = vunpack.c.h.b16 %v1033
      %v3907 = vunpack.c.l.b16 %v1034
      %v3908 = vunpack.c.h.b16 %v1034
      %v3909 = vunpack.c.l.b16 %v1035
      %v3910 = vunpack.c.h.b16 %v1035
      %v3911 = vunpack.c.l.b16 %v1036
      %v3912 = vunpack.c.h.b16 %v1036
      %v3913 = vunpack.c.l.b16 %v1037
      %v3914 = vunpack.c.h.b16 %v1037
      %v3915 = vunpack.c.l.b16 %v1038
      %v3916 = vunpack.c.h.b16 %v1038
      %v3917 = vunpack.c.l.b16 %v1039
      %v3918 = vunpack.c.h.b16 %v1039
      %v3919 = vunpack.c.l.b16 %v1040
      %v3920 = vunpack.c.h.b16 %v1040
      %v3921 = vunpack.c.l.b16 %v1041
      %v3922 = vunpack.c.h.b16 %v1041
      %v3923 = vunpack.c.l.b16 %v1042
      %v3924 = vunpack.c.h.b16 %v1042
      %v3925 = vunpack.c.l.b16 %v1043
      %v3926 = vunpack.c.h.b16 %v1043
      %v3927 = vunpack.c.l.b16 %v1044
      %v3928 = vunpack.c.h.b16 %v1044
      %v3929 = vunpack.c.l.b16 %v1045
      %v3930 = vunpack.c.h.b16 %v1045
      %v3931 = vunpack.c.l.b16 %v1046
      %v3932 = vunpack.c.h.b16 %v1046
      %v3933 = vunpack.c.l.b16 %v1047
      %v3934 = vunpack.c.h.b16 %v1047
      %v3935 = vunpack.c.l.b16 %v1048
      %v3936 = vunpack.c.h.b16 %v1048
      %v3937 = vunpack.c.l.b16 %v1049
      %v3938 = vunpack.c.h.b16 %v1049
      %v3939 = vunpack.c.l.b16 %v1050
      %v3940 = vunpack.c.h.b16 %v1050
      %v3941 = vunpack.c.l.b16 %v1051
      %v3942 = vunpack.c.h.b16 %v1051
      %v3943 = vunpack.c.l.b16 %v1052
      %v3944 = vunpack.c.h.b16 %v1052
      %v3945 = vunpack.c.l.b16 %v1053
      %v3946 = vunpack.c.h.b16 %v1053
      %v3947 = vunpack.c.l.b16 %v1054
      %v3948 = vunpack.c.h.b16 %v1054
      %v3949 = vunpack.c.l.b16 %v1055
      %v3950 = vunpack.c.h.b16 %v1055
      %v3951 = vunpack.c.l.b16 %v1056
      %v3952 = vunpack.c.h.b16 %v1056
      %v3953 = vunpack.c.l.b16 %v1057
      %v3954 = vunpack.c.h.b16 %v1057
      %v3955 = vunpack.c.l.b16 %v1058
      %v3956 = vunpack.c.h.b16 %v1058
      %v3957 = vunpack.c.l.b16 %v1059
      %v3958 = vunpack.c.h.b16 %v1059
      %v3959 = vunpack.c.l.b16 %v1060
      %v3960 = vunpack.c.h.b16 %v1060
      %v3961 = vunpack.c.l.b16 %v1061
      %v3962 = vunpack.c.h.b16 %v1061
      %v3963 = vunpack.c.l.b16 %v1062
      %v3964 = vunpack.c.h.b16 %v1062
      %v3965 = vunpack.c.l.b16 %v1063
      %v3966 = vunpack.c.h.b16 %v1063
      %v3967 = vunpack.c.l.b16 %v1064
      %v3968 = vunpack.c.h.b16 %v1064
      %v3969 = vunpack.c.l.b16 %v1065
      %v3970 = vunpack.c.h.b16 %v1065
      %v3971 = vunpack.c.l.b16 %v1066
      %v3972 = vunpack.c.h.b16 %v1066
      %v3973 = vunpack.c.l.b16 %v1067
      %v3974 = vunpack.c.h.b16 %v1067
      %v3975 = vunpack.c.l.b16 %v1068
      %v3976 = vunpack.c.h.b16 %v1068
      %v3977 = vunpack.c.l.b16 %v1069
      %v3978 = vunpack.c.h.b16 %v1069
      %v3979 = vunpack.c.l.b16 %v1070
      %v3980 = vunpack.c.h.b16 %v1070
      %v3981 = vunpack.c.l.b16 %v1071
      %v3982 = vunpack.c.h.b16 %v1071
      %v3983 = vunpack.c.l.b16 %v1072
      %v3984 = vunpack.c.h.b16 %v1072
      %v3985 = vunpack.c.l.b16 %v1073
      %v3986 = vunpack.c.h.b16 %v1073
      %v3987 = vunpack.c.l.b16 %v1074
      %v3988 = vunpack.c.h.b16 %v1074
      %v3989 = vunpack.c.l.b16 %v1075
      %v3990 = vunpack.c.h.b16 %v1075
      %v3991 = vunpack.c.l.b16 %v1076
      %v3992 = vunpack.c.h.b16 %v1076
      %v3993 = vunpack.c.l.b16 %v1077
      %v3994 = vunpack.c.h.b16 %v1077
      %v3995 = vunpack.c.l.b16 %v1078
      %v3996 = vunpack.c.h.b16 %v1078
      %v3997 = vunpack.c.l.b16 %v1079
      %v3998 = vunpack.c.h.b16 %v1079
      %v3999 = vunpack.c.l.b16 %v1080
      %v4000 = vunpack.c.h.b16 %v1080
      %v4001 = vunpack.c.l.b16 %v1081
      %v4002 = vunpack.c.h.b16 %v1081
      %v4003 = vunpack.c.l.b16 %v1082
      %v4004 = vunpack.c.h.b16 %v1082
      %v4005 = vunpack.c.l.b16 %v1083
      %v4006 = vunpack.c.h.b16 %v1083
      %v4007 = vunpack.c.l.b16 %v1084
      %v4008 = vunpack.c.h.b16 %v1084
      %v4009 = vunpack.c.l.b16 %v1085
      %v4010 = vunpack.c.h.b16 %v1085
      %v4011 = vunpack.c.l.b16 %v1086
      %v4012 = vunpack.c.h.b16 %v1086
      %v4013 = vunpack.c.l.b16 %v1087
      %v4014 = vunpack.c.h.b16 %v1087
      %v4015 = vunpack.c.l.b16 %v1088
      %v4016 = vunpack.c.h.b16 %v1088
      %v4017 = vunpack.c.l.b16 %v1089
      %v4018 = vunpack.c.h.b16 %v1089
      %v4019 = vunpack.c.l.b16 %v1090
      %v4020 = vunpack.c.h.b16 %v1090
      %v4021 = vunpack.c.l.b16 %v1091
      %v4022 = vunpack.c.h.b16 %v1091
      %v4023 = vunpack.c.l.b16 %v1092
      %v4024 = vunpack.c.h.b16 %v1092
      %v4025 = vunpack.c.l.b16 %v1093
      %v4026 = vunpack.c.h.b16 %v1093
      %v4027 = vunpack.c.l.b16 %v1094
      %v4028 = vunpack.c.h.b16 %v1094
      %v4029 = vunpack.c.l.b16 %v1095
      %v4030 = vunpack.c.h.b16 %v1095
      %v4031 = vunpack.c.l.b16 %v1096
      %v4032 = vunpack.c.h.b16 %v1096
      %v4033 = vunpack.c.l.b16 %v1097
      %v4034 = vunpack.c.h.b16 %v1097
      %v4035 = vunpack.c.l.b16 %v1098
      %v4036 = vunpack.c.h.b16 %v1098
      %v4037 = vunpack.c.l.b16 %v1099
      %v4038 = vunpack.c.h.b16 %v1099
      %v4039 = vunpack.c.l.b16 %v1100
      %v4040 = vunpack.c.h.b16 %v1100
      %v4041 = vunpack.c.l.b16 %v1101
      %v4042 = vunpack.c.h.b16 %v1101
      %v4043 = vunpack.c.l.b16 %v1102
      %v4044 = vunpack.c.h.b16 %v1102
      %v4045 = vunpack.c.l.b16 %v1103
      %v4046 = vunpack.c.h.b16 %v1103
      %v4047 = vunpack.c.l.b16 %v1104
      %v4048 = vunpack.c.h.b16 %v1104
      %v4049 = vunpack.c.l.b16 %v1105
      %v4050 = vunpack.c.h.b16 %v1105
      %v4051 = vunpack.c.l.b16 %v1106
      %v4052 = vunpack.c.h.b16 %v1106
      %v4053 = vunpack.c.l.b16 %v1107
      %v4054 = vunpack.c.h.b16 %v1107
      %v4055 = vunpack.c.l.b16 %v1108
      %v4056 = vunpack.c.h.b16 %v1108
      %v4057 = vunpack.c.l.b16 %v1109
      %v4058 = vunpack.c.h.b16 %v1109
      %v4059 = vunpack.c.l.b16 %v1110
      %v4060 = vunpack.c.h.b16 %v1110
      %v4061 = vunpack.c.l.b16 %v1111
      %v4062 = vunpack.c.h.b16 %v1111
      %v4063 = vunpack.c.l.b16 %v1112
      %v4064 = vunpack.c.h.b16 %v1112
      %v4065 = vunpack.c.l.b16 %v1113
      %v4066 = vunpack.c.h.b16 %v1113
      %v4067 = vunpack.c.l.b16 %v1114
      %v4068 = vunpack.c.h.b16 %v1114
      %v4069 = vunpack.c.l.b16 %v1115
      %v4070 = vunpack.c.h.b16 %v1115
      %v4071 = vunpack.c.l.b16 %v1116
      %v4072 = vunpack.c.h.b16 %v1116
      %v4073 = vunpack.c.l.b16 %v1117
      %v4074 = vunpack.c.h.b16 %v1117
      %v4075 = vunpack.c.l.b16 %v1118
      %v4076 = vunpack.c.h.b16 %v1118
      %v4077 = vunpack.c.l.b16 %v1119
      %v4078 = vunpack.c.h.b16 %v1119
      %v4079 = vunpack.c.l.b16 %v1120
      %v4080 = vunpack.c.h.b16 %v1120
      %v4081 = vunpack.c.l.b16 %v1121
      %v4082 = vunpack.c.h.b16 %v1121
      %v4083 = vunpack.c.l.b16 %v1122
      %v4084 = vunpack.c.h.b16 %v1122
      %v4085 = vunpack.c.l.b16 %v1123
      %v4086 = vunpack.c.h.b16 %v1123
      %v4087 = vunpack.c.l.b16 %v1124
      %v4088 = vunpack.c.h.b16 %v1124
      %v4089 = vunpack.c.l.b16 %v1125
      %v4090 = vunpack.c.h.b16 %v1125
      %v4091 = vunpack.c.l.b16 %v1126
      %v4092 = vunpack.c.h.b16 %v1126
      %v4093 = vunpack.c.l.b16 %v1127
      %v4094 = vunpack.c.h.b16 %v1127
      %v4095 = vunpack.c.l.b16 %v1128
      %v4096 = vunpack.c.h.b16 %v1128
      %v4097 = vunpack.c.l.b16 %v1129
      %v4098 = vunpack.c.h.b16 %v1129
      %v4099 = vunpack.c.l.b16 %v1130
      %v4100 = vunpack.c.h.b16 %v1130
      %v4101 = vunpack.c.l.b16 %v1131
      %v4102 = vunpack.c.h.b16 %v1131
      %v4103 = vunpack.c.l.b16 %v1132
      %v4104 = vunpack.c.h.b16 %v1132
      %v4105 = vunpack.c.l.b16 %v1133
      %v4106 = vunpack.c.h.b16 %v1133
      %v4107 = vunpack.c.l.b16 %v1134
      %v4108 = vunpack.c.h.b16 %v1134
      %v4109 = vunpack.c.l.b16 %v1135
      %v4110 = vunpack.c.h.b16 %v1135
      %v4111 = vunpack.c.l.b16 %v1136
      %v4112 = vunpack.c.h.b16 %v1136
      %v4113 = vunpack.c.l.b16 %v1137
      %v4114 = vunpack.c.h.b16 %v1137
      %v4115 = vunpack.c.l.b16 %v1138
      %v4116 = vunpack.c.h.b16 %v1138
      %v4117 = vunpack.c.l.b16 %v1139
      %v4118 = vunpack.c.h.b16 %v1139
      %v4119 = vunpack.c.l.b16 %v1140
      %v4120 = vunpack.c.h.b16 %v1140
      %v4121 = vunpack.c.l.b16 %v1141
      %v4122 = vunpack.c.h.b16 %v1141
      %v4123 = vunpack.c.l.b16 %v1142
      %v4124 = vunpack.c.h.b16 %v1142
      %v4125 = vunpack.c.l.b16 %v1143
      %v4126 = vunpack.c.h.b16 %v1143
      %v4127 = vunpack.c.l.b16 %v1144
      %v4128 = vunpack.c.h.b16 %v1144
      %v4129 = vunpack.c.l.b16 %v1145
      %v4130 = vunpack.c.h.b16 %v1145
      %v4131 = vunpack.c.l.b16 %v1146
      %v4132 = vunpack.c.h.b16 %v1146
      %v4133 = vunpack.c.l.b16 %v1147
      %v4134 = vunpack.c.h.b16 %v1147
      %v4135 = vunpack.c.l.b16 %v1148
      %v4136 = vunpack.c.h.b16 %v1148
      %v4137 = vunpack.c.l.b16 %v1149
      %v4138 = vunpack.c.h.b16 %v1149
      %v4139 = vunpack.c.l.b16 %v1150
      %v4140 = vunpack.c.h.b16 %v1150
      %v4141 = vunpack.c.l.b16 %v1151
      %v4142 = vunpack.c.h.b16 %v1151
      %v4143 = vunpack.c.l.b16 %v1152
      %v4144 = vunpack.c.h.b16 %v1152
      %v4145 = vunpack.c.l.b16 %v1153
      %v4146 = vunpack.c.h.b16 %v1153
      %v4147 = vunpack.c.l.b16 %v1154
      %v4148 = vunpack.c.h.b16 %v1154
      %v4149 = vunpack.c.l.b16 %v1155
      %v4150 = vunpack.c.h.b16 %v1155
      %v4151 = vunpack.c.l.b16 %v1156
      %v4152 = vunpack.c.h.b16 %v1156
      %v4153 = vunpack.c.l.b16 %v1157
      %v4154 = vunpack.c.h.b16 %v1157
      %v4155 = vunpack.c.l.b16 %v1158
      %v4156 = vunpack.c.h.b16 %v1158
      %v4157 = vunpack.c.l.b16 %v1159
      %v4158 = vunpack.c.h.b16 %v1159
      %v4159 = vunpack.c.l.b16 %v1160
      %v4160 = vunpack.c.h.b16 %v1160
      %v4161 = vunpack.c.l.b16 %v1161
      %v4162 = vunpack.c.h.b16 %v1161
      %v4163 = vunpack.c.l.b16 %v1162
      %v4164 = vunpack.c.h.b16 %v1162
      %v4165 = vunpack.c.l.b16 %v1163
      %v4166 = vunpack.c.h.b16 %v1163
      %v4167 = vunpack.c.l.b16 %v1164
      %v4168 = vunpack.c.h.b16 %v1164
      %v4169 = vunpack.c.l.b16 %v1165
      %v4170 = vunpack.c.h.b16 %v1165
      %v4171 = vunpack.c.l.b16 %v1166
      %v4172 = vunpack.c.h.b16 %v1166
      %v4173 = vunpack.c.l.b16 %v1167
      %v4174 = vunpack.c.h.b16 %v1167
      %v4175 = vunpack.c.l.b16 %v1168
      %v4176 = vunpack.c.h.b16 %v1168
      %v4177 = vunpack.c.l.b16 %v1169
      %v4178 = vunpack.c.h.b16 %v1169
      %v4179 = vunpack.c.l.b16 %v1170
      %v4180 = vunpack.c.h.b16 %v1170
      %v4181 = vunpack.c.l.b16 %v1171
      %v4182 = vunpack.c.h.b16 %v1171
      %v4183 = vunpack.c.l.b16 %v1172
      %v4184 = vunpack.c.h.b16 %v1172
      %v4185 = vunpack.c.l.b16 %v1173
      %v4186 = vunpack.c.h.b16 %v1173
      %v4187 = vunpack.c.l.b16 %v1174
      %v4188 = vunpack.c.h.b16 %v1174
      %v4189 = vunpack.c.l.b16 %v1175
      %v4190 = vunpack.c.h.b16 %v1175
      %v4191 = vunpack.c.l.b16 %v1176
      %v4192 = vunpack.c.h.b16 %v1176
      %v4193 = vunpack.c.l.b16 %v1177
      %v4194 = vunpack.c.h.b16 %v1177
      %v4195 = vunpack.c.l.b16 %v1178
      %v4196 = vunpack.c.h.b16 %v1178
      %v4197 = vunpack.c.l.b16 %v1179
      %v4198 = vunpack.c.h.b16 %v1179
      %v4199 = vunpack.c.l.b16 %v1180
      %v4200 = vunpack.c.h.b16 %v1180
      %v4201 = vunpack.c.l.b16 %v1181
      %v4202 = vunpack.c.h.b16 %v1181
      %v4203 = vunpack.c.l.b16 %v1182
      %v4204 = vunpack.c.h.b16 %v1182
      %v4205 = vunpack.c.l.b16 %v1183
      %v4206 = vunpack.c.h.b16 %v1183
      %v4207 = vunpack.c.l.b16 %v1184
      %v4208 = vunpack.c.h.b16 %v1184
      %v4209 = vunpack.c.l.b16 %v1185
      %v4210 = vunpack.c.h.b16 %v1185
      %v4211 = vunpack.c.l.b16 %v1186
      %v4212 = vunpack.c.h.b16 %v1186
      %v4213 = vunpack.c.l.b16 %v1187
      %v4214 = vunpack.c.h.b16 %v1187
      %v4215 = vunpack.c.l.b16 %v1188
      %v4216 = vunpack.c.h.b16 %v1188
      %v4217 = vunpack.c.l.b16 %v1189
      %v4218 = vunpack.c.h.b16 %v1189
      %v4219 = vunpack.c.l.b16 %v1190
      %v4220 = vunpack.c.h.b16 %v1190
      %v4221 = vunpack.c.l.b16 %v1191
      %v4222 = vunpack.c.h.b16 %v1191
      %v4223 = vunpack.c.l.b16 %v1192
      %v4224 = vunpack.c.h.b16 %v1192
      %v4225 = vunpack.c.l.b16 %v1193
      %v4226 = vunpack.c.h.b16 %v1193
      %v4227 = vunpack.c.l.b16 %v1194
      %v4228 = vunpack.c.h.b16 %v1194
      %v4229 = vunpack.c.l.b16 %v1195
      %v4230 = vunpack.c.h.b16 %v1195
      %v4231 = vunpack.c.l.b16 %v1196
      %v4232 = vunpack.c.h.b16 %v1196
      %v4233 = vunpack.c.l.b16 %v1197
      %v4234 = vunpack.c.h.b16 %v1197
      %v4235 = vunpack.c.l.b16 %v1198
      %v4236 = vunpack.c.h.b16 %v1198
      %v4237 = vunpack.c.l.b16 %v1199
      %v4238 = vunpack.c.h.b16 %v1199
      %v4239 = vunpack.c.l.b16 %v1200
      %v4240 = vunpack.c.h.b16 %v1200
      %v4241 = vunpack.c.l.b16 %v1201
      %v4242 = vunpack.c.h.b16 %v1201
      %v4243 = vunpack.c.l.b16 %v1202
      %v4244 = vunpack.c.h.b16 %v1202
      %v4245 = vunpack.c.l.b16 %v1203
      %v4246 = vunpack.c.h.b16 %v1203
      %v4247 = vunpack.c.l.b16 %v1204
      %v4248 = vunpack.c.h.b16 %v1204
      %v4249 = vunpack.c.l.b16 %v1205
      %v4250 = vunpack.c.h.b16 %v1205
      %v4251 = vunpack.c.l.b16 %v1206
      %v4252 = vunpack.c.h.b16 %v1206
      %v4253 = vunpack.c.l.b16 %v1207
      %v4254 = vunpack.c.h.b16 %v1207
      %v4255 = vunpack.c.l.b16 %v1208
      %v4256 = vunpack.c.h.b16 %v1208
      %v4257 = vunpack.c.l.b16 %v1209
      %v4258 = vunpack.c.h.b16 %v1209
      %v4259 = vunpack.c.l.b16 %v1210
      %v4260 = vunpack.c.h.b16 %v1210
      %v4261 = vunpack.c.l.b16 %v1211
      %v4262 = vunpack.c.h.b16 %v1211
      %v4263 = vunpack.c.l.b16 %v1212
      %v4264 = vunpack.c.h.b16 %v1212
      %v4265 = vunpack.c.l.b16 %v1213
      %v4266 = vunpack.c.h.b16 %v1213
      %v4267 = vunpack.c.l.b16 %v1214
      %v4268 = vunpack.c.h.b16 %v1214
      %v4269 = vunpack.c.l.b16 %v1215
      %v4270 = vunpack.c.h.b16 %v1215
      %v4271 = vunpack.c.l.b16 %v1216
      %v4272 = vunpack.c.h.b16 %v1216
      %v4273 = vunpack.c.l.b16 %v1217
      %v4274 = vunpack.c.h.b16 %v1217
      %v4275 = vunpack.c.l.b16 %v1218
      %v4276 = vunpack.c.h.b16 %v1218
      %v4277 = vunpack.c.l.b16 %v1219
      %v4278 = vunpack.c.h.b16 %v1219
      %v4279 = vunpack.c.l.b16 %v1220
      %v4280 = vunpack.c.h.b16 %v1220
      %v4281 = vunpack.c.l.b16 %v1221
      %v4282 = vunpack.c.h.b16 %v1221
      %v4283 = vunpack.c.l.b16 %v1222
      %v4284 = vunpack.c.h.b16 %v1222
      %v4285 = vunpack.c.l.b16 %v1223
      %v4286 = vunpack.c.h.b16 %v1223
      %v4287 = vunpack.c.l.b16 %v1224
      %v4288 = vunpack.c.h.b16 %v1224
      %v4289 = vunpack.c.l.b16 %v1225
      %v4290 = vunpack.c.h.b16 %v1225
      %v4291 = vunpack.c.l.b16 %v1226
      %v4292 = vunpack.c.h.b16 %v1226
      %v4293 = vunpack.c.l.b16 %v1227
      %v4294 = vunpack.c.h.b16 %v1227
      %v4295 = vunpack.c.l.b16 %v1228
      %v4296 = vunpack.c.h.b16 %v1228
      %v4297 = vunpack.c.l.b16 %v1229
      %v4298 = vunpack.c.h.b16 %v1229
      %v4299 = vunpack.c.l.b16 %v1230
      %v4300 = vunpack.c.h.b16 %v1230
      %v4301 = vunpack.c.l.b16 %v1231
      %v4302 = vunpack.c.h.b16 %v1231
      %v4303 = vunpack.c.l.b16 %v1232
      %v4304 = vunpack.c.h.b16 %v1232
      %v4305 = vunpack.c.l.b16 %v1233
      %v4306 = vunpack.c.h.b16 %v1233
      %v4307 = vunpack.c.l.b16 %v1234
      %v4308 = vunpack.c.h.b16 %v1234
      %v4309 = vunpack.c.l.b16 %v1235
      %v4310 = vunpack.c.h.b16 %v1235
      %v4311 = vunpack.c.l.b16 %v1236
      %v4312 = vunpack.c.h.b16 %v1236
      %v4313 = vunpack.c.l.b16 %v1237
      %v4314 = vunpack.c.h.b16 %v1237
      %v4315 = vunpack.c.l.b16 %v1238
      %v4316 = vunpack.c.h.b16 %v1238
      %v4317 = vunpack.c.l.b16 %v1239
      %v4318 = vunpack.c.h.b16 %v1239
      %v4319 = vunpack.c.l.b16 %v1240
      %v4320 = vunpack.c.h.b16 %v1240
      %v4321 = vunpack.c.l.b16 %v1241
      %v4322 = vunpack.c.h.b16 %v1241
      %v4323 = vunpack.c.l.b16 %v1242
      %v4324 = vunpack.c.h.b16 %v1242
      %v4325 = vunpack.c.l.b16 %v1243
      %v4326 = vunpack.c.h.b16 %v1243
      %v4327 = vunpack.c.l.b16 %v1244
      %v4328 = vunpack.c.h.b16 %v1244
      %v4329 = vunpack.c.l.b16 %v1245
      %v4330 = vunpack.c.h.b16 %v1245
      %v4331 = vunpack.c.l.b16 %v1246
      %v4332 = vunpack.c.h.b16 %v1246
      %v4333 = vunpack.c.l.b16 %v1247
      %v4334 = vunpack.c.h.b16 %v1247
      %v4335 = vunpack.c.l.b16 %v1248
      %v4336 = vunpack.c.h.b16 %v1248
      %v4337 = vunpack.c.l.b16 %v1249
      %v4338 = vunpack.c.h.b16 %v1249
      %v4339 = vunpack.c.l.b16 %v1250
      %v4340 = vunpack.c.h.b16 %v1250
      %v4341 = vunpack.c.l.b16 %v1251
      %v4342 = vunpack.c.h.b16 %v1251
      %v4343 = vunpack.c.l.b16 %v1252
      %v4344 = vunpack.c.h.b16 %v1252
      %v4345 = vunpack.c.l.b16 %v1253
      %v4346 = vunpack.c.h.b16 %v1253
      %v4347 = vunpack.c.l.b16 %v1254
      %v4348 = vunpack.c.h.b16 %v1254
      %v4349 = vunpack.c.l.b16 %v1255
      %v4350 = vunpack.c.h.b16 %v1255
      %v4351 = vunpack.c.l.b16 %v1256
      %v4352 = vunpack.c.h.b16 %v1256
      %v4353 = vunpack.c.l.b16 %v1257
      %v4354 = vunpack.c.h.b16 %v1257
      %v4355 = vunpack.c.l.b16 %v1258
      %v4356 = vunpack.c.h.b16 %v1258
      %v4357 = vunpack.c.l.b16 %v1259
      %v4358 = vunpack.c.h.b16 %v1259
      %v4359 = vunpack.c.l.b16 %v1260
      %v4360 = vunpack.c.h.b16 %v1260
      %v4361 = vunpack.c.l.b16 %v1261
      %v4362 = vunpack.c.h.b16 %v1261
      %v4363 = vunpack.c.l.b16 %v1262
      %v4364 = vunpack.c.h.b16 %v1262
      %v4365 = vunpack.c.l.b16 %v1263
      %v4366 = vunpack.c.h.b16 %v1263
      %v4367 = vunpack.c.l.b16 %v1264
      %v4368 = vunpack.c.h.b16 %v1264
      %v4369 = vunpack.c.l.b16 %v1265
      %v4370 = vunpack.c.h.b16 %v1265
      %v4371 = vunpack.c.l.b16 %v1266
      %v4372 = vunpack.c.h.b16 %v1266
      %v4373 = vunpack.c.l.b16 %v1267
      %v4374 = vunpack.c.h.b16 %v1267
      %v4375 = vunpack.c.l.b16 %v1268
      %v4376 = vunpack.c.h.b16 %v1268
      %v4377 = vunpack.c.l.b16 %v1269
      %v4378 = vunpack.c.h.b16 %v1269
      %v4379 = vunpack.c.l.b16 %v1270
      %v4380 = vunpack.c.h.b16 %v1270
      %v4381 = vunpack.c.l.b16 %v1271
      %v4382 = vunpack.c.h.b16 %v1271
      %v4383 = vunpack.c.l.b16 %v1272
      %v4384 = vunpack.c.h.b16 %v1272
      %v4385 = vunpack.c.l.b16 %v1273
      %v4386 = vunpack.c.h.b16 %v1273
      %v4387 = vunpack.c.l.b16 %v1274
      %v4388 = vunpack.c.h.b16 %v1274
      %v4389 = vunpack.c.l.b16 %v1275
      %v4390 = vunpack.c.h.b16 %v1275
      %v4391 = vunpack.c.l.b16 %v1276
      %v4392 = vunpack.c.h.b16 %v1276
      %v4393 = vunpack.c.l.b16 %v1277
      %v4394 = vunpack.c.h.b16 %v1277
      %v4395 = vunpack.c.l.b16 %v1278
      %v4396 = vunpack.c.h.b16 %v1278
      %v4397 = vunpack.c.l.b16 %v1279
      %v4398 = vunpack.c.h.b16 %v1279
      %v4399 = vunpack.c.l.b16 %v1280
      %v4400 = vunpack.c.h.b16 %v1280
      %v4401 = vunpack.c.l.b16 %v1281
      %v4402 = vunpack.c.h.b16 %v1281
      %v4403 = vunpack.c.l.b16 %v1282
      %v4404 = vunpack.c.h.b16 %v1282
      %v4405 = vunpack.c.l.b16 %v1283
      %v4406 = vunpack.c.h.b16 %v1283
      %v4407 = vunpack.c.l.b16 %v1284
      %v4408 = vunpack.c.h.b16 %v1284
      %v4409 = vunpack.c.l.b16 %v1285
      %v4410 = vunpack.c.h.b16 %v1285
      %v4411 = vunpack.c.l.b16 %v1286
      %v4412 = vunpack.c.h.b16 %v1286
      %v4413 = vunpack.c.l.b16 %v1287
      %v4414 = vunpack.c.h.b16 %v1287
      %v4415 = vunpack.c.l.b16 %v1288
      %v4416 = vunpack.c.h.b16 %v1288
      %v4417 = vpack.c.b16 %v2377, %v2369
      %v4418 = vpack.c.b16 %v2378, %v2370
      %v4419 = vpack.c.b16 %v2379, %v2371
      %v4420 = vpack.c.b16 %v2380, %v2372
      %v4421 = vpack.c.b16 %v2381, %v2373
      %v4422 = vpack.c.b16 %v2382, %v2374
      %v4423 = vpack.c.b16 %v2383, %v2375
      %v4424 = vpack.c.b16 %v2384, %v2376
      %v4425 = vpack.c.b16 %v2393, %v2385
      %v4426 = vpack.c.b16 %v2394, %v2386
      %v4427 = vpack.c.b16 %v2395, %v2387
      %v4428 = vpack.c.b16 %v2396, %v2388
      %v4429 = vpack.c.b16 %v2397, %v2389
      %v4430 = vpack.c.b16 %v2398, %v2390
      %v4431 = vpack.c.b16 %v2399, %v2391
      %v4432 = vpack.c.b16 %v2400, %v2392
      %v4433 = vpack.c.b16 %v2409, %v2401
      %v4434 = vpack.c.b16 %v2410, %v2402
      %v4435 = vpack.c.b16 %v2411, %v2403
      %v4436 = vpack.c.b16 %v2412, %v2404
      %v4437 = vpack.c.b16 %v2413, %v2405
      %v4438 = vpack.c.b16 %v2414, %v2406
      %v4439 = vpack.c.b16 %v2415, %v2407
      %v4440 = vpack.c.b16 %v2416, %v2408
      %v4441 = vpack.c.b16 %v2425, %v2417
      %v4442 = vpack.c.b16 %v2426, %v2418
      %v4443 = vpack.c.b16 %v2427, %v2419
      %v4444 = vpack.c.b16 %v2428, %v2420
      %v4445 = vpack.c.b16 %v2429, %v2421
      %v4446 = vpack.c.b16 %v2430, %v2422
      %v4447 = vpack.c.b16 %v2431, %v2423
      %v4448 = vpack.c.b16 %v2432, %v2424
      %v4449 = vpack.c.b16 %v2441, %v2433
      %v4450 = vpack.c.b16 %v2442, %v2434
      %v4451 = vpack.c.b16 %v2443, %v2435
      %v4452 = vpack.c.b16 %v2444, %v2436
      %v4453 = vpack.c.b16 %v2445, %v2437
      %v4454 = vpack.c.b16 %v2446, %v2438
      %v4455 = vpack.c.b16 %v2447, %v2439
      %v4456 = vpack.c.b16 %v2448, %v2440
      %v4457 = vpack.c.b16 %v2457, %v2449
      %v4458 = vpack.c.b16 %v2458, %v2450
      %v4459 = vpack.c.b16 %v2459, %v2451
      %v4460 = vpack.c.b16 %v2460, %v2452
      %v4461 = vpack.c.b16 %v2461, %v2453
      %v4462 = vpack.c.b16 %v2462, %v2454
      %v4463 = vpack.c.b16 %v2463, %v2455
      %v4464 = vpack.c.b16 %v2464, %v2456
      %v4465 = vpack.c.b16 %v2473, %v2465
      %v4466 = vpack.c.b16 %v2474, %v2466
      %v4467 = vpack.c.b16 %v2475, %v2467
      %v4468 = vpack.c.b16 %v2476, %v2468
      %v4469 = vpack.c.b16 %v2477, %v2469
      %v4470 = vpack.c.b16 %v2478, %v2470
      %v4471 = vpack.c.b16 %v2479, %v2471
      %v4472 = vpack.c.b16 %v2480, %v2472
      %v4473 = vpack.c.b16 %v2489, %v2481
      %v4474 = vpack.c.b16 %v2490, %v2482
      %v4475 = vpack.c.b16 %v2491, %v2483
      %v4476 = vpack.c.b16 %v2492, %v2484
      %v4477 = vpack.c.b16 %v2493, %v2485
      %v4478 = vpack.c.b16 %v2494, %v2486
      %v4479 = vpack.c.b16 %v2495, %v2487
      %v4480 = vpack.c.b16 %v2496, %v2488
      %v4481 = vpack.c.b16 %v2505, %v2497
      %v4482 = vpack.c.b16 %v2506, %v2498
      %v4483 = vpack.c.b16 %v2507, %v2499
      %v4484 = vpack.c.b16 %v2508, %v2500
      %v4485 = vpack.c.b16 %v2509, %v2501
      %v4486 = vpack.c.b16 %v2510, %v2502
      %v4487 = vpack.c.b16 %v2511, %v2503
      %v4488 = vpack.c.b16 %v2512, %v2504
      %v4489 = vpack.c.b16 %v2521, %v2513
      %v4490 = vpack.c.b16 %v2522, %v2514
      %v4491 = vpack.c.b16 %v2523, %v2515
      %v4492 = vpack.c.b16 %v2524, %v2516
      %v4493 = vpack.c.b16 %v2525, %v2517
      %v4494 = vpack.c.b16 %v2526, %v2518
      %v4495 = vpack.c.b16 %v2527, %v2519
      %v4496 = vpack.c.b16 %v2528, %v2520
      %v4497 = vpack.c.b16 %v2537, %v2529
      %v4498 = vpack.c.b16 %v2538, %v2530
      %v4499 = vpack.c.b16 %v2539, %v2531
      %v4500 = vpack.c.b16 %v2540, %v2532
      %v4501 = vpack.c.b16 %v2541, %v2533
      %v4502 = vpack.c.b16 %v2542, %v2534
      %v4503 = vpack.c.b16 %v2543, %v2535
      %v4504 = vpack.c.b16 %v2544, %v2536
      %v4505 = vpack.c.b16 %v2553, %v2545
      %v4506 = vpack.c.b16 %v2554, %v2546
      %v4507 = vpack.c.b16 %v2555, %v2547
      %v4508 = vpack.c.b16 %v2556, %v2548
      %v4509 = vpack.c.b16 %v2557, %v2549
      %v4510 = vpack.c.b16 %v2558, %v2550
      %v4511 = vpack.c.b16 %v2559, %v2551
      %v4512 = vpack.c.b16 %v2560, %v2552
      %v4513 = vpack.c.b16 %v2569, %v2561
      %v4514 = vpack.c.b16 %v2570, %v2562
      %v4515 = vpack.c.b16 %v2571, %v2563
      %v4516 = vpack.c.b16 %v2572, %v2564
      %v4517 = vpack.c.b16 %v2573, %v2565
      %v4518 = vpack.c.b16 %v2574, %v2566
      %v4519 = vpack.c.b16 %v2575, %v2567
      %v4520 = vpack.c.b16 %v2576, %v2568
      %v4521 = vpack.c.b16 %v2585, %v2577
      %v4522 = vpack.c.b16 %v2586, %v2578
      %v4523 = vpack.c.b16 %v2587, %v2579
      %v4524 = vpack.c.b16 %v2588, %v2580
      %v4525 = vpack.c.b16 %v2589, %v2581
      %v4526 = vpack.c.b16 %v2590, %v2582
      %v4527 = vpack.c.b16 %v2591, %v2583
      %v4528 = vpack.c.b16 %v2592, %v2584
      %v4529 = vpack.c.b16 %v2601, %v2593
      %v4530 = vpack.c.b16 %v2602, %v2594
      %v4531 = vpack.c.b16 %v2603, %v2595
      %v4532 = vpack.c.b16 %v2604, %v2596
      %v4533 = vpack.c.b16 %v2605, %v2597
      %v4534 = vpack.c.b16 %v2606, %v2598
      %v4535 = vpack.c.b16 %v2607, %v2599
      %v4536 = vpack.c.b16 %v2608, %v2600
      %v4537 = vpack.c.b16 %v2617, %v2609
      %v4538 = vpack.c.b16 %v2618, %v2610
      %v4539 = vpack.c.b16 %v2619, %v2611
      %v4540 = vpack.c.b16 %v2620, %v2612
      %v4541 = vpack.c.b16 %v2621, %v2613
      %v4542 = vpack.c.b16 %v2622, %v2614
      %v4543 = vpack.c.b16 %v2623, %v2615
      %v4544 = vpack.c.b16 %v2624, %v2616
      %v4545 = vpack.c.b16 %v2633, %v2625
      %v4546 = vpack.c.b16 %v2634, %v2626
      %v4547 = vpack.c.b16 %v2635, %v2627
      %v4548 = vpack.c.b16 %v2636, %v2628
      %v4549 = vpack.c.b16 %v2637, %v2629
      %v4550 = vpack.c.b16 %v2638, %v2630
      %v4551 = vpack.c.b16 %v2639, %v2631
      %v4552 = vpack.c.b16 %v2640, %v2632
      %v4553 = vpack.c.b16 %v2649, %v2641
      %v4554 = vpack.c.b16 %v2650, %v2642
      %v4555 = vpack.c.b16 %v2651, %v2643
      %v4556 = vpack.c.b16 %v2652, %v2644
      %v4557 = vpack.c.b16 %v2653, %v2645
      %v4558 = vpack.c.b16 %v2654, %v2646
      %v4559 = vpack.c.b16 %v2655, %v2647
      %v4560 = vpack.c.b16 %v2656, %v2648
      %v4561 = vpack.c.b16 %v2665, %v2657
      %v4562 = vpack.c.b16 %v2666, %v2658
      %v4563 = vpack.c.b16 %v2667, %v2659
      %v4564 = vpack.c.b16 %v2668, %v2660
      %v4565 = vpack.c.b16 %v2669, %v2661
      %v4566 = vpack.c.b16 %v2670, %v2662
      %v4567 = vpack.c.b16 %v2671, %v2663
      %v4568 = vpack.c.b16 %v2672, %v2664
      %v4569 = vpack.c.b16 %v2681, %v2673
      %v4570 = vpack.c.b16 %v2682, %v2674
      %v4571 = vpack.c.b16 %v2683, %v2675
      %v4572 = vpack.c.b16 %v2684, %v2676
      %v4573 = vpack.c.b16 %v2685, %v2677
      %v4574 = vpack.c.b16 %v2686, %v2678
      %v4575 = vpack.c.b16 %v2687, %v2679
      %v4576 = vpack.c.b16 %v2688, %v2680
      %v4577 = vpack.c.b16 %v2697, %v2689
      %v4578 = vpack.c.b16 %v2698, %v2690
      %v4579 = vpack.c.b16 %v2699, %v2691
      %v4580 = vpack.c.b16 %v2700, %v2692
      %v4581 = vpack.c.b16 %v2701, %v2693
      %v4582 = vpack.c.b16 %v2702, %v2694
      %v4583 = vpack.c.b16 %v2703, %v2695
      %v4584 = vpack.c.b16 %v2704, %v2696
      %v4585 = vpack.c.b16 %v2713, %v2705
      %v4586 = vpack.c.b16 %v2714, %v2706
      %v4587 = vpack.c.b16 %v2715, %v2707
      %v4588 = vpack.c.b16 %v2716, %v2708
      %v4589 = vpack.c.b16 %v2717, %v2709
      %v4590 = vpack.c.b16 %v2718, %v2710
      %v4591 = vpack.c.b16 %v2719, %v2711
      %v4592 = vpack.c.b16 %v2720, %v2712
      %v4593 = vpack.c.b16 %v2729, %v2721
      %v4594 = vpack.c.b16 %v2730, %v2722
      %v4595 = vpack.c.b16 %v2731, %v2723
      %v4596 = vpack.c.b16 %v2732, %v2724
      %v4597 = vpack.c.b16 %v2733, %v2725
      %v4598 = vpack.c.b16 %v2734, %v2726
      %v4599 = vpack.c.b16 %v2735, %v2727
      %v4600 = vpack.c.b16 %v2736, %v2728
      %v4601 = vpack.c.b16 %v2745, %v2737
      %v4602 = vpack.c.b16 %v2746, %v2738
      %v4603 = vpack.c.b16 %v2747, %v2739
      %v4604 = vpack.c.b16 %v2748, %v2740
      %v4605 = vpack.c.b16 %v2749, %v2741
      %v4606 = vpack.c.b16 %v2750, %v2742
      %v4607 = vpack.c.b16 %v2751, %v2743
      %v4608 = vpack.c.b16 %v2752, %v2744
      %v4609 = vpack.c.b16 %v2761, %v2753
      %v4610 = vpack.c.b16 %v2762, %v2754
      %v4611 = vpack.c.b16 %v2763, %v2755
      %v4612 = vpack.c.b16 %v2764, %v2756
      %v4613 = vpack.c.b16 %v2765, %v2757
      %v4614 = vpack.c.b16 %v2766, %v2758
      %v4615 = vpack.c.b16 %v2767, %v2759
      %v4616 = vpack.c.b16 %v2768, %v2760
      %v4617 = vpack.c.b16 %v2777, %v2769
      %v4618 = vpack.c.b16 %v2778, %v2770
      %v4619 = vpack.c.b16 %v2779, %v2771
      %v4620 = vpack.c.b16 %v2780, %v2772
      %v4621 = vpack.c.b16 %v2781, %v2773
      %v4622 = vpack.c.b16 %v2782, %v2774
      %v4623 = vpack.c.b16 %v2783, %v2775
      %v4624 = vpack.c.b16 %v2784, %v2776
      %v4625 = vpack.c.b16 %v2793, %v2785
      %v4626 = vpack.c.b16 %v2794, %v2786
      %v4627 = vpack.c.b16 %v2795, %v2787
      %v4628 = vpack.c.b16 %v2796, %v2788
      %v4629 = vpack.c.b16 %v2797, %v2789
      %v4630 = vpack.c.b16 %v2798, %v2790
      %v4631 = vpack.c.b16 %v2799, %v2791
      %v4632 = vpack.c.b16 %v2800, %v2792
      %v4633 = vpack.c.b16 %v2809, %v2801
      %v4634 = vpack.c.b16 %v2810, %v2802
      %v4635 = vpack.c.b16 %v2811, %v2803
      %v4636 = vpack.c.b16 %v2812, %v2804
      %v4637 = vpack.c.b16 %v2813, %v2805
      %v4638 = vpack.c.b16 %v2814, %v2806
      %v4639 = vpack.c.b16 %v2815, %v2807
      %v4640 = vpack.c.b16 %v2816, %v2808
      %v4641 = vpack.c.b16 %v2825, %v2817
      %v4642 = vpack.c.b16 %v2826, %v2818
      %v4643 = vpack.c.b16 %v2827, %v2819
      %v4644 = vpack.c.b16 %v2828, %v2820
      %v4645 = vpack.c.b16 %v2829, %v2821
      %v4646 = vpack.c.b16 %v2830, %v2822
      %v4647 = vpack.c.b16 %v2831, %v2823
      %v4648 = vpack.c.b16 %v2832, %v2824
      %v4649 = vpack.c.b16 %v2841, %v2833
      %v4650 = vpack.c.b16 %v2842, %v2834
      %v4651 = vpack.c.b16 %v2843, %v2835
      %v4652 = vpack.c.b16 %v2844, %v2836
      %v4653 = vpack.c.b16 %v2845, %v2837
      %v4654 = vpack.c.b16 %v2846, %v2838
      %v4655 = vpack.c.b16 %v2847, %v2839
      %v4656 = vpack.c.b16 %v2848, %v2840
      %v4657 = vpack.c.b16 %v2857, %v2849
      %v4658 = vpack.c.b16 %v2858, %v2850
      %v4659 = vpack.c.b16 %v2859, %v2851
      %v4660 = vpack.c.b16 %v2860, %v2852
      %v4661 = vpack.c.b16 %v2861, %v2853
      %v4662 = vpack.c.b16 %v2862, %v2854
      %v4663 = vpack.c.b16 %v2863, %v2855
      %v4664 = vpack.c.b16 %v2864, %v2856
      %v4665 = vpack.c.b16 %v2873, %v2865
      %v4666 = vpack.c.b16 %v2874, %v2866
      %v4667 = vpack.c.b16 %v2875, %v2867
      %v4668 = vpack.c.b16 %v2876, %v2868
      %v4669 = vpack.c.b16 %v2877, %v2869
      %v4670 = vpack.c.b16 %v2878, %v2870
      %v4671 = vpack.c.b16 %v2879, %v2871
      %v4672 = vpack.c.b16 %v2880, %v2872
      %v4673 = vpack.c.b16 %v2889, %v2881
      %v4674 = vpack.c.b16 %v2890, %v2882
      %v4675 = vpack.c.b16 %v2891, %v2883
      %v4676 = vpack.c.b16 %v2892, %v2884
      %v4677 = vpack.c.b16 %v2893, %v2885
      %v4678 = vpack.c.b16 %v2894, %v2886
      %v4679 = vpack.c.b16 %v2895, %v2887
      %v4680 = vpack.c.b16 %v2896, %v2888
      %v4681 = vpack.c.b16 %v2905, %v2897
      %v4682 = vpack.c.b16 %v2906, %v2898
      %v4683 = vpack.c.b16 %v2907, %v2899
      %v4684 = vpack.c.b16 %v2908, %v2900
      %v4685 = vpack.c.b16 %v2909, %v2901
      %v4686 = vpack.c.b16 %v2910, %v2902
      %v4687 = vpack.c.b16 %v2911, %v2903
      %v4688 = vpack.c.b16 %v2912, %v2904
      %v4689 = vpack.c.b16 %v2921, %v2913
      %v4690 = vpack.c.b16 %v2922, %v2914
      %v4691 = vpack.c.b16 %v2923, %v2915
      %v4692 = vpack.c.b16 %v2924, %v2916
      %v4693 = vpack.c.b16 %v2925, %v2917
      %v4694 = vpack.c.b16 %v2926, %v2918
      %v4695 = vpack.c.b16 %v2927, %v2919
      %v4696 = vpack.c.b16 %v2928, %v2920
      %v4697 = vpack.c.b16 %v2937, %v2929
      %v4698 = vpack.c.b16 %v2938, %v2930
      %v4699 = vpack.c.b16 %v2939, %v2931
      %v4700 = vpack.c.b16 %v2940, %v2932
      %v4701 = vpack.c.b16 %v2941, %v2933
      %v4702 = vpack.c.b16 %v2942, %v2934
      %v4703 = vpack.c.b16 %v2943, %v2935
      %v4704 = vpack.c.b16 %v2944, %v2936
      %v4705 = vpack.c.b16 %v2953, %v2945
      %v4706 = vpack.c.b16 %v2954, %v2946
      %v4707 = vpack.c.b16 %v2955, %v2947
      %v4708 = vpack.c.b16 %v2956, %v2948
      %v4709 = vpack.c.b16 %v2957, %v2949
      %v4710 = vpack.c.b16 %v2958, %v2950
      %v4711 = vpack.c.b16 %v2959, %v2951
      %v4712 = vpack.c.b16 %v2960, %v2952
      %v4713 = vpack.c.b16 %v2969, %v2961
      %v4714 = vpack.c.b16 %v2970, %v2962
      %v4715 = vpack.c.b16 %v2971, %v2963
      %v4716 = vpack.c.b16 %v2972, %v2964
      %v4717 = vpack.c.b16 %v2973, %v2965
      %v4718 = vpack.c.b16 %v2974, %v2966
      %v4719 = vpack.c.b16 %v2975, %v2967
      %v4720 = vpack.c.b16 %v2976, %v2968
      %v4721 = vpack.c.b16 %v2985, %v2977
      %v4722 = vpack.c.b16 %v2986, %v2978
      %v4723 = vpack.c.b16 %v2987, %v2979
      %v4724 = vpack.c.b16 %v2988, %v2980
      %v4725 = vpack.c.b16 %v2989, %v2981
      %v4726 = vpack.c.b16 %v2990, %v2982
      %v4727 = vpack.c.b16 %v2991, %v2983
      %v4728 = vpack.c.b16 %v2992, %v2984
      %v4729 = vpack.c.b16 %v3001, %v2993
      %v4730 = vpack.c.b16 %v3002, %v2994
      %v4731 = vpack.c.b16 %v3003, %v2995
      %v4732 = vpack.c.b16 %v3004, %v2996
      %v4733 = vpack.c.b16 %v3005, %v2997
      %v4734 = vpack.c.b16 %v3006, %v2998
      %v4735 = vpack.c.b16 %v3007, %v2999
      %v4736 = vpack.c.b16 %v3008, %v3000
      %v4737 = vpack.c.b16 %v3017, %v3009
      %v4738 = vpack.c.b16 %v3018, %v3010
      %v4739 = vpack.c.b16 %v3019, %v3011
      %v4740 = vpack.c.b16 %v3020, %v3012
      %v4741 = vpack.c.b16 %v3021, %v3013
      %v4742 = vpack.c.b16 %v3022, %v3014
      %v4743 = vpack.c.b16 %v3023, %v3015
      %v4744 = vpack.c.b16 %v3024, %v3016
      %v4745 = vpack.c.b16 %v3033, %v3025
      %v4746 = vpack.c.b16 %v3034, %v3026
      %v4747 = vpack.c.b16 %v3035, %v3027
      %v4748 = vpack.c.b16 %v3036, %v3028
      %v4749 = vpack.c.b16 %v3037, %v3029
      %v4750 = vpack.c.b16 %v3038, %v3030
      %v4751 = vpack.c.b16 %v3039, %v3031
      %v4752 = vpack.c.b16 %v3040, %v3032
      %v4753 = vpack.c.b16 %v3049, %v3041
      %v4754 = vpack.c.b16 %v3050, %v3042
      %v4755 = vpack.c.b16 %v3051, %v3043
      %v4756 = vpack.c.b16 %v3052, %v3044
      %v4757 = vpack.c.b16 %v3053, %v3045
      %v4758 = vpack.c.b16 %v3054, %v3046
      %v4759 = vpack.c.b16 %v3055, %v3047
      %v4760 = vpack.c.b16 %v3056, %v3048
      %v4761 = vpack.c.b16 %v3065, %v3057
      %v4762 = vpack.c.b16 %v3066, %v3058
      %v4763 = vpack.c.b16 %v3067, %v3059
      %v4764 = vpack.c.b16 %v3068, %v3060
      %v4765 = vpack.c.b16 %v3069, %v3061
      %v4766 = vpack.c.b16 %v3070, %v3062
      %v4767 = vpack.c.b16 %v3071, %v3063
      %v4768 = vpack.c.b16 %v3072, %v3064
      %v4769 = vpack.c.b16 %v3081, %v3073
      %v4770 = vpack.c.b16 %v3082, %v3074
      %v4771 = vpack.c.b16 %v3083, %v3075
      %v4772 = vpack.c.b16 %v3084, %v3076
      %v4773 = vpack.c.b16 %v3085, %v3077
      %v4774 = vpack.c.b16 %v3086, %v3078
      %v4775 = vpack.c.b16 %v3087, %v3079
      %v4776 = vpack.c.b16 %v3088, %v3080
      %v4777 = vpack.c.b16 %v3097, %v3089
      %v4778 = vpack.c.b16 %v3098, %v3090
      %v4779 = vpack.c.b16 %v3099, %v3091
      %v4780 = vpack.c.b16 %v3100, %v3092
      %v4781 = vpack.c.b16 %v3101, %v3093
      %v4782 = vpack.c.b16 %v3102, %v3094
      %v4783 = vpack.c.b16 %v3103, %v3095
      %v4784 = vpack.c.b16 %v3104, %v3096
      %v4785 = vpack.c.b16 %v3113, %v3105
      %v4786 = vpack.c.b16 %v3114, %v3106
      %v4787 = vpack.c.b16 %v3115, %v3107
      %v4788 = vpack.c.b16 %v3116, %v3108
      %v4789 = vpack.c.b16 %v3117, %v3109
      %v4790 = vpack.c.b16 %v3118, %v3110
      %v4791 = vpack.c.b16 %v3119, %v3111
      %v4792 = vpack.c.b16 %v3120, %v3112
      %v4793 = vpack.c.b16 %v3129, %v3121
      %v4794 = vpack.c.b16 %v3130, %v3122
      %v4795 = vpack.c.b16 %v3131, %v3123
      %v4796 = vpack.c.b16 %v3132, %v3124
      %v4797 = vpack.c.b16 %v3133, %v3125
      %v4798 = vpack.c.b16 %v3134, %v3126
      %v4799 = vpack.c.b16 %v3135, %v3127
      %v4800 = vpack.c.b16 %v3136, %v3128
      %v4801 = vpack.c.b16 %v3145, %v3137
      %v4802 = vpack.c.b16 %v3146, %v3138
      %v4803 = vpack.c.b16 %v3147, %v3139
      %v4804 = vpack.c.b16 %v3148, %v3140
      %v4805 = vpack.c.b16 %v3149, %v3141
      %v4806 = vpack.c.b16 %v3150, %v3142
      %v4807 = vpack.c.b16 %v3151, %v3143
      %v4808 = vpack.c.b16 %v3152, %v3144
      %v4809 = vpack.c.b16 %v3161, %v3153
      %v4810 = vpack.c.b16 %v3162, %v3154
      %v4811 = vpack.c.b16 %v3163, %v3155
      %v4812 = vpack.c.b16 %v3164, %v3156
      %v4813 = vpack.c.b16 %v3165, %v3157
      %v4814 = vpack.c.b16 %v3166, %v3158
      %v4815 = vpack.c.b16 %v3167, %v3159
      %v4816 = vpack.c.b16 %v3168, %v3160
      %v4817 = vpack.c.b16 %v3177, %v3169
      %v4818 = vpack.c.b16 %v3178, %v3170
      %v4819 = vpack.c.b16 %v3179, %v3171
      %v4820 = vpack.c.b16 %v3180, %v3172
      %v4821 = vpack.c.b16 %v3181, %v3173
      %v4822 = vpack.c.b16 %v3182, %v3174
      %v4823 = vpack.c.b16 %v3183, %v3175
      %v4824 = vpack.c.b16 %v3184, %v3176
      %v4825 = vpack.c.b16 %v3193, %v3185
      %v4826 = vpack.c.b16 %v3194, %v3186
      %v4827 = vpack.c.b16 %v3195, %v3187
      %v4828 = vpack.c.b16 %v3196, %v3188
      %v4829 = vpack.c.b16 %v3197, %v3189
      %v4830 = vpack.c.b16 %v3198, %v3190
      %v4831 = vpack.c.b16 %v3199, %v3191
      %v4832 = vpack.c.b16 %v3200, %v3192
      %v4833 = vpack.c.b16 %v3209, %v3201
      %v4834 = vpack.c.b16 %v3210, %v3202
      %v4835 = vpack.c.b16 %v3211, %v3203
      %v4836 = vpack.c.b16 %v3212, %v3204
      %v4837 = vpack.c.b16 %v3213, %v3205
      %v4838 = vpack.c.b16 %v3214, %v3206
      %v4839 = vpack.c.b16 %v3215, %v3207
      %v4840 = vpack.c.b16 %v3216, %v3208
      %v4841 = vpack.c.b16 %v3225, %v3217
      %v4842 = vpack.c.b16 %v3226, %v3218
      %v4843 = vpack.c.b16 %v3227, %v3219
      %v4844 = vpack.c.b16 %v3228, %v3220
      %v4845 = vpack.c.b16 %v3229, %v3221
      %v4846 = vpack.c.b16 %v3230, %v3222
      %v4847 = vpack.c.b16 %v3231, %v3223
      %v4848 = vpack.c.b16 %v3232, %v3224
      %v4849 = vpack.c.b16 %v3241, %v3233
      %v4850 = vpack.c.b16 %v3242, %v3234
      %v4851 = vpack.c.b16 %v3243, %v3235
      %v4852 = vpack.c.b16 %v3244, %v3236
      %v4853 = vpack.c.b16 %v3245, %v3237
      %v4854 = vpack.c.b16 %v3246, %v3238
      %v4855 = vpack.c.b16 %v3247, %v3239
      %v4856 = vpack.c.b16 %v3248, %v3240
      %v4857 = vpack.c.b16 %v3257, %v3249
      %v4858 = vpack.c.b16 %v3258, %v3250
      %v4859 = vpack.c.b16 %v3259, %v3251
      %v4860 = vpack.c.b16 %v3260, %v3252
      %v4861 = vpack.c.b16 %v3261, %v3253
      %v4862 = vpack.c.b16 %v3262, %v3254
      %v4863 = vpack.c.b16 %v3263, %v3255
      %v4864 = vpack.c.b16 %v3264, %v3256
      %v4865 = vpack.c.b16 %v3273, %v3265
      %v4866 = vpack.c.b16 %v3274, %v3266
      %v4867 = vpack.c.b16 %v3275, %v3267
      %v4868 = vpack.c.b16 %v3276, %v3268
      %v4869 = vpack.c.b16 %v3277, %v3269
      %v4870 = vpack.c.b16 %v3278, %v3270
      %v4871 = vpack.c.b16 %v3279, %v3271
      %v4872 = vpack.c.b16 %v3280, %v3272
      %v4873 = vpack.c.b16 %v3289, %v3281
      %v4874 = vpack.c.b16 %v3290, %v3282
      %v4875 = vpack.c.b16 %v3291, %v3283
      %v4876 = vpack.c.b16 %v3292, %v3284
      %v4877 = vpack.c.b16 %v3293, %v3285
      %v4878 = vpack.c.b16 %v3294, %v3286
      %v4879 = vpack.c.b16 %v3295, %v3287
      %v4880 = vpack.c.b16 %v3296, %v3288
      %v4881 = vpack.c.b16 %v3305, %v3297
      %v4882 = vpack.c.b16 %v3306, %v3298
      %v4883 = vpack.c.b16 %v3307, %v3299
      %v4884 = vpack.c.b16 %v3308, %v3300
      %v4885 = vpack.c.b16 %v3309, %v3301
      %v4886 = vpack.c.b16 %v3310, %v3302
      %v4887 = vpack.c.b16 %v3311, %v3303
      %v4888 = vpack.c.b16 %v3312, %v3304
      %v4889 = vpack.c.b16 %v3321, %v3313
      %v4890 = vpack.c.b16 %v3322, %v3314
      %v4891 = vpack.c.b16 %v3323, %v3315
      %v4892 = vpack.c.b16 %v3324, %v3316
      %v4893 = vpack.c.b16 %v3325, %v3317
      %v4894 = vpack.c.b16 %v3326, %v3318
      %v4895 = vpack.c.b16 %v3327, %v3319
      %v4896 = vpack.c.b16 %v3328, %v3320
      %v4897 = vpack.c.b16 %v3337, %v3329
      %v4898 = vpack.c.b16 %v3338, %v3330
      %v4899 = vpack.c.b16 %v3339, %v3331
      %v4900 = vpack.c.b16 %v3340, %v3332
      %v4901 = vpack.c.b16 %v3341, %v3333
      %v4902 = vpack.c.b16 %v3342, %v3334
      %v4903 = vpack.c.b16 %v3343, %v3335
      %v4904 = vpack.c.b16 %v3344, %v3336
      %v4905 = vpack.c.b16 %v3353, %v3345
      %v4906 = vpack.c.b16 %v3354, %v3346
      %v4907 = vpack.c.b16 %v3355, %v3347
      %v4908 = vpack.c.b16 %v3356, %v3348
      %v4909 = vpack.c.b16 %v3357, %v3349
      %v4910 = vpack.c.b16 %v3358, %v3350
      %v4911 = vpack.c.b16 %v3359, %v3351
      %v4912 = vpack.c.b16 %v3360, %v3352
      %v4913 = vpack.c.b16 %v3369, %v3361
      %v4914 = vpack.c.b16 %v3370, %v3362
      %v4915 = vpack.c.b16 %v3371, %v3363
      %v4916 = vpack.c.b16 %v3372, %v3364
      %v4917 = vpack.c.b16 %v3373, %v3365
      %v4918 = vpack.c.b16 %v3374, %v3366
      %v4919 = vpack.c.b16 %v3375, %v3367
      %v4920 = vpack.c.b16 %v3376, %v3368
      %v4921 = vpack.c.b16 %v3385, %v3377
      %v4922 = vpack.c.b16 %v3386, %v3378
      %v4923 = vpack.c.b16 %v3387, %v3379
      %v4924 = vpack.c.b16 %v3388, %v3380
      %v4925 = vpack.c.b16 %v3389, %v3381
      %v4926 = vpack.c.b16 %v3390, %v3382
      %v4927 = vpack.c.b16 %v3391, %v3383
      %v4928 = vpack.c.b16 %v3392, %v3384
      %v4929 = vpack.c.b16 %v3401, %v3393
      %v4930 = vpack.c.b16 %v3402, %v3394
      %v4931 = vpack.c.b16 %v3403, %v3395
      %v4932 = vpack.c.b16 %v3404, %v3396
      %v4933 = vpack.c.b16 %v3405, %v3397
      %v4934 = vpack.c.b16 %v3406, %v3398
      %v4935 = vpack.c.b16 %v3407, %v3399
      %v4936 = vpack.c.b16 %v3408, %v3400
      %v4937 = vpack.c.b16 %v3417, %v3409
      %v4938 = vpack.c.b16 %v3418, %v3410
      %v4939 = vpack.c.b16 %v3419, %v3411
      %v4940 = vpack.c.b16 %v3420, %v3412
      %v4941 = vpack.c.b16 %v3421, %v3413
      %v4942 = vpack.c.b16 %v3422, %v3414
      %v4943 = vpack.c.b16 %v3423, %v3415
      %v4944 = vpack.c.b16 %v3424, %v3416
      %v4945 = vpack.c.b16 %v3433, %v3425
      %v4946 = vpack.c.b16 %v3434, %v3426
      %v4947 = vpack.c.b16 %v3435, %v3427
      %v4948 = vpack.c.b16 %v3436, %v3428
      %v4949 = vpack.c.b16 %v3437, %v3429
      %v4950 = vpack.c.b16 %v3438, %v3430
      %v4951 = vpack.c.b16 %v3439, %v3431
      %v4952 = vpack.c.b16 %v3440, %v3432
      %v4953 = vpack.c.b16 %v3449, %v3441
      %v4954 = vpack.c.b16 %v3450, %v3442
      %v4955 = vpack.c.b16 %v3451, %v3443
      %v4956 = vpack.c.b16 %v3452, %v3444
      %v4957 = vpack.c.b16 %v3453, %v3445
      %v4958 = vpack.c.b16 %v3454, %v3446
      %v4959 = vpack.c.b16 %v3455, %v3447
      %v4960 = vpack.c.b16 %v3456, %v3448
      %v4961 = vpack.c.b16 %v3465, %v3457
      %v4962 = vpack.c.b16 %v3466, %v3458
      %v4963 = vpack.c.b16 %v3467, %v3459
      %v4964 = vpack.c.b16 %v3468, %v3460
      %v4965 = vpack.c.b16 %v3469, %v3461
      %v4966 = vpack.c.b16 %v3470, %v3462
      %v4967 = vpack.c.b16 %v3471, %v3463
      %v4968 = vpack.c.b16 %v3472, %v3464
      %v4969 = vpack.c.b16 %v3481, %v3473
      %v4970 = vpack.c.b16 %v3482, %v3474
      %v4971 = vpack.c.b16 %v3483, %v3475
      %v4972 = vpack.c.b16 %v3484, %v3476
      %v4973 = vpack.c.b16 %v3485, %v3477
      %v4974 = vpack.c.b16 %v3486, %v3478
      %v4975 = vpack.c.b16 %v3487, %v3479
      %v4976 = vpack.c.b16 %v3488, %v3480
      %v4977 = vpack.c.b16 %v3497, %v3489
      %v4978 = vpack.c.b16 %v3498, %v3490
      %v4979 = vpack.c.b16 %v3499, %v3491
      %v4980 = vpack.c.b16 %v3500, %v3492
      %v4981 = vpack.c.b16 %v3501, %v3493
      %v4982 = vpack.c.b16 %v3502, %v3494
      %v4983 = vpack.c.b16 %v3503, %v3495
      %v4984 = vpack.c.b16 %v3504, %v3496
      %v4985 = vpack.c.b16 %v3513, %v3505
      %v4986 = vpack.c.b16 %v3514, %v3506
      %v4987 = vpack.c.b16 %v3515, %v3507
      %v4988 = vpack.c.b16 %v3516, %v3508
      %v4989 = vpack.c.b16 %v3517, %v3509
      %v4990 = vpack.c.b16 %v3518, %v3510
      %v4991 = vpack.c.b16 %v3519, %v3511
      %v4992 = vpack.c.b16 %v3520, %v3512
      %v4993 = vpack.c.b16 %v3529, %v3521
      %v4994 = vpack.c.b16 %v3530, %v3522
      %v4995 = vpack.c.b16 %v3531, %v3523
      %v4996 = vpack.c.b16 %v3532, %v3524
      %v4997 = vpack.c.b16 %v3533, %v3525
      %v4998 = vpack.c.b16 %v3534, %v3526
      %v4999 = vpack.c.b16 %v3535, %v3527
      %v5000 = vpack.c.b16 %v3536, %v3528
      %v5001 = vpack.c.b16 %v3545, %v3537
      %v5002 = vpack.c.b16 %v3546, %v3538
      %v5003 = vpack.c.b16 %v3547, %v3539
      %v5004 = vpack.c.b16 %v3548, %v3540
      %v5005 = vpack.c.b16 %v3549, %v3541
      %v5006 = vpack.c.b16 %v3550, %v3542
      %v5007 = vpack.c.b16 %v3551, %v3543
      %v5008 = vpack.c.b16 %v3552, %v3544
      %v5009 = vpack.c.b16 %v3561, %v3553
      %v5010 = vpack.c.b16 %v3562, %v3554
      %v5011 = vpack.c.b16 %v3563, %v3555
      %v5012 = vpack.c.b16 %v3564, %v3556
      %v5013 = vpack.c.b16 %v3565, %v3557
      %v5014 = vpack.c.b16 %v3566, %v3558
      %v5015 = vpack.c.b16 %v3567, %v3559
      %v5016 = vpack.c.b16 %v3568, %v3560
      %v5017 = vpack.c.b16 %v3577, %v3569
      %v5018 = vpack.c.b16 %v3578, %v3570
      %v5019 = vpack.c.b16 %v3579, %v3571
      %v5020 = vpack.c.b16 %v3580, %v3572
      %v5021 = vpack.c.b16 %v3581, %v3573
      %v5022 = vpack.c.b16 %v3582, %v3574
      %v5023 = vpack.c.b16 %v3583, %v3575
      %v5024 = vpack.c.b16 %v3584, %v3576
      %v5025 = vpack.c.b16 %v3593, %v3585
      %v5026 = vpack.c.b16 %v3594, %v3586
      %v5027 = vpack.c.b16 %v3595, %v3587
      %v5028 = vpack.c.b16 %v3596, %v3588
      %v5029 = vpack.c.b16 %v3597, %v3589
      %v5030 = vpack.c.b16 %v3598, %v3590
      %v5031 = vpack.c.b16 %v3599, %v3591
      %v5032 = vpack.c.b16 %v3600, %v3592
      %v5033 = vpack.c.b16 %v3609, %v3601
      %v5034 = vpack.c.b16 %v3610, %v3602
      %v5035 = vpack.c.b16 %v3611, %v3603
      %v5036 = vpack.c.b16 %v3612, %v3604
      %v5037 = vpack.c.b16 %v3613, %v3605
      %v5038 = vpack.c.b16 %v3614, %v3606
      %v5039 = vpack.c.b16 %v3615, %v3607
      %v5040 = vpack.c.b16 %v3616, %v3608
      %v5041 = vpack.c.b16 %v3625, %v3617
      %v5042 = vpack.c.b16 %v3626, %v3618
      %v5043 = vpack.c.b16 %v3627, %v3619
      %v5044 = vpack.c.b16 %v3628, %v3620
      %v5045 = vpack.c.b16 %v3629, %v3621
      %v5046 = vpack.c.b16 %v3630, %v3622
      %v5047 = vpack.c.b16 %v3631, %v3623
      %v5048 = vpack.c.b16 %v3632, %v3624
      %v5049 = vpack.c.b16 %v3641, %v3633
      %v5050 = vpack.c.b16 %v3642, %v3634
      %v5051 = vpack.c.b16 %v3643, %v3635
      %v5052 = vpack.c.b16 %v3644, %v3636
      %v5053 = vpack.c.b16 %v3645, %v3637
      %v5054 = vpack.c.b16 %v3646, %v3638
      %v5055 = vpack.c.b16 %v3647, %v3639
      %v5056 = vpack.c.b16 %v3648, %v3640
      %v5057 = vpack.c.b16 %v3657, %v3649
      %v5058 = vpack.c.b16 %v3658, %v3650
      %v5059 = vpack.c.b16 %v3659, %v3651
      %v5060 = vpack.c.b16 %v3660, %v3652
      %v5061 = vpack.c.b16 %v3661, %v3653
      %v5062 = vpack.c.b16 %v3662, %v3654
      %v5063 = vpack.c.b16 %v3663, %v3655
      %v5064 = vpack.c.b16 %v3664, %v3656
      %v5065 = vpack.c.b16 %v3673, %v3665
      %v5066 = vpack.c.b16 %v3674, %v3666
      %v5067 = vpack.c.b16 %v3675, %v3667
      %v5068 = vpack.c.b16 %v3676, %v3668
      %v5069 = vpack.c.b16 %v3677, %v3669
      %v5070 = vpack.c.b16 %v3678, %v3670
      %v5071 = vpack.c.b16 %v3679, %v3671
      %v5072 = vpack.c.b16 %v3680, %v3672
      %v5073 = vpack.c.b16 %v3689, %v3681
      %v5074 = vpack.c.b16 %v3690, %v3682
      %v5075 = vpack.c.b16 %v3691, %v3683
      %v5076 = vpack.c.b16 %v3692, %v3684
      %v5077 = vpack.c.b16 %v3693, %v3685
      %v5078 = vpack.c.b16 %v3694, %v3686
      %v5079 = vpack.c.b16 %v3695, %v3687
      %v5080 = vpack.c.b16 %v3696, %v3688
      %v5081 = vpack.c.b16 %v3705, %v3697
      %v5082 = vpack.c.b16 %v3706, %v3698
      %v5083 = vpack.c.b16 %v3707, %v3699
      %v5084 = vpack.c.b16 %v3708, %v3700
      %v5085 = vpack.c.b16 %v3709, %v3701
      %v5086 = vpack.c.b16 %v3710, %v3702
      %v5087 = vpack.c.b16 %v3711, %v3703
      %v5088 = vpack.c.b16 %v3712, %v3704
      %v5089 = vpack.c.b16 %v3721, %v3713
      %v5090 = vpack.c.b16 %v3722, %v3714
      %v5091 = vpack.c.b16 %v3723, %v3715
      %v5092 = vpack.c.b16 %v3724, %v3716
      %v5093 = vpack.c.b16 %v3725, %v3717
      %v5094 = vpack.c.b16 %v3726, %v3718
      %v5095 = vpack.c.b16 %v3727, %v3719
      %v5096 = vpack.c.b16 %v3728, %v3720
      %v5097 = vpack.c.b16 %v3737, %v3729
      %v5098 = vpack.c.b16 %v3738, %v3730
      %v5099 = vpack.c.b16 %v3739, %v3731
      %v5100 = vpack.c.b16 %v3740, %v3732
      %v5101 = vpack.c.b16 %v3741, %v3733
      %v5102 = vpack.c.b16 %v3742, %v3734
      %v5103 = vpack.c.b16 %v3743, %v3735
      %v5104 = vpack.c.b16 %v3744, %v3736
      %v5105 = vpack.c.b16 %v3753, %v3745
      %v5106 = vpack.c.b16 %v3754, %v3746
      %v5107 = vpack.c.b16 %v3755, %v3747
      %v5108 = vpack.c.b16 %v3756, %v3748
      %v5109 = vpack.c.b16 %v3757, %v3749
      %v5110 = vpack.c.b16 %v3758, %v3750
      %v5111 = vpack.c.b16 %v3759, %v3751
      %v5112 = vpack.c.b16 %v3760, %v3752
      %v5113 = vpack.c.b16 %v3769, %v3761
      %v5114 = vpack.c.b16 %v3770, %v3762
      %v5115 = vpack.c.b16 %v3771, %v3763
      %v5116 = vpack.c.b16 %v3772, %v3764
      %v5117 = vpack.c.b16 %v3773, %v3765
      %v5118 = vpack.c.b16 %v3774, %v3766
      %v5119 = vpack.c.b16 %v3775, %v3767
      %v5120 = vpack.c.b16 %v3776, %v3768
      %v5121 = vpack.c.b16 %v3785, %v3777
      %v5122 = vpack.c.b16 %v3786, %v3778
      %v5123 = vpack.c.b16 %v3787, %v3779
      %v5124 = vpack.c.b16 %v3788, %v3780
      %v5125 = vpack.c.b16 %v3789, %v3781
      %v5126 = vpack.c.b16 %v3790, %v3782
      %v5127 = vpack.c.b16 %v3791, %v3783
      %v5128 = vpack.c.b16 %v3792, %v3784
      %v5129 = vpack.c.b16 %v3801, %v3793
      %v5130 = vpack.c.b16 %v3802, %v3794
      %v5131 = vpack.c.b16 %v3803, %v3795
      %v5132 = vpack.c.b16 %v3804, %v3796
      %v5133 = vpack.c.b16 %v3805, %v3797
      %v5134 = vpack.c.b16 %v3806, %v3798
      %v5135 = vpack.c.b16 %v3807, %v3799
      %v5136 = vpack.c.b16 %v3808, %v3800
      %v5137 = vpack.c.b16 %v3817, %v3809
      %v5138 = vpack.c.b16 %v3818, %v3810
      %v5139 = vpack.c.b16 %v3819, %v3811
      %v5140 = vpack.c.b16 %v3820, %v3812
      %v5141 = vpack.c.b16 %v3821, %v3813
      %v5142 = vpack.c.b16 %v3822, %v3814
      %v5143 = vpack.c.b16 %v3823, %v3815
      %v5144 = vpack.c.b16 %v3824, %v3816
      %v5145 = vpack.c.b16 %v3833, %v3825
      %v5146 = vpack.c.b16 %v3834, %v3826
      %v5147 = vpack.c.b16 %v3835, %v3827
      %v5148 = vpack.c.b16 %v3836, %v3828
      %v5149 = vpack.c.b16 %v3837, %v3829
      %v5150 = vpack.c.b16 %v3838, %v3830
      %v5151 = vpack.c.b16 %v3839, %v3831
      %v5152 = vpack.c.b16 %v3840, %v3832
      %v5153 = vpack.c.b16 %v3849, %v3841
      %v5154 = vpack.c.b16 %v3850, %v3842
      %v5155 = vpack.c.b16 %v3851, %v3843
      %v5156 = vpack.c.b16 %v3852, %v3844
      %v5157 = vpack.c.b16 %v3853, %v3845
      %v5158 = vpack.c.b16 %v3854, %v3846
      %v5159 = vpack.c.b16 %v3855, %v3847
      %v5160 = vpack.c.b16 %v3856, %v3848
      %v5161 = vpack.c.b16 %v3865, %v3857
      %v5162 = vpack.c.b16 %v3866, %v3858
      %v5163 = vpack.c.b16 %v3867, %v3859
      %v5164 = vpack.c.b16 %v3868, %v3860
      %v5165 = vpack.c.b16 %v3869, %v3861
      %v5166 = vpack.c.b16 %v3870, %v3862
      %v5167 = vpack.c.b16 %v3871, %v3863
      %v5168 = vpack.c.b16 %v3872, %v3864
      %v5169 = vpack.c.b16 %v3881, %v3873
      %v5170 = vpack.c.b16 %v3882, %v3874
      %v5171 = vpack.c.b16 %v3883, %v3875
      %v5172 = vpack.c.b16 %v3884, %v3876
      %v5173 = vpack.c.b16 %v3885, %v3877
      %v5174 = vpack.c.b16 %v3886, %v3878
      %v5175 = vpack.c.b16 %v3887, %v3879
      %v5176 = vpack.c.b16 %v3888, %v3880
      %v5177 = vpack.c.b16 %v3897, %v3889
      %v5178 = vpack.c.b16 %v3898, %v3890
      %v5179 = vpack.c.b16 %v3899, %v3891
      %v5180 = vpack.c.b16 %v3900, %v3892
      %v5181 = vpack.c.b16 %v3901, %v3893
      %v5182 = vpack.c.b16 %v3902, %v3894
      %v5183 = vpack.c.b16 %v3903, %v3895
      %v5184 = vpack.c.b16 %v3904, %v3896
      %v5185 = vpack.c.b16 %v3913, %v3905
      %v5186 = vpack.c.b16 %v3914, %v3906
      %v5187 = vpack.c.b16 %v3915, %v3907
      %v5188 = vpack.c.b16 %v3916, %v3908
      %v5189 = vpack.c.b16 %v3917, %v3909
      %v5190 = vpack.c.b16 %v3918, %v3910
      %v5191 = vpack.c.b16 %v3919, %v3911
      %v5192 = vpack.c.b16 %v3920, %v3912
      %v5193 = vpack.c.b16 %v3929, %v3921
      %v5194 = vpack.c.b16 %v3930, %v3922
      %v5195 = vpack.c.b16 %v3931, %v3923
      %v5196 = vpack.c.b16 %v3932, %v3924
      %v5197 = vpack.c.b16 %v3933, %v3925
      %v5198 = vpack.c.b16 %v3934, %v3926
      %v5199 = vpack.c.b16 %v3935, %v3927
      %v5200 = vpack.c.b16 %v3936, %v3928
      %v5201 = vpack.c.b16 %v3945, %v3937
      %v5202 = vpack.c.b16 %v3946, %v3938
      %v5203 = vpack.c.b16 %v3947, %v3939
      %v5204 = vpack.c.b16 %v3948, %v3940
      %v5205 = vpack.c.b16 %v3949, %v3941
      %v5206 = vpack.c.b16 %v3950, %v3942
      %v5207 = vpack.c.b16 %v3951, %v3943
      %v5208 = vpack.c.b16 %v3952, %v3944
      %v5209 = vpack.c.b16 %v3961, %v3953
      %v5210 = vpack.c.b16 %v3962, %v3954
      %v5211 = vpack.c.b16 %v3963, %v3955
      %v5212 = vpack.c.b16 %v3964, %v3956
      %v5213 = vpack.c.b16 %v3965, %v3957
      %v5214 = vpack.c.b16 %v3966, %v3958
      %v5215 = vpack.c.b16 %v3967, %v3959
      %v5216 = vpack.c.b16 %v3968, %v3960
      %v5217 = vpack.c.b16 %v3977, %v3969
      %v5218 = vpack.c.b16 %v3978, %v3970
      %v5219 = vpack.c.b16 %v3979, %v3971
      %v5220 = vpack.c.b16 %v3980, %v3972
      %v5221 = vpack.c.b16 %v3981, %v3973
      %v5222 = vpack.c.b16 %v3982, %v3974
      %v5223 = vpack.c.b16 %v3983, %v3975
      %v5224 = vpack.c.b16 %v3984, %v3976
      %v5225 = vpack.c.b16 %v3993, %v3985
      %v5226 = vpack.c.b16 %v3994, %v3986
      %v5227 = vpack.c.b16 %v3995, %v3987
      %v5228 = vpack.c.b16 %v3996, %v3988
      %v5229 = vpack.c.b16 %v3997, %v3989
      %v5230 = vpack.c.b16 %v3998, %v3990
      %v5231 = vpack.c.b16 %v3999, %v3991
      %v5232 = vpack.c.b16 %v4000, %v3992
      %v5233 = vpack.c.b16 %v4009, %v4001
      %v5234 = vpack.c.b16 %v4010, %v4002
      %v5235 = vpack.c.b16 %v4011, %v4003
      %v5236 = vpack.c.b16 %v4012, %v4004
      %v5237 = vpack.c.b16 %v4013, %v4005
      %v5238 = vpack.c.b16 %v4014, %v4006
      %v5239 = vpack.c.b16 %v4015, %v4007
      %v5240 = vpack.c.b16 %v4016, %v4008
      %v5241 = vpack.c.b16 %v4025, %v4017
      %v5242 = vpack.c.b16 %v4026, %v4018
      %v5243 = vpack.c.b16 %v4027, %v4019
      %v5244 = vpack.c.b16 %v4028, %v4020
      %v5245 = vpack.c.b16 %v4029, %v4021
      %v5246 = vpack.c.b16 %v4030, %v4022
      %v5247 = vpack.c.b16 %v4031, %v4023
      %v5248 = vpack.c.b16 %v4032, %v4024
      %v5249 = vpack.c.b16 %v4041, %v4033
      %v5250 = vpack.c.b16 %v4042, %v4034
      %v5251 = vpack.c.b16 %v4043, %v4035
      %v5252 = vpack.c.b16 %v4044, %v4036
      %v5253 = vpack.c.b16 %v4045, %v4037
      %v5254 = vpack.c.b16 %v4046, %v4038
      %v5255 = vpack.c.b16 %v4047, %v4039
      %v5256 = vpack.c.b16 %v4048, %v4040
      %v5257 = vpack.c.b16 %v4057, %v4049
      %v5258 = vpack.c.b16 %v4058, %v4050
      %v5259 = vpack.c.b16 %v4059, %v4051
      %v5260 = vpack.c.b16 %v4060, %v4052
      %v5261 = vpack.c.b16 %v4061, %v4053
      %v5262 = vpack.c.b16 %v4062, %v4054
      %v5263 = vpack.c.b16 %v4063, %v4055
      %v5264 = vpack.c.b16 %v4064, %v4056
      %v5265 = vpack.c.b16 %v4073, %v4065
      %v5266 = vpack.c.b16 %v4074, %v4066
      %v5267 = vpack.c.b16 %v4075, %v4067
      %v5268 = vpack.c.b16 %v4076, %v4068
      %v5269 = vpack.c.b16 %v4077, %v4069
      %v5270 = vpack.c.b16 %v4078, %v4070
      %v5271 = vpack.c.b16 %v4079, %v4071
      %v5272 = vpack.c.b16 %v4080, %v4072
      %v5273 = vpack.c.b16 %v4089, %v4081
      %v5274 = vpack.c.b16 %v4090, %v4082
      %v5275 = vpack.c.b16 %v4091, %v4083
      %v5276 = vpack.c.b16 %v4092, %v4084
      %v5277 = vpack.c.b16 %v4093, %v4085
      %v5278 = vpack.c.b16 %v4094, %v4086
      %v5279 = vpack.c.b16 %v4095, %v4087
      %v5280 = vpack.c.b16 %v4096, %v4088
      %v5281 = vpack.c.b16 %v4105, %v4097
      %v5282 = vpack.c.b16 %v4106, %v4098
      %v5283 = vpack.c.b16 %v4107, %v4099
      %v5284 = vpack.c.b16 %v4108, %v4100
      %v5285 = vpack.c.b16 %v4109, %v4101
      %v5286 = vpack.c.b16 %v4110, %v4102
      %v5287 = vpack.c.b16 %v4111, %v4103
      %v5288 = vpack.c.b16 %v4112, %v4104
      %v5289 = vpack.c.b16 %v4121, %v4113
      %v5290 = vpack.c.b16 %v4122, %v4114
      %v5291 = vpack.c.b16 %v4123, %v4115
      %v5292 = vpack.c.b16 %v4124, %v4116
      %v5293 = vpack.c.b16 %v4125, %v4117
      %v5294 = vpack.c.b16 %v4126, %v4118
      %v5295 = vpack.c.b16 %v4127, %v4119
      %v5296 = vpack.c.b16 %v4128, %v4120
      %v5297 = vpack.c.b16 %v4137, %v4129
      %v5298 = vpack.c.b16 %v4138, %v4130
      %v5299 = vpack.c.b16 %v4139, %v4131
      %v5300 = vpack.c.b16 %v4140, %v4132
      %v5301 = vpack.c.b16 %v4141, %v4133
      %v5302 = vpack.c.b16 %v4142, %v4134
      %v5303 = vpack.c.b16 %v4143, %v4135
      %v5304 = vpack.c.b16 %v4144, %v4136
      %v5305 = vpack.c.b16 %v4153, %v4145
      %v5306 = vpack.c.b16 %v4154, %v4146
      %v5307 = vpack.c.b16 %v4155, %v4147
      %v5308 = vpack.c.b16 %v4156, %v4148
      %v5309 = vpack.c.b16 %v4157, %v4149
      %v5310 = vpack.c.b16 %v4158, %v4150
      %v5311 = vpack.c.b16 %v4159, %v4151
      %v5312 = vpack.c.b16 %v4160, %v4152
      %v5313 = vpack.c.b16 %v4169, %v4161
      %v5314 = vpack.c.b16 %v4170, %v4162
      %v5315 = vpack.c.b16 %v4171, %v4163
      %v5316 = vpack.c.b16 %v4172, %v4164
      %v5317 = vpack.c.b16 %v4173, %v4165
      %v5318 = vpack.c.b16 %v4174, %v4166
      %v5319 = vpack.c.b16 %v4175, %v4167
      %v5320 = vpack.c.b16 %v4176, %v4168
      %v5321 = vpack.c.b16 %v4185, %v4177
      %v5322 = vpack.c.b16 %v4186, %v4178
      %v5323 = vpack.c.b16 %v4187, %v4179
      %v5324 = vpack.c.b16 %v4188, %v4180
      %v5325 = vpack.c.b16 %v4189, %v4181
      %v5326 = vpack.c.b16 %v4190, %v4182
      %v5327 = vpack.c.b16 %v4191, %v4183
      %v5328 = vpack.c.b16 %v4192, %v4184
      %v5329 = vpack.c.b16 %v4201, %v4193
      %v5330 = vpack.c.b16 %v4202, %v4194
      %v5331 = vpack.c.b16 %v4203, %v4195
      %v5332 = vpack.c.b16 %v4204, %v4196
      %v5333 = vpack.c.b16 %v4205, %v4197
      %v5334 = vpack.c.b16 %v4206, %v4198
      %v5335 = vpack.c.b16 %v4207, %v4199
      %v5336 = vpack.c.b16 %v4208, %v4200
      %v5337 = vpack.c.b16 %v4217, %v4209
      %v5338 = vpack.c.b16 %v4218, %v4210
      %v5339 = vpack.c.b16 %v4219, %v4211
      %v5340 = vpack.c.b16 %v4220, %v4212
      %v5341 = vpack.c.b16 %v4221, %v4213
      %v5342 = vpack.c.b16 %v4222, %v4214
      %v5343 = vpack.c.b16 %v4223, %v4215
      %v5344 = vpack.c.b16 %v4224, %v4216
      %v5345 = vpack.c.b16 %v4233, %v4225
      %v5346 = vpack.c.b16 %v4234, %v4226
      %v5347 = vpack.c.b16 %v4235, %v4227
      %v5348 = vpack.c.b16 %v4236, %v4228
      %v5349 = vpack.c.b16 %v4237, %v4229
      %v5350 = vpack.c.b16 %v4238, %v4230
      %v5351 = vpack.c.b16 %v4239, %v4231
      %v5352 = vpack.c.b16 %v4240, %v4232
      %v5353 = vpack.c.b16 %v4249, %v4241
      %v5354 = vpack.c.b16 %v4250, %v4242
      %v5355 = vpack.c.b16 %v4251, %v4243
      %v5356 = vpack.c.b16 %v4252, %v4244
      %v5357 = vpack.c.b16 %v4253, %v4245
      %v5358 = vpack.c.b16 %v4254, %v4246
      %v5359 = vpack.c.b16 %v4255, %v4247
      %v5360 = vpack.c.b16 %v4256, %v4248
      %v5361 = vpack.c.b16 %v4265, %v4257
      %v5362 = vpack.c.b16 %v4266, %v4258
      %v5363 = vpack.c.b16 %v4267, %v4259
      %v5364 = vpack.c.b16 %v4268, %v4260
      %v5365 = vpack.c.b16 %v4269, %v4261
      %v5366 = vpack.c.b16 %v4270, %v4262
      %v5367 = vpack.c.b16 %v4271, %v4263
      %v5368 = vpack.c.b16 %v4272, %v4264
      %v5369 = vpack.c.b16 %v4281, %v4273
      %v5370 = vpack.c.b16 %v4282, %v4274
      %v5371 = vpack.c.b16 %v4283, %v4275
      %v5372 = vpack.c.b16 %v4284, %v4276
      %v5373 = vpack.c.b16 %v4285, %v4277
      %v5374 = vpack.c.b16 %v4286, %v4278
      %v5375 = vpack.c.b16 %v4287, %v4279
      %v5376 = vpack.c.b16 %v4288, %v4280
      %v5377 = vpack.c.b16 %v4297, %v4289
      %v5378 = vpack.c.b16 %v4298, %v4290
      %v5379 = vpack.c.b16 %v4299, %v4291
      %v5380 = vpack.c.b16 %v4300, %v4292
      %v5381 = vpack.c.b16 %v4301, %v4293
      %v5382 = vpack.c.b16 %v4302, %v4294
      %v5383 = vpack.c.b16 %v4303, %v4295
      %v5384 = vpack.c.b16 %v4304, %v4296
      %v5385 = vpack.c.b16 %v4313, %v4305
      %v5386 = vpack.c.b16 %v4314, %v4306
      %v5387 = vpack.c.b16 %v4315, %v4307
      %v5388 = vpack.c.b16 %v4316, %v4308
      %v5389 = vpack.c.b16 %v4317, %v4309
      %v5390 = vpack.c.b16 %v4318, %v4310
      %v5391 = vpack.c.b16 %v4319, %v4311
      %v5392 = vpack.c.b16 %v4320, %v4312
      %v5393 = vpack.c.b16 %v4329, %v4321
      %v5394 = vpack.c.b16 %v4330, %v4322
      %v5395 = vpack.c.b16 %v4331, %v4323
      %v5396 = vpack.c.b16 %v4332, %v4324
      %v5397 = vpack.c.b16 %v4333, %v4325
      %v5398 = vpack.c.b16 %v4334, %v4326
      %v5399 = vpack.c.b16 %v4335, %v4327
      %v5400 = vpack.c.b16 %v4336, %v4328
      %v5401 = vpack.c.b16 %v4345, %v4337
      %v5402 = vpack.c.b16 %v4346, %v4338
      %v5403 = vpack.c.b16 %v4347, %v4339
      %v5404 = vpack.c.b16 %v4348, %v4340
      %v5405 = vpack.c.b16 %v4349, %v4341
      %v5406 = vpack.c.b16 %v4350, %v4342
      %v5407 = vpack.c.b16 %v4351, %v4343
      %v5408 = vpack.c.b16 %v4352, %v4344
      %v5409 = vpack.c.b16 %v4361, %v4353
      %v5410 = vpack.c.b16 %v4362, %v4354
      %v5411 = vpack.c.b16 %v4363, %v4355
      %v5412 = vpack.c.b16 %v4364, %v4356
      %v5413 = vpack.c.b16 %v4365, %v4357
      %v5414 = vpack.c.b16 %v4366, %v4358
      %v5415 = vpack.c.b16 %v4367, %v4359
      %v5416 = vpack.c.b16 %v4368, %v4360
      %v5417 = vpack.c.b16 %v4377, %v4369
      %v5418 = vpack.c.b16 %v4378, %v4370
      %v5419 = vpack.c.b16 %v4379, %v4371
      %v5420 = vpack.c.b16 %v4380, %v4372
      %v5421 = vpack.c.b16 %v4381, %v4373
      %v5422 = vpack.c.b16 %v4382, %v4374
      %v5423 = vpack.c.b16 %v4383, %v4375
      %v5424 = vpack.c.b16 %v4384, %v4376
      %v5425 = vpack.c.b16 %v4393, %v4385
      %v5426 = vpack.c.b16 %v4394, %v4386
      %v5427 = vpack.c.b16 %v4395, %v4387
      %v5428 = vpack.c.b16 %v4396, %v4388
      %v5429 = vpack.c.b16 %v4397, %v4389
      %v5430 = vpack.c.b16 %v4398, %v4390
      %v5431 = vpack.c.b16 %v4399, %v4391
      %v5432 = vpack.c.b16 %v4400, %v4392
      %v5433 = vpack.c.b16 %v4409, %v4401
      %v5434 = vpack.c.b16 %v4410, %v4402
      %v5435 = vpack.c.b16 %v4411, %v4403
      %v5436 = vpack.c.b16 %v4412, %v4404
      %v5437 = vpack.c.b16 %v4413, %v4405
      %v5438 = vpack.c.b16 %v4414, %v4406
      %v5439 = vpack.c.b16 %v4415, %v4407
      %v5440 = vpack.c.b16 %v4416, %v4408
      %6465 = vmatpush.bf16.msra.mxu0 %v4473
      %6466 = vmatpush.bf16.msra.mxu0 %v4465
      %6467 = vmatpush.bf16.msra.mxu0 %v4457
      %6468 = vmatpush.bf16.msra.mxu0 %v4449
      %6469 = vmatpush.bf16.msra.mxu0 %v4441
      %6470 = vmatpush.bf16.msra.mxu0 %v4433
      %6471 = vmatpush.bf16.msra.mxu0 %v4425
      %6472 = vmatpush.bf16.msra.mxu0 %v4417
      %6473 = vmatmul.bf16.gmra.mxu0 %v1313
      %v6474 = vpop.f32.mrf.mxu0
      %v6475 = vadd.f32 0.0, %v6474
      %v6476 = vpop.f32.mrf.mxu0
      %6477 = vdwg.mxu0
      %6478 = vmatpush.bf16.msra.mxu0 %v4537
      %6479 = vmatpush.bf16.msra.mxu0 %v4529
      %6480 = vmatpush.bf16.msra.mxu0 %v4521
      %6481 = vmatpush.bf16.msra.mxu0 %v4513
      %6482 = vmatpush.bf16.msra.mxu0 %v4505
      %6483 = vmatpush.bf16.msra.mxu0 %v4497
      %6484 = vmatpush.bf16.msra.mxu0 %v4489
      %6485 = vmatpush.bf16.msra.mxu0 %v4481
      %6486 = vmatmul.bf16.gmra.mxu0 %v1314
      %v6487 = vpop.f32.mrf.mxu0
      %v6488 = vadd.f32 %v6475, %v6487
      %v6489 = vpop.f32.mrf.mxu0
      %6490 = vdwg.mxu0
      %6491 = vmatpush.bf16.msra.mxu0 %v4601
      %6492 = vmatpush.bf16.msra.mxu0 %v4593
      %6493 = vmatpush.bf16.msra.mxu0 %v4585
      %6494 = vmatpush.bf16.msra.mxu0 %v4577
      %6495 = vmatpush.bf16.msra.mxu0 %v4569
      %6496 = vmatpush.bf16.msra.mxu0 %v4561
      %6497 = vmatpush.bf16.msra.mxu0 %v4553
      %6498 = vmatpush.bf16.msra.mxu0 %v4545
      %6499 = vmatmul.bf16.gmra.mxu0 %v1315
      %v6500 = vpop.f32.mrf.mxu0
      %v6501 = vadd.f32 %v6488, %v6500
      %v6502 = vpop.f32.mrf.mxu0
      %6503 = vdwg.mxu0
      %6504 = vmatpush.bf16.msra.mxu0 %v4665
      %6505 = vmatpush.bf16.msra.mxu0 %v4657
      %6506 = vmatpush.bf16.msra.mxu0 %v4649
      %6507 = vmatpush.bf16.msra.mxu0 %v4641
      %6508 = vmatpush.bf16.msra.mxu0 %v4633
      %6509 = vmatpush.bf16.msra.mxu0 %v4625
      %6510 = vmatpush.bf16.msra.mxu0 %v4617
      %6511 = vmatpush.bf16.msra.mxu0 %v4609
      %6512 = vmatmul.bf16.gmra.mxu0 %v1316
      %v6513 = vpop.f32.mrf.mxu0
      %v6514 = vadd.f32 %v6501, %v6513
      %v6515 = vpop.f32.mrf.mxu0
      %6516 = vdwg.mxu0
      %6517 = vmatpush.bf16.msra.mxu0 %v4729
      %6518 = vmatpush.bf16.msra.mxu0 %v4721
      %6519 = vmatpush.bf16.msra.mxu0 %v4713
      %6520 = vmatpush.bf16.msra.mxu0 %v4705
      %6521 = vmatpush.bf16.msra.mxu0 %v4697
      %6522 = vmatpush.bf16.msra.mxu0 %v4689
      %6523 = vmatpush.bf16.msra.mxu0 %v4681
      %6524 = vmatpush.bf16.msra.mxu0 %v4673
      %6525 = vmatmul.bf16.gmra.mxu0 %v1317
      %v6526 = vpop.f32.mrf.mxu0
      %v6527 = vadd.f32 %v6514, %v6526
      %v6528 = vpop.f32.mrf.mxu0
      %6529 = vdwg.mxu0
      %6530 = vmatpush.bf16.msra.mxu0 %v4793
      %6531 = vmatpush.bf16.msra.mxu0 %v4785
      %6532 = vmatpush.bf16.msra.mxu0 %v4777
      %6533 = vmatpush.bf16.msra.mxu0 %v4769
      %6534 = vmatpush.bf16.msra.mxu0 %v4761
      %6535 = vmatpush.bf16.msra.mxu0 %v4753
      %6536 = vmatpush.bf16.msra.mxu0 %v4745
      %6537 = vmatpush.bf16.msra.mxu0 %v4737
      %6538 = vmatmul.bf16.gmra.mxu0 %v1318
      %v6539 = vpop.f32.mrf.mxu0
      %v6540 = vadd.f32 %v6527, %v6539
      %v6541 = vpop.f32.mrf.mxu0
      %6542 = vdwg.mxu0
      %6543 = vmatpush.bf16.msra.mxu0 %v4857
      %6544 = vmatpush.bf16.msra.mxu0 %v4849
      %6545 = vmatpush.bf16.msra.mxu0 %v4841
      %6546 = vmatpush.bf16.msra.mxu0 %v4833
      %6547 = vmatpush.bf16.msra.mxu0 %v4825
      %6548 = vmatpush.bf16.msra.mxu0 %v4817
      %6549 = vmatpush.bf16.msra.mxu0 %v4809
      %6550 = vmatpush.bf16.msra.mxu0 %v4801
      %6551 = vmatmul.bf16.gmra.mxu0 %v1319
      %v6552 = vpop.f32.mrf.mxu0
      %v6553 = vadd.f32 %v6540, %v6552
      %v6554 = vpop.f32.mrf.mxu0
      %6555 = vdwg.mxu0
      %6556 = vmatpush.bf16.msra.mxu0 %v4921
      %6557 = vmatpush.bf16.msra.mxu0 %v4913
      %6558 = vmatpush.bf16.msra.mxu0 %v4905
      %6559 = vmatpush.bf16.msra.mxu0 %v4897
      %6560 = vmatpush.bf16.msra.mxu0 %v4889
      %6561 = vmatpush.bf16.msra.mxu0 %v4881
      %6562 = vmatpush.bf16.msra.mxu0 %v4873
      %6563 = vmatpush.bf16.msra.mxu0 %v4865
      %6564 = vmatmul.bf16.gmra.mxu0 %v1320
      %v6565 = vpop.f32.mrf.mxu0
      %v6566 = vadd.f32 %v6553, %v6565
      %v6567 = vpop.f32.mrf.mxu0
      %6568 = vdwg.mxu0
      %6569 = vmatpush.bf16.msra.mxu0 %v4985
      %6570 = vmatpush.bf16.msra.mxu0 %v4977
      %6571 = vmatpush.bf16.msra.mxu0 %v4969
      %6572 = vmatpush.bf16.msra.mxu0 %v4961
      %6573 = vmatpush.bf16.msra.mxu0 %v4953
      %6574 = vmatpush.bf16.msra.mxu0 %v4945
      %6575 = vmatpush.bf16.msra.mxu0 %v4937
      %6576 = vmatpush.bf16.msra.mxu0 %v4929
      %6577 = vmatmul.bf16.gmra.mxu0 %v1321
      %v6578 = vpop.f32.mrf.mxu0
      %v6579 = vadd.f32 %v6566, %v6578
      %v6580 = vpop.f32.mrf.mxu0
      %6581 = vdwg.mxu0
      %6582 = vmatpush.bf16.msra.mxu0 %v5049
      %6583 = vmatpush.bf16.msra.mxu0 %v5041
      %6584 = vmatpush.bf16.msra.mxu0 %v5033
      %6585 = vmatpush.bf16.msra.mxu0 %v5025
      %6586 = vmatpush.bf16.msra.mxu0 %v5017
      %6587 = vmatpush.bf16.msra.mxu0 %v5009
      %6588 = vmatpush.bf16.msra.mxu0 %v5001
      %6589 = vmatpush.bf16.msra.mxu0 %v4993
      %6590 = vmatmul.bf16.gmra.mxu0 %v1322
      %v6591 = vpop.f32.mrf.mxu0
      %v6592 = vadd.f32 %v6579, %v6591
      %v6593 = vpop.f32.mrf.mxu0
      %6594 = vdwg.mxu0
      %6595 = vmatpush.bf16.msra.mxu0 %v5113
      %6596 = vmatpush.bf16.msra.mxu0 %v5105
      %6597 = vmatpush.bf16.msra.mxu0 %v5097
      %6598 = vmatpush.bf16.msra.mxu0 %v5089
      %6599 = vmatpush.bf16.msra.mxu0 %v5081
      %6600 = vmatpush.bf16.msra.mxu0 %v5073
      %6601 = vmatpush.bf16.msra.mxu0 %v5065
      %6602 = vmatpush.bf16.msra.mxu0 %v5057
      %6603 = vmatmul.bf16.gmra.mxu0 %v1323
      %v6604 = vpop.f32.mrf.mxu0
      %v6605 = vadd.f32 %v6592, %v6604
      %v6606 = vpop.f32.mrf.mxu0
      %6607 = vdwg.mxu0
      %6608 = vmatpush.bf16.msra.mxu0 %v5177
      %6609 = vmatpush.bf16.msra.mxu0 %v5169
      %6610 = vmatpush.bf16.msra.mxu0 %v5161
      %6611 = vmatpush.bf16.msra.mxu0 %v5153
      %6612 = vmatpush.bf16.msra.mxu0 %v5145
      %6613 = vmatpush.bf16.msra.mxu0 %v5137
      %6614 = vmatpush.bf16.msra.mxu0 %v5129
      %6615 = vmatpush.bf16.msra.mxu0 %v5121
      %6616 = vmatmul.bf16.gmra.mxu0 %v1324
      %v6617 = vpop.f32.mrf.mxu0
      %v6618 = vadd.f32 %v6605, %v6617
      %v6619 = vpop.f32.mrf.mxu0
      %6620 = vdwg.mxu0
      %6621 = vmatpush.bf16.msra.mxu0 %v5241
      %6622 = vmatpush.bf16.msra.mxu0 %v5233
      %6623 = vmatpush.bf16.msra.mxu0 %v5225
      %6624 = vmatpush.bf16.msra.mxu0 %v5217
      %6625 = vmatpush.bf16.msra.mxu0 %v5209
      %6626 = vmatpush.bf16.msra.mxu0 %v5201
      %6627 = vmatpush.bf16.msra.mxu0 %v5193
      %6628 = vmatpush.bf16.msra.mxu0 %v5185
      %6629 = vmatmul.bf16.gmra.mxu0 %v1325
      %v6630 = vpop.f32.mrf.mxu0
      %v6631 = vadd.f32 %v6618, %v6630
      %v6632 = vpop.f32.mrf.mxu0
      %6633 = vdwg.mxu0
      %6634 = vmatpush.bf16.msra.mxu0 %v5305
      %6635 = vmatpush.bf16.msra.mxu0 %v5297
      %6636 = vmatpush.bf16.msra.mxu0 %v5289
      %6637 = vmatpush.bf16.msra.mxu0 %v5281
      %6638 = vmatpush.bf16.msra.mxu0 %v5273
      %6639 = vmatpush.bf16.msra.mxu0 %v5265
      %6640 = vmatpush.bf16.msra.mxu0 %v5257
      %6641 = vmatpush.bf16.msra.mxu0 %v5249
      %6642 = vmatmul.bf16.gmra.mxu0 %v1326
      %v6643 = vpop.f32.mrf.mxu0
      %v6644 = vadd.f32 %v6631, %v6643
      %v6645 = vpop.f32.mrf.mxu0
      %6646 = vdwg.mxu0
      %6647 = vmatpush.bf16.msra.mxu0 %v5369
      %6648 = vmatpush.bf16.msra.mxu0 %v5361
      %6649 = vmatpush.bf16.msra.mxu0 %v5353
      %6650 = vmatpush.bf16.msra.mxu0 %v5345
      %6651 = vmatpush.bf16.msra.mxu0 %v5337
      %6652 = vmatpush.bf16.msra.mxu0 %v5329
      %6653 = vmatpush.bf16.msra.mxu0 %v5321
      %6654 = vmatpush.bf16.msra.mxu0 %v5313
      %6655 = vmatmul.bf16.gmra.mxu0 %v1327
      %v6656 = vpop.f32.mrf.mxu0
      %v6657 = vadd.f32 %v6644, %v6656
      %v6658 = vpop.f32.mrf.mxu0
      %6659 = vdwg.mxu0
      %6660 = vmatpush.bf16.msra.mxu0 %v5433
      %6661 = vmatpush.bf16.msra.mxu0 %v5425
      %6662 = vmatpush.bf16.msra.mxu0 %v5417
      %6663 = vmatpush.bf16.msra.mxu0 %v5409
      %6664 = vmatpush.bf16.msra.mxu0 %v5401
      %6665 = vmatpush.bf16.msra.mxu0 %v5393
      %6666 = vmatpush.bf16.msra.mxu0 %v5385
      %6667 = vmatpush.bf16.msra.mxu0 %v5377
      %6668 = vmatmul.bf16.gmra.mxu0 %v1328
      %v6669 = vpop.f32.mrf.mxu0
      %v6670 = vadd.f32 %v6657, %v6669
      %v6671 = vpop.f32.mrf.mxu0
      %6672 = vdwg.mxu0
      %6673 = vmatpush.bf16.msra.mxu0 %v4474
      %6674 = vmatpush.bf16.msra.mxu0 %v4466
      %6675 = vmatpush.bf16.msra.mxu0 %v4458
      %6676 = vmatpush.bf16.msra.mxu0 %v4450
      %6677 = vmatpush.bf16.msra.mxu0 %v4442
      %6678 = vmatpush.bf16.msra.mxu0 %v4434
      %6679 = vmatpush.bf16.msra.mxu0 %v4426
      %6680 = vmatpush.bf16.msra.mxu0 %v4418
      %6681 = vmatmul.bf16.gmra.mxu0 %v1313
      %v6682 = vpop.f32.mrf.mxu0
      %v6683 = vadd.f32 0.0, %v6682
      %v6684 = vpop.f32.mrf.mxu0
      %6685 = vdwg.mxu0
      %6686 = vmatpush.bf16.msra.mxu0 %v4538
      %6687 = vmatpush.bf16.msra.mxu0 %v4530
      %6688 = vmatpush.bf16.msra.mxu0 %v4522
      %6689 = vmatpush.bf16.msra.mxu0 %v4514
      %6690 = vmatpush.bf16.msra.mxu0 %v4506
      %6691 = vmatpush.bf16.msra.mxu0 %v4498
      %6692 = vmatpush.bf16.msra.mxu0 %v4490
      %6693 = vmatpush.bf16.msra.mxu0 %v4482
      %6694 = vmatmul.bf16.gmra.mxu0 %v1314
      %v6695 = vpop.f32.mrf.mxu0
      %v6696 = vadd.f32 %v6683, %v6695
      %v6697 = vpop.f32.mrf.mxu0
      %6698 = vdwg.mxu0
      %6699 = vmatpush.bf16.msra.mxu0 %v4602
      %6700 = vmatpush.bf16.msra.mxu0 %v4594
      %6701 = vmatpush.bf16.msra.mxu0 %v4586
      %6702 = vmatpush.bf16.msra.mxu0 %v4578
      %6703 = vmatpush.bf16.msra.mxu0 %v4570
      %6704 = vmatpush.bf16.msra.mxu0 %v4562
      %6705 = vmatpush.bf16.msra.mxu0 %v4554
      %6706 = vmatpush.bf16.msra.mxu0 %v4546
      %6707 = vmatmul.bf16.gmra.mxu0 %v1315
      %v6708 = vpop.f32.mrf.mxu0
      %v6709 = vadd.f32 %v6696, %v6708
      %v6710 = vpop.f32.mrf.mxu0
      %6711 = vdwg.mxu0
      %6712 = vmatpush.bf16.msra.mxu0 %v4666
      %6713 = vmatpush.bf16.msra.mxu0 %v4658
      %6714 = vmatpush.bf16.msra.mxu0 %v4650
      %6715 = vmatpush.bf16.msra.mxu0 %v4642
      %6716 = vmatpush.bf16.msra.mxu0 %v4634
      %6717 = vmatpush.bf16.msra.mxu0 %v4626
      %6718 = vmatpush.bf16.msra.mxu0 %v4618
      %6719 = vmatpush.bf16.msra.mxu0 %v4610
      %6720 = vmatmul.bf16.gmra.mxu0 %v1316
      %v6721 = vpop.f32.mrf.mxu0
      %v6722 = vadd.f32 %v6709, %v6721
      %v6723 = vpop.f32.mrf.mxu0
      %6724 = vdwg.mxu0
      %6725 = vmatpush.bf16.msra.mxu0 %v4730
      %6726 = vmatpush.bf16.msra.mxu0 %v4722
      %6727 = vmatpush.bf16.msra.mxu0 %v4714
      %6728 = vmatpush.bf16.msra.mxu0 %v4706
      %6729 = vmatpush.bf16.msra.mxu0 %v4698
      %6730 = vmatpush.bf16.msra.mxu0 %v4690
      %6731 = vmatpush.bf16.msra.mxu0 %v4682
      %6732 = vmatpush.bf16.msra.mxu0 %v4674
      %6733 = vmatmul.bf16.gmra.mxu0 %v1317
      %v6734 = vpop.f32.mrf.mxu0
      %v6735 = vadd.f32 %v6722, %v6734
      %v6736 = vpop.f32.mrf.mxu0
      %6737 = vdwg.mxu0
      %6738 = vmatpush.bf16.msra.mxu0 %v4794
      %6739 = vmatpush.bf16.msra.mxu0 %v4786
      %6740 = vmatpush.bf16.msra.mxu0 %v4778
      %6741 = vmatpush.bf16.msra.mxu0 %v4770
      %6742 = vmatpush.bf16.msra.mxu0 %v4762
      %6743 = vmatpush.bf16.msra.mxu0 %v4754
      %6744 = vmatpush.bf16.msra.mxu0 %v4746
      %6745 = vmatpush.bf16.msra.mxu0 %v4738
      %6746 = vmatmul.bf16.gmra.mxu0 %v1318
      %v6747 = vpop.f32.mrf.mxu0
      %v6748 = vadd.f32 %v6735, %v6747
      %v6749 = vpop.f32.mrf.mxu0
      %6750 = vdwg.mxu0
      %6751 = vmatpush.bf16.msra.mxu0 %v4858
      %6752 = vmatpush.bf16.msra.mxu0 %v4850
      %6753 = vmatpush.bf16.msra.mxu0 %v4842
      %6754 = vmatpush.bf16.msra.mxu0 %v4834
      %6755 = vmatpush.bf16.msra.mxu0 %v4826
      %6756 = vmatpush.bf16.msra.mxu0 %v4818
      %6757 = vmatpush.bf16.msra.mxu0 %v4810
      %6758 = vmatpush.bf16.msra.mxu0 %v4802
      %6759 = vmatmul.bf16.gmra.mxu0 %v1319
      %v6760 = vpop.f32.mrf.mxu0
      %v6761 = vadd.f32 %v6748, %v6760
      %v6762 = vpop.f32.mrf.mxu0
      %6763 = vdwg.mxu0
      %6764 = vmatpush.bf16.msra.mxu0 %v4922
      %6765 = vmatpush.bf16.msra.mxu0 %v4914
      %6766 = vmatpush.bf16.msra.mxu0 %v4906
      %6767 = vmatpush.bf16.msra.mxu0 %v4898
      %6768 = vmatpush.bf16.msra.mxu0 %v4890
      %6769 = vmatpush.bf16.msra.mxu0 %v4882
      %6770 = vmatpush.bf16.msra.mxu0 %v4874
      %6771 = vmatpush.bf16.msra.mxu0 %v4866
      %6772 = vmatmul.bf16.gmra.mxu0 %v1320
      %v6773 = vpop.f32.mrf.mxu0
      %v6774 = vadd.f32 %v6761, %v6773
      %v6775 = vpop.f32.mrf.mxu0
      %6776 = vdwg.mxu0
      %6777 = vmatpush.bf16.msra.mxu0 %v4986
      %6778 = vmatpush.bf16.msra.mxu0 %v4978
      %6779 = vmatpush.bf16.msra.mxu0 %v4970
      %6780 = vmatpush.bf16.msra.mxu0 %v4962
      %6781 = vmatpush.bf16.msra.mxu0 %v4954
      %6782 = vmatpush.bf16.msra.mxu0 %v4946
      %6783 = vmatpush.bf16.msra.mxu0 %v4938
      %6784 = vmatpush.bf16.msra.mxu0 %v4930
      %6785 = vmatmul.bf16.gmra.mxu0 %v1321
      %v6786 = vpop.f32.mrf.mxu0
      %v6787 = vadd.f32 %v6774, %v6786
      %v6788 = vpop.f32.mrf.mxu0
      %6789 = vdwg.mxu0
      %6790 = vmatpush.bf16.msra.mxu0 %v5050
      %6791 = vmatpush.bf16.msra.mxu0 %v5042
      %6792 = vmatpush.bf16.msra.mxu0 %v5034
      %6793 = vmatpush.bf16.msra.mxu0 %v5026
      %6794 = vmatpush.bf16.msra.mxu0 %v5018
      %6795 = vmatpush.bf16.msra.mxu0 %v5010
      %6796 = vmatpush.bf16.msra.mxu0 %v5002
      %6797 = vmatpush.bf16.msra.mxu0 %v4994
      %6798 = vmatmul.bf16.gmra.mxu0 %v1322
      %v6799 = vpop.f32.mrf.mxu0
      %v6800 = vadd.f32 %v6787, %v6799
      %v6801 = vpop.f32.mrf.mxu0
      %6802 = vdwg.mxu0
      %6803 = vmatpush.bf16.msra.mxu0 %v5114
      %6804 = vmatpush.bf16.msra.mxu0 %v5106
      %6805 = vmatpush.bf16.msra.mxu0 %v5098
      %6806 = vmatpush.bf16.msra.mxu0 %v5090
      %6807 = vmatpush.bf16.msra.mxu0 %v5082
      %6808 = vmatpush.bf16.msra.mxu0 %v5074
      %6809 = vmatpush.bf16.msra.mxu0 %v5066
      %6810 = vmatpush.bf16.msra.mxu0 %v5058
      %6811 = vmatmul.bf16.gmra.mxu0 %v1323
      %v6812 = vpop.f32.mrf.mxu0
      %v6813 = vadd.f32 %v6800, %v6812
      %v6814 = vpop.f32.mrf.mxu0
      %6815 = vdwg.mxu0
      %6816 = vmatpush.bf16.msra.mxu0 %v5178
      %6817 = vmatpush.bf16.msra.mxu0 %v5170
      %6818 = vmatpush.bf16.msra.mxu0 %v5162
      %6819 = vmatpush.bf16.msra.mxu0 %v5154
      %6820 = vmatpush.bf16.msra.mxu0 %v5146
      %6821 = vmatpush.bf16.msra.mxu0 %v5138
      %6822 = vmatpush.bf16.msra.mxu0 %v5130
      %6823 = vmatpush.bf16.msra.mxu0 %v5122
      %6824 = vmatmul.bf16.gmra.mxu0 %v1324
      %v6825 = vpop.f32.mrf.mxu0
      %v6826 = vadd.f32 %v6813, %v6825
      %v6827 = vpop.f32.mrf.mxu0
      %6828 = vdwg.mxu0
      %6829 = vmatpush.bf16.msra.mxu0 %v5242
      %6830 = vmatpush.bf16.msra.mxu0 %v5234
      %6831 = vmatpush.bf16.msra.mxu0 %v5226
      %6832 = vmatpush.bf16.msra.mxu0 %v5218
      %6833 = vmatpush.bf16.msra.mxu0 %v5210
      %6834 = vmatpush.bf16.msra.mxu0 %v5202
      %6835 = vmatpush.bf16.msra.mxu0 %v5194
      %6836 = vmatpush.bf16.msra.mxu0 %v5186
      %6837 = vmatmul.bf16.gmra.mxu0 %v1325
      %v6838 = vpop.f32.mrf.mxu0
      %v6839 = vadd.f32 %v6826, %v6838
      %v6840 = vpop.f32.mrf.mxu0
      %6841 = vdwg.mxu0
      %6842 = vmatpush.bf16.msra.mxu0 %v5306
      %6843 = vmatpush.bf16.msra.mxu0 %v5298
      %6844 = vmatpush.bf16.msra.mxu0 %v5290
      %6845 = vmatpush.bf16.msra.mxu0 %v5282
      %6846 = vmatpush.bf16.msra.mxu0 %v5274
      %6847 = vmatpush.bf16.msra.mxu0 %v5266
      %6848 = vmatpush.bf16.msra.mxu0 %v5258
      %6849 = vmatpush.bf16.msra.mxu0 %v5250
      %6850 = vmatmul.bf16.gmra.mxu0 %v1326
      %v6851 = vpop.f32.mrf.mxu0
      %v6852 = vadd.f32 %v6839, %v6851
      %v6853 = vpop.f32.mrf.mxu0
      %6854 = vdwg.mxu0
      %6855 = vmatpush.bf16.msra.mxu0 %v5370
      %6856 = vmatpush.bf16.msra.mxu0 %v5362
      %6857 = vmatpush.bf16.msra.mxu0 %v5354
      %6858 = vmatpush.bf16.msra.mxu0 %v5346
      %6859 = vmatpush.bf16.msra.mxu0 %v5338
      %6860 = vmatpush.bf16.msra.mxu0 %v5330
      %6861 = vmatpush.bf16.msra.mxu0 %v5322
      %6862 = vmatpush.bf16.msra.mxu0 %v5314
      %6863 = vmatmul.bf16.gmra.mxu0 %v1327
      %v6864 = vpop.f32.mrf.mxu0
      %v6865 = vadd.f32 %v6852, %v6864
      %v6866 = vpop.f32.mrf.mxu0
      %6867 = vdwg.mxu0
      %6868 = vmatpush.bf16.msra.mxu0 %v5434
      %6869 = vmatpush.bf16.msra.mxu0 %v5426
      %6870 = vmatpush.bf16.msra.mxu0 %v5418
      %6871 = vmatpush.bf16.msra.mxu0 %v5410
      %6872 = vmatpush.bf16.msra.mxu0 %v5402
      %6873 = vmatpush.bf16.msra.mxu0 %v5394
      %6874 = vmatpush.bf16.msra.mxu0 %v5386
      %6875 = vmatpush.bf16.msra.mxu0 %v5378
      %6876 = vmatmul.bf16.gmra.mxu0 %v1328
      %v6877 = vpop.f32.mrf.mxu0
      %v6878 = vadd.f32 %v6865, %v6877
      %v6879 = vpop.f32.mrf.mxu0
      %6880 = vdwg.mxu0
      %6881 = vmatpush.bf16.msra.mxu0 %v4475
      %6882 = vmatpush.bf16.msra.mxu0 %v4467
      %6883 = vmatpush.bf16.msra.mxu0 %v4459
      %6884 = vmatpush.bf16.msra.mxu0 %v4451
      %6885 = vmatpush.bf16.msra.mxu0 %v4443
      %6886 = vmatpush.bf16.msra.mxu0 %v4435
      %6887 = vmatpush.bf16.msra.mxu0 %v4427
      %6888 = vmatpush.bf16.msra.mxu0 %v4419
      %6889 = vmatmul.bf16.gmra.mxu0 %v1313
      %v6890 = vpop.f32.mrf.mxu0
      %v6891 = vadd.f32 0.0, %v6890
      %v6892 = vpop.f32.mrf.mxu0
      %6893 = vdwg.mxu0
      %6894 = vmatpush.bf16.msra.mxu0 %v4539
      %6895 = vmatpush.bf16.msra.mxu0 %v4531
      %6896 = vmatpush.bf16.msra.mxu0 %v4523
      %6897 = vmatpush.bf16.msra.mxu0 %v4515
      %6898 = vmatpush.bf16.msra.mxu0 %v4507
      %6899 = vmatpush.bf16.msra.mxu0 %v4499
      %6900 = vmatpush.bf16.msra.mxu0 %v4491
      %6901 = vmatpush.bf16.msra.mxu0 %v4483
      %6902 = vmatmul.bf16.gmra.mxu0 %v1314
      %v6903 = vpop.f32.mrf.mxu0
      %v6904 = vadd.f32 %v6891, %v6903
      %v6905 = vpop.f32.mrf.mxu0
      %6906 = vdwg.mxu0
      %6907 = vmatpush.bf16.msra.mxu0 %v4603
      %6908 = vmatpush.bf16.msra.mxu0 %v4595
      %6909 = vmatpush.bf16.msra.mxu0 %v4587
      %6910 = vmatpush.bf16.msra.mxu0 %v4579
      %6911 = vmatpush.bf16.msra.mxu0 %v4571
      %6912 = vmatpush.bf16.msra.mxu0 %v4563
      %6913 = vmatpush.bf16.msra.mxu0 %v4555
      %6914 = vmatpush.bf16.msra.mxu0 %v4547
      %6915 = vmatmul.bf16.gmra.mxu0 %v1315
      %v6916 = vpop.f32.mrf.mxu0
      %v6917 = vadd.f32 %v6904, %v6916
      %v6918 = vpop.f32.mrf.mxu0
      %6919 = vdwg.mxu0
      %6920 = vmatpush.bf16.msra.mxu0 %v4667
      %6921 = vmatpush.bf16.msra.mxu0 %v4659
      %6922 = vmatpush.bf16.msra.mxu0 %v4651
      %6923 = vmatpush.bf16.msra.mxu0 %v4643
      %6924 = vmatpush.bf16.msra.mxu0 %v4635
      %6925 = vmatpush.bf16.msra.mxu0 %v4627
      %6926 = vmatpush.bf16.msra.mxu0 %v4619
      %6927 = vmatpush.bf16.msra.mxu0 %v4611
      %6928 = vmatmul.bf16.gmra.mxu0 %v1316
      %v6929 = vpop.f32.mrf.mxu0
      %v6930 = vadd.f32 %v6917, %v6929
      %v6931 = vpop.f32.mrf.mxu0
      %6932 = vdwg.mxu0
      %6933 = vmatpush.bf16.msra.mxu0 %v4731
      %6934 = vmatpush.bf16.msra.mxu0 %v4723
      %6935 = vmatpush.bf16.msra.mxu0 %v4715
      %6936 = vmatpush.bf16.msra.mxu0 %v4707
      %6937 = vmatpush.bf16.msra.mxu0 %v4699
      %6938 = vmatpush.bf16.msra.mxu0 %v4691
      %6939 = vmatpush.bf16.msra.mxu0 %v4683
      %6940 = vmatpush.bf16.msra.mxu0 %v4675
      %6941 = vmatmul.bf16.gmra.mxu0 %v1317
      %v6942 = vpop.f32.mrf.mxu0
      %v6943 = vadd.f32 %v6930, %v6942
      %v6944 = vpop.f32.mrf.mxu0
      %6945 = vdwg.mxu0
      %6946 = vmatpush.bf16.msra.mxu0 %v4795
      %6947 = vmatpush.bf16.msra.mxu0 %v4787
      %6948 = vmatpush.bf16.msra.mxu0 %v4779
      %6949 = vmatpush.bf16.msra.mxu0 %v4771
      %6950 = vmatpush.bf16.msra.mxu0 %v4763
      %6951 = vmatpush.bf16.msra.mxu0 %v4755
      %6952 = vmatpush.bf16.msra.mxu0 %v4747
      %6953 = vmatpush.bf16.msra.mxu0 %v4739
      %6954 = vmatmul.bf16.gmra.mxu0 %v1318
      %v6955 = vpop.f32.mrf.mxu0
      %v6956 = vadd.f32 %v6943, %v6955
      %v6957 = vpop.f32.mrf.mxu0
      %6958 = vdwg.mxu0
      %6959 = vmatpush.bf16.msra.mxu0 %v4859
      %6960 = vmatpush.bf16.msra.mxu0 %v4851
      %6961 = vmatpush.bf16.msra.mxu0 %v4843
      %6962 = vmatpush.bf16.msra.mxu0 %v4835
      %6963 = vmatpush.bf16.msra.mxu0 %v4827
      %6964 = vmatpush.bf16.msra.mxu0 %v4819
      %6965 = vmatpush.bf16.msra.mxu0 %v4811
      %6966 = vmatpush.bf16.msra.mxu0 %v4803
      %6967 = vmatmul.bf16.gmra.mxu0 %v1319
      %v6968 = vpop.f32.mrf.mxu0
      %v6969 = vadd.f32 %v6956, %v6968
      %v6970 = vpop.f32.mrf.mxu0
      %6971 = vdwg.mxu0
      %6972 = vmatpush.bf16.msra.mxu0 %v4923
      %6973 = vmatpush.bf16.msra.mxu0 %v4915
      %6974 = vmatpush.bf16.msra.mxu0 %v4907
      %6975 = vmatpush.bf16.msra.mxu0 %v4899
      %6976 = vmatpush.bf16.msra.mxu0 %v4891
      %6977 = vmatpush.bf16.msra.mxu0 %v4883
      %6978 = vmatpush.bf16.msra.mxu0 %v4875
      %6979 = vmatpush.bf16.msra.mxu0 %v4867
      %6980 = vmatmul.bf16.gmra.mxu0 %v1320
      %v6981 = vpop.f32.mrf.mxu0
      %v6982 = vadd.f32 %v6969, %v6981
      %v6983 = vpop.f32.mrf.mxu0
      %6984 = vdwg.mxu0
      %6985 = vmatpush.bf16.msra.mxu0 %v4987
      %6986 = vmatpush.bf16.msra.mxu0 %v4979
      %6987 = vmatpush.bf16.msra.mxu0 %v4971
      %6988 = vmatpush.bf16.msra.mxu0 %v4963
      %6989 = vmatpush.bf16.msra.mxu0 %v4955
      %6990 = vmatpush.bf16.msra.mxu0 %v4947
      %6991 = vmatpush.bf16.msra.mxu0 %v4939
      %6992 = vmatpush.bf16.msra.mxu0 %v4931
      %6993 = vmatmul.bf16.gmra.mxu0 %v1321
      %v6994 = vpop.f32.mrf.mxu0
      %v6995 = vadd.f32 %v6982, %v6994
      %v6996 = vpop.f32.mrf.mxu0
      %6997 = vdwg.mxu0
      %6998 = vmatpush.bf16.msra.mxu0 %v5051
      %6999 = vmatpush.bf16.msra.mxu0 %v5043
      %7000 = vmatpush.bf16.msra.mxu0 %v5035
      %7001 = vmatpush.bf16.msra.mxu0 %v5027
      %7002 = vmatpush.bf16.msra.mxu0 %v5019
      %7003 = vmatpush.bf16.msra.mxu0 %v5011
      %7004 = vmatpush.bf16.msra.mxu0 %v5003
      %7005 = vmatpush.bf16.msra.mxu0 %v4995
      %7006 = vmatmul.bf16.gmra.mxu0 %v1322
      %v7007 = vpop.f32.mrf.mxu0
      %v7008 = vadd.f32 %v6995, %v7007
      %v7009 = vpop.f32.mrf.mxu0
      %7010 = vdwg.mxu0
      %7011 = vmatpush.bf16.msra.mxu0 %v5115
      %7012 = vmatpush.bf16.msra.mxu0 %v5107
      %7013 = vmatpush.bf16.msra.mxu0 %v5099
      %7014 = vmatpush.bf16.msra.mxu0 %v5091
      %7015 = vmatpush.bf16.msra.mxu0 %v5083
      %7016 = vmatpush.bf16.msra.mxu0 %v5075
      %7017 = vmatpush.bf16.msra.mxu0 %v5067
      %7018 = vmatpush.bf16.msra.mxu0 %v5059
      %7019 = vmatmul.bf16.gmra.mxu0 %v1323
      %v7020 = vpop.f32.mrf.mxu0
      %v7021 = vadd.f32 %v7008, %v7020
      %v7022 = vpop.f32.mrf.mxu0
      %7023 = vdwg.mxu0
      %7024 = vmatpush.bf16.msra.mxu0 %v5179
      %7025 = vmatpush.bf16.msra.mxu0 %v5171
      %7026 = vmatpush.bf16.msra.mxu0 %v5163
      %7027 = vmatpush.bf16.msra.mxu0 %v5155
      %7028 = vmatpush.bf16.msra.mxu0 %v5147
      %7029 = vmatpush.bf16.msra.mxu0 %v5139
      %7030 = vmatpush.bf16.msra.mxu0 %v5131
      %7031 = vmatpush.bf16.msra.mxu0 %v5123
      %7032 = vmatmul.bf16.gmra.mxu0 %v1324
      %v7033 = vpop.f32.mrf.mxu0
      %v7034 = vadd.f32 %v7021, %v7033
      %v7035 = vpop.f32.mrf.mxu0
      %7036 = vdwg.mxu0
      %7037 = vmatpush.bf16.msra.mxu0 %v5243
      %7038 = vmatpush.bf16.msra.mxu0 %v5235
      %7039 = vmatpush.bf16.msra.mxu0 %v5227
      %7040 = vmatpush.bf16.msra.mxu0 %v5219
      %7041 = vmatpush.bf16.msra.mxu0 %v5211
      %7042 = vmatpush.bf16.msra.mxu0 %v5203
      %7043 = vmatpush.bf16.msra.mxu0 %v5195
      %7044 = vmatpush.bf16.msra.mxu0 %v5187
      %7045 = vmatmul.bf16.gmra.mxu0 %v1325
      %v7046 = vpop.f32.mrf.mxu0
      %v7047 = vadd.f32 %v7034, %v7046
      %v7048 = vpop.f32.mrf.mxu0
      %7049 = vdwg.mxu0
      %7050 = vmatpush.bf16.msra.mxu0 %v5307
      %7051 = vmatpush.bf16.msra.mxu0 %v5299
      %7052 = vmatpush.bf16.msra.mxu0 %v5291
      %7053 = vmatpush.bf16.msra.mxu0 %v5283
      %7054 = vmatpush.bf16.msra.mxu0 %v5275
      %7055 = vmatpush.bf16.msra.mxu0 %v5267
      %7056 = vmatpush.bf16.msra.mxu0 %v5259
      %7057 = vmatpush.bf16.msra.mxu0 %v5251
      %7058 = vmatmul.bf16.gmra.mxu0 %v1326
      %v7059 = vpop.f32.mrf.mxu0
      %v7060 = vadd.f32 %v7047, %v7059
      %v7061 = vpop.f32.mrf.mxu0
      %7062 = vdwg.mxu0
      %7063 = vmatpush.bf16.msra.mxu0 %v5371
      %7064 = vmatpush.bf16.msra.mxu0 %v5363
      %7065 = vmatpush.bf16.msra.mxu0 %v5355
      %7066 = vmatpush.bf16.msra.mxu0 %v5347
      %7067 = vmatpush.bf16.msra.mxu0 %v5339
      %7068 = vmatpush.bf16.msra.mxu0 %v5331
      %7069 = vmatpush.bf16.msra.mxu0 %v5323
      %7070 = vmatpush.bf16.msra.mxu0 %v5315
      %7071 = vmatmul.bf16.gmra.mxu0 %v1327
      %v7072 = vpop.f32.mrf.mxu0
      %v7073 = vadd.f32 %v7060, %v7072
      %v7074 = vpop.f32.mrf.mxu0
      %7075 = vdwg.mxu0
      %7076 = vmatpush.bf16.msra.mxu0 %v5435
      %7077 = vmatpush.bf16.msra.mxu0 %v5427
      %7078 = vmatpush.bf16.msra.mxu0 %v5419
      %7079 = vmatpush.bf16.msra.mxu0 %v5411
      %7080 = vmatpush.bf16.msra.mxu0 %v5403
      %7081 = vmatpush.bf16.msra.mxu0 %v5395
      %7082 = vmatpush.bf16.msra.mxu0 %v5387
      %7083 = vmatpush.bf16.msra.mxu0 %v5379
      %7084 = vmatmul.bf16.gmra.mxu0 %v1328
      %v7085 = vpop.f32.mrf.mxu0
      %v7086 = vadd.f32 %v7073, %v7085
      %v7087 = vpop.f32.mrf.mxu0
      %7088 = vdwg.mxu0
      %7089 = vmatpush.bf16.msra.mxu0 %v4476
      %7090 = vmatpush.bf16.msra.mxu0 %v4468
      %7091 = vmatpush.bf16.msra.mxu0 %v4460
      %7092 = vmatpush.bf16.msra.mxu0 %v4452
      %7093 = vmatpush.bf16.msra.mxu0 %v4444
      %7094 = vmatpush.bf16.msra.mxu0 %v4436
      %7095 = vmatpush.bf16.msra.mxu0 %v4428
      %7096 = vmatpush.bf16.msra.mxu0 %v4420
      %7097 = vmatmul.bf16.gmra.mxu0 %v1313
      %v7098 = vpop.f32.mrf.mxu0
      %v7099 = vadd.f32 0.0, %v7098
      %v7100 = vpop.f32.mrf.mxu0
      %7101 = vdwg.mxu0
      %7102 = vmatpush.bf16.msra.mxu0 %v4540
      %7103 = vmatpush.bf16.msra.mxu0 %v4532
      %7104 = vmatpush.bf16.msra.mxu0 %v4524
      %7105 = vmatpush.bf16.msra.mxu0 %v4516
      %7106 = vmatpush.bf16.msra.mxu0 %v4508
      %7107 = vmatpush.bf16.msra.mxu0 %v4500
      %7108 = vmatpush.bf16.msra.mxu0 %v4492
      %7109 = vmatpush.bf16.msra.mxu0 %v4484
      %7110 = vmatmul.bf16.gmra.mxu0 %v1314
      %v7111 = vpop.f32.mrf.mxu0
      %v7112 = vadd.f32 %v7099, %v7111
      %v7113 = vpop.f32.mrf.mxu0
      %7114 = vdwg.mxu0
      %7115 = vmatpush.bf16.msra.mxu0 %v4604
      %7116 = vmatpush.bf16.msra.mxu0 %v4596
      %7117 = vmatpush.bf16.msra.mxu0 %v4588
      %7118 = vmatpush.bf16.msra.mxu0 %v4580
      %7119 = vmatpush.bf16.msra.mxu0 %v4572
      %7120 = vmatpush.bf16.msra.mxu0 %v4564
      %7121 = vmatpush.bf16.msra.mxu0 %v4556
      %7122 = vmatpush.bf16.msra.mxu0 %v4548
      %7123 = vmatmul.bf16.gmra.mxu0 %v1315
      %v7124 = vpop.f32.mrf.mxu0
      %v7125 = vadd.f32 %v7112, %v7124
      %v7126 = vpop.f32.mrf.mxu0
      %7127 = vdwg.mxu0
      %7128 = vmatpush.bf16.msra.mxu0 %v4668
      %7129 = vmatpush.bf16.msra.mxu0 %v4660
      %7130 = vmatpush.bf16.msra.mxu0 %v4652
      %7131 = vmatpush.bf16.msra.mxu0 %v4644
      %7132 = vmatpush.bf16.msra.mxu0 %v4636
      %7133 = vmatpush.bf16.msra.mxu0 %v4628
      %7134 = vmatpush.bf16.msra.mxu0 %v4620
      %7135 = vmatpush.bf16.msra.mxu0 %v4612
      %7136 = vmatmul.bf16.gmra.mxu0 %v1316
      %v7137 = vpop.f32.mrf.mxu0
      %v7138 = vadd.f32 %v7125, %v7137
      %v7139 = vpop.f32.mrf.mxu0
      %7140 = vdwg.mxu0
      %7141 = vmatpush.bf16.msra.mxu0 %v4732
      %7142 = vmatpush.bf16.msra.mxu0 %v4724
      %7143 = vmatpush.bf16.msra.mxu0 %v4716
      %7144 = vmatpush.bf16.msra.mxu0 %v4708
      %7145 = vmatpush.bf16.msra.mxu0 %v4700
      %7146 = vmatpush.bf16.msra.mxu0 %v4692
      %7147 = vmatpush.bf16.msra.mxu0 %v4684
      %7148 = vmatpush.bf16.msra.mxu0 %v4676
      %7149 = vmatmul.bf16.gmra.mxu0 %v1317
      %v7150 = vpop.f32.mrf.mxu0
      %v7151 = vadd.f32 %v7138, %v7150
      %v7152 = vpop.f32.mrf.mxu0
      %7153 = vdwg.mxu0
      %7154 = vmatpush.bf16.msra.mxu0 %v4796
      %7155 = vmatpush.bf16.msra.mxu0 %v4788
      %7156 = vmatpush.bf16.msra.mxu0 %v4780
      %7157 = vmatpush.bf16.msra.mxu0 %v4772
      %7158 = vmatpush.bf16.msra.mxu0 %v4764
      %7159 = vmatpush.bf16.msra.mxu0 %v4756
      %7160 = vmatpush.bf16.msra.mxu0 %v4748
      %7161 = vmatpush.bf16.msra.mxu0 %v4740
      %7162 = vmatmul.bf16.gmra.mxu0 %v1318
      %v7163 = vpop.f32.mrf.mxu0
      %v7164 = vadd.f32 %v7151, %v7163
      %v7165 = vpop.f32.mrf.mxu0
      %7166 = vdwg.mxu0
      %7167 = vmatpush.bf16.msra.mxu0 %v4860
      %7168 = vmatpush.bf16.msra.mxu0 %v4852
      %7169 = vmatpush.bf16.msra.mxu0 %v4844
      %7170 = vmatpush.bf16.msra.mxu0 %v4836
      %7171 = vmatpush.bf16.msra.mxu0 %v4828
      %7172 = vmatpush.bf16.msra.mxu0 %v4820
      %7173 = vmatpush.bf16.msra.mxu0 %v4812
      %7174 = vmatpush.bf16.msra.mxu0 %v4804
      %7175 = vmatmul.bf16.gmra.mxu0 %v1319
      %v7176 = vpop.f32.mrf.mxu0
      %v7177 = vadd.f32 %v7164, %v7176
      %v7178 = vpop.f32.mrf.mxu0
      %7179 = vdwg.mxu0
      %7180 = vmatpush.bf16.msra.mxu0 %v4924
      %7181 = vmatpush.bf16.msra.mxu0 %v4916
      %7182 = vmatpush.bf16.msra.mxu0 %v4908
      %7183 = vmatpush.bf16.msra.mxu0 %v4900
      %7184 = vmatpush.bf16.msra.mxu0 %v4892
      %7185 = vmatpush.bf16.msra.mxu0 %v4884
      %7186 = vmatpush.bf16.msra.mxu0 %v4876
      %7187 = vmatpush.bf16.msra.mxu0 %v4868
      %7188 = vmatmul.bf16.gmra.mxu0 %v1320
      %v7189 = vpop.f32.mrf.mxu0
      %v7190 = vadd.f32 %v7177, %v7189
      %v7191 = vpop.f32.mrf.mxu0
      %7192 = vdwg.mxu0
      %7193 = vmatpush.bf16.msra.mxu0 %v4988
      %7194 = vmatpush.bf16.msra.mxu0 %v4980
      %7195 = vmatpush.bf16.msra.mxu0 %v4972
      %7196 = vmatpush.bf16.msra.mxu0 %v4964
      %7197 = vmatpush.bf16.msra.mxu0 %v4956
      %7198 = vmatpush.bf16.msra.mxu0 %v4948
      %7199 = vmatpush.bf16.msra.mxu0 %v4940
      %7200 = vmatpush.bf16.msra.mxu0 %v4932
      %7201 = vmatmul.bf16.gmra.mxu0 %v1321
      %v7202 = vpop.f32.mrf.mxu0
      %v7203 = vadd.f32 %v7190, %v7202
      %v7204 = vpop.f32.mrf.mxu0
      %7205 = vdwg.mxu0
      %7206 = vmatpush.bf16.msra.mxu0 %v5052
      %7207 = vmatpush.bf16.msra.mxu0 %v5044
      %7208 = vmatpush.bf16.msra.mxu0 %v5036
      %7209 = vmatpush.bf16.msra.mxu0 %v5028
      %7210 = vmatpush.bf16.msra.mxu0 %v5020
      %7211 = vmatpush.bf16.msra.mxu0 %v5012
      %7212 = vmatpush.bf16.msra.mxu0 %v5004
      %7213 = vmatpush.bf16.msra.mxu0 %v4996
      %7214 = vmatmul.bf16.gmra.mxu0 %v1322
      %v7215 = vpop.f32.mrf.mxu0
      %v7216 = vadd.f32 %v7203, %v7215
      %v7217 = vpop.f32.mrf.mxu0
      %7218 = vdwg.mxu0
      %7219 = vmatpush.bf16.msra.mxu0 %v5116
      %7220 = vmatpush.bf16.msra.mxu0 %v5108
      %7221 = vmatpush.bf16.msra.mxu0 %v5100
      %7222 = vmatpush.bf16.msra.mxu0 %v5092
      %7223 = vmatpush.bf16.msra.mxu0 %v5084
      %7224 = vmatpush.bf16.msra.mxu0 %v5076
      %7225 = vmatpush.bf16.msra.mxu0 %v5068
      %7226 = vmatpush.bf16.msra.mxu0 %v5060
      %7227 = vmatmul.bf16.gmra.mxu0 %v1323
      %v7228 = vpop.f32.mrf.mxu0
      %v7229 = vadd.f32 %v7216, %v7228
      %v7230 = vpop.f32.mrf.mxu0
      %7231 = vdwg.mxu0
      %7232 = vmatpush.bf16.msra.mxu0 %v5180
      %7233 = vmatpush.bf16.msra.mxu0 %v5172
      %7234 = vmatpush.bf16.msra.mxu0 %v5164
      %7235 = vmatpush.bf16.msra.mxu0 %v5156
      %7236 = vmatpush.bf16.msra.mxu0 %v5148
      %7237 = vmatpush.bf16.msra.mxu0 %v5140
      %7238 = vmatpush.bf16.msra.mxu0 %v5132
      %7239 = vmatpush.bf16.msra.mxu0 %v5124
      %7240 = vmatmul.bf16.gmra.mxu0 %v1324
      %v7241 = vpop.f32.mrf.mxu0
      %v7242 = vadd.f32 %v7229, %v7241
      %v7243 = vpop.f32.mrf.mxu0
      %7244 = vdwg.mxu0
      %7245 = vmatpush.bf16.msra.mxu0 %v5244
      %7246 = vmatpush.bf16.msra.mxu0 %v5236
      %7247 = vmatpush.bf16.msra.mxu0 %v5228
      %7248 = vmatpush.bf16.msra.mxu0 %v5220
      %7249 = vmatpush.bf16.msra.mxu0 %v5212
      %7250 = vmatpush.bf16.msra.mxu0 %v5204
      %7251 = vmatpush.bf16.msra.mxu0 %v5196
      %7252 = vmatpush.bf16.msra.mxu0 %v5188
      %7253 = vmatmul.bf16.gmra.mxu0 %v1325
      %v7254 = vpop.f32.mrf.mxu0
      %v7255 = vadd.f32 %v7242, %v7254
      %v7256 = vpop.f32.mrf.mxu0
      %7257 = vdwg.mxu0
      %7258 = vmatpush.bf16.msra.mxu0 %v5308
      %7259 = vmatpush.bf16.msra.mxu0 %v5300
      %7260 = vmatpush.bf16.msra.mxu0 %v5292
      %7261 = vmatpush.bf16.msra.mxu0 %v5284
      %7262 = vmatpush.bf16.msra.mxu0 %v5276
      %7263 = vmatpush.bf16.msra.mxu0 %v5268
      %7264 = vmatpush.bf16.msra.mxu0 %v5260
      %7265 = vmatpush.bf16.msra.mxu0 %v5252
      %7266 = vmatmul.bf16.gmra.mxu0 %v1326
      %v7267 = vpop.f32.mrf.mxu0
      %v7268 = vadd.f32 %v7255, %v7267
      %v7269 = vpop.f32.mrf.mxu0
      %7270 = vdwg.mxu0
      %7271 = vmatpush.bf16.msra.mxu0 %v5372
      %7272 = vmatpush.bf16.msra.mxu0 %v5364
      %7273 = vmatpush.bf16.msra.mxu0 %v5356
      %7274 = vmatpush.bf16.msra.mxu0 %v5348
      %7275 = vmatpush.bf16.msra.mxu0 %v5340
      %7276 = vmatpush.bf16.msra.mxu0 %v5332
      %7277 = vmatpush.bf16.msra.mxu0 %v5324
      %7278 = vmatpush.bf16.msra.mxu0 %v5316
      %7279 = vmatmul.bf16.gmra.mxu0 %v1327
      %v7280 = vpop.f32.mrf.mxu0
      %v7281 = vadd.f32 %v7268, %v7280
      %v7282 = vpop.f32.mrf.mxu0
      %7283 = vdwg.mxu0
      %7284 = vmatpush.bf16.msra.mxu0 %v5436
      %7285 = vmatpush.bf16.msra.mxu0 %v5428
      %7286 = vmatpush.bf16.msra.mxu0 %v5420
      %7287 = vmatpush.bf16.msra.mxu0 %v5412
      %7288 = vmatpush.bf16.msra.mxu0 %v5404
      %7289 = vmatpush.bf16.msra.mxu0 %v5396
      %7290 = vmatpush.bf16.msra.mxu0 %v5388
      %7291 = vmatpush.bf16.msra.mxu0 %v5380
      %7292 = vmatmul.bf16.gmra.mxu0 %v1328
      %v7293 = vpop.f32.mrf.mxu0
      %v7294 = vadd.f32 %v7281, %v7293
      %v7295 = vpop.f32.mrf.mxu0
      %7296 = vdwg.mxu0
      %7297 = vmatpush.bf16.msra.mxu0 %v4477
      %7298 = vmatpush.bf16.msra.mxu0 %v4469
      %7299 = vmatpush.bf16.msra.mxu0 %v4461
      %7300 = vmatpush.bf16.msra.mxu0 %v4453
      %7301 = vmatpush.bf16.msra.mxu0 %v4445
      %7302 = vmatpush.bf16.msra.mxu0 %v4437
      %7303 = vmatpush.bf16.msra.mxu0 %v4429
      %7304 = vmatpush.bf16.msra.mxu0 %v4421
      %7305 = vmatmul.bf16.gmra.mxu0 %v1313
      %v7306 = vpop.f32.mrf.mxu0
      %v7307 = vadd.f32 0.0, %v7306
      %v7308 = vpop.f32.mrf.mxu0
      %7309 = vdwg.mxu0
      %7310 = vmatpush.bf16.msra.mxu0 %v4541
      %7311 = vmatpush.bf16.msra.mxu0 %v4533
      %7312 = vmatpush.bf16.msra.mxu0 %v4525
      %7313 = vmatpush.bf16.msra.mxu0 %v4517
      %7314 = vmatpush.bf16.msra.mxu0 %v4509
      %7315 = vmatpush.bf16.msra.mxu0 %v4501
      %7316 = vmatpush.bf16.msra.mxu0 %v4493
      %7317 = vmatpush.bf16.msra.mxu0 %v4485
      %7318 = vmatmul.bf16.gmra.mxu0 %v1314
      %v7319 = vpop.f32.mrf.mxu0
      %v7320 = vadd.f32 %v7307, %v7319
      %v7321 = vpop.f32.mrf.mxu0
      %7322 = vdwg.mxu0
      %7323 = vmatpush.bf16.msra.mxu0 %v4605
      %7324 = vmatpush.bf16.msra.mxu0 %v4597
      %7325 = vmatpush.bf16.msra.mxu0 %v4589
      %7326 = vmatpush.bf16.msra.mxu0 %v4581
      %7327 = vmatpush.bf16.msra.mxu0 %v4573
      %7328 = vmatpush.bf16.msra.mxu0 %v4565
      %7329 = vmatpush.bf16.msra.mxu0 %v4557
      %7330 = vmatpush.bf16.msra.mxu0 %v4549
      %7331 = vmatmul.bf16.gmra.mxu0 %v1315
      %v7332 = vpop.f32.mrf.mxu0
      %v7333 = vadd.f32 %v7320, %v7332
      %v7334 = vpop.f32.mrf.mxu0
      %7335 = vdwg.mxu0
      %7336 = vmatpush.bf16.msra.mxu0 %v4669
      %7337 = vmatpush.bf16.msra.mxu0 %v4661
      %7338 = vmatpush.bf16.msra.mxu0 %v4653
      %7339 = vmatpush.bf16.msra.mxu0 %v4645
      %7340 = vmatpush.bf16.msra.mxu0 %v4637
      %7341 = vmatpush.bf16.msra.mxu0 %v4629
      %7342 = vmatpush.bf16.msra.mxu0 %v4621
      %7343 = vmatpush.bf16.msra.mxu0 %v4613
      %7344 = vmatmul.bf16.gmra.mxu0 %v1316
      %v7345 = vpop.f32.mrf.mxu0
      %v7346 = vadd.f32 %v7333, %v7345
      %v7347 = vpop.f32.mrf.mxu0
      %7348 = vdwg.mxu0
      %7349 = vmatpush.bf16.msra.mxu0 %v4733
      %7350 = vmatpush.bf16.msra.mxu0 %v4725
      %7351 = vmatpush.bf16.msra.mxu0 %v4717
      %7352 = vmatpush.bf16.msra.mxu0 %v4709
      %7353 = vmatpush.bf16.msra.mxu0 %v4701
      %7354 = vmatpush.bf16.msra.mxu0 %v4693
      %7355 = vmatpush.bf16.msra.mxu0 %v4685
      %7356 = vmatpush.bf16.msra.mxu0 %v4677
      %7357 = vmatmul.bf16.gmra.mxu0 %v1317
      %v7358 = vpop.f32.mrf.mxu0
      %v7359 = vadd.f32 %v7346, %v7358
      %v7360 = vpop.f32.mrf.mxu0
      %7361 = vdwg.mxu0
      %7362 = vmatpush.bf16.msra.mxu0 %v4797
      %7363 = vmatpush.bf16.msra.mxu0 %v4789
      %7364 = vmatpush.bf16.msra.mxu0 %v4781
      %7365 = vmatpush.bf16.msra.mxu0 %v4773
      %7366 = vmatpush.bf16.msra.mxu0 %v4765
      %7367 = vmatpush.bf16.msra.mxu0 %v4757
      %7368 = vmatpush.bf16.msra.mxu0 %v4749
      %7369 = vmatpush.bf16.msra.mxu0 %v4741
      %7370 = vmatmul.bf16.gmra.mxu0 %v1318
      %v7371 = vpop.f32.mrf.mxu0
      %v7372 = vadd.f32 %v7359, %v7371
      %v7373 = vpop.f32.mrf.mxu0
      %7374 = vdwg.mxu0
      %7375 = vmatpush.bf16.msra.mxu0 %v4861
      %7376 = vmatpush.bf16.msra.mxu0 %v4853
      %7377 = vmatpush.bf16.msra.mxu0 %v4845
      %7378 = vmatpush.bf16.msra.mxu0 %v4837
      %7379 = vmatpush.bf16.msra.mxu0 %v4829
      %7380 = vmatpush.bf16.msra.mxu0 %v4821
      %7381 = vmatpush.bf16.msra.mxu0 %v4813
      %7382 = vmatpush.bf16.msra.mxu0 %v4805
      %7383 = vmatmul.bf16.gmra.mxu0 %v1319
      %v7384 = vpop.f32.mrf.mxu0
      %v7385 = vadd.f32 %v7372, %v7384
      %v7386 = vpop.f32.mrf.mxu0
      %7387 = vdwg.mxu0
      %7388 = vmatpush.bf16.msra.mxu0 %v4925
      %7389 = vmatpush.bf16.msra.mxu0 %v4917
      %7390 = vmatpush.bf16.msra.mxu0 %v4909
      %7391 = vmatpush.bf16.msra.mxu0 %v4901
      %7392 = vmatpush.bf16.msra.mxu0 %v4893
      %7393 = vmatpush.bf16.msra.mxu0 %v4885
      %7394 = vmatpush.bf16.msra.mxu0 %v4877
      %7395 = vmatpush.bf16.msra.mxu0 %v4869
      %7396 = vmatmul.bf16.gmra.mxu0 %v1320
      %v7397 = vpop.f32.mrf.mxu0
      %v7398 = vadd.f32 %v7385, %v7397
      %v7399 = vpop.f32.mrf.mxu0
      %7400 = vdwg.mxu0
      %7401 = vmatpush.bf16.msra.mxu0 %v4989
      %7402 = vmatpush.bf16.msra.mxu0 %v4981
      %7403 = vmatpush.bf16.msra.mxu0 %v4973
      %7404 = vmatpush.bf16.msra.mxu0 %v4965
      %7405 = vmatpush.bf16.msra.mxu0 %v4957
      %7406 = vmatpush.bf16.msra.mxu0 %v4949
      %7407 = vmatpush.bf16.msra.mxu0 %v4941
      %7408 = vmatpush.bf16.msra.mxu0 %v4933
      %7409 = vmatmul.bf16.gmra.mxu0 %v1321
      %v7410 = vpop.f32.mrf.mxu0
      %v7411 = vadd.f32 %v7398, %v7410
      %v7412 = vpop.f32.mrf.mxu0
      %7413 = vdwg.mxu0
      %7414 = vmatpush.bf16.msra.mxu0 %v5053
      %7415 = vmatpush.bf16.msra.mxu0 %v5045
      %7416 = vmatpush.bf16.msra.mxu0 %v5037
      %7417 = vmatpush.bf16.msra.mxu0 %v5029
      %7418 = vmatpush.bf16.msra.mxu0 %v5021
      %7419 = vmatpush.bf16.msra.mxu0 %v5013
      %7420 = vmatpush.bf16.msra.mxu0 %v5005
      %7421 = vmatpush.bf16.msra.mxu0 %v4997
      %7422 = vmatmul.bf16.gmra.mxu0 %v1322
      %v7423 = vpop.f32.mrf.mxu0
      %v7424 = vadd.f32 %v7411, %v7423
      %v7425 = vpop.f32.mrf.mxu0
      %7426 = vdwg.mxu0
      %7427 = vmatpush.bf16.msra.mxu0 %v5117
      %7428 = vmatpush.bf16.msra.mxu0 %v5109
      %7429 = vmatpush.bf16.msra.mxu0 %v5101
      %7430 = vmatpush.bf16.msra.mxu0 %v5093
      %7431 = vmatpush.bf16.msra.mxu0 %v5085
      %7432 = vmatpush.bf16.msra.mxu0 %v5077
      %7433 = vmatpush.bf16.msra.mxu0 %v5069
      %7434 = vmatpush.bf16.msra.mxu0 %v5061
      %7435 = vmatmul.bf16.gmra.mxu0 %v1323
      %v7436 = vpop.f32.mrf.mxu0
      %v7437 = vadd.f32 %v7424, %v7436
      %v7438 = vpop.f32.mrf.mxu0
      %7439 = vdwg.mxu0
      %7440 = vmatpush.bf16.msra.mxu0 %v5181
      %7441 = vmatpush.bf16.msra.mxu0 %v5173
      %7442 = vmatpush.bf16.msra.mxu0 %v5165
      %7443 = vmatpush.bf16.msra.mxu0 %v5157
      %7444 = vmatpush.bf16.msra.mxu0 %v5149
      %7445 = vmatpush.bf16.msra.mxu0 %v5141
      %7446 = vmatpush.bf16.msra.mxu0 %v5133
      %7447 = vmatpush.bf16.msra.mxu0 %v5125
      %7448 = vmatmul.bf16.gmra.mxu0 %v1324
      %v7449 = vpop.f32.mrf.mxu0
      %v7450 = vadd.f32 %v7437, %v7449
      %v7451 = vpop.f32.mrf.mxu0
      %7452 = vdwg.mxu0
      %7453 = vmatpush.bf16.msra.mxu0 %v5245
      %7454 = vmatpush.bf16.msra.mxu0 %v5237
      %7455 = vmatpush.bf16.msra.mxu0 %v5229
      %7456 = vmatpush.bf16.msra.mxu0 %v5221
      %7457 = vmatpush.bf16.msra.mxu0 %v5213
      %7458 = vmatpush.bf16.msra.mxu0 %v5205
      %7459 = vmatpush.bf16.msra.mxu0 %v5197
      %7460 = vmatpush.bf16.msra.mxu0 %v5189
      %7461 = vmatmul.bf16.gmra.mxu0 %v1325
      %v7462 = vpop.f32.mrf.mxu0
      %v7463 = vadd.f32 %v7450, %v7462
      %v7464 = vpop.f32.mrf.mxu0
      %7465 = vdwg.mxu0
      %7466 = vmatpush.bf16.msra.mxu0 %v5309
      %7467 = vmatpush.bf16.msra.mxu0 %v5301
      %7468 = vmatpush.bf16.msra.mxu0 %v5293
      %7469 = vmatpush.bf16.msra.mxu0 %v5285
      %7470 = vmatpush.bf16.msra.mxu0 %v5277
      %7471 = vmatpush.bf16.msra.mxu0 %v5269
      %7472 = vmatpush.bf16.msra.mxu0 %v5261
      %7473 = vmatpush.bf16.msra.mxu0 %v5253
      %7474 = vmatmul.bf16.gmra.mxu0 %v1326
      %v7475 = vpop.f32.mrf.mxu0
      %v7476 = vadd.f32 %v7463, %v7475
      %v7477 = vpop.f32.mrf.mxu0
      %7478 = vdwg.mxu0
      %7479 = vmatpush.bf16.msra.mxu0 %v5373
      %7480 = vmatpush.bf16.msra.mxu0 %v5365
      %7481 = vmatpush.bf16.msra.mxu0 %v5357
      %7482 = vmatpush.bf16.msra.mxu0 %v5349
      %7483 = vmatpush.bf16.msra.mxu0 %v5341
      %7484 = vmatpush.bf16.msra.mxu0 %v5333
      %7485 = vmatpush.bf16.msra.mxu0 %v5325
      %7486 = vmatpush.bf16.msra.mxu0 %v5317
      %7487 = vmatmul.bf16.gmra.mxu0 %v1327
      %v7488 = vpop.f32.mrf.mxu0
      %v7489 = vadd.f32 %v7476, %v7488
      %v7490 = vpop.f32.mrf.mxu0
      %7491 = vdwg.mxu0
      %7492 = vmatpush.bf16.msra.mxu0 %v5437
      %7493 = vmatpush.bf16.msra.mxu0 %v5429
      %7494 = vmatpush.bf16.msra.mxu0 %v5421
      %7495 = vmatpush.bf16.msra.mxu0 %v5413
      %7496 = vmatpush.bf16.msra.mxu0 %v5405
      %7497 = vmatpush.bf16.msra.mxu0 %v5397
      %7498 = vmatpush.bf16.msra.mxu0 %v5389
      %7499 = vmatpush.bf16.msra.mxu0 %v5381
      %7500 = vmatmul.bf16.gmra.mxu0 %v1328
      %v7501 = vpop.f32.mrf.mxu0
      %v7502 = vadd.f32 %v7489, %v7501
      %v7503 = vpop.f32.mrf.mxu0
      %7504 = vdwg.mxu0
      %7505 = vmatpush.bf16.msra.mxu0 %v4478
      %7506 = vmatpush.bf16.msra.mxu0 %v4470
      %7507 = vmatpush.bf16.msra.mxu0 %v4462
      %7508 = vmatpush.bf16.msra.mxu0 %v4454
      %7509 = vmatpush.bf16.msra.mxu0 %v4446
      %7510 = vmatpush.bf16.msra.mxu0 %v4438
      %7511 = vmatpush.bf16.msra.mxu0 %v4430
      %7512 = vmatpush.bf16.msra.mxu0 %v4422
      %7513 = vmatmul.bf16.gmra.mxu0 %v1313
      %v7514 = vpop.f32.mrf.mxu0
      %v7515 = vadd.f32 0.0, %v7514
      %v7516 = vpop.f32.mrf.mxu0
      %7517 = vdwg.mxu0
      %7518 = vmatpush.bf16.msra.mxu0 %v4542
      %7519 = vmatpush.bf16.msra.mxu0 %v4534
      %7520 = vmatpush.bf16.msra.mxu0 %v4526
      %7521 = vmatpush.bf16.msra.mxu0 %v4518
      %7522 = vmatpush.bf16.msra.mxu0 %v4510
      %7523 = vmatpush.bf16.msra.mxu0 %v4502
      %7524 = vmatpush.bf16.msra.mxu0 %v4494
      %7525 = vmatpush.bf16.msra.mxu0 %v4486
      %7526 = vmatmul.bf16.gmra.mxu0 %v1314
      %v7527 = vpop.f32.mrf.mxu0
      %v7528 = vadd.f32 %v7515, %v7527
      %v7529 = vpop.f32.mrf.mxu0
      %7530 = vdwg.mxu0
      %7531 = vmatpush.bf16.msra.mxu0 %v4606
      %7532 = vmatpush.bf16.msra.mxu0 %v4598
      %7533 = vmatpush.bf16.msra.mxu0 %v4590
      %7534 = vmatpush.bf16.msra.mxu0 %v4582
      %7535 = vmatpush.bf16.msra.mxu0 %v4574
      %7536 = vmatpush.bf16.msra.mxu0 %v4566
      %7537 = vmatpush.bf16.msra.mxu0 %v4558
      %7538 = vmatpush.bf16.msra.mxu0 %v4550
      %7539 = vmatmul.bf16.gmra.mxu0 %v1315
      %v7540 = vpop.f32.mrf.mxu0
      %v7541 = vadd.f32 %v7528, %v7540
      %v7542 = vpop.f32.mrf.mxu0
      %7543 = vdwg.mxu0
      %7544 = vmatpush.bf16.msra.mxu0 %v4670
      %7545 = vmatpush.bf16.msra.mxu0 %v4662
      %7546 = vmatpush.bf16.msra.mxu0 %v4654
      %7547 = vmatpush.bf16.msra.mxu0 %v4646
      %7548 = vmatpush.bf16.msra.mxu0 %v4638
      %7549 = vmatpush.bf16.msra.mxu0 %v4630
      %7550 = vmatpush.bf16.msra.mxu0 %v4622
      %7551 = vmatpush.bf16.msra.mxu0 %v4614
      %7552 = vmatmul.bf16.gmra.mxu0 %v1316
      %v7553 = vpop.f32.mrf.mxu0
      %v7554 = vadd.f32 %v7541, %v7553
      %v7555 = vpop.f32.mrf.mxu0
      %7556 = vdwg.mxu0
      %7557 = vmatpush.bf16.msra.mxu0 %v4734
      %7558 = vmatpush.bf16.msra.mxu0 %v4726
      %7559 = vmatpush.bf16.msra.mxu0 %v4718
      %7560 = vmatpush.bf16.msra.mxu0 %v4710
      %7561 = vmatpush.bf16.msra.mxu0 %v4702
      %7562 = vmatpush.bf16.msra.mxu0 %v4694
      %7563 = vmatpush.bf16.msra.mxu0 %v4686
      %7564 = vmatpush.bf16.msra.mxu0 %v4678
      %7565 = vmatmul.bf16.gmra.mxu0 %v1317
      %v7566 = vpop.f32.mrf.mxu0
      %v7567 = vadd.f32 %v7554, %v7566
      %v7568 = vpop.f32.mrf.mxu0
      %7569 = vdwg.mxu0
      %7570 = vmatpush.bf16.msra.mxu0 %v4798
      %7571 = vmatpush.bf16.msra.mxu0 %v4790
      %7572 = vmatpush.bf16.msra.mxu0 %v4782
      %7573 = vmatpush.bf16.msra.mxu0 %v4774
      %7574 = vmatpush.bf16.msra.mxu0 %v4766
      %7575 = vmatpush.bf16.msra.mxu0 %v4758
      %7576 = vmatpush.bf16.msra.mxu0 %v4750
      %7577 = vmatpush.bf16.msra.mxu0 %v4742
      %7578 = vmatmul.bf16.gmra.mxu0 %v1318
      %v7579 = vpop.f32.mrf.mxu0
      %v7580 = vadd.f32 %v7567, %v7579
      %v7581 = vpop.f32.mrf.mxu0
      %7582 = vdwg.mxu0
      %7583 = vmatpush.bf16.msra.mxu0 %v4862
      %7584 = vmatpush.bf16.msra.mxu0 %v4854
      %7585 = vmatpush.bf16.msra.mxu0 %v4846
      %7586 = vmatpush.bf16.msra.mxu0 %v4838
      %7587 = vmatpush.bf16.msra.mxu0 %v4830
      %7588 = vmatpush.bf16.msra.mxu0 %v4822
      %7589 = vmatpush.bf16.msra.mxu0 %v4814
      %7590 = vmatpush.bf16.msra.mxu0 %v4806
      %7591 = vmatmul.bf16.gmra.mxu0 %v1319
      %v7592 = vpop.f32.mrf.mxu0
      %v7593 = vadd.f32 %v7580, %v7592
      %v7594 = vpop.f32.mrf.mxu0
      %7595 = vdwg.mxu0
      %7596 = vmatpush.bf16.msra.mxu0 %v4926
      %7597 = vmatpush.bf16.msra.mxu0 %v4918
      %7598 = vmatpush.bf16.msra.mxu0 %v4910
      %7599 = vmatpush.bf16.msra.mxu0 %v4902
      %7600 = vmatpush.bf16.msra.mxu0 %v4894
      %7601 = vmatpush.bf16.msra.mxu0 %v4886
      %7602 = vmatpush.bf16.msra.mxu0 %v4878
      %7603 = vmatpush.bf16.msra.mxu0 %v4870
      %7604 = vmatmul.bf16.gmra.mxu0 %v1320
      %v7605 = vpop.f32.mrf.mxu0
      %v7606 = vadd.f32 %v7593, %v7605
      %v7607 = vpop.f32.mrf.mxu0
      %7608 = vdwg.mxu0
      %7609 = vmatpush.bf16.msra.mxu0 %v4990
      %7610 = vmatpush.bf16.msra.mxu0 %v4982
      %7611 = vmatpush.bf16.msra.mxu0 %v4974
      %7612 = vmatpush.bf16.msra.mxu0 %v4966
      %7613 = vmatpush.bf16.msra.mxu0 %v4958
      %7614 = vmatpush.bf16.msra.mxu0 %v4950
      %7615 = vmatpush.bf16.msra.mxu0 %v4942
      %7616 = vmatpush.bf16.msra.mxu0 %v4934
      %7617 = vmatmul.bf16.gmra.mxu0 %v1321
      %v7618 = vpop.f32.mrf.mxu0
      %v7619 = vadd.f32 %v7606, %v7618
      %v7620 = vpop.f32.mrf.mxu0
      %7621 = vdwg.mxu0
      %7622 = vmatpush.bf16.msra.mxu0 %v5054
      %7623 = vmatpush.bf16.msra.mxu0 %v5046
      %7624 = vmatpush.bf16.msra.mxu0 %v5038
      %7625 = vmatpush.bf16.msra.mxu0 %v5030
      %7626 = vmatpush.bf16.msra.mxu0 %v5022
      %7627 = vmatpush.bf16.msra.mxu0 %v5014
      %7628 = vmatpush.bf16.msra.mxu0 %v5006
      %7629 = vmatpush.bf16.msra.mxu0 %v4998
      %7630 = vmatmul.bf16.gmra.mxu0 %v1322
      %v7631 = vpop.f32.mrf.mxu0
      %v7632 = vadd.f32 %v7619, %v7631
      %v7633 = vpop.f32.mrf.mxu0
      %7634 = vdwg.mxu0
      %7635 = vmatpush.bf16.msra.mxu0 %v5118
      %7636 = vmatpush.bf16.msra.mxu0 %v5110
      %7637 = vmatpush.bf16.msra.mxu0 %v5102
      %7638 = vmatpush.bf16.msra.mxu0 %v5094
      %7639 = vmatpush.bf16.msra.mxu0 %v5086
      %7640 = vmatpush.bf16.msra.mxu0 %v5078
      %7641 = vmatpush.bf16.msra.mxu0 %v5070
      %7642 = vmatpush.bf16.msra.mxu0 %v5062
      %7643 = vmatmul.bf16.gmra.mxu0 %v1323
      %v7644 = vpop.f32.mrf.mxu0
      %v7645 = vadd.f32 %v7632, %v7644
      %v7646 = vpop.f32.mrf.mxu0
      %7647 = vdwg.mxu0
      %7648 = vmatpush.bf16.msra.mxu0 %v5182
      %7649 = vmatpush.bf16.msra.mxu0 %v5174
      %7650 = vmatpush.bf16.msra.mxu0 %v5166
      %7651 = vmatpush.bf16.msra.mxu0 %v5158
      %7652 = vmatpush.bf16.msra.mxu0 %v5150
      %7653 = vmatpush.bf16.msra.mxu0 %v5142
      %7654 = vmatpush.bf16.msra.mxu0 %v5134
      %7655 = vmatpush.bf16.msra.mxu0 %v5126
      %7656 = vmatmul.bf16.gmra.mxu0 %v1324
      %v7657 = vpop.f32.mrf.mxu0
      %v7658 = vadd.f32 %v7645, %v7657
      %v7659 = vpop.f32.mrf.mxu0
      %7660 = vdwg.mxu0
      %7661 = vmatpush.bf16.msra.mxu0 %v5246
      %7662 = vmatpush.bf16.msra.mxu0 %v5238
      %7663 = vmatpush.bf16.msra.mxu0 %v5230
      %7664 = vmatpush.bf16.msra.mxu0 %v5222
      %7665 = vmatpush.bf16.msra.mxu0 %v5214
      %7666 = vmatpush.bf16.msra.mxu0 %v5206
      %7667 = vmatpush.bf16.msra.mxu0 %v5198
      %7668 = vmatpush.bf16.msra.mxu0 %v5190
      %7669 = vmatmul.bf16.gmra.mxu0 %v1325
      %v7670 = vpop.f32.mrf.mxu0
      %v7671 = vadd.f32 %v7658, %v7670
      %v7672 = vpop.f32.mrf.mxu0
      %7673 = vdwg.mxu0
      %7674 = vmatpush.bf16.msra.mxu0 %v5310
      %7675 = vmatpush.bf16.msra.mxu0 %v5302
      %7676 = vmatpush.bf16.msra.mxu0 %v5294
      %7677 = vmatpush.bf16.msra.mxu0 %v5286
      %7678 = vmatpush.bf16.msra.mxu0 %v5278
      %7679 = vmatpush.bf16.msra.mxu0 %v5270
      %7680 = vmatpush.bf16.msra.mxu0 %v5262
      %7681 = vmatpush.bf16.msra.mxu0 %v5254
      %7682 = vmatmul.bf16.gmra.mxu0 %v1326
      %v7683 = vpop.f32.mrf.mxu0
      %v7684 = vadd.f32 %v7671, %v7683
      %v7685 = vpop.f32.mrf.mxu0
      %7686 = vdwg.mxu0
      %7687 = vmatpush.bf16.msra.mxu0 %v5374
      %7688 = vmatpush.bf16.msra.mxu0 %v5366
      %7689 = vmatpush.bf16.msra.mxu0 %v5358
      %7690 = vmatpush.bf16.msra.mxu0 %v5350
      %7691 = vmatpush.bf16.msra.mxu0 %v5342
      %7692 = vmatpush.bf16.msra.mxu0 %v5334
      %7693 = vmatpush.bf16.msra.mxu0 %v5326
      %7694 = vmatpush.bf16.msra.mxu0 %v5318
      %7695 = vmatmul.bf16.gmra.mxu0 %v1327
      %v7696 = vpop.f32.mrf.mxu0
      %v7697 = vadd.f32 %v7684, %v7696
      %v7698 = vpop.f32.mrf.mxu0
      %7699 = vdwg.mxu0
      %7700 = vmatpush.bf16.msra.mxu0 %v5438
      %7701 = vmatpush.bf16.msra.mxu0 %v5430
      %7702 = vmatpush.bf16.msra.mxu0 %v5422
      %7703 = vmatpush.bf16.msra.mxu0 %v5414
      %7704 = vmatpush.bf16.msra.mxu0 %v5406
      %7705 = vmatpush.bf16.msra.mxu0 %v5398
      %7706 = vmatpush.bf16.msra.mxu0 %v5390
      %7707 = vmatpush.bf16.msra.mxu0 %v5382
      %7708 = vmatmul.bf16.gmra.mxu0 %v1328
      %v7709 = vpop.f32.mrf.mxu0
      %v7710 = vadd.f32 %v7697, %v7709
      %v7711 = vpop.f32.mrf.mxu0
      %7712 = vdwg.mxu0
      %7713 = vmatpush.bf16.msra.mxu0 %v4479
      %7714 = vmatpush.bf16.msra.mxu0 %v4471
      %7715 = vmatpush.bf16.msra.mxu0 %v4463
      %7716 = vmatpush.bf16.msra.mxu0 %v4455
      %7717 = vmatpush.bf16.msra.mxu0 %v4447
      %7718 = vmatpush.bf16.msra.mxu0 %v4439
      %7719 = vmatpush.bf16.msra.mxu0 %v4431
      %7720 = vmatpush.bf16.msra.mxu0 %v4423
      %7721 = vmatmul.bf16.gmra.mxu0 %v1313
      %v7722 = vpop.f32.mrf.mxu0
      %v7723 = vadd.f32 0.0, %v7722
      %v7724 = vpop.f32.mrf.mxu0
      %7725 = vdwg.mxu0
      %7726 = vmatpush.bf16.msra.mxu0 %v4543
      %7727 = vmatpush.bf16.msra.mxu0 %v4535
      %7728 = vmatpush.bf16.msra.mxu0 %v4527
      %7729 = vmatpush.bf16.msra.mxu0 %v4519
      %7730 = vmatpush.bf16.msra.mxu0 %v4511
      %7731 = vmatpush.bf16.msra.mxu0 %v4503
      %7732 = vmatpush.bf16.msra.mxu0 %v4495
      %7733 = vmatpush.bf16.msra.mxu0 %v4487
      %7734 = vmatmul.bf16.gmra.mxu0 %v1314
      %v7735 = vpop.f32.mrf.mxu0
      %v7736 = vadd.f32 %v7723, %v7735
      %v7737 = vpop.f32.mrf.mxu0
      %7738 = vdwg.mxu0
      %7739 = vmatpush.bf16.msra.mxu0 %v4607
      %7740 = vmatpush.bf16.msra.mxu0 %v4599
      %7741 = vmatpush.bf16.msra.mxu0 %v4591
      %7742 = vmatpush.bf16.msra.mxu0 %v4583
      %7743 = vmatpush.bf16.msra.mxu0 %v4575
      %7744 = vmatpush.bf16.msra.mxu0 %v4567
      %7745 = vmatpush.bf16.msra.mxu0 %v4559
      %7746 = vmatpush.bf16.msra.mxu0 %v4551
      %7747 = vmatmul.bf16.gmra.mxu0 %v1315
      %v7748 = vpop.f32.mrf.mxu0
      %v7749 = vadd.f32 %v7736, %v7748
      %v7750 = vpop.f32.mrf.mxu0
      %7751 = vdwg.mxu0
      %7752 = vmatpush.bf16.msra.mxu0 %v4671
      %7753 = vmatpush.bf16.msra.mxu0 %v4663
      %7754 = vmatpush.bf16.msra.mxu0 %v4655
      %7755 = vmatpush.bf16.msra.mxu0 %v4647
      %7756 = vmatpush.bf16.msra.mxu0 %v4639
      %7757 = vmatpush.bf16.msra.mxu0 %v4631
      %7758 = vmatpush.bf16.msra.mxu0 %v4623
      %7759 = vmatpush.bf16.msra.mxu0 %v4615
      %7760 = vmatmul.bf16.gmra.mxu0 %v1316
      %v7761 = vpop.f32.mrf.mxu0
      %v7762 = vadd.f32 %v7749, %v7761
      %v7763 = vpop.f32.mrf.mxu0
      %7764 = vdwg.mxu0
      %7765 = vmatpush.bf16.msra.mxu0 %v4735
      %7766 = vmatpush.bf16.msra.mxu0 %v4727
      %7767 = vmatpush.bf16.msra.mxu0 %v4719
      %7768 = vmatpush.bf16.msra.mxu0 %v4711
      %7769 = vmatpush.bf16.msra.mxu0 %v4703
      %7770 = vmatpush.bf16.msra.mxu0 %v4695
      %7771 = vmatpush.bf16.msra.mxu0 %v4687
      %7772 = vmatpush.bf16.msra.mxu0 %v4679
      %7773 = vmatmul.bf16.gmra.mxu0 %v1317
      %v7774 = vpop.f32.mrf.mxu0
      %v7775 = vadd.f32 %v7762, %v7774
      %v7776 = vpop.f32.mrf.mxu0
      %7777 = vdwg.mxu0
      %7778 = vmatpush.bf16.msra.mxu0 %v4799
      %7779 = vmatpush.bf16.msra.mxu0 %v4791
      %7780 = vmatpush.bf16.msra.mxu0 %v4783
      %7781 = vmatpush.bf16.msra.mxu0 %v4775
      %7782 = vmatpush.bf16.msra.mxu0 %v4767
      %7783 = vmatpush.bf16.msra.mxu0 %v4759
      %7784 = vmatpush.bf16.msra.mxu0 %v4751
      %7785 = vmatpush.bf16.msra.mxu0 %v4743
      %7786 = vmatmul.bf16.gmra.mxu0 %v1318
      %v7787 = vpop.f32.mrf.mxu0
      %v7788 = vadd.f32 %v7775, %v7787
      %v7789 = vpop.f32.mrf.mxu0
      %7790 = vdwg.mxu0
      %7791 = vmatpush.bf16.msra.mxu0 %v4863
      %7792 = vmatpush.bf16.msra.mxu0 %v4855
      %7793 = vmatpush.bf16.msra.mxu0 %v4847
      %7794 = vmatpush.bf16.msra.mxu0 %v4839
      %7795 = vmatpush.bf16.msra.mxu0 %v4831
      %7796 = vmatpush.bf16.msra.mxu0 %v4823
      %7797 = vmatpush.bf16.msra.mxu0 %v4815
      %7798 = vmatpush.bf16.msra.mxu0 %v4807
      %7799 = vmatmul.bf16.gmra.mxu0 %v1319
      %v7800 = vpop.f32.mrf.mxu0
      %v7801 = vadd.f32 %v7788, %v7800
      %v7802 = vpop.f32.mrf.mxu0
      %7803 = vdwg.mxu0
      %7804 = vmatpush.bf16.msra.mxu0 %v4927
      %7805 = vmatpush.bf16.msra.mxu0 %v4919
      %7806 = vmatpush.bf16.msra.mxu0 %v4911
      %7807 = vmatpush.bf16.msra.mxu0 %v4903
      %7808 = vmatpush.bf16.msra.mxu0 %v4895
      %7809 = vmatpush.bf16.msra.mxu0 %v4887
      %7810 = vmatpush.bf16.msra.mxu0 %v4879
      %7811 = vmatpush.bf16.msra.mxu0 %v4871
      %7812 = vmatmul.bf16.gmra.mxu0 %v1320
      %v7813 = vpop.f32.mrf.mxu0
      %v7814 = vadd.f32 %v7801, %v7813
      %v7815 = vpop.f32.mrf.mxu0
      %7816 = vdwg.mxu0
      %7817 = vmatpush.bf16.msra.mxu0 %v4991
      %7818 = vmatpush.bf16.msra.mxu0 %v4983
      %7819 = vmatpush.bf16.msra.mxu0 %v4975
      %7820 = vmatpush.bf16.msra.mxu0 %v4967
      %7821 = vmatpush.bf16.msra.mxu0 %v4959
      %7822 = vmatpush.bf16.msra.mxu0 %v4951
      %7823 = vmatpush.bf16.msra.mxu0 %v4943
      %7824 = vmatpush.bf16.msra.mxu0 %v4935
      %7825 = vmatmul.bf16.gmra.mxu0 %v1321
      %v7826 = vpop.f32.mrf.mxu0
      %v7827 = vadd.f32 %v7814, %v7826
      %v7828 = vpop.f32.mrf.mxu0
      %7829 = vdwg.mxu0
      %7830 = vmatpush.bf16.msra.mxu0 %v5055
      %7831 = vmatpush.bf16.msra.mxu0 %v5047
      %7832 = vmatpush.bf16.msra.mxu0 %v5039
      %7833 = vmatpush.bf16.msra.mxu0 %v5031
      %7834 = vmatpush.bf16.msra.mxu0 %v5023
      %7835 = vmatpush.bf16.msra.mxu0 %v5015
      %7836 = vmatpush.bf16.msra.mxu0 %v5007
      %7837 = vmatpush.bf16.msra.mxu0 %v4999
      %7838 = vmatmul.bf16.gmra.mxu0 %v1322
      %v7839 = vpop.f32.mrf.mxu0
      %v7840 = vadd.f32 %v7827, %v7839
      %v7841 = vpop.f32.mrf.mxu0
      %7842 = vdwg.mxu0
      %7843 = vmatpush.bf16.msra.mxu0 %v5119
      %7844 = vmatpush.bf16.msra.mxu0 %v5111
      %7845 = vmatpush.bf16.msra.mxu0 %v5103
      %7846 = vmatpush.bf16.msra.mxu0 %v5095
      %7847 = vmatpush.bf16.msra.mxu0 %v5087
      %7848 = vmatpush.bf16.msra.mxu0 %v5079
      %7849 = vmatpush.bf16.msra.mxu0 %v5071
      %7850 = vmatpush.bf16.msra.mxu0 %v5063
      %7851 = vmatmul.bf16.gmra.mxu0 %v1323
      %v7852 = vpop.f32.mrf.mxu0
      %v7853 = vadd.f32 %v7840, %v7852
      %v7854 = vpop.f32.mrf.mxu0
      %7855 = vdwg.mxu0
      %7856 = vmatpush.bf16.msra.mxu0 %v5183
      %7857 = vmatpush.bf16.msra.mxu0 %v5175
      %7858 = vmatpush.bf16.msra.mxu0 %v5167
      %7859 = vmatpush.bf16.msra.mxu0 %v5159
      %7860 = vmatpush.bf16.msra.mxu0 %v5151
      %7861 = vmatpush.bf16.msra.mxu0 %v5143
      %7862 = vmatpush.bf16.msra.mxu0 %v5135
      %7863 = vmatpush.bf16.msra.mxu0 %v5127
      %7864 = vmatmul.bf16.gmra.mxu0 %v1324
      %v7865 = vpop.f32.mrf.mxu0
      %v7866 = vadd.f32 %v7853, %v7865
      %v7867 = vpop.f32.mrf.mxu0
      %7868 = vdwg.mxu0
      %7869 = vmatpush.bf16.msra.mxu0 %v5247
      %7870 = vmatpush.bf16.msra.mxu0 %v5239
      %7871 = vmatpush.bf16.msra.mxu0 %v5231
      %7872 = vmatpush.bf16.msra.mxu0 %v5223
      %7873 = vmatpush.bf16.msra.mxu0 %v5215
      %7874 = vmatpush.bf16.msra.mxu0 %v5207
      %7875 = vmatpush.bf16.msra.mxu0 %v5199
      %7876 = vmatpush.bf16.msra.mxu0 %v5191
      %7877 = vmatmul.bf16.gmra.mxu0 %v1325
      %v7878 = vpop.f32.mrf.mxu0
      %v7879 = vadd.f32 %v7866, %v7878
      %v7880 = vpop.f32.mrf.mxu0
      %7881 = vdwg.mxu0
      %7882 = vmatpush.bf16.msra.mxu0 %v5311
      %7883 = vmatpush.bf16.msra.mxu0 %v5303
      %7884 = vmatpush.bf16.msra.mxu0 %v5295
      %7885 = vmatpush.bf16.msra.mxu0 %v5287
      %7886 = vmatpush.bf16.msra.mxu0 %v5279
      %7887 = vmatpush.bf16.msra.mxu0 %v5271
      %7888 = vmatpush.bf16.msra.mxu0 %v5263
      %7889 = vmatpush.bf16.msra.mxu0 %v5255
      %7890 = vmatmul.bf16.gmra.mxu0 %v1326
      %v7891 = vpop.f32.mrf.mxu0
      %v7892 = vadd.f32 %v7879, %v7891
      %v7893 = vpop.f32.mrf.mxu0
      %7894 = vdwg.mxu0
      %7895 = vmatpush.bf16.msra.mxu0 %v5375
      %7896 = vmatpush.bf16.msra.mxu0 %v5367
      %7897 = vmatpush.bf16.msra.mxu0 %v5359
      %7898 = vmatpush.bf16.msra.mxu0 %v5351
      %7899 = vmatpush.bf16.msra.mxu0 %v5343
      %7900 = vmatpush.bf16.msra.mxu0 %v5335
      %7901 = vmatpush.bf16.msra.mxu0 %v5327
      %7902 = vmatpush.bf16.msra.mxu0 %v5319
      %7903 = vmatmul.bf16.gmra.mxu0 %v1327
      %v7904 = vpop.f32.mrf.mxu0
      %v7905 = vadd.f32 %v7892, %v7904
      %v7906 = vpop.f32.mrf.mxu0
      %7907 = vdwg.mxu0
      %7908 = vmatpush.bf16.msra.mxu0 %v5439
      %7909 = vmatpush.bf16.msra.mxu0 %v5431
      %7910 = vmatpush.bf16.msra.mxu0 %v5423
      %7911 = vmatpush.bf16.msra.mxu0 %v5415
      %7912 = vmatpush.bf16.msra.mxu0 %v5407
      %7913 = vmatpush.bf16.msra.mxu0 %v5399
      %7914 = vmatpush.bf16.msra.mxu0 %v5391
      %7915 = vmatpush.bf16.msra.mxu0 %v5383
      %7916 = vmatmul.bf16.gmra.mxu0 %v1328
      %v7917 = vpop.f32.mrf.mxu0
      %v7918 = vadd.f32 %v7905, %v7917
      %v7919 = vpop.f32.mrf.mxu0
      %7920 = vdwg.mxu0
      %7921 = vmatpush.bf16.msra.mxu0 %v4480
      %7922 = vmatpush.bf16.msra.mxu0 %v4472
      %7923 = vmatpush.bf16.msra.mxu0 %v4464
      %7924 = vmatpush.bf16.msra.mxu0 %v4456
      %7925 = vmatpush.bf16.msra.mxu0 %v4448
      %7926 = vmatpush.bf16.msra.mxu0 %v4440
      %7927 = vmatpush.bf16.msra.mxu0 %v4432
      %7928 = vmatpush.bf16.msra.mxu0 %v4424
      %7929 = vmatmul.bf16.gmra.mxu0 %v1313
      %v7930 = vpop.f32.mrf.mxu0
      %v7931 = vadd.f32 0.0, %v7930
      %v7932 = vpop.f32.mrf.mxu0
      %7933 = vdwg.mxu0
      %7934 = vmatpush.bf16.msra.mxu0 %v4544
      %7935 = vmatpush.bf16.msra.mxu0 %v4536
      %7936 = vmatpush.bf16.msra.mxu0 %v4528
      %7937 = vmatpush.bf16.msra.mxu0 %v4520
      %7938 = vmatpush.bf16.msra.mxu0 %v4512
      %7939 = vmatpush.bf16.msra.mxu0 %v4504
      %7940 = vmatpush.bf16.msra.mxu0 %v4496
      %7941 = vmatpush.bf16.msra.mxu0 %v4488
      %7942 = vmatmul.bf16.gmra.mxu0 %v1314
      %v7943 = vpop.f32.mrf.mxu0
      %v7944 = vadd.f32 %v7931, %v7943
      %v7945 = vpop.f32.mrf.mxu0
      %7946 = vdwg.mxu0
      %7947 = vmatpush.bf16.msra.mxu0 %v4608
      %7948 = vmatpush.bf16.msra.mxu0 %v4600
      %7949 = vmatpush.bf16.msra.mxu0 %v4592
      %7950 = vmatpush.bf16.msra.mxu0 %v4584
      %7951 = vmatpush.bf16.msra.mxu0 %v4576
      %7952 = vmatpush.bf16.msra.mxu0 %v4568
      %7953 = vmatpush.bf16.msra.mxu0 %v4560
      %7954 = vmatpush.bf16.msra.mxu0 %v4552
      %7955 = vmatmul.bf16.gmra.mxu0 %v1315
      %v7956 = vpop.f32.mrf.mxu0
      %v7957 = vadd.f32 %v7944, %v7956
      %v7958 = vpop.f32.mrf.mxu0
      %7959 = vdwg.mxu0
      %7960 = vmatpush.bf16.msra.mxu0 %v4672
      %7961 = vmatpush.bf16.msra.mxu0 %v4664
      %7962 = vmatpush.bf16.msra.mxu0 %v4656
      %7963 = vmatpush.bf16.msra.mxu0 %v4648
      %7964 = vmatpush.bf16.msra.mxu0 %v4640
      %7965 = vmatpush.bf16.msra.mxu0 %v4632
      %7966 = vmatpush.bf16.msra.mxu0 %v4624
      %7967 = vmatpush.bf16.msra.mxu0 %v4616
      %7968 = vmatmul.bf16.gmra.mxu0 %v1316
      %v7969 = vpop.f32.mrf.mxu0
      %v7970 = vadd.f32 %v7957, %v7969
      %v7971 = vpop.f32.mrf.mxu0
      %7972 = vdwg.mxu0
      %7973 = vmatpush.bf16.msra.mxu0 %v4736
      %7974 = vmatpush.bf16.msra.mxu0 %v4728
      %7975 = vmatpush.bf16.msra.mxu0 %v4720
      %7976 = vmatpush.bf16.msra.mxu0 %v4712
      %7977 = vmatpush.bf16.msra.mxu0 %v4704
      %7978 = vmatpush.bf16.msra.mxu0 %v4696
      %7979 = vmatpush.bf16.msra.mxu0 %v4688
      %7980 = vmatpush.bf16.msra.mxu0 %v4680
      %7981 = vmatmul.bf16.gmra.mxu0 %v1317
      %v7982 = vpop.f32.mrf.mxu0
      %v7983 = vadd.f32 %v7970, %v7982
      %v7984 = vpop.f32.mrf.mxu0
      %7985 = vdwg.mxu0
      %7986 = vmatpush.bf16.msra.mxu0 %v4800
      %7987 = vmatpush.bf16.msra.mxu0 %v4792
      %7988 = vmatpush.bf16.msra.mxu0 %v4784
      %7989 = vmatpush.bf16.msra.mxu0 %v4776
      %7990 = vmatpush.bf16.msra.mxu0 %v4768
      %7991 = vmatpush.bf16.msra.mxu0 %v4760
      %7992 = vmatpush.bf16.msra.mxu0 %v4752
      %7993 = vmatpush.bf16.msra.mxu0 %v4744
      %7994 = vmatmul.bf16.gmra.mxu0 %v1318
      %v7995 = vpop.f32.mrf.mxu0
      %v7996 = vadd.f32 %v7983, %v7995
      %v7997 = vpop.f32.mrf.mxu0
      %7998 = vdwg.mxu0
      %7999 = vmatpush.bf16.msra.mxu0 %v4864
      %8000 = vmatpush.bf16.msra.mxu0 %v4856
      %8001 = vmatpush.bf16.msra.mxu0 %v4848
      %8002 = vmatpush.bf16.msra.mxu0 %v4840
      %8003 = vmatpush.bf16.msra.mxu0 %v4832
      %8004 = vmatpush.bf16.msra.mxu0 %v4824
      %8005 = vmatpush.bf16.msra.mxu0 %v4816
      %8006 = vmatpush.bf16.msra.mxu0 %v4808
      %8007 = vmatmul.bf16.gmra.mxu0 %v1319
      %v8008 = vpop.f32.mrf.mxu0
      %v8009 = vadd.f32 %v7996, %v8008
      %v8010 = vpop.f32.mrf.mxu0
      %8011 = vdwg.mxu0
      %8012 = vmatpush.bf16.msra.mxu0 %v4928
      %8013 = vmatpush.bf16.msra.mxu0 %v4920
      %8014 = vmatpush.bf16.msra.mxu0 %v4912
      %8015 = vmatpush.bf16.msra.mxu0 %v4904
      %8016 = vmatpush.bf16.msra.mxu0 %v4896
      %8017 = vmatpush.bf16.msra.mxu0 %v4888
      %8018 = vmatpush.bf16.msra.mxu0 %v4880
      %8019 = vmatpush.bf16.msra.mxu0 %v4872
      %8020 = vmatmul.bf16.gmra.mxu0 %v1320
      %v8021 = vpop.f32.mrf.mxu0
      %v8022 = vadd.f32 %v8009, %v8021
      %v8023 = vpop.f32.mrf.mxu0
      %8024 = vdwg.mxu0
      %8025 = vmatpush.bf16.msra.mxu0 %v4992
      %8026 = vmatpush.bf16.msra.mxu0 %v4984
      %8027 = vmatpush.bf16.msra.mxu0 %v4976
      %8028 = vmatpush.bf16.msra.mxu0 %v4968
      %8029 = vmatpush.bf16.msra.mxu0 %v4960
      %8030 = vmatpush.bf16.msra.mxu0 %v4952
      %8031 = vmatpush.bf16.msra.mxu0 %v4944
      %8032 = vmatpush.bf16.msra.mxu0 %v4936
      %8033 = vmatmul.bf16.gmra.mxu0 %v1321
      %v8034 = vpop.f32.mrf.mxu0
      %v8035 = vadd.f32 %v8022, %v8034
      %v8036 = vpop.f32.mrf.mxu0
      %8037 = vdwg.mxu0
      %8038 = vmatpush.bf16.msra.mxu0 %v5056
      %8039 = vmatpush.bf16.msra.mxu0 %v5048
      %8040 = vmatpush.bf16.msra.mxu0 %v5040
      %8041 = vmatpush.bf16.msra.mxu0 %v5032
      %8042 = vmatpush.bf16.msra.mxu0 %v5024
      %8043 = vmatpush.bf16.msra.mxu0 %v5016
      %8044 = vmatpush.bf16.msra.mxu0 %v5008
      %8045 = vmatpush.bf16.msra.mxu0 %v5000
      %8046 = vmatmul.bf16.gmra.mxu0 %v1322
      %v8047 = vpop.f32.mrf.mxu0
      %v8048 = vadd.f32 %v8035, %v8047
      %v8049 = vpop.f32.mrf.mxu0
      %8050 = vdwg.mxu0
      %8051 = vmatpush.bf16.msra.mxu0 %v5120
      %8052 = vmatpush.bf16.msra.mxu0 %v5112
      %8053 = vmatpush.bf16.msra.mxu0 %v5104
      %8054 = vmatpush.bf16.msra.mxu0 %v5096
      %8055 = vmatpush.bf16.msra.mxu0 %v5088
      %8056 = vmatpush.bf16.msra.mxu0 %v5080
      %8057 = vmatpush.bf16.msra.mxu0 %v5072
      %8058 = vmatpush.bf16.msra.mxu0 %v5064
      %8059 = vmatmul.bf16.gmra.mxu0 %v1323
      %v8060 = vpop.f32.mrf.mxu0
      %v8061 = vadd.f32 %v8048, %v8060
      %v8062 = vpop.f32.mrf.mxu0
      %8063 = vdwg.mxu0
      %8064 = vmatpush.bf16.msra.mxu0 %v5184
      %8065 = vmatpush.bf16.msra.mxu0 %v5176
      %8066 = vmatpush.bf16.msra.mxu0 %v5168
      %8067 = vmatpush.bf16.msra.mxu0 %v5160
      %8068 = vmatpush.bf16.msra.mxu0 %v5152
      %8069 = vmatpush.bf16.msra.mxu0 %v5144
      %8070 = vmatpush.bf16.msra.mxu0 %v5136
      %8071 = vmatpush.bf16.msra.mxu0 %v5128
      %8072 = vmatmul.bf16.gmra.mxu0 %v1324
      %v8073 = vpop.f32.mrf.mxu0
      %v8074 = vadd.f32 %v8061, %v8073
      %v8075 = vpop.f32.mrf.mxu0
      %8076 = vdwg.mxu0
      %8077 = vmatpush.bf16.msra.mxu0 %v5248
      %8078 = vmatpush.bf16.msra.mxu0 %v5240
      %8079 = vmatpush.bf16.msra.mxu0 %v5232
      %8080 = vmatpush.bf16.msra.mxu0 %v5224
      %8081 = vmatpush.bf16.msra.mxu0 %v5216
      %8082 = vmatpush.bf16.msra.mxu0 %v5208
      %8083 = vmatpush.bf16.msra.mxu0 %v5200
      %8084 = vmatpush.bf16.msra.mxu0 %v5192
      %8085 = vmatmul.bf16.gmra.mxu0 %v1325
      %v8086 = vpop.f32.mrf.mxu0
      %v8087 = vadd.f32 %v8074, %v8086
      %v8088 = vpop.f32.mrf.mxu0
      %8089 = vdwg.mxu0
      %8090 = vmatpush.bf16.msra.mxu0 %v5312
      %8091 = vmatpush.bf16.msra.mxu0 %v5304
      %8092 = vmatpush.bf16.msra.mxu0 %v5296
      %8093 = vmatpush.bf16.msra.mxu0 %v5288
      %8094 = vmatpush.bf16.msra.mxu0 %v5280
      %8095 = vmatpush.bf16.msra.mxu0 %v5272
      %8096 = vmatpush.bf16.msra.mxu0 %v5264
      %8097 = vmatpush.bf16.msra.mxu0 %v5256
      %8098 = vmatmul.bf16.gmra.mxu0 %v1326
      %v8099 = vpop.f32.mrf.mxu0
      %v8100 = vadd.f32 %v8087, %v8099
      %v8101 = vpop.f32.mrf.mxu0
      %8102 = vdwg.mxu0
      %8103 = vmatpush.bf16.msra.mxu0 %v5376
      %8104 = vmatpush.bf16.msra.mxu0 %v5368
      %8105 = vmatpush.bf16.msra.mxu0 %v5360
      %8106 = vmatpush.bf16.msra.mxu0 %v5352
      %8107 = vmatpush.bf16.msra.mxu0 %v5344
      %8108 = vmatpush.bf16.msra.mxu0 %v5336
      %8109 = vmatpush.bf16.msra.mxu0 %v5328
      %8110 = vmatpush.bf16.msra.mxu0 %v5320
      %8111 = vmatmul.bf16.gmra.mxu0 %v1327
      %v8112 = vpop.f32.mrf.mxu0
      %v8113 = vadd.f32 %v8100, %v8112
      %v8114 = vpop.f32.mrf.mxu0
      %8115 = vdwg.mxu0
      %8116 = vmatpush.bf16.msra.mxu0 %v5440
      %8117 = vmatpush.bf16.msra.mxu0 %v5432
      %8118 = vmatpush.bf16.msra.mxu0 %v5424
      %8119 = vmatpush.bf16.msra.mxu0 %v5416
      %8120 = vmatpush.bf16.msra.mxu0 %v5408
      %8121 = vmatpush.bf16.msra.mxu0 %v5400
      %8122 = vmatpush.bf16.msra.mxu0 %v5392
      %8123 = vmatpush.bf16.msra.mxu0 %v5384
      %8124 = vmatmul.bf16.gmra.mxu0 %v1328
      %v8125 = vpop.f32.mrf.mxu0
      %v8126 = vadd.f32 %v8113, %v8125
      %v8127 = vpop.f32.mrf.mxu0
      %8128 = vdwg.mxu0
      %v8129 = vadd.f32 %v249, %v6670
      %v8130 = vadd.f32 %v250, %v6878
      %v8131 = vadd.f32 %v251, %v7086
      %v8132 = vadd.f32 %v252, %v7294
      %v8133 = vadd.f32 %v253, %v7502
      %v8134 = vadd.f32 %v254, %v7710
      %v8135 = vadd.f32 %v255, %v7918
      %v8136 = vadd.f32 %v256, %v8126
      %8137 = vst [vmem:[#allocation2] sm:$0xff] %v8129
      %8138 = vst [vmem:[#allocation2 + $0x8] sm:$0xff] %v8130
      %8139 = vst [vmem:[#allocation2 + $0x10] sm:$0xff] %v8131
      %8140 = vst [vmem:[#allocation2 + $0x18] sm:$0xff] %v8132
      %8141 = vst [vmem:[#allocation2 + $0x20] sm:$0xff] %v8133
      %8142 = vst [vmem:[#allocation2 + $0x28] sm:$0xff] %v8134
      %8143 = vst [vmem:[#allocation2 + $0x30] sm:$0xff] %v8135
      %8144 = vst [vmem:[#allocation2 + $0x38] sm:$0xff] %v8136
      %p8145 = scmp.eq.s32.totalorder %s16, 3
      // Predicated region
      $region45: #{discriminator_img_forward.3} parent=39 // pred_check
        %p8146 = pneg %p8145
      $region46: #{discriminator_img_forward.3} parent=39 // pred_check_branch
        %8148 = sbr.rel (%p8146) target = $region48
      $region47: #{discriminator_img_forward.3} parent=39 // pred_region
        %v8149 = vld [vmem:[#allocation2] sm:$0xff]
        %v8150 = vld [vmem:[#allocation2 + $0x8] sm:$0xff]
        %v8151 = vld [vmem:[#allocation2 + $0x10] sm:$0xff]
        %v8152 = vld [vmem:[#allocation2 + $0x18] sm:$0xff]
        %v8153 = vld [vmem:[#allocation2 + $0x20] sm:$0xff]
        %v8154 = vld [vmem:[#allocation2 + $0x28] sm:$0xff]
        %v8155 = vld [vmem:[#allocation2 + $0x30] sm:$0xff]
        %v8156 = vld [vmem:[#allocation2 + $0x38] sm:$0xff]
        %v8157 = vld [vmem:[%s2] sm:$0xff]
        %v8159 = vperm.slane %v8157, 0
        %v8160 = vperm.slane %v8157, 1
        %v8161 = vperm.slane %v8157, 2
        %v8162 = vperm.slane %v8157, 3
        %v8163 = vperm.slane %v8157, 4
        %v8164 = vperm.slane %v8157, 5
        %v8165 = vperm.slane %v8157, 6
        %v8166 = vperm.slane %v8157, 7
        %v8175 = vadd.f32 %v8149, %v8159
        %v8176 = vadd.f32 %v8150, %v8160
        %v8177 = vadd.f32 %v8151, %v8161
        %v8178 = vadd.f32 %v8152, %v8162
        %v8179 = vadd.f32 %v8153, %v8163
        %v8180 = vadd.f32 %v8154, %v8164
        %v8181 = vadd.f32 %v8155, %v8165
        %v8182 = vadd.f32 %v8156, %v8166
        %vm8183 = vcmp.ge.f32.partialorder %v8175, 0.0
        %vm8184 = vcmp.ge.f32.partialorder %v8176, 0.0
        %vm8185 = vcmp.ge.f32.partialorder %v8177, 0.0
        %vm8186 = vcmp.ge.f32.partialorder %v8178, 0.0
        %vm8187 = vcmp.ge.f32.partialorder %v8179, 0.0
        %vm8188 = vcmp.ge.f32.partialorder %v8180, 0.0
        %vm8189 = vcmp.ge.f32.partialorder %v8181, 0.0
        %vm8190 = vcmp.ge.f32.partialorder %v8182, 0.0
        %v8191 = vmul.f32 %v8175, 0.01
        %v8192 = vmul.f32 %v8176, 0.01
        %v8193 = vmul.f32 %v8177, 0.01
        %v8194 = vmul.f32 %v8178, 0.01
        %v8195 = vmul.f32 %v8179, 0.01
        %v8196 = vmul.f32 %v8180, 0.01
        %v8197 = vmul.f32 %v8181, 0.01
        %v8198 = vmul.f32 %v8182, 0.01
        %v8199 = vsel %vm8183, %v8175, %v8191
        %v8200 = vsel %vm8184, %v8176, %v8192
        %v8201 = vsel %vm8185, %v8177, %v8193
        %v8202 = vsel %vm8186, %v8178, %v8194
        %v8203 = vsel %vm8187, %v8179, %v8195
        %v8204 = vsel %vm8188, %v8180, %v8196
        %v8205 = vsel %vm8189, %v8181, %v8197
        %v8206 = vsel %vm8190, %v8182, %v8198
        %v8207 = vpack.c.bf16 %v8199, %v8199
        %v8208 = vpack.c.bf16 %v8200, %v8200
        %v8209 = vpack.c.bf16 %v8201, %v8201
        %v8210 = vpack.c.bf16 %v8202, %v8202
        %v8211 = vpack.c.bf16 %v8203, %v8203
        %v8212 = vpack.c.bf16 %v8204, %v8204
        %v8213 = vpack.c.bf16 %v8205, %v8205
        %v8214 = vpack.c.bf16 %v8206, %v8206
        %v8215 = vld [vmem:[%s3] sm:$0xf]
        %v8216 = vld [vmem:[%s3 + $0x4] sm:$0xf]
        %v8217 = vld [vmem:[%s3 + $0x8] sm:$0xf]
        %v8218 = vld [vmem:[%s3 + $0xc] sm:$0xf]
        %v8219 = vld [vmem:[%s3 + $0x10] sm:$0xf]
        %v8220 = vld [vmem:[%s3 + $0x14] sm:$0xf]
        %v8221 = vld [vmem:[%s3 + $0x18] sm:$0xf]
        %v8222 = vld [vmem:[%s3 + $0x1c] sm:$0xf]
        %v8223 = vld [vmem:[%s3 + $0x20] sm:$0xf]
        %v8224 = vld [vmem:[%s3 + $0x24] sm:$0xf]
        %v8225 = vld [vmem:[%s3 + $0x28] sm:$0xf]
        %v8226 = vld [vmem:[%s3 + $0x2c] sm:$0xf]
        %v8227 = vld [vmem:[%s3 + $0x30] sm:$0xf]
        %v8228 = vld [vmem:[%s3 + $0x34] sm:$0xf]
        %v8229 = vld [vmem:[%s3 + $0x38] sm:$0xf]
        %v8230 = vld [vmem:[%s3 + $0x3c] sm:$0xf]
        %v8231 = vld [vmem:[%s3 + $0x40] sm:$0xf]
        %v8232 = vld [vmem:[%s3 + $0x44] sm:$0xf]
        %v8233 = vld [vmem:[%s3 + $0x48] sm:$0xf]
        %v8234 = vld [vmem:[%s3 + $0x4c] sm:$0xf]
        %v8235 = vld [vmem:[%s3 + $0x50] sm:$0xf]
        %v8236 = vld [vmem:[%s3 + $0x54] sm:$0xf]
        %v8237 = vld [vmem:[%s3 + $0x58] sm:$0xf]
        %v8238 = vld [vmem:[%s3 + $0x5c] sm:$0xf]
        %v8239 = vld [vmem:[%s3 + $0x60] sm:$0xf]
        %v8240 = vld [vmem:[%s3 + $0x64] sm:$0xf]
        %v8241 = vld [vmem:[%s3 + $0x68] sm:$0xf]
        %v8242 = vld [vmem:[%s3 + $0x6c] sm:$0xf]
        %v8243 = vld [vmem:[%s3 + $0x70] sm:$0xf]
        %v8244 = vld [vmem:[%s3 + $0x74] sm:$0xf]
        %v8245 = vld [vmem:[%s3 + $0x78] sm:$0xf]
        %v8246 = vld [vmem:[%s3 + $0x7c] sm:$0xf]
        %v8247 = vld [vmem:[%s3 + $0x80] sm:$0xf]
        %v8248 = vld [vmem:[%s3 + $0x84] sm:$0xf]
        %v8249 = vld [vmem:[%s3 + $0x88] sm:$0xf]
        %v8250 = vld [vmem:[%s3 + $0x8c] sm:$0xf]
        %v8251 = vld [vmem:[%s3 + $0x90] sm:$0xf]
        %v8252 = vld [vmem:[%s3 + $0x94] sm:$0xf]
        %v8253 = vld [vmem:[%s3 + $0x98] sm:$0xf]
        %v8254 = vld [vmem:[%s3 + $0x9c] sm:$0xf]
        %v8255 = vld [vmem:[%s3 + $0xa0] sm:$0xf]
        %v8256 = vld [vmem:[%s3 + $0xa4] sm:$0xf]
        %v8257 = vld [vmem:[%s3 + $0xa8] sm:$0xf]
        %v8258 = vld [vmem:[%s3 + $0xac] sm:$0xf]
        %v8259 = vld [vmem:[%s3 + $0xb0] sm:$0xf]
        %v8260 = vld [vmem:[%s3 + $0xb4] sm:$0xf]
        %v8261 = vld [vmem:[%s3 + $0xb8] sm:$0xf]
        %v8262 = vld [vmem:[%s3 + $0xbc] sm:$0xf]
        %v8263 = vld [vmem:[%s3 + $0xc0] sm:$0xf]
        %v8264 = vld [vmem:[%s3 + $0xc4] sm:$0xf]
        %v8265 = vld [vmem:[%s3 + $0xc8] sm:$0xf]
        %v8266 = vld [vmem:[%s3 + $0xcc] sm:$0xf]
        %v8267 = vld [vmem:[%s3 + $0xd0] sm:$0xf]
        %v8268 = vld [vmem:[%s3 + $0xd4] sm:$0xf]
        %v8269 = vld [vmem:[%s3 + $0xd8] sm:$0xf]
        %v8270 = vld [vmem:[%s3 + $0xdc] sm:$0xf]
        %v8271 = vld [vmem:[%s3 + $0xe0] sm:$0xf]
        %v8272 = vld [vmem:[%s3 + $0xe4] sm:$0xf]
        %v8273 = vld [vmem:[%s3 + $0xe8] sm:$0xf]
        %v8274 = vld [vmem:[%s3 + $0xec] sm:$0xf]
        %v8275 = vld [vmem:[%s3 + $0xf0] sm:$0xf]
        %v8276 = vld [vmem:[%s3 + $0xf4] sm:$0xf]
        %v8277 = vld [vmem:[%s3 + $0xf8] sm:$0xf]
        %v8278 = vld [vmem:[%s3 + $0xfc] sm:$0xf]
        %v8279 = vld [vmem:[%s3 + $0x100] sm:$0xf]
        %v8280 = vld [vmem:[%s3 + $0x104] sm:$0xf]
        %v8281 = vld [vmem:[%s3 + $0x108] sm:$0xf]
        %v8282 = vld [vmem:[%s3 + $0x10c] sm:$0xf]
        %v8283 = vld [vmem:[%s3 + $0x110] sm:$0xf]
        %v8284 = vld [vmem:[%s3 + $0x114] sm:$0xf]
        %v8285 = vld [vmem:[%s3 + $0x118] sm:$0xf]
        %v8286 = vld [vmem:[%s3 + $0x11c] sm:$0xf]
        %v8287 = vld [vmem:[%s3 + $0x120] sm:$0xf]
        %v8288 = vld [vmem:[%s3 + $0x124] sm:$0xf]
        %v8289 = vld [vmem:[%s3 + $0x128] sm:$0xf]
        %v8290 = vld [vmem:[%s3 + $0x12c] sm:$0xf]
        %v8291 = vld [vmem:[%s3 + $0x130] sm:$0xf]
        %v8292 = vld [vmem:[%s3 + $0x134] sm:$0xf]
        %v8293 = vld [vmem:[%s3 + $0x138] sm:$0xf]
        %v8294 = vld [vmem:[%s3 + $0x13c] sm:$0xf]
        %v8295 = vld [vmem:[%s3 + $0x140] sm:$0xf]
        %v8296 = vld [vmem:[%s3 + $0x144] sm:$0xf]
        %v8297 = vld [vmem:[%s3 + $0x148] sm:$0xf]
        %v8298 = vld [vmem:[%s3 + $0x14c] sm:$0xf]
        %v8299 = vld [vmem:[%s3 + $0x150] sm:$0xf]
        %v8300 = vld [vmem:[%s3 + $0x154] sm:$0xf]
        %v8301 = vld [vmem:[%s3 + $0x158] sm:$0xf]
        %v8302 = vld [vmem:[%s3 + $0x15c] sm:$0xf]
        %v8303 = vld [vmem:[%s3 + $0x160] sm:$0xf]
        %v8304 = vld [vmem:[%s3 + $0x164] sm:$0xf]
        %v8305 = vld [vmem:[%s3 + $0x168] sm:$0xf]
        %v8306 = vld [vmem:[%s3 + $0x16c] sm:$0xf]
        %v8307 = vld [vmem:[%s3 + $0x170] sm:$0xf]
        %v8308 = vld [vmem:[%s3 + $0x174] sm:$0xf]
        %v8309 = vld [vmem:[%s3 + $0x178] sm:$0xf]
        %v8310 = vld [vmem:[%s3 + $0x17c] sm:$0xf]
        %v8311 = vld [vmem:[%s3 + $0x180] sm:$0xf]
        %v8312 = vld [vmem:[%s3 + $0x184] sm:$0xf]
        %v8313 = vld [vmem:[%s3 + $0x188] sm:$0xf]
        %v8314 = vld [vmem:[%s3 + $0x18c] sm:$0xf]
        %v8315 = vld [vmem:[%s3 + $0x190] sm:$0xf]
        %v8316 = vld [vmem:[%s3 + $0x194] sm:$0xf]
        %v8317 = vld [vmem:[%s3 + $0x198] sm:$0xf]
        %v8318 = vld [vmem:[%s3 + $0x19c] sm:$0xf]
        %v8319 = vld [vmem:[%s3 + $0x1a0] sm:$0xf]
        %v8320 = vld [vmem:[%s3 + $0x1a4] sm:$0xf]
        %v8321 = vld [vmem:[%s3 + $0x1a8] sm:$0xf]
        %v8322 = vld [vmem:[%s3 + $0x1ac] sm:$0xf]
        %v8323 = vld [vmem:[%s3 + $0x1b0] sm:$0xf]
        %v8324 = vld [vmem:[%s3 + $0x1b4] sm:$0xf]
        %v8325 = vld [vmem:[%s3 + $0x1b8] sm:$0xf]
        %v8326 = vld [vmem:[%s3 + $0x1bc] sm:$0xf]
        %v8327 = vld [vmem:[%s3 + $0x1c0] sm:$0xf]
        %v8328 = vld [vmem:[%s3 + $0x1c4] sm:$0xf]
        %v8329 = vld [vmem:[%s3 + $0x1c8] sm:$0xf]
        %v8330 = vld [vmem:[%s3 + $0x1cc] sm:$0xf]
        %v8331 = vld [vmem:[%s3 + $0x1d0] sm:$0xf]
        %v8332 = vld [vmem:[%s3 + $0x1d4] sm:$0xf]
        %v8333 = vld [vmem:[%s3 + $0x1d8] sm:$0xf]
        %v8334 = vld [vmem:[%s3 + $0x1dc] sm:$0xf]
        %v8335 = vld [vmem:[%s3 + $0x1e0] sm:$0xf]
        %v8336 = vld [vmem:[%s3 + $0x1e4] sm:$0xf]
        %v8337 = vld [vmem:[%s3 + $0x1e8] sm:$0xf]
        %v8338 = vld [vmem:[%s3 + $0x1ec] sm:$0xf]
        %v8339 = vld [vmem:[%s3 + $0x1f0] sm:$0xf]
        %v8340 = vld [vmem:[%s3 + $0x1f4] sm:$0xf]
        %v8341 = vld [vmem:[%s3 + $0x1f8] sm:$0xf]
        %v8342 = vld [vmem:[%s3 + $0x1fc] sm:$0xf]
        %v8343 = vld [vmem:[%s4] sm:$0x1]
        %v8345 = vperm.slane %v8343, 0
        %v8475 = vunpack.c.l.b16 %v8215
        %v8476 = vunpack.c.l.b16 %v8216
        %v8477 = vunpack.c.l.b16 %v8217
        %v8478 = vunpack.c.l.b16 %v8218
        %v8479 = vunpack.c.l.b16 %v8219
        %v8480 = vunpack.c.l.b16 %v8220
        %v8481 = vunpack.c.l.b16 %v8221
        %v8482 = vunpack.c.l.b16 %v8222
        %v8483 = vunpack.c.l.b16 %v8223
        %v8484 = vunpack.c.l.b16 %v8224
        %v8485 = vunpack.c.l.b16 %v8225
        %v8486 = vunpack.c.l.b16 %v8226
        %v8487 = vunpack.c.l.b16 %v8227
        %v8488 = vunpack.c.l.b16 %v8228
        %v8489 = vunpack.c.l.b16 %v8229
        %v8490 = vunpack.c.l.b16 %v8230
        %v8491 = vunpack.c.l.b16 %v8231
        %v8492 = vunpack.c.l.b16 %v8232
        %v8493 = vunpack.c.l.b16 %v8233
        %v8494 = vunpack.c.l.b16 %v8234
        %v8495 = vunpack.c.l.b16 %v8235
        %v8496 = vunpack.c.l.b16 %v8236
        %v8497 = vunpack.c.l.b16 %v8237
        %v8498 = vunpack.c.l.b16 %v8238
        %v8499 = vunpack.c.l.b16 %v8239
        %v8500 = vunpack.c.l.b16 %v8240
        %v8501 = vunpack.c.l.b16 %v8241
        %v8502 = vunpack.c.l.b16 %v8242
        %v8503 = vunpack.c.l.b16 %v8243
        %v8504 = vunpack.c.l.b16 %v8244
        %v8505 = vunpack.c.l.b16 %v8245
        %v8506 = vunpack.c.l.b16 %v8246
        %v8507 = vunpack.c.l.b16 %v8247
        %v8508 = vunpack.c.l.b16 %v8248
        %v8509 = vunpack.c.l.b16 %v8249
        %v8510 = vunpack.c.l.b16 %v8250
        %v8511 = vunpack.c.l.b16 %v8251
        %v8512 = vunpack.c.l.b16 %v8252
        %v8513 = vunpack.c.l.b16 %v8253
        %v8514 = vunpack.c.l.b16 %v8254
        %v8515 = vunpack.c.l.b16 %v8255
        %v8516 = vunpack.c.l.b16 %v8256
        %v8517 = vunpack.c.l.b16 %v8257
        %v8518 = vunpack.c.l.b16 %v8258
        %v8519 = vunpack.c.l.b16 %v8259
        %v8520 = vunpack.c.l.b16 %v8260
        %v8521 = vunpack.c.l.b16 %v8261
        %v8522 = vunpack.c.l.b16 %v8262
        %v8523 = vunpack.c.l.b16 %v8263
        %v8524 = vunpack.c.l.b16 %v8264
        %v8525 = vunpack.c.l.b16 %v8265
        %v8526 = vunpack.c.l.b16 %v8266
        %v8527 = vunpack.c.l.b16 %v8267
        %v8528 = vunpack.c.l.b16 %v8268
        %v8529 = vunpack.c.l.b16 %v8269
        %v8530 = vunpack.c.l.b16 %v8270
        %v8531 = vunpack.c.l.b16 %v8271
        %v8532 = vunpack.c.l.b16 %v8272
        %v8533 = vunpack.c.l.b16 %v8273
        %v8534 = vunpack.c.l.b16 %v8274
        %v8535 = vunpack.c.l.b16 %v8275
        %v8536 = vunpack.c.l.b16 %v8276
        %v8537 = vunpack.c.l.b16 %v8277
        %v8538 = vunpack.c.l.b16 %v8278
        %v8539 = vunpack.c.l.b16 %v8279
        %v8540 = vunpack.c.l.b16 %v8280
        %v8541 = vunpack.c.l.b16 %v8281
        %v8542 = vunpack.c.l.b16 %v8282
        %v8543 = vunpack.c.l.b16 %v8283
        %v8544 = vunpack.c.l.b16 %v8284
        %v8545 = vunpack.c.l.b16 %v8285
        %v8546 = vunpack.c.l.b16 %v8286
        %v8547 = vunpack.c.l.b16 %v8287
        %v8548 = vunpack.c.l.b16 %v8288
        %v8549 = vunpack.c.l.b16 %v8289
        %v8550 = vunpack.c.l.b16 %v8290
        %v8551 = vunpack.c.l.b16 %v8291
        %v8552 = vunpack.c.l.b16 %v8292
        %v8553 = vunpack.c.l.b16 %v8293
        %v8554 = vunpack.c.l.b16 %v8294
        %v8555 = vunpack.c.l.b16 %v8295
        %v8556 = vunpack.c.l.b16 %v8296
        %v8557 = vunpack.c.l.b16 %v8297
        %v8558 = vunpack.c.l.b16 %v8298
        %v8559 = vunpack.c.l.b16 %v8299
        %v8560 = vunpack.c.l.b16 %v8300
        %v8561 = vunpack.c.l.b16 %v8301
        %v8562 = vunpack.c.l.b16 %v8302
        %v8563 = vunpack.c.l.b16 %v8303
        %v8564 = vunpack.c.l.b16 %v8304
        %v8565 = vunpack.c.l.b16 %v8305
        %v8566 = vunpack.c.l.b16 %v8306
        %v8567 = vunpack.c.l.b16 %v8307
        %v8568 = vunpack.c.l.b16 %v8308
        %v8569 = vunpack.c.l.b16 %v8309
        %v8570 = vunpack.c.l.b16 %v8310
        %v8571 = vunpack.c.l.b16 %v8311
        %v8572 = vunpack.c.l.b16 %v8312
        %v8573 = vunpack.c.l.b16 %v8313
        %v8574 = vunpack.c.l.b16 %v8314
        %v8575 = vunpack.c.l.b16 %v8315
        %v8576 = vunpack.c.l.b16 %v8316
        %v8577 = vunpack.c.l.b16 %v8317
        %v8578 = vunpack.c.l.b16 %v8318
        %v8579 = vunpack.c.l.b16 %v8319
        %v8580 = vunpack.c.l.b16 %v8320
        %v8581 = vunpack.c.l.b16 %v8321
        %v8582 = vunpack.c.l.b16 %v8322
        %v8583 = vunpack.c.l.b16 %v8323
        %v8584 = vunpack.c.l.b16 %v8324
        %v8585 = vunpack.c.l.b16 %v8325
        %v8586 = vunpack.c.l.b16 %v8326
        %v8587 = vunpack.c.l.b16 %v8327
        %v8588 = vunpack.c.l.b16 %v8328
        %v8589 = vunpack.c.l.b16 %v8329
        %v8590 = vunpack.c.l.b16 %v8330
        %v8591 = vunpack.c.l.b16 %v8331
        %v8592 = vunpack.c.l.b16 %v8332
        %v8593 = vunpack.c.l.b16 %v8333
        %v8594 = vunpack.c.l.b16 %v8334
        %v8595 = vunpack.c.l.b16 %v8335
        %v8596 = vunpack.c.l.b16 %v8336
        %v8597 = vunpack.c.l.b16 %v8337
        %v8598 = vunpack.c.l.b16 %v8338
        %v8599 = vunpack.c.l.b16 %v8339
        %v8600 = vunpack.c.l.b16 %v8340
        %v8601 = vunpack.c.l.b16 %v8341
        %v8602 = vunpack.c.l.b16 %v8342
        %v8603 = vpack.c.b16 %v8476, %v8475
        %v8604 = vpack.c.b16 %v8478, %v8477
        %v8605 = vpack.c.b16 %v8480, %v8479
        %v8606 = vpack.c.b16 %v8482, %v8481
        %v8607 = vpack.c.b16 %v8484, %v8483
        %v8608 = vpack.c.b16 %v8486, %v8485
        %v8609 = vpack.c.b16 %v8488, %v8487
        %v8610 = vpack.c.b16 %v8490, %v8489
        %v8611 = vpack.c.b16 %v8492, %v8491
        %v8612 = vpack.c.b16 %v8494, %v8493
        %v8613 = vpack.c.b16 %v8496, %v8495
        %v8614 = vpack.c.b16 %v8498, %v8497
        %v8615 = vpack.c.b16 %v8500, %v8499
        %v8616 = vpack.c.b16 %v8502, %v8501
        %v8617 = vpack.c.b16 %v8504, %v8503
        %v8618 = vpack.c.b16 %v8506, %v8505
        %v8619 = vpack.c.b16 %v8508, %v8507
        %v8620 = vpack.c.b16 %v8510, %v8509
        %v8621 = vpack.c.b16 %v8512, %v8511
        %v8622 = vpack.c.b16 %v8514, %v8513
        %v8623 = vpack.c.b16 %v8516, %v8515
        %v8624 = vpack.c.b16 %v8518, %v8517
        %v8625 = vpack.c.b16 %v8520, %v8519
        %v8626 = vpack.c.b16 %v8522, %v8521
        %v8627 = vpack.c.b16 %v8524, %v8523
        %v8628 = vpack.c.b16 %v8526, %v8525
        %v8629 = vpack.c.b16 %v8528, %v8527
        %v8630 = vpack.c.b16 %v8530, %v8529
        %v8631 = vpack.c.b16 %v8532, %v8531
        %v8632 = vpack.c.b16 %v8534, %v8533
        %v8633 = vpack.c.b16 %v8536, %v8535
        %v8634 = vpack.c.b16 %v8538, %v8537
        %v8635 = vpack.c.b16 %v8540, %v8539
        %v8636 = vpack.c.b16 %v8542, %v8541
        %v8637 = vpack.c.b16 %v8544, %v8543
        %v8638 = vpack.c.b16 %v8546, %v8545
        %v8639 = vpack.c.b16 %v8548, %v8547
        %v8640 = vpack.c.b16 %v8550, %v8549
        %v8641 = vpack.c.b16 %v8552, %v8551
        %v8642 = vpack.c.b16 %v8554, %v8553
        %v8643 = vpack.c.b16 %v8556, %v8555
        %v8644 = vpack.c.b16 %v8558, %v8557
        %v8645 = vpack.c.b16 %v8560, %v8559
        %v8646 = vpack.c.b16 %v8562, %v8561
        %v8647 = vpack.c.b16 %v8564, %v8563
        %v8648 = vpack.c.b16 %v8566, %v8565
        %v8649 = vpack.c.b16 %v8568, %v8567
        %v8650 = vpack.c.b16 %v8570, %v8569
        %v8651 = vpack.c.b16 %v8572, %v8571
        %v8652 = vpack.c.b16 %v8574, %v8573
        %v8653 = vpack.c.b16 %v8576, %v8575
        %v8654 = vpack.c.b16 %v8578, %v8577
        %v8655 = vpack.c.b16 %v8580, %v8579
        %v8656 = vpack.c.b16 %v8582, %v8581
        %v8657 = vpack.c.b16 %v8584, %v8583
        %v8658 = vpack.c.b16 %v8586, %v8585
        %v8659 = vpack.c.b16 %v8588, %v8587
        %v8660 = vpack.c.b16 %v8590, %v8589
        %v8661 = vpack.c.b16 %v8592, %v8591
        %v8662 = vpack.c.b16 %v8594, %v8593
        %v8663 = vpack.c.b16 %v8596, %v8595
        %v8664 = vpack.c.b16 %v8598, %v8597
        %v8665 = vpack.c.b16 %v8600, %v8599
        %v8666 = vpack.c.b16 %v8602, %v8601
        %8731 = vmatpush.bf16.msra.mxu0 %v8610
        %8732 = vmatpush.bf16.msra.mxu0 %v8609
        %8733 = vmatpush.bf16.msra.mxu0 %v8608
        %8734 = vmatpush.bf16.msra.mxu0 %v8607
        %8735 = vmatpush.bf16.msra.mxu0 %v8606
        %8736 = vmatpush.bf16.msra.mxu0 %v8605
        %8737 = vmatpush.bf16.msra.mxu0 %v8604
        %8738 = vmatpush.bf16.msra.mxu0 %v8603
        %8739 = vmatmul.bf16.gmra.mxu0 %v8207
        %v8740 = vpop.f32.mrf.mxu0
        %v8741 = vadd.f32 %v8345, %v8740
        %v8742 = vpop.f32.mrf.mxu0
        %8743 = vdwg.mxu0
        %8744 = vmatpush.bf16.msra.mxu0 %v8618
        %8745 = vmatpush.bf16.msra.mxu0 %v8617
        %8746 = vmatpush.bf16.msra.mxu0 %v8616
        %8747 = vmatpush.bf16.msra.mxu0 %v8615
        %8748 = vmatpush.bf16.msra.mxu0 %v8614
        %8749 = vmatpush.bf16.msra.mxu0 %v8613
        %8750 = vmatpush.bf16.msra.mxu0 %v8612
        %8751 = vmatpush.bf16.msra.mxu0 %v8611
        %8752 = vmatmul.bf16.gmra.mxu0 %v8208
        %v8753 = vpop.f32.mrf.mxu0
        %v8754 = vadd.f32 %v8741, %v8753
        %v8755 = vpop.f32.mrf.mxu0
        %8756 = vdwg.mxu0
        %8757 = vmatpush.bf16.msra.mxu0 %v8626
        %8758 = vmatpush.bf16.msra.mxu0 %v8625
        %8759 = vmatpush.bf16.msra.mxu0 %v8624
        %8760 = vmatpush.bf16.msra.mxu0 %v8623
        %8761 = vmatpush.bf16.msra.mxu0 %v8622
        %8762 = vmatpush.bf16.msra.mxu0 %v8621
        %8763 = vmatpush.bf16.msra.mxu0 %v8620
        %8764 = vmatpush.bf16.msra.mxu0 %v8619
        %8765 = vmatmul.bf16.gmra.mxu0 %v8209
        %v8766 = vpop.f32.mrf.mxu0
        %v8767 = vadd.f32 %v8754, %v8766
        %v8768 = vpop.f32.mrf.mxu0
        %8769 = vdwg.mxu0
        %8770 = vmatpush.bf16.msra.mxu0 %v8634
        %8771 = vmatpush.bf16.msra.mxu0 %v8633
        %8772 = vmatpush.bf16.msra.mxu0 %v8632
        %8773 = vmatpush.bf16.msra.mxu0 %v8631
        %8774 = vmatpush.bf16.msra.mxu0 %v8630
        %8775 = vmatpush.bf16.msra.mxu0 %v8629
        %8776 = vmatpush.bf16.msra.mxu0 %v8628
        %8777 = vmatpush.bf16.msra.mxu0 %v8627
        %8778 = vmatmul.bf16.gmra.mxu0 %v8210
        %v8779 = vpop.f32.mrf.mxu0
        %v8780 = vadd.f32 %v8767, %v8779
        %v8781 = vpop.f32.mrf.mxu0
        %8782 = vdwg.mxu0
        %8783 = vmatpush.bf16.msra.mxu0 %v8642
        %8784 = vmatpush.bf16.msra.mxu0 %v8641
        %8785 = vmatpush.bf16.msra.mxu0 %v8640
        %8786 = vmatpush.bf16.msra.mxu0 %v8639
        %8787 = vmatpush.bf16.msra.mxu0 %v8638
        %8788 = vmatpush.bf16.msra.mxu0 %v8637
        %8789 = vmatpush.bf16.msra.mxu0 %v8636
        %8790 = vmatpush.bf16.msra.mxu0 %v8635
        %8791 = vmatmul.bf16.gmra.mxu0 %v8211
        %v8792 = vpop.f32.mrf.mxu0
        %v8793 = vadd.f32 %v8780, %v8792
        %v8794 = vpop.f32.mrf.mxu0
        %8795 = vdwg.mxu0
        %8796 = vmatpush.bf16.msra.mxu0 %v8650
        %8797 = vmatpush.bf16.msra.mxu0 %v8649
        %8798 = vmatpush.bf16.msra.mxu0 %v8648
        %8799 = vmatpush.bf16.msra.mxu0 %v8647
        %8800 = vmatpush.bf16.msra.mxu0 %v8646
        %8801 = vmatpush.bf16.msra.mxu0 %v8645
        %8802 = vmatpush.bf16.msra.mxu0 %v8644
        %8803 = vmatpush.bf16.msra.mxu0 %v8643
        %8804 = vmatmul.bf16.gmra.mxu0 %v8212
        %v8805 = vpop.f32.mrf.mxu0
        %v8806 = vadd.f32 %v8793, %v8805
        %v8807 = vpop.f32.mrf.mxu0
        %8808 = vdwg.mxu0
        %8809 = vmatpush.bf16.msra.mxu0 %v8658
        %8810 = vmatpush.bf16.msra.mxu0 %v8657
        %8811 = vmatpush.bf16.msra.mxu0 %v8656
        %8812 = vmatpush.bf16.msra.mxu0 %v8655
        %8813 = vmatpush.bf16.msra.mxu0 %v8654
        %8814 = vmatpush.bf16.msra.mxu0 %v8653
        %8815 = vmatpush.bf16.msra.mxu0 %v8652
        %8816 = vmatpush.bf16.msra.mxu0 %v8651
        %8817 = vmatmul.bf16.gmra.mxu0 %v8213
        %v8818 = vpop.f32.mrf.mxu0
        %v8819 = vadd.f32 %v8806, %v8818
        %v8820 = vpop.f32.mrf.mxu0
        %8821 = vdwg.mxu0
        %8822 = vmatpush.bf16.msra.mxu0 %v8666
        %8823 = vmatpush.bf16.msra.mxu0 %v8665
        %8824 = vmatpush.bf16.msra.mxu0 %v8664
        %8825 = vmatpush.bf16.msra.mxu0 %v8663
        %8826 = vmatpush.bf16.msra.mxu0 %v8662
        %8827 = vmatpush.bf16.msra.mxu0 %v8661
        %8828 = vmatpush.bf16.msra.mxu0 %v8660
        %8829 = vmatpush.bf16.msra.mxu0 %v8659
        %8830 = vmatmul.bf16.gmra.mxu0 %v8214
        %v8831 = vpop.f32.mrf.mxu0
        %v8832 = vadd.f32 %v8819, %v8831
        %v8833 = vpop.f32.mrf.mxu0
        %8834 = vdwg.mxu0
        %8835 = vst [vmem:[%s5] sm:$0xff] %v8832
      $region48: #{discriminator_img_forward.3} parent=39 // pred_fallthru
        _
      // Predicated region
      $region49: #{discriminator_img_forward.3} parent=39 // pred_check
        %p8836 = pneg %p144
      $region50: #{discriminator_img_forward.3} parent=39 // pred_check_branch
        %8838 = sbr.rel (%p8836) target = $region52
      $region51: #{discriminator_img_forward.3} parent=39 // pred_region
        _
      $region52: #{discriminator_img_forward.3} parent=39 // pred_fallthru
        _
      // Predicated region
      $region53: #{discriminator_img_forward.3} parent=39 // pred_check
        %p8839 = pneg %p144
      $region54: #{discriminator_img_forward.3} parent=39 // pred_check_branch
        %8841 = sbr.rel (%p8839) target = $region56
      $region55: #{discriminator_img_forward.3} parent=39 // pred_region
        _
      $region56: #{discriminator_img_forward.3} parent=39 // pred_fallthru
        _
    $region40: #{discriminator_img_forward.3} parent=5 // pred_fallthru
      _
    %p8842 = scmp.le.s32.totalorder 2, %s11
    // Predicated region
    $region57: #{discriminator_img_forward.3} parent=5 // pred_check
      %p8843 = pneg %p8842
    $region58: #{discriminator_img_forward.3} parent=5 // pred_check_branch
      %8845 = sbr.rel (%p8843) target = $region60
    $region59: #{discriminator_img_forward.3} parent=5 // pred_region
      %s8846 = ssub.s32 %s11, 2
    $region60: #{discriminator_img_forward.3} parent=5 // pred_fallthru
      _
  $region6: #{discriminator_img_forward.3} parent=0 // loop_footer
    %s15 = sadd.s32 1, %s11
  $region7: #{discriminator_img_forward.3} parent=0 // loop_footer_branch
    %10 = sbr.rel target = $region3
  $region8: #{discriminator_img_forward.3} parent=0 // loop_exit
    _

</llo_original>
